<compile_context>
chip_gen: v7x
topology: tpu7x:2x2x1
jax: 0.10.0
libtpu: 0.0.40
codegen_flags: <defaults>
</compile_context>

<pallas_src>
import functools

import jax
import jax.numpy as jnp
from jax import lax
from jax.experimental import pallas as pl
from jax.experimental.pallas import tpu as pltpu

ALPHA = 0.2                       # LeakyReLU negative slope (the `alpha` ctor arg)
BN_EPS = 1e-5                     # PyTorch BatchNorm default eps
N_CLASSES = 12
VMEM_LIMIT = 48 * 1024 * 1024     # v7x-safe (64 MiB physical); v5e/v6e have 128 MiB
TILE_M_CONV1 = 2048               # conv1 row tile (K=75)
TILE_M_CONV2 = 1024               # conv2 row tile (K=800)


# ---------------------------------------------------------------------------
# glue helpers
# ---------------------------------------------------------------------------
def im2col(x_nhwc, k, s, p):
    """Extract conv patches.  Returns ((N*Ho*Wo, k*k*C), Ho, Wo).

    Row order is (n, ho, wo); column order is (kh, kw, c_in), matching a PyTorch
    conv weight transposed to (kh, kw, c_in, c_out).  The jnp.pad here is the
    conv's own spatial zero padding (part of the operator), not layout padding.
    Patches stay bf16 so the matmul kernels DMA half the bytes.
    """
    N, H, W, C = x_nhwc.shape
    Ho = (H + 2 * p - k) // s + 1
    Wo = (W + 2 * p - k) // s + 1
    xp = jnp.pad(x_nhwc, ((0, 0), (p, p), (p, p), (0, 0)))
    patches = []
    for di in range(k):
        for dj in range(k):
            patches.append(xp[:, di:di + s * Ho:s, dj:dj + s * Wo:s, :])
    pat = jnp.stack(patches, axis=3)                     # (N, Ho, Wo, k*k, C)
    return pat.reshape(N * Ho * Wo, k * k * C), Ho, Wo


def _pick_tile(m, tile):
    """Largest row tile within `tile`.  If everything fits in one block, split
    into two 8-aligned blocks when possible so the 'parallel' axis still has
    work for both v7x TensorCores (a no-op on single-core v5e/v6e)."""
    if m > tile:
        return tile
    half = m // 2
    if half >= 8 and half % 8 == 0:
        return half
    return m


# ---------------------------------------------------------------------------
# Kernel A: tiled matmul (+ optional LeakyReLU) for conv1 / conv2 as im2col GEMMs
# ---------------------------------------------------------------------------
def _conv_mm_kernel(p_ref, w_ref, o_ref, *, alpha):
    y = jnp.dot(p_ref[...], w_ref[...], preferred_element_type=jnp.float32)
    if alpha is not None:
        y = jnp.where(y >= 0.0, y, alpha * y)            # LeakyReLU in f32
    o_ref[...] = y.astype(o_ref.dtype)


def conv_matmul(patches, w_mat, *, alpha, out_dtype, tile_m):
    """Pure row-tiled map: grid axis is 'parallel' (megacore-friendly).

    The last block may overhang M: out-of-bounds output rows are clipped by
    Pallas on writeback, and matmul rows are independent, so unspecified OOB
    input rows cannot corrupt valid outputs.
    """
    M, K = patches.shape
    _, C = w_mat.shape
    tm = _pick_tile(M, tile_m)
    return pl.pallas_call(
        functools.partial(_conv_mm_kernel, alpha=alpha),
        out_shape=jax.ShapeDtypeStruct((M, C), out_dtype),
        grid=(pl.cdiv(M, tm),),
        in_specs=[pl.BlockSpec((tm, K), lambda i: (i, 0)),
                  pl.BlockSpec((K, C), lambda i: (0, 0))],
        out_specs=pl.BlockSpec((tm, C), lambda i: (i, 0)),
        compiler_params=pltpu.CompilerParams(
            dimension_semantics=("parallel",),
            vmem_limit_bytes=VMEM_LIMIT),
    )(patches, w_mat)


# ---------------------------------------------------------------------------
# Kernel B: fused head + loss
#   conv2 BN2d (two-pass batch stats) + act, cond one-hot matmul + BN1d + act,
#   add, fc1 + BN1d + act, fc2, BCE-with-logits mean.
# The batch is fully resident (grid=(1,)) because every BatchNorm needs
# whole-batch statistics.
# ---------------------------------------------------------------------------
def _head_loss_kernel(y2_ref, lab_ref, condw_ref, condb_ref, cg_ref, cb_ref,
                      bn2g_ref, bn2b_ref, sel_ref, selt_ref,
                      w1_ref, b1_ref, g1_ref, be1_ref,
                      fc2w_ref, fc2b_ref, t_ref, o_ref,
                      *, n, hw, n_classes, alpha, eps):
    inv_n = 1.0 / float(n)
    inv_nhw = 1.0 / float(n * hw)

    def leaky(v):
        return jnp.where(v >= 0.0, v, alpha * v)

    # --- conv2 BatchNorm2d (training mode, biased variance) + LeakyReLU.
    # Per-channel stats are gathered from the NHWC-flat (N, hw*C) layout with a
    # 0/1 channel-selector matrix so the (hw, C)-grouped reduction runs on the
    # MXU; variance is two-pass/centered (no E[x^2]-E[x]^2 cancellation).
    y2 = y2_ref[...]                                                    # (N, 784) f32
    col_sum = jnp.sum(y2, axis=0, keepdims=True)                        # (1, 784)
    mean_c = jnp.dot(col_sum, sel_ref[...],
                     preferred_element_type=jnp.float32) * inv_nhw      # (1, 16)
    mean_cols = jnp.dot(mean_c, selt_ref[...],
                        preferred_element_type=jnp.float32)             # (1, 784)
    y2c = y2 - mean_cols
    var_c = jnp.dot(jnp.sum(y2c * y2c, axis=0, keepdims=True), sel_ref[...],
                    preferred_element_type=jnp.float32) * inv_nhw       # (1, 16)
    scale_c = bn2g_ref[...] * lax.rsqrt(var_c + eps)
    shift_c = bn2b_ref[...] - mean_c * scale_c
    scale_cols = jnp.dot(scale_c, selt_ref[...], preferred_element_type=jnp.float32)
    shift_cols = jnp.dot(shift_c, selt_ref[...], preferred_element_type=jnp.float32)
    x = leaky(y2 * scale_cols + shift_cols)                             # (N, 784)

    # --- cond path: one_hot(labels) @ W^T + b (weights VMEM-resident, no HBM
    # intermediate), BatchNorm1d over the batch (biased variance) + act.
    onehot = (lab_ref[...] ==
              lax.broadcasted_iota(jnp.int32, (n, n_classes), 1)).astype(jnp.float32)
    c = jnp.dot(onehot, condw_ref[...],
                preferred_element_type=jnp.float32) + condb_ref[...]    # (N, 784)
    cm = jnp.sum(c, axis=0, keepdims=True) * inv_n
    cc = c - cm
    cv = jnp.sum(cc * cc, axis=0, keepdims=True) * inv_n
    c = leaky(cc * lax.rsqrt(cv + eps) * cg_ref[...] + cb_ref[...])

    # --- fc1 (bf16 MXU operands, f32 accumulate) + BatchNorm1d + act.
    z = (x + c).astype(jnp.bfloat16)                    # bf16 cuts live VMEM bytes
    h = jnp.dot(z, w1_ref[...], preferred_element_type=jnp.float32) + b1_ref[...]
    hm = jnp.sum(h, axis=0, keepdims=True) * inv_n
    hc = h - hm
    hv = jnp.sum(hc * hc, axis=0, keepdims=True) * inv_n
    h = leaky(hc * lax.rsqrt(hv + eps) * g1_ref[...] + be1_ref[...])

    # --- fc2 (784 -> 1) as broadcast-multiply + lane reduction (avoids a
    # 1-lane matmul), then numerically stable BCE-with-logits mean.
    logits = jnp.sum(h * fc2w_ref[...], axis=1, keepdims=True) + fc2b_ref[...]
    t = t_ref[...]
    per = jnp.maximum(logits, 0.0) - logits * t + jnp.log1p(jnp.exp(-jnp.abs(logits)))
    o_ref[...] = jnp.sum(per, axis=0, keepdims=True) * inv_n


def head_loss(y2_flat, labels2d, params, targets, *, alpha=ALPHA, eps=BN_EPS):
    n = y2_flat.shape[0]
    n_ch = params["bn2_gamma"].shape[1]
    hw = y2_flat.shape[1] // n_ch
    args = (y2_flat, labels2d,
            params["cond_wt_perm"], params["cond_b_perm"],
            params["cond_gamma_perm"], params["cond_beta_perm"],
            params["bn2_gamma"], params["bn2_beta"],
            params["sel"], params["selT"],
            params["fc1_wt_perm"], params["fc1_b"],
            params["fc1_gamma"], params["fc1_beta"],
            params["fc2_w_row"], params["fc2_b"], targets)
    in_specs = [pl.BlockSpec(a.shape, lambda i: (0, 0)) for a in args]
    out = pl.pallas_call(
        functools.partial(_head_loss_kernel, n=n, hw=hw,
                          n_classes=params["cond_wt_perm"].shape[0],
                          alpha=alpha, eps=eps),
        out_shape=jax.ShapeDtypeStruct((1, 1), jnp.float32),
        grid=(1,),
        in_specs=in_specs,
        out_specs=pl.BlockSpec((1, 1), lambda i: (0, 0)),
        compiler_params=pltpu.CompilerParams(
            dimension_semantics=("arbitrary",),
            vmem_limit_bytes=VMEM_LIMIT),
    )(*args)
    return out[0, 0]


# ---------------------------------------------------------------------------
# parameters (deterministic synthetic init, PyTorch-style shapes) + one-time prep
# ---------------------------------------------------------------------------
def init_params(key):
    ks = jax.random.split(key, 8)
    s = 0.05
    return {
        # Conv2d weights: (C_out, C_in, kh, kw), bias=False in the module
        "conv1_w": jax.random.normal(ks[0], (32, 3, 5, 5), jnp.float32) * s,
        "conv2_w": jax.random.normal(ks[1], (16, 32, 5, 5), jnp.float32) * s,
        # BatchNorm2d(16)
        "bn2_gamma": jnp.ones((16,), jnp.float32),
        "bn2_beta": jnp.zeros((16,), jnp.float32),
        # Condition: Linear(12, 784) (weight is (out, in)), BatchNorm1d(784)
        "cond_w": jax.random.normal(ks[2], (784, N_CLASSES), jnp.float32) * s,
        "cond_b": jax.random.normal(ks[3], (784,), jnp.float32) * s,
        "cond_gamma": jnp.ones((784,), jnp.float32),
        "cond_beta": jnp.zeros((784,), jnp.float32),
        # fc head: Linear(784, 784), BatchNorm1d(784), Linear(784, 1)
        "fc1_w": jax.random.normal(ks[4], (784, 784), jnp.float32) * s,
        "fc1_b": jax.random.normal(ks[5], (784,), jnp.float32) * s,
        "fc1_gamma": jnp.ones((784,), jnp.float32),
        "fc1_beta": jnp.zeros((784,), jnp.float32),
        "fc2_w": jax.random.normal(ks[6], (1, 784), jnp.float32) * s,
        "fc2_b": jax.random.normal(ks[7], (1,), jnp.float32) * s,
    }


def prepare_params(raw):
    """One-time layout prep: conv weights -> (k*k*Cin, Cout) bf16; cond/fc1
    weights permuted so the head consumes conv2's NHWC-flat output directly
    (no per-step activation transpose); channel-selector matrices for in-kernel
    BatchNorm2d statistics."""
    c2_out = raw["conv2_w"].shape[0]                 # 16
    hw = raw["cond_w"].shape[0] // c2_out            # 49 (= 7*7)
    feat = hw * c2_out                               # 784

    # sigma maps NHWC-flat index (h*W+w)*C + c -> NCHW-flat index c*HW + (h*W+w)
    hw_idx = jnp.arange(hw, dtype=jnp.int32)
    ch_idx = jnp.arange(c2_out, dtype=jnp.int32)
    sigma = (ch_idx[None, :] * hw + hw_idx[:, None]).reshape(-1)

    # 0/1 channel selector: sel[j, c] = 1 iff NHWC-flat column j has channel c.
    col = jnp.arange(feat, dtype=jnp.int32)
    sel = (col[:, None] % c2_out == ch_idx[None, :]).astype(jnp.float32)  # (784, 16)

    cond_wt = raw["cond_w"].T                        # (12, 784)
    fc1_wt = raw["fc1_w"].T                          # (784_in, 784_out)
    return {
        "conv1_w_mat": jnp.transpose(raw["conv1_w"], (2, 3, 1, 0))
                          .reshape(-1, raw["conv1_w"].shape[0]).astype(jnp.bfloat16),
        "conv2_w_mat": jnp.transpose(raw["conv2_w"], (2, 3, 1, 0))
                          .reshape(-1, c2_out).astype(jnp.bfloat16),
        "bn2_gamma": raw["bn2_gamma"][None, :],                  # (1, 16)
        "bn2_beta": raw["bn2_beta"][None, :],
        "sel": sel,                                              # (784, 16)
        "selT": sel.T,                                           # (16, 784)
        "cond_wt_perm": cond_wt[:, sigma],                       # (12, 784) f32
        "cond_b_perm": raw["cond_b"][sigma][None, :],            # (1, 784)
        "cond_gamma_perm": raw["cond_gamma"][sigma][None, :],
        "cond_beta_perm": raw["cond_beta"][sigma][None, :],
        "fc1_wt_perm": fc1_wt[sigma, :].astype(jnp.bfloat16),    # (784, 784) bf16
        "fc1_b": raw["fc1_b"][None, :],
        "fc1_gamma": raw["fc1_gamma"][None, :],
        "fc1_beta": raw["fc1_beta"][None, :],
        "fc2_w_row": raw["fc2_w"],                               # (1, 784) f32
        "fc2_b": raw["fc2_b"][None, :],                          # (1, 1)
    }


# ---------------------------------------------------------------------------
# forward pass (mirrors Discriminator.forward)
# ---------------------------------------------------------------------------
def discriminator_forward(params, images, labels, targets, alpha=ALPHA):
    N = images.shape[0]
    x = jnp.transpose(images, (0, 2, 3, 1)).astype(jnp.bfloat16)   # NCHW -> NHWC bf16

    # conv1: Conv2d(3,32,5,s=2,p=2,bias=False) + LeakyReLU   (28x28 -> 14x14)
    p1, Ho1, Wo1 = im2col(x, 5, 2, 2)                              # (N*196, 75) bf16
    y1 = conv_matmul(p1, params["conv1_w_mat"], alpha=alpha,
                     out_dtype=jnp.bfloat16, tile_m=TILE_M_CONV1)  # (N*196, 32) bf16
    y1 = y1.reshape(N, Ho1, Wo1, 32)                               # free bitcast

    # conv2: Conv2d(32,16,5,s=2,p=2,bias=False); BN2d + LeakyReLU run in the head.
    # TODO(synk): p2 is a ~6x HBM expansion of y1; fusing this im2col into the
    # conv2 kernel would remove it but needs relayout-heavy 7/49-sized sublane
    # merges in-kernel, so the patch matrix is still built with XLA ops (bf16).
    p2, Ho2, Wo2 = im2col(y1, 5, 2, 2)                             # (N*49, 800) bf16
    y2 = conv_matmul(p2, params["conv2_w_mat"], alpha=None,
                     out_dtype=jnp.float32, tile_m=TILE_M_CONV2)   # (N*49, 16) f32

    # Row-major (N*49, 16) -> (N, 784) is a free bitcast; columns are NHWC-flat
    # (col j -> position j//16, channel j%16), matching the permuted weights.
    y2_flat = y2.reshape(N, Ho2 * Wo2 * 16)
    labels2d = labels.reshape(N, 1).astype(jnp.int32)

    # fused head: BN2d+act, cond (one-hot matmul)+BN1d+act, add, fc1+BN1d+act,
    # fc2, BCE-with-logits mean -- one kernel, no lane-sparse logits round trip.
    return head_loss(y2_flat, labels2d, params, targets, alpha=alpha)


# ---------------------------------------------------------------------------
if __name__ == "__main__":
    key = jax.random.PRNGKey(0)
    k_param, k_img, k_lab, k_tgt = jax.random.split(key, 4)

    raw_params = init_params(k_param)
    params = prepare_params(raw_params)        # one-time weight layout prep

    # Shapes implied by the module: 3x28x28 images (conv1,conv2 -> 16x7x7 = 784).
    images = jax.random.normal(k_img, (2, 3, 28, 28), jnp.float32)
    labels = jax.random.randint(k_lab, (2,), 0, N_CLASSES)
    targets = jax.random.bernoulli(k_tgt, 0.5, (2, 1)).astype(jnp.float32)

    loss_fn = jax.jit(discriminator_forward)
    loss = loss_fn(params, images, labels, targets)
    jax.block_until_ready(loss)
    print("KERNEL_OK")
</pallas_src>

<mosaic_0001>
module attributes {stable_mosaic.version = 11 : i64} {
  func.func @_conv_mm_kernel(%arg0: i32, %arg1: memref<392x75xbf16, #tpu.memory_space<vmem>>, %arg2: memref<75x32xbf16, #tpu.memory_space<vmem>>, %arg3: memref<392x32xbf16, #tpu.memory_space<vmem>>) attributes {dimension_semantics = [#tpu.dimension_semantics<parallel>], iteration_bounds = array<i64: 1>, scalar_prefetch = 0 : i64, scratch_operands = 0 : i64, tpu.core_type = #tpu.core_type<tc>, window_params = [{transform_indices = @transform_0, window_bounds = array<i64: 392, 75>}, {pipeline_mode = #tpu.pipeline_mode<synchronous>, transform_indices = @transform_1, window_bounds = array<i64: 75, 32>}, {transform_indices = @transform_2, window_bounds = array<i64: 392, 32>}]} {
    %c0 = arith.constant 0 : index
    %c0_0 = arith.constant 0 : index
    %0 = vector.load %arg1[%c0, %c0_0] : memref<392x75xbf16, #tpu.memory_space<vmem>>, vector<392x75xbf16>
    %c0_1 = arith.constant 0 : index
    %c0_2 = arith.constant 0 : index
    %1 = vector.load %arg2[%c0_1, %c0_2] : memref<75x32xbf16, #tpu.memory_space<vmem>>, vector<75x32xbf16>
    %cst = arith.constant dense<0.000000e+00> : vector<392x32xf32>
    %2 = tpu.matmul %0, %1, %cst {dimension_numbers = #tpu.dot_dimension_numbers<[1], [0], [0], [1], [0, 0, 1, 1], [], []>} : vector<392x75xbf16>, vector<75x32xbf16>, vector<392x32xf32> -> vector<392x32xf32>
    %cst_3 = arith.constant 0.000000e+00 : f32
    %3 = vector.broadcast %cst_3 : f32 to vector<392x32xf32>
    %4 = arith.cmpf oge, %2, %3 : vector<392x32xf32>
    %cst_4 = arith.constant 2.000000e-01 : f32
    %5 = vector.broadcast %cst_4 : f32 to vector<392x32xf32>
    %6 = arith.mulf %5, %2 : vector<392x32xf32>
    %7 = arith.select %4, %2, %6 : vector<392x32xi1>, vector<392x32xf32>
    %8 = arith.truncf %7 : vector<392x32xf32> to vector<392x32xbf16>
    %c0_5 = arith.constant 0 : index
    %c0_6 = arith.constant 0 : index
    %9 = vector.load %arg3[%c0_5, %c0_6] : memref<392x32xbf16, #tpu.memory_space<vmem>>, vector<392x32xbf16>
    tpu.vector_store %arg3[%c0_5, %c0_6], %8 {strides = array<i32>} : memref<392x32xbf16, #tpu.memory_space<vmem>>, vector<392x32xbf16>,
    return
  }
  func.func @transform_0(%arg0: i32) -> (i32, i32) {
    %c0_i32 = arith.constant 0 : i32
    %c0_i32_0 = arith.constant 0 : i32
    return %arg0, %c0_i32 : i32, i32
  }
  func.func @transform_1(%arg0: i32) -> (i32, i32) {
    %c0_i32 = arith.constant 0 : i32
    %c0_i32_0 = arith.constant 0 : i32
    %c0_i32_1 = arith.constant 0 : i32
    return %c0_i32, %c0_i32_0 : i32, i32
  }
  func.func @transform_2(%arg0: i32) -> (i32, i32) {
    %c0_i32 = arith.constant 0 : i32
    %c0_i32_0 = arith.constant 0 : i32
    return %arg0, %c0_i32 : i32, i32
  }
}

module attributes {stable_mosaic.version = 11 : i64} {
  func.func @_conv_mm_kernel(%arg0: i32, %arg1: memref<98x800xbf16, #tpu.memory_space<vmem>>, %arg2: memref<800x16xbf16, #tpu.memory_space<vmem>>, %arg3: memref<98x16xf32, #tpu.memory_space<vmem>>) attributes {dimension_semantics = [#tpu.dimension_semantics<parallel>], iteration_bounds = array<i64: 1>, scalar_prefetch = 0 : i64, scratch_operands = 0 : i64, tpu.core_type = #tpu.core_type<tc>, window_params = [{transform_indices = @transform_0, window_bounds = array<i64: 98, 800>}, {pipeline_mode = #tpu.pipeline_mode<synchronous>, transform_indices = @transform_1, window_bounds = array<i64: 800, 16>}, {transform_indices = @transform_2, window_bounds = array<i64: 98, 16>}]} {
    %c0 = arith.constant 0 : index
    %c0_0 = arith.constant 0 : index
    %0 = vector.load %arg1[%c0, %c0_0] : memref<98x800xbf16, #tpu.memory_space<vmem>>, vector<98x800xbf16>
    %c0_1 = arith.constant 0 : index
    %c0_2 = arith.constant 0 : index
    %1 = vector.load %arg2[%c0_1, %c0_2] : memref<800x16xbf16, #tpu.memory_space<vmem>>, vector<800x16xbf16>
    %cst = arith.constant dense<0.000000e+00> : vector<98x16xf32>
    %2 = tpu.matmul %0, %1, %cst {dimension_numbers = #tpu.dot_dimension_numbers<[1], [0], [0], [1], [0, 0, 1, 1], [], []>} : vector<98x800xbf16>, vector<800x16xbf16>, vector<98x16xf32> -> vector<98x16xf32>
    %c0_3 = arith.constant 0 : index
    %c0_4 = arith.constant 0 : index
    %3 = vector.load %arg3[%c0_3, %c0_4] : memref<98x16xf32, #tpu.memory_space<vmem>>, vector<98x16xf32>
    tpu.vector_store %arg3[%c0_3, %c0_4], %2 {strides = array<i32>} : memref<98x16xf32, #tpu.memory_space<vmem>>, vector<98x16xf32>,
    return
  }
  func.func @transform_0(%arg0: i32) -> (i32, i32) {
    %c0_i32 = arith.constant 0 : i32
    %c0_i32_0 = arith.constant 0 : i32
    return %arg0, %c0_i32 : i32, i32
  }
  func.func @transform_1(%arg0: i32) -> (i32, i32) {
    %c0_i32 = arith.constant 0 : i32
    %c0_i32_0 = arith.constant 0 : i32
    %c0_i32_1 = arith.constant 0 : i32
    return %c0_i32, %c0_i32_0 : i32, i32
  }
  func.func @transform_2(%arg0: i32) -> (i32, i32) {
    %c0_i32 = arith.constant 0 : i32
    %c0_i32_0 = arith.constant 0 : i32
    return %arg0, %c0_i32 : i32, i32
  }
}

module attributes {stable_mosaic.version = 11 : i64} {
  func.func @_head_loss_kernel(%arg0: i32, %arg1: memref<2x784xf32, #tpu.memory_space<vmem>>, %arg2: memref<2x1xi32, #tpu.memory_space<vmem>>, %arg3: memref<12x784xf32, #tpu.memory_space<vmem>>, %arg4: memref<1x784xf32, #tpu.memory_space<vmem>>, %arg5: memref<1x784xf32, #tpu.memory_space<vmem>>, %arg6: memref<1x784xf32, #tpu.memory_space<vmem>>, %arg7: memref<1x16xf32, #tpu.memory_space<vmem>>, %arg8: memref<1x16xf32, #tpu.memory_space<vmem>>, %arg9: memref<784x16xf32, #tpu.memory_space<vmem>>, %arg10: memref<16x784xf32, #tpu.memory_space<vmem>>, %arg11: memref<784x784xbf16, #tpu.memory_space<vmem>>, %arg12: memref<1x784xf32, #tpu.memory_space<vmem>>, %arg13: memref<1x784xf32, #tpu.memory_space<vmem>>, %arg14: memref<1x784xf32, #tpu.memory_space<vmem>>, %arg15: memref<1x784xf32, #tpu.memory_space<vmem>>, %arg16: memref<1x1xf32, #tpu.memory_space<vmem>>, %arg17: memref<2x1xf32, #tpu.memory_space<vmem>>, %arg18: memref<1x1xf32, #tpu.memory_space<vmem>>) attributes {dimension_semantics = [#tpu.dimension_semantics<arbitrary>], iteration_bounds = array<i64: 1>, scalar_prefetch = 0 : i64, scratch_operands = 0 : i64, tpu.core_type = #tpu.core_type<tc>, window_params = [{pipeline_mode = #tpu.pipeline_mode<synchronous>, transform_indices = @transform_0, window_bounds = array<i64: 2, 784>}, {pipeline_mode = #tpu.pipeline_mode<synchronous>, transform_indices = @transform_1, window_bounds = array<i64: 2, 1>}, {pipeline_mode = #tpu.pipeline_mode<synchronous>, transform_indices = @transform_2, window_bounds = array<i64: 12, 784>}, {pipeline_mode = #tpu.pipeline_mode<synchronous>, transform_indices = @transform_3, window_bounds = array<i64: 1, 784>}, {pipeline_mode = #tpu.pipeline_mode<synchronous>, transform_indices = @transform_4, window_bounds = array<i64: 1, 784>}, {pipeline_mode = #tpu.pipeline_mode<synchronous>, transform_indices = @transform_5, window_bounds = array<i64: 1, 784>}, {pipeline_mode = #tpu.pipeline_mode<synchronous>, transform_indices = @transform_6, window_bounds = array<i64: 1, 16>}, {pipeline_mode = #tpu.pipeline_mode<synchronous>, transform_indices = @transform_7, window_bounds = array<i64: 1, 16>}, {pipeline_mode = #tpu.pipeline_mode<synchronous>, transform_indices = @transform_8, window_bounds = array<i64: 784, 16>}, {pipeline_mode = #tpu.pipeline_mode<synchronous>, transform_indices = @transform_9, window_bounds = array<i64: 16, 784>}, {pipeline_mode = #tpu.pipeline_mode<synchronous>, transform_indices = @transform_10, window_bounds = array<i64: 784, 784>}, {pipeline_mode = #tpu.pipeline_mode<synchronous>, transform_indices = @transform_11, window_bounds = array<i64: 1, 784>}, {pipeline_mode = #tpu.pipeline_mode<synchronous>, transform_indices = @transform_12, window_bounds = array<i64: 1, 784>}, {pipeline_mode = #tpu.pipeline_mode<synchronous>, transform_indices = @transform_13, window_bounds = array<i64: 1, 784>}, {pipeline_mode = #tpu.pipeline_mode<synchronous>, transform_indices = @transform_14, window_bounds = array<i64: 1, 784>}, {pipeline_mode = #tpu.pipeline_mode<synchronous>, transform_indices = @transform_15, window_bounds = array<i64: 1, 1>}, {pipeline_mode = #tpu.pipeline_mode<synchronous>, transform_indices = @transform_16, window_bounds = array<i64: 2, 1>}, {pipeline_mode = #tpu.pipeline_mode<synchronous>, transform_indices = @transform_17, window_bounds = array<i64: 1, 1>}]} {
    %c0 = arith.constant 0 : index
    %c0_0 = arith.constant 0 : index
    %0 = vector.load %arg1[%c0, %c0_0] : memref<2x784xf32, #tpu.memory_space<vmem>>, vector<2x784xf32>
    %cst = arith.constant dense<0.000000e+00> : vector<784xf32>
    %1 = vector.multi_reduction <add>, %0, %cst [0] : vector<2x784xf32> to vector<784xf32>
    %2 = vector.shape_cast %1 : vector<784xf32> to vector<1x784xf32>
    %c0_1 = arith.constant 0 : index
    %c0_2 = arith.constant 0 : index
    %3 = vector.load %arg9[%c0_1, %c0_2] : memref<784x16xf32, #tpu.memory_space<vmem>>, vector<784x16xf32>
    %cst_3 = arith.constant dense<0.000000e+00> : vector<1x16xf32>
    %4 = tpu.matmul %2, %3, %cst_3 {dimension_numbers = #tpu.dot_dimension_numbers<[1], [0], [0], [1], [0, 0, 1, 1], [], []>} : vector<1x784xf32>, vector<784x16xf32>, vector<1x16xf32> -> vector<1x16xf32>
    %cst_4 = arith.constant 0.0102040814 : f32
    %5 = vector.broadcast %cst_4 : f32 to vector<1x16xf32>
    %6 = arith.mulf %4, %5 : vector<1x16xf32>
    %c0_5 = arith.constant 0 : index
    %c0_6 = arith.constant 0 : index
    %7 = vector.load %arg10[%c0_5, %c0_6] : memref<16x784xf32, #tpu.memory_space<vmem>>, vector<16x784xf32>
    %cst_7 = arith.constant dense<0.000000e+00> : vector<1x784xf32>
    %8 = tpu.matmul %6, %7, %cst_7 {dimension_numbers = #tpu.dot_dimension_numbers<[1], [0], [0], [1], [0, 0, 1, 1], [], []>} : vector<1x16xf32>, vector<16x784xf32>, vector<1x784xf32> -> vector<1x784xf32>
    %9 = vector.broadcast %8 : vector<1x784xf32> to vector<2x784xf32>
    %10 = arith.subf %0, %9 : vector<2x784xf32>
    %11 = arith.mulf %10, %10 : vector<2x784xf32>
    %cst_8 = arith.constant dense<0.000000e+00> : vector<784xf32>
    %12 = vector.multi_reduction <add>, %11, %cst_8 [0] : vector<2x784xf32> to vector<784xf32>
    %13 = vector.shape_cast %12 : vector<784xf32> to vector<1x784xf32>
    %c0_9 = arith.constant 0 : index
    %c0_10 = arith.constant 0 : index
    %14 = vector.load %arg9[%c0_9, %c0_10] : memref<784x16xf32, #tpu.memory_space<vmem>>, vector<784x16xf32>
    %cst_11 = arith.constant dense<0.000000e+00> : vector<1x16xf32>
    %15 = tpu.matmul %13, %14, %cst_11 {dimension_numbers = #tpu.dot_dimension_numbers<[1], [0], [0], [1], [0, 0, 1, 1], [], []>} : vector<1x784xf32>, vector<784x16xf32>, vector<1x16xf32> -> vector<1x16xf32>
    %cst_12 = arith.constant 0.0102040814 : f32
    %16 = vector.broadcast %cst_12 : f32 to vector<1x16xf32>
    %17 = arith.mulf %15, %16 : vector<1x16xf32>
    %c0_13 = arith.constant 0 : index
    %c0_14 = arith.constant 0 : index
    %18 = vector.load %arg7[%c0_13, %c0_14] : memref<1x16xf32, #tpu.memory_space<vmem>>, vector<1x16xf32>
    %cst_15 = arith.constant 9.99999974E-6 : f32
    %19 = vector.broadcast %cst_15 : f32 to vector<1x16xf32>
    %20 = arith.addf %17, %19 : vector<1x16xf32>
    %21 = math.rsqrt %20 : vector<1x16xf32>
    %22 = arith.mulf %18, %21 : vector<1x16xf32>
    %c0_16 = arith.constant 0 : index
    %c0_17 = arith.constant 0 : index
    %23 = vector.load %arg8[%c0_16, %c0_17] : memref<1x16xf32, #tpu.memory_space<vmem>>, vector<1x16xf32>
    %24 = arith.mulf %6, %22 : vector<1x16xf32>
    %25 = arith.subf %23, %24 : vector<1x16xf32>
    %c0_18 = arith.constant 0 : index
    %c0_19 = arith.constant 0 : index
    %26 = vector.load %arg10[%c0_18, %c0_19] : memref<16x784xf32, #tpu.memory_space<vmem>>, vector<16x784xf32>
    %cst_20 = arith.constant dense<0.000000e+00> : vector<1x784xf32>
    %27 = tpu.matmul %22, %26, %cst_20 {dimension_numbers = #tpu.dot_dimension_numbers<[1], [0], [0], [1], [0, 0, 1, 1], [], []>} : vector<1x16xf32>, vector<16x784xf32>, vector<1x784xf32> -> vector<1x784xf32>
    %c0_21 = arith.constant 0 : index
    %c0_22 = arith.constant 0 : index
    %28 = vector.load %arg10[%c0_21, %c0_22] : memref<16x784xf32, #tpu.memory_space<vmem>>, vector<16x784xf32>
    %cst_23 = arith.constant dense<0.000000e+00> : vector<1x784xf32>
    %29 = tpu.matmul %25, %28, %cst_23 {dimension_numbers = #tpu.dot_dimension_numbers<[1], [0], [0], [1], [0, 0, 1, 1], [], []>} : vector<1x16xf32>, vector<16x784xf32>, vector<1x784xf32> -> vector<1x784xf32>
    %30 = vector.broadcast %27 : vector<1x784xf32> to vector<2x784xf32>
    %31 = arith.mulf %0, %30 : vector<2x784xf32>
    %32 = vector.broadcast %29 : vector<1x784xf32> to vector<2x784xf32>
    %33 = arith.addf %31, %32 : vector<2x784xf32>
    %cst_24 = arith.constant 0.000000e+00 : f32
    %34 = vector.broadcast %cst_24 : f32 to vector<2x784xf32>
    %35 = arith.cmpf oge, %33, %34 : vector<2x784xf32>
    %cst_25 = arith.constant 2.000000e-01 : f32
    %36 = vector.broadcast %cst_25 : f32 to vector<2x784xf32>
    %37 = arith.mulf %36, %33 : vector<2x784xf32>
    %38 = arith.select %35, %33, %37 : vector<2x784xi1>, vector<2x784xf32>
    %c0_26 = arith.constant 0 : index
    %c0_27 = arith.constant 0 : index
    %39 = vector.load %arg2[%c0_26, %c0_27] : memref<2x1xi32, #tpu.memory_space<vmem>>, vector<2x1xi32>
    %40 = tpu.iota {dimensions = array<i32: 1>} : vector<2x12xi32>
    %41 = vector.broadcast %39 : vector<2x1xi32> to vector<2x12xi32>
    %42 = arith.cmpi eq, %41, %40 : vector<2x12xi32>
    %43 = arith.extui %42 : vector<2x12xi1> to vector<2x12xi32>
    %44 = arith.sitofp %43 : vector<2x12xi32> to vector<2x12xf32>
    %c0_28 = arith.constant 0 : index
    %c0_29 = arith.constant 0 : index
    %45 = vector.load %arg3[%c0_28, %c0_29] : memref<12x784xf32, #tpu.memory_space<vmem>>, vector<12x784xf32>
    %cst_30 = arith.constant dense<0.000000e+00> : vector<2x784xf32>
    %46 = tpu.matmul %44, %45, %cst_30 {dimension_numbers = #tpu.dot_dimension_numbers<[1], [0], [0], [1], [0, 0, 1, 1], [], []>} : vector<2x12xf32>, vector<12x784xf32>, vector<2x784xf32> -> vector<2x784xf32>
    %c0_31 = arith.constant 0 : index
    %c0_32 = arith.constant 0 : index
    %47 = vector.load %arg4[%c0_31, %c0_32] : memref<1x784xf32, #tpu.memory_space<vmem>>, vector<1x784xf32>
    %48 = vector.broadcast %47 : vector<1x784xf32> to vector<2x784xf32>
    %49 = arith.addf %46, %48 : vector<2x784xf32>
    %cst_33 = arith.constant dense<0.000000e+00> : vector<784xf32>
    %50 = vector.multi_reduction <add>, %49, %cst_33 [0] : vector<2x784xf32> to vector<784xf32>
    %51 = vector.shape_cast %50 : vector<784xf32> to vector<1x784xf32>
    %cst_34 = arith.constant 5.000000e-01 : f32
    %52 = vector.broadcast %cst_34 : f32 to vector<1x784xf32>
    %53 = arith.mulf %51, %52 : vector<1x784xf32>
    %54 = vector.broadcast %53 : vector<1x784xf32> to vector<2x784xf32>
    %55 = arith.subf %49, %54 : vector<2x784xf32>
    %56 = arith.mulf %55, %55 : vector<2x784xf32>
    %cst_35 = arith.constant dense<0.000000e+00> : vector<784xf32>
    %57 = vector.multi_reduction <add>, %56, %cst_35 [0] : vector<2x784xf32> to vector<784xf32>
    %58 = vector.shape_cast %57 : vector<784xf32> to vector<1x784xf32>
    %cst_36 = arith.constant 5.000000e-01 : f32
    %59 = vector.broadcast %cst_36 : f32 to vector<1x784xf32>
    %60 = arith.mulf %58, %59 : vector<1x784xf32>
    %cst_37 = arith.constant 9.99999974E-6 : f32
    %61 = vector.broadcast %cst_37 : f32 to vector<1x784xf32>
    %62 = arith.addf %60, %61 : vector<1x784xf32>
    %63 = math.rsqrt %62 : vector<1x784xf32>
    %64 = vector.broadcast %63 : vector<1x784xf32> to vector<2x784xf32>
    %65 = arith.mulf %55, %64 : vector<2x784xf32>
    %c0_38 = arith.constant 0 : index
    %c0_39 = arith.constant 0 : index
    %66 = vector.load %arg5[%c0_38, %c0_39] : memref<1x784xf32, #tpu.memory_space<vmem>>, vector<1x784xf32>
    %67 = vector.broadcast %66 : vector<1x784xf32> to vector<2x784xf32>
    %68 = arith.mulf %65, %67 : vector<2x784xf32>
    %c0_40 = arith.constant 0 : index
    %c0_41 = arith.constant 0 : index
    %69 = vector.load %arg6[%c0_40, %c0_41] : memref<1x784xf32, #tpu.memory_space<vmem>>, vector<1x784xf32>
    %70 = vector.broadcast %69 : vector<1x784xf32> to vector<2x784xf32>
    %71 = arith.addf %68, %70 : vector<2x784xf32>
    %cst_42 = arith.constant 0.000000e+00 : f32
    %72 = vector.broadcast %cst_42 : f32 to vector<2x784xf32>
    %73 = arith.cmpf oge, %71, %72 : vector<2x784xf32>
    %cst_43 = arith.constant 2.000000e-01 : f32
    %74 = vector.broadcast %cst_43 : f32 to vector<2x784xf32>
    %75 = arith.mulf %74, %71 : vector<2x784xf32>
    %76 = arith.select %73, %71, %75 : vector<2x784xi1>, vector<2x784xf32>
    %77 = arith.addf %38, %76 : vector<2x784xf32>
    %78 = arith.truncf %77 : vector<2x784xf32> to vector<2x784xbf16>
    %c0_44 = arith.constant 0 : index
    %c0_45 = arith.constant 0 : index
    %79 = vector.load %arg11[%c0_44, %c0_45] : memref<784x784xbf16, #tpu.memory_space<vmem>>, vector<784x784xbf16>
    %cst_46 = arith.constant dense<0.000000e+00> : vector<2x784xf32>
    %80 = tpu.matmul %78, %79, %cst_46 {dimension_numbers = #tpu.dot_dimension_numbers<[1], [0], [0], [1], [0, 0, 1, 1], [], []>} : vector<2x784xbf16>, vector<784x784xbf16>, vector<2x784xf32> -> vector<2x784xf32>
    %c0_47 = arith.constant 0 : index
    %c0_48 = arith.constant 0 : index
    %81 = vector.load %arg12[%c0_47, %c0_48] : memref<1x784xf32, #tpu.memory_space<vmem>>, vector<1x784xf32>
    %82 = vector.broadcast %81 : vector<1x784xf32> to vector<2x784xf32>
    %83 = arith.addf %80, %82 : vector<2x784xf32>
    %cst_49 = arith.constant dense<0.000000e+00> : vector<784xf32>
    %84 = vector.multi_reduction <add>, %83, %cst_49 [0] : vector<2x784xf32> to vector<784xf32>
    %85 = vector.shape_cast %84 : vector<784xf32> to vector<1x784xf32>
    %cst_50 = arith.constant 5.000000e-01 : f32
    %86 = vector.broadcast %cst_50 : f32 to vector<1x784xf32>
    %87 = arith.mulf %85, %86 : vector<1x784xf32>
    %88 = vector.broadcast %87 : vector<1x784xf32> to vector<2x784xf32>
    %89 = arith.subf %83, %88 : vector<2x784xf32>
    %90 = arith.mulf %89, %89 : vector<2x784xf32>
    %cst_51 = arith.constant dense<0.000000e+00> : vector<784xf32>
    %91 = vector.multi_reduction <add>, %90, %cst_51 [0] : vector<2x784xf32> to vector<784xf32>
    %92 = vector.shape_cast %91 : vector<784xf32> to vector<1x784xf32>
    %cst_52 = arith.constant 5.000000e-01 : f32
    %93 = vector.broadcast %cst_52 : f32 to vector<1x784xf32>
    %94 = arith.mulf %92, %93 : vector<1x784xf32>
    %cst_53 = arith.constant 9.99999974E-6 : f32
    %95 = vector.broadcast %cst_53 : f32 to vector<1x784xf32>
    %96 = arith.addf %94, %95 : vector<1x784xf32>
    %97 = math.rsqrt %96 : vector<1x784xf32>
    %98 = vector.broadcast %97 : vector<1x784xf32> to vector<2x784xf32>
    %99 = arith.mulf %89, %98 : vector<2x784xf32>
    %c0_54 = arith.constant 0 : index
    %c0_55 = arith.constant 0 : index
    %100 = vector.load %arg13[%c0_54, %c0_55] : memref<1x784xf32, #tpu.memory_space<vmem>>, vector<1x784xf32>
    %101 = vector.broadcast %100 : vector<1x784xf32> to vector<2x784xf32>
    %102 = arith.mulf %99, %101 : vector<2x784xf32>
    %c0_56 = arith.constant 0 : index
    %c0_57 = arith.constant 0 : index
    %103 = vector.load %arg14[%c0_56, %c0_57] : memref<1x784xf32, #tpu.memory_space<vmem>>, vector<1x784xf32>
    %104 = vector.broadcast %103 : vector<1x784xf32> to vector<2x784xf32>
    %105 = arith.addf %102, %104 : vector<2x784xf32>
    %cst_58 = arith.constant 0.000000e+00 : f32
    %106 = vector.broadcast %cst_58 : f32 to vector<2x784xf32>
    %107 = arith.cmpf oge, %105, %106 : vector<2x784xf32>
    %cst_59 = arith.constant 2.000000e-01 : f32
    %108 = vector.broadcast %cst_59 : f32 to vector<2x784xf32>
    %109 = arith.mulf %108, %105 : vector<2x784xf32>
    %110 = arith.select %107, %105, %109 : vector<2x784xi1>, vector<2x784xf32>
    %c0_60 = arith.constant 0 : index
    %c0_61 = arith.constant 0 : index
    %111 = vector.load %arg15[%c0_60, %c0_61] : memref<1x784xf32, #tpu.memory_space<vmem>>, vector<1x784xf32>
    %112 = vector.broadcast %111 : vector<1x784xf32> to vector<2x784xf32>
    %113 = arith.mulf %110, %112 : vector<2x784xf32>
    %cst_62 = arith.constant dense<0.000000e+00> : vector<2xf32>
    %114 = vector.multi_reduction <add>, %113, %cst_62 [1] : vector<2x784xf32> to vector<2xf32>
    %115 = vector.shape_cast %114 : vector<2xf32> to vector<2x1xf32>
    %c0_63 = arith.constant 0 : index
    %c0_64 = arith.constant 0 : index
    %116 = vector.load %arg16[%c0_63, %c0_64] : memref<1x1xf32, #tpu.memory_space<vmem>>, vector<1x1xf32>
    %117 = vector.broadcast %116 : vector<1x1xf32> to vector<2x1xf32>
    %118 = arith.addf %115, %117 : vector<2x1xf32>
    %c0_65 = arith.constant 0 : index
    %c0_66 = arith.constant 0 : index
    %119 = vector.load %arg17[%c0_65, %c0_66] : memref<2x1xf32, #tpu.memory_space<vmem>>, vector<2x1xf32>
    %cst_67 = arith.constant 0.000000e+00 : f32
    %120 = vector.broadcast %cst_67 : f32 to vector<2x1xf32>
    %121 = arith.maximumf %118, %120 : vector<2x1xf32>
    %122 = arith.mulf %118, %119 : vector<2x1xf32>
    %123 = arith.subf %121, %122 : vector<2x1xf32>
    %124 = math.absf %118 : vector<2x1xf32>
    %cst_68 = arith.constant 0.000000e+00 : f32
    %125 = vector.broadcast %cst_68 : f32 to vector<2x1xf32>
    %126 = arith.subf %125, %124 : vector<2x1xf32>
    %127 = math.exp %126 : vector<2x1xf32>
    %128 = math.log1p %127 : vector<2x1xf32>
    %129 = arith.addf %123, %128 : vector<2x1xf32>
    %cst_69 = arith.constant dense<0.000000e+00> : vector<1xf32>
    %130 = vector.multi_reduction <add>, %129, %cst_69 [0] : vector<2x1xf32> to vector<1xf32>
    %131 = vector.shape_cast %130 : vector<1xf32> to vector<1x1xf32>
    %cst_70 = arith.constant 5.000000e-01 : f32
    %132 = vector.broadcast %cst_70 : f32 to vector<1x1xf32>
    %133 = arith.mulf %131, %132 : vector<1x1xf32>
    %c0_71 = arith.constant 0 : index
    %c0_72 = arith.constant 0 : index
    %134 = vector.load %arg18[%c0_71, %c0_72] : memref<1x1xf32, #tpu.memory_space<vmem>>, vector<1x1xf32>
    tpu.vector_store %arg18[%c0_71, %c0_72], %133 {strides = array<i32>} : memref<1x1xf32, #tpu.memory_space<vmem>>, vector<1x1xf32>,
    return
  }
  func.func @transform_0(%arg0: i32) -> (i32, i32) {
    %c0_i32 = arith.constant 0 : i32
    %c0_i32_0 = arith.constant 0 : i32
    %c0_i32_1 = arith.constant 0 : i32
    return %c0_i32, %c0_i32_0 : i32, i32
  }
  func.func @transform_1(%arg0: i32) -> (i32, i32) {
    %c0_i32 = arith.constant 0 : i32
    %c0_i32_0 = arith.constant 0 : i32
    %c0_i32_1 = arith.constant 0 : i32
    return %c0_i32, %c0_i32_0 : i32, i32
  }
  func.func @transform_2(%arg0: i32) -> (i32, i32) {
    %c0_i32 = arith.constant 0 : i32
    %c0_i32_0 = arith.constant 0 : i32
    %c0_i32_1 = arith.constant 0 : i32
    return %c0_i32, %c0_i32_0 : i32, i32
  }
  func.func @transform_3(%arg0: i32) -> (i32, i32) {
    %c0_i32 = arith.constant 0 : i32
    %c0_i32_0 = arith.constant 0 : i32
    %c0_i32_1 = arith.constant 0 : i32
    return %c0_i32, %c0_i32_0 : i32, i32
  }
  func.func @transform_4(%arg0: i32) -> (i32, i32) {
    %c0_i32 = arith.constant 0 : i32
    %c0_i32_0 = arith.constant 0 : i32
    %c0_i32_1 = arith.constant 0 : i32
    return %c0_i32, %c0_i32_0 : i32, i32
  }
  func.func @transform_5(%arg0: i32) -> (i32, i32) {
    %c0_i32 = arith.constant 0 : i32
    %c0_i32_0 = arith.constant 0 : i32
    %c0_i32_1 = arith.constant 0 : i32
    return %c0_i32, %c0_i32_0 : i32, i32
  }
  func.func @transform_6(%arg0: i32) -> (i32, i32) {
    %c0_i32 = arith.constant 0 : i32
    %c0_i32_0 = arith.constant 0 : i32
    %c0_i32_1 = arith.constant 0 : i32
    return %c0_i32, %c0_i32_0 : i32, i32
  }
  func.func @transform_7(%arg0: i32) -> (i32, i32) {
    %c0_i32 = arith.constant 0 : i32
    %c0_i32_0 = arith.constant 0 : i32
    %c0_i32_1 = arith.constant 0 : i32
    return %c0_i32, %c0_i32_0 : i32, i32
  }
  func.func @transform_8(%arg0: i32) -> (i32, i32) {
    %c0_i32 = arith.constant 0 : i32
    %c0_i32_0 = arith.constant 0 : i32
    %c0_i32_1 = arith.constant 0 : i32
    return %c0_i32, %c0_i32_0 : i32, i32
  }
  func.func @transform_9(%arg0: i32) -> (i32, i32) {
    %c0_i32 = arith.constant 0 : i32
    %c0_i32_0 = arith.constant 0 : i32
    %c0_i32_1 = arith.constant 0 : i32
    return %c0_i32, %c0_i32_0 : i32, i32
  }
  func.func @transform_10(%arg0: i32) -> (i32, i32) {
    %c0_i32 = arith.constant 0 : i32
    %c0_i32_0 = arith.constant 0 : i32
    %c0_i32_1 = arith.constant 0 : i32
    return %c0_i32, %c0_i32_0 : i32, i32
  }
  func.func @transform_11(%arg0: i32) -> (i32, i32) {
    %c0_i32 = arith.constant 0 : i32
    %c0_i32_0 = arith.constant 0 : i32
    %c0_i32_1 = arith.constant 0 : i32
    return %c0_i32, %c0_i32_0 : i32, i32
  }
  func.func @transform_12(%arg0: i32) -> (i32, i32) {
    %c0_i32 = arith.constant 0 : i32
    %c0_i32_0 = arith.constant 0 : i32
    %c0_i32_1 = arith.constant 0 : i32
    return %c0_i32, %c0_i32_0 : i32, i32
  }
  func.func @transform_13(%arg0: i32) -> (i32, i32) {
    %c0_i32 = arith.constant 0 : i32
    %c0_i32_0 = arith.constant 0 : i32
    %c0_i32_1 = arith.constant 0 : i32
    return %c0_i32, %c0_i32_0 : i32, i32
  }
  func.func @transform_14(%arg0: i32) -> (i32, i32) {
    %c0_i32 = arith.constant 0 : i32
    %c0_i32_0 = arith.constant 0 : i32
    %c0_i32_1 = arith.constant 0 : i32
    return %c0_i32, %c0_i32_0 : i32, i32
  }
  func.func @transform_15(%arg0: i32) -> (i32, i32) {
    %c0_i32 = arith.constant 0 : i32
    %c0_i32_0 = arith.constant 0 : i32
    %c0_i32_1 = arith.constant 0 : i32
    return %c0_i32, %c0_i32_0 : i32, i32
  }
  func.func @transform_16(%arg0: i32) -> (i32, i32) {
    %c0_i32 = arith.constant 0 : i32
    %c0_i32_0 = arith.constant 0 : i32
    %c0_i32_1 = arith.constant 0 : i32
    return %c0_i32, %c0_i32_0 : i32, i32
  }
  func.func @transform_17(%arg0: i32) -> (i32, i32) {
    %c0_i32 = arith.constant 0 : i32
    %c0_i32_0 = arith.constant 0 : i32
    %c0_i32_1 = arith.constant 0 : i32
    return %c0_i32, %c0_i32_0 : i32, i32
  }
}

</mosaic_0001>

<llo_original>
// kernel: discriminator_forward.3
$region0: #{discriminator_forward.3}
  #allocation0 [shape = 'u32[]', space=smem, size = 0x4, offset = 0x4, fixed_abs, tag = 'smem constant byte address 0x4 - core index']
  #allocation1 [shape = 'u32[144,128]{1,0:T(1,128)}', space=vmem, size = 0x12000, scoped, tag = 'internal scratch']
  %s0 = inlined_call_operand.vmem [shape: bf16[392,75], index: 0, kind: input, shape index: {}]
  %s1 = inlined_call_operand.vmem [shape: bf16[75,32], index: 1, kind: input, shape index: {}]
  %s2 = inlined_call_operand.vmem [shape: bf16[392,32], index: 2, kind: output, shape index: {}]
  %s3 = sld [smem:[#allocation0]]
  $region18: #{discriminator_forward.3} parent=0
    _
  %s5 = ssub.s32 1, %s3
  %s6 = scalar_select 0, %s5, %s3
  // Predicated region
  $region2: #{discriminator_forward.3} parent=0 // pred_check
    _
  $region3: #{discriminator_forward.3} parent=0 // pred_check_branch
    %8 = sbr.rel (0) target = $region5
  $region4: #{discriminator_forward.3} parent=0 // pred_region
    _
  $region5: #{discriminator_forward.3} parent=0 // pred_fallthru
    _
  // Predicated region
  $region6: #{discriminator_forward.3} parent=0 // pred_check
    _
  $region7: #{discriminator_forward.3} parent=0 // pred_check_branch
    %10 = sbr.rel (0) target = $region9
  $region8: #{discriminator_forward.3} parent=0 // pred_region
    _
  $region9: #{discriminator_forward.3} parent=0 // pred_fallthru
    _
  %v12 = vld [vmem:[%s0] sm:$0xf]
  %v13 = vld [vmem:[%s0 + $0x4] sm:$0xf]
  %v14 = vld [vmem:[%s0 + $0x8] sm:$0xf]
  %v15 = vld [vmem:[%s0 + $0xc] sm:$0xf]
  %v16 = vld [vmem:[%s0 + $0x10] sm:$0xf]
  %v17 = vld [vmem:[%s0 + $0x14] sm:$0xf]
  %v18 = vld [vmem:[%s0 + $0x18] sm:$0xf]
  %v19 = vld [vmem:[%s0 + $0x1c] sm:$0xf]
  %v20 = vld [vmem:[%s0 + $0x20] sm:$0xf]
  %v21 = vld [vmem:[%s0 + $0x24] sm:$0xf]
  %v22 = vld [vmem:[%s0 + $0x28] sm:$0xf]
  %v23 = vld [vmem:[%s0 + $0x2c] sm:$0xf]
  %v24 = vld [vmem:[%s0 + $0x30] sm:$0xf]
  %v25 = vld [vmem:[%s0 + $0x34] sm:$0xf]
  %v26 = vld [vmem:[%s0 + $0x38] sm:$0xf]
  %v27 = vld [vmem:[%s0 + $0x3c] sm:$0xf]
  %v28 = vld [vmem:[%s0 + $0x40] sm:$0xf]
  %v29 = vld [vmem:[%s0 + $0x44] sm:$0xf]
  %v30 = vld [vmem:[%s0 + $0x48] sm:$0xf]
  %v31 = vld [vmem:[%s0 + $0x4c] sm:$0xf]
  %v32 = vld [vmem:[%s0 + $0x50] sm:$0xf]
  %v33 = vld [vmem:[%s0 + $0x54] sm:$0xf]
  %v34 = vld [vmem:[%s0 + $0x58] sm:$0xf]
  %v35 = vld [vmem:[%s0 + $0x5c] sm:$0xf]
  %v36 = vld [vmem:[%s0 + $0x60] sm:$0xf]
  %v37 = vld [vmem:[%s0 + $0x64] sm:$0xf]
  %v38 = vld [vmem:[%s0 + $0x68] sm:$0xf]
  %v39 = vld [vmem:[%s0 + $0x6c] sm:$0xf]
  %v40 = vld [vmem:[%s0 + $0x70] sm:$0xf]
  %v41 = vld [vmem:[%s0 + $0x74] sm:$0xf]
  %v42 = vld [vmem:[%s0 + $0x78] sm:$0xf]
  %v43 = vld [vmem:[%s0 + $0x7c] sm:$0xf]
  %v44 = vld [vmem:[%s0 + $0x80] sm:$0xf]
  %v45 = vld [vmem:[%s0 + $0x84] sm:$0xf]
  %v46 = vld [vmem:[%s0 + $0x88] sm:$0xf]
  %v47 = vld [vmem:[%s0 + $0x8c] sm:$0xf]
  %v48 = vld [vmem:[%s0 + $0x90] sm:$0xf]
  %v49 = vld [vmem:[%s0 + $0x94] sm:$0xf]
  %v50 = vld [vmem:[%s0 + $0x98] sm:$0xf]
  %v51 = vld [vmem:[%s0 + $0x9c] sm:$0xf]
  %v52 = vld [vmem:[%s0 + $0xa0] sm:$0xf]
  %v53 = vld [vmem:[%s0 + $0xa4] sm:$0xf]
  %v54 = vld [vmem:[%s0 + $0xa8] sm:$0xf]
  %v55 = vld [vmem:[%s0 + $0xac] sm:$0xf]
  %v56 = vld [vmem:[%s0 + $0xb0] sm:$0xf]
  %v57 = vld [vmem:[%s0 + $0xb4] sm:$0xf]
  %v58 = vld [vmem:[%s0 + $0xb8] sm:$0xf]
  %v59 = vld [vmem:[%s0 + $0xbc] sm:$0xf]
  %v60 = vld [vmem:[%s0 + $0xc0] sm:$0xf]
  %v61 = vld [vmem:[%s1] sm:$0xf]
  %v62 = vld [vmem:[%s1 + $0x4] sm:$0xf]
  %v63 = vld [vmem:[%s1 + $0x8] sm:$0xf]
  %v64 = vld [vmem:[%s1 + $0xc] sm:$0xf]
  %v65 = vld [vmem:[%s1 + $0x10] sm:$0xf]
  %v66 = vld [vmem:[%s1 + $0x14] sm:$0xf]
  %v67 = vld [vmem:[%s1 + $0x18] sm:$0xf]
  %v68 = vld [vmem:[%s1 + $0x1c] sm:$0xf]
  %v69 = vld [vmem:[%s1 + $0x20] sm:$0xf]
  %v70 = vld [vmem:[%s1 + $0x24] sm:$0x3]
  %v120 = vunpack.c.l.b16 %v12
  %v121 = vunpack.c.l.b16 %v13
  %v122 = vunpack.c.l.b16 %v14
  %v123 = vunpack.c.l.b16 %v15
  %v124 = vunpack.c.l.b16 %v16
  %v125 = vunpack.c.l.b16 %v17
  %v126 = vunpack.c.l.b16 %v18
  %v127 = vunpack.c.l.b16 %v19
  %v128 = vunpack.c.l.b16 %v20
  %v129 = vunpack.c.l.b16 %v21
  %v130 = vunpack.c.l.b16 %v22
  %v131 = vunpack.c.l.b16 %v23
  %v132 = vunpack.c.l.b16 %v24
  %v133 = vunpack.c.l.b16 %v25
  %v134 = vunpack.c.l.b16 %v26
  %v135 = vunpack.c.l.b16 %v27
  %v136 = vunpack.c.l.b16 %v28
  %v137 = vunpack.c.l.b16 %v29
  %v138 = vunpack.c.l.b16 %v30
  %v139 = vunpack.c.l.b16 %v31
  %v140 = vunpack.c.l.b16 %v32
  %v141 = vunpack.c.l.b16 %v33
  %v142 = vunpack.c.l.b16 %v34
  %v143 = vunpack.c.l.b16 %v35
  %v144 = vunpack.c.l.b16 %v36
  %v145 = vunpack.c.l.b16 %v37
  %v146 = vunpack.c.l.b16 %v38
  %v147 = vunpack.c.l.b16 %v39
  %v148 = vunpack.c.l.b16 %v40
  %v149 = vunpack.c.l.b16 %v41
  %v150 = vunpack.c.l.b16 %v42
  %v151 = vunpack.c.l.b16 %v43
  %v152 = vunpack.c.l.b16 %v44
  %v153 = vunpack.c.l.b16 %v45
  %v154 = vunpack.c.l.b16 %v46
  %v155 = vunpack.c.l.b16 %v47
  %v156 = vunpack.c.l.b16 %v48
  %v157 = vunpack.c.l.b16 %v49
  %v158 = vunpack.c.l.b16 %v50
  %v159 = vunpack.c.l.b16 %v51
  %v160 = vunpack.c.l.b16 %v52
  %v161 = vunpack.c.l.b16 %v53
  %v162 = vunpack.c.l.b16 %v54
  %v163 = vunpack.c.l.b16 %v55
  %v164 = vunpack.c.l.b16 %v56
  %v165 = vunpack.c.l.b16 %v57
  %v166 = vunpack.c.l.b16 %v58
  %v167 = vunpack.c.l.b16 %v59
  %v168 = vunpack.c.l.b16 %v60
  %v169 = vpack.c.b16 %v121, %v120
  %v170 = vpack.c.b16 %v123, %v122
  %v171 = vpack.c.b16 %v125, %v124
  %v172 = vpack.c.b16 %v127, %v126
  %v173 = vpack.c.b16 %v129, %v128
  %v174 = vpack.c.b16 %v131, %v130
  %v175 = vpack.c.b16 %v133, %v132
  %v176 = vpack.c.b16 %v135, %v134
  %v177 = vpack.c.b16 %v137, %v136
  %v178 = vpack.c.b16 %v139, %v138
  %v179 = vpack.c.b16 %v141, %v140
  %v180 = vpack.c.b16 %v143, %v142
  %v181 = vpack.c.b16 %v145, %v144
  %v182 = vpack.c.b16 %v147, %v146
  %v183 = vpack.c.b16 %v149, %v148
  %v184 = vpack.c.b16 %v151, %v150
  %v185 = vpack.c.b16 %v153, %v152
  %v186 = vpack.c.b16 %v155, %v154
  %v187 = vpack.c.b16 %v157, %v156
  %v188 = vpack.c.b16 %v159, %v158
  %v189 = vpack.c.b16 %v161, %v160
  %v190 = vpack.c.b16 %v163, %v162
  %v191 = vpack.c.b16 %v165, %v164
  %v192 = vpack.c.b16 %v167, %v166
  %v193 = vpack.c.b16 %v168, %v168
  %v204 = vunpack.c.l.b16 %v61
  %v205 = vunpack.c.l.b16 %v62
  %v206 = vunpack.c.l.b16 %v63
  %v207 = vunpack.c.l.b16 %v64
  %v208 = vunpack.c.l.b16 %v65
  %v209 = vunpack.c.l.b16 %v66
  %v210 = vunpack.c.l.b16 %v67
  %v211 = vunpack.c.l.b16 %v68
  %v212 = vunpack.c.l.b16 %v69
  %v213 = vunpack.c.l.b16 %v70
  %v214 = vpack.c.b16 %v205, %v204
  %v215 = vpack.c.b16 %v207, %v206
  %v216 = vpack.c.b16 %v209, %v208
  %v217 = vpack.c.b16 %v211, %v210
  %v218 = vpack.c.b16 %v213, %v212
  %vm223 = vcmask 613376
  %v225 = vsel %vm223, %v169, 0
  %v228 = vsel %vm223, %v170, 0
  %v231 = vsel %vm223, %v171, 0
  %v234 = vsel %vm223, %v172, 0
  %v237 = vsel %vm223, %v173, 0
  %v240 = vsel %vm223, %v174, 0
  %v243 = vsel %vm223, %v175, 0
  %v246 = vsel %vm223, %v176, 0
  %v249 = vsel %vm223, %v177, 0
  %v252 = vsel %vm223, %v178, 0
  %v255 = vsel %vm223, %v179, 0
  %v258 = vsel %vm223, %v180, 0
  %v261 = vsel %vm223, %v181, 0
  %v264 = vsel %vm223, %v182, 0
  %v267 = vsel %vm223, %v183, 0
  %v270 = vsel %vm223, %v184, 0
  %v273 = vsel %vm223, %v185, 0
  %v276 = vsel %vm223, %v186, 0
  %v279 = vsel %vm223, %v187, 0
  %v282 = vsel %vm223, %v188, 0
  %v285 = vsel %vm223, %v189, 0
  %v288 = vsel %vm223, %v190, 0
  %v291 = vsel %vm223, %v191, 0
  %v294 = vsel %vm223, %v192, 0
  %v297 = vsel %vm223, %v193, 0
  %vm299 = vcmask 1044480
  %vm300 = vcmask 1045504
  %v301 = vsel %vm299, 4294967295, 65535
  %v302 = vsel %vm300, %v301, 0
  %v304 = vand.u32 %v218, %v302
  %306 = vmatprep.subr.bf16.mxu0 0
  %307 = vmatpush1.bf16.msra.mxu0 %v214
  %308 = vmatprep.subr.bf16.mxu0 0
  %309 = vmatpush1.bf16.msra.mxu0 %v215
  %310 = vmatprep.subr.bf16.mxu0 0
  %311 = vmatpush1.bf16.msra.mxu0 %v216
  %312 = vmatprep.subr.bf16.mxu0 0
  %313 = vmatpush1.bf16.msra.mxu0 %v217
  %314 = vmatprep.subr.bf16.mxu0 0
  %315 = vmatpush1.bf16.msra.mxu0 %v304
  %316 = vmatprep.subr.bf16.mxu0 0
  %317 = vmatpush1.bf16.msra.mxu0 0
  %318 = vmatprep.subr.bf16.mxu0 0
  %319 = vmatpush1.bf16.msra.mxu0 0
  %320 = vmatprep.subr.bf16.mxu0 0
  %321 = vmatpush1.bf16.msra.mxu0 0
  %322 = vmatprep.subr.bf16.mxu0 0
  %323 = vmatpush1.bf16.msra.mxu0 0
  %324 = vmatprep.subr.bf16.mxu0 0
  %325 = vmatpush1.bf16.msra.mxu0 0
  %326 = vmatprep.subr.bf16.mxu0 0
  %327 = vmatpush1.bf16.msra.mxu0 0
  %328 = vmatprep.subr.bf16.mxu0 0
  %329 = vmatpush1.bf16.msra.mxu0 0
  %330 = vmatprep.subr.bf16.mxu0 0
  %331 = vmatpush1.bf16.msra.mxu0 0
  %332 = vmatprep.subr.bf16.mxu0 0
  %333 = vmatpush1.bf16.msra.mxu0 0
  %334 = vmatprep.subr.bf16.mxu0 0
  %335 = vmatpush1.bf16.msra.mxu0 0
  %336 = vmatprep.subr.bf16.mxu0 0
  %337 = vmatpush1.bf16.msra.mxu0 0
  %338 = vmatprep.mubr.bf16.mxu0 0
  %339 = vmatmul.mubr.bf16.gmra.mrb[0].mxu0 %v225
  %v340 = vpop.f32.mrb[0].mxu0
  %v341 = vadd.f32 0.0, %v340
  %v342 = vpop.f32.mrb[0].mxu0
  %v343 = vpop.f32.mrb[0].mxu0
  %v344 = vadd.f32 0.0, %v343
  %v345 = vpop.f32.mrb[0].mxu0
  %346 = vmatprep.mubr.bf16.mxu0 0
  %347 = vmatmul.mubr.bf16.gmra.mrb[0].mxu0 %v228
  %v348 = vpop.f32.mrb[0].mxu0
  %v349 = vadd.f32 0.0, %v348
  %v350 = vpop.f32.mrb[0].mxu0
  %v351 = vpop.f32.mrb[0].mxu0
  %v352 = vadd.f32 0.0, %v351
  %v353 = vpop.f32.mrb[0].mxu0
  %354 = vmatprep.mubr.bf16.mxu0 0
  %355 = vmatmul.mubr.bf16.gmra.mrb[0].mxu0 %v231
  %v356 = vpop.f32.mrb[0].mxu0
  %v357 = vadd.f32 0.0, %v356
  %v358 = vpop.f32.mrb[0].mxu0
  %v359 = vpop.f32.mrb[0].mxu0
  %v360 = vadd.f32 0.0, %v359
  %v361 = vpop.f32.mrb[0].mxu0
  %362 = vmatprep.mubr.bf16.mxu0 0
  %363 = vmatmul.mubr.bf16.gmra.mrb[0].mxu0 %v234
  %v364 = vpop.f32.mrb[0].mxu0
  %v365 = vadd.f32 0.0, %v364
  %v366 = vpop.f32.mrb[0].mxu0
  %v367 = vpop.f32.mrb[0].mxu0
  %v368 = vadd.f32 0.0, %v367
  %v369 = vpop.f32.mrb[0].mxu0
  %370 = vmatprep.mubr.bf16.mxu0 0
  %371 = vmatmul.mubr.bf16.gmra.mrb[0].mxu0 %v237
  %v372 = vpop.f32.mrb[0].mxu0
  %v373 = vadd.f32 0.0, %v372
  %v374 = vpop.f32.mrb[0].mxu0
  %v375 = vpop.f32.mrb[0].mxu0
  %v376 = vadd.f32 0.0, %v375
  %v377 = vpop.f32.mrb[0].mxu0
  %378 = vmatprep.mubr.bf16.mxu0 0
  %379 = vmatmul.mubr.bf16.gmra.mrb[0].mxu0 %v240
  %v380 = vpop.f32.mrb[0].mxu0
  %v381 = vadd.f32 0.0, %v380
  %v382 = vpop.f32.mrb[0].mxu0
  %v383 = vpop.f32.mrb[0].mxu0
  %v384 = vadd.f32 0.0, %v383
  %v385 = vpop.f32.mrb[0].mxu0
  %386 = vmatprep.mubr.bf16.mxu0 0
  %387 = vmatmul.mubr.bf16.gmra.mrb[0].mxu0 %v243
  %v388 = vpop.f32.mrb[0].mxu0
  %v389 = vadd.f32 0.0, %v388
  %v390 = vpop.f32.mrb[0].mxu0
  %v391 = vpop.f32.mrb[0].mxu0
  %v392 = vadd.f32 0.0, %v391
  %v393 = vpop.f32.mrb[0].mxu0
  %394 = vmatprep.mubr.bf16.mxu0 0
  %395 = vmatmul.mubr.bf16.gmra.mrb[0].mxu0 %v246
  %v396 = vpop.f32.mrb[0].mxu0
  %v397 = vadd.f32 0.0, %v396
  %v398 = vpop.f32.mrb[0].mxu0
  %v399 = vpop.f32.mrb[0].mxu0
  %v400 = vadd.f32 0.0, %v399
  %v401 = vpop.f32.mrb[0].mxu0
  %402 = vmatprep.mubr.bf16.mxu0 0
  %403 = vmatmul.mubr.bf16.gmra.mrb[0].mxu0 %v249
  %v404 = vpop.f32.mrb[0].mxu0
  %v405 = vadd.f32 0.0, %v404
  %v406 = vpop.f32.mrb[0].mxu0
  %v407 = vpop.f32.mrb[0].mxu0
  %v408 = vadd.f32 0.0, %v407
  %v409 = vpop.f32.mrb[0].mxu0
  %410 = vmatprep.mubr.bf16.mxu0 0
  %411 = vmatmul.mubr.bf16.gmra.mrb[0].mxu0 %v252
  %v412 = vpop.f32.mrb[0].mxu0
  %v413 = vadd.f32 0.0, %v412
  %v414 = vpop.f32.mrb[0].mxu0
  %v415 = vpop.f32.mrb[0].mxu0
  %v416 = vadd.f32 0.0, %v415
  %v417 = vpop.f32.mrb[0].mxu0
  %418 = vmatprep.mubr.bf16.mxu0 0
  %419 = vmatmul.mubr.bf16.gmra.mrb[0].mxu0 %v255
  %v420 = vpop.f32.mrb[0].mxu0
  %v421 = vadd.f32 0.0, %v420
  %v422 = vpop.f32.mrb[0].mxu0
  %v423 = vpop.f32.mrb[0].mxu0
  %v424 = vadd.f32 0.0, %v423
  %v425 = vpop.f32.mrb[0].mxu0
  %426 = vmatprep.mubr.bf16.mxu0 0
  %427 = vmatmul.mubr.bf16.gmra.mrb[0].mxu0 %v258
  %v428 = vpop.f32.mrb[0].mxu0
  %v429 = vadd.f32 0.0, %v428
  %v430 = vpop.f32.mrb[0].mxu0
  %v431 = vpop.f32.mrb[0].mxu0
  %v432 = vadd.f32 0.0, %v431
  %v433 = vpop.f32.mrb[0].mxu0
  %434 = vmatprep.mubr.bf16.mxu0 0
  %435 = vmatmul.mubr.bf16.gmra.mrb[0].mxu0 %v261
  %v436 = vpop.f32.mrb[0].mxu0
  %v437 = vadd.f32 0.0, %v436
  %v438 = vpop.f32.mrb[0].mxu0
  %v439 = vpop.f32.mrb[0].mxu0
  %v440 = vadd.f32 0.0, %v439
  %v441 = vpop.f32.mrb[0].mxu0
  %442 = vmatprep.mubr.bf16.mxu0 0
  %443 = vmatmul.mubr.bf16.gmra.mrb[0].mxu0 %v264
  %v444 = vpop.f32.mrb[0].mxu0
  %v445 = vadd.f32 0.0, %v444
  %v446 = vpop.f32.mrb[0].mxu0
  %v447 = vpop.f32.mrb[0].mxu0
  %v448 = vadd.f32 0.0, %v447
  %v449 = vpop.f32.mrb[0].mxu0
  %450 = vmatprep.mubr.bf16.mxu0 0
  %451 = vmatmul.mubr.bf16.gmra.mrb[0].mxu0 %v267
  %v452 = vpop.f32.mrb[0].mxu0
  %v453 = vadd.f32 0.0, %v452
  %v454 = vpop.f32.mrb[0].mxu0
  %v455 = vpop.f32.mrb[0].mxu0
  %v456 = vadd.f32 0.0, %v455
  %v457 = vpop.f32.mrb[0].mxu0
  %458 = vmatprep.mubr.bf16.mxu0 0
  %459 = vmatmul.mubr.bf16.gmra.mrb[0].mxu0 %v270
  %v460 = vpop.f32.mrb[0].mxu0
  %v461 = vadd.f32 0.0, %v460
  %v462 = vpop.f32.mrb[0].mxu0
  %v463 = vpop.f32.mrb[0].mxu0
  %v464 = vadd.f32 0.0, %v463
  %v465 = vpop.f32.mrb[0].mxu0
  %466 = vmatprep.mubr.bf16.mxu0 0
  %467 = vmatmul.mubr.bf16.gmra.mrb[0].mxu0 %v273
  %v468 = vpop.f32.mrb[0].mxu0
  %v469 = vadd.f32 0.0, %v468
  %v470 = vpop.f32.mrb[0].mxu0
  %v471 = vpop.f32.mrb[0].mxu0
  %v472 = vadd.f32 0.0, %v471
  %v473 = vpop.f32.mrb[0].mxu0
  %474 = vmatprep.mubr.bf16.mxu0 0
  %475 = vmatmul.mubr.bf16.gmra.mrb[0].mxu0 %v276
  %v476 = vpop.f32.mrb[0].mxu0
  %v477 = vadd.f32 0.0, %v476
  %v478 = vpop.f32.mrb[0].mxu0
  %v479 = vpop.f32.mrb[0].mxu0
  %v480 = vadd.f32 0.0, %v479
  %v481 = vpop.f32.mrb[0].mxu0
  %482 = vmatprep.mubr.bf16.mxu0 0
  %483 = vmatmul.mubr.bf16.gmra.mrb[0].mxu0 %v279
  %v484 = vpop.f32.mrb[0].mxu0
  %v485 = vadd.f32 0.0, %v484
  %v486 = vpop.f32.mrb[0].mxu0
  %v487 = vpop.f32.mrb[0].mxu0
  %v488 = vadd.f32 0.0, %v487
  %v489 = vpop.f32.mrb[0].mxu0
  %490 = vmatprep.mubr.bf16.mxu0 0
  %491 = vmatmul.mubr.bf16.gmra.mrb[0].mxu0 %v282
  %v492 = vpop.f32.mrb[0].mxu0
  %v493 = vadd.f32 0.0, %v492
  %v494 = vpop.f32.mrb[0].mxu0
  %v495 = vpop.f32.mrb[0].mxu0
  %v496 = vadd.f32 0.0, %v495
  %v497 = vpop.f32.mrb[0].mxu0
  %498 = vmatprep.mubr.bf16.mxu0 0
  %499 = vmatmul.mubr.bf16.gmra.mrb[0].mxu0 %v285
  %v500 = vpop.f32.mrb[0].mxu0
  %v501 = vadd.f32 0.0, %v500
  %v502 = vpop.f32.mrb[0].mxu0
  %v503 = vpop.f32.mrb[0].mxu0
  %v504 = vadd.f32 0.0, %v503
  %v505 = vpop.f32.mrb[0].mxu0
  %506 = vmatprep.mubr.bf16.mxu0 0
  %507 = vmatmul.mubr.bf16.gmra.mrb[0].mxu0 %v288
  %v508 = vpop.f32.mrb[0].mxu0
  %v509 = vadd.f32 0.0, %v508
  %v510 = vpop.f32.mrb[0].mxu0
  %v511 = vpop.f32.mrb[0].mxu0
  %v512 = vadd.f32 0.0, %v511
  %v513 = vpop.f32.mrb[0].mxu0
  %514 = vmatprep.mubr.bf16.mxu0 0
  %515 = vmatmul.mubr.bf16.gmra.mrb[0].mxu0 %v291
  %v516 = vpop.f32.mrb[0].mxu0
  %v517 = vadd.f32 0.0, %v516
  %v518 = vpop.f32.mrb[0].mxu0
  %v519 = vpop.f32.mrb[0].mxu0
  %v520 = vadd.f32 0.0, %v519
  %v521 = vpop.f32.mrb[0].mxu0
  %522 = vmatprep.mubr.bf16.mxu0 0
  %523 = vmatmul.mubr.bf16.gmra.mrb[0].mxu0 %v294
  %v524 = vpop.f32.mrb[0].mxu0
  %v525 = vadd.f32 0.0, %v524
  %v526 = vpop.f32.mrb[0].mxu0
  %v527 = vpop.f32.mrb[0].mxu0
  %v528 = vadd.f32 0.0, %v527
  %v529 = vpop.f32.mrb[0].mxu0
  %530 = vmatprep.mubr.bf16.mxu0 0
  %531 = vmatmul.mubr.bf16.gmra.mrb[0].mxu0 %v297
  %v532 = vpop.f32.mrb[0].mxu0
  %v533 = vadd.f32 0.0, %v532
  %v534 = vpop.f32.mrb[0].mxu0
  %v535 = vpop.f32.mrb[0].mxu0
  %v536 = vpop.f32.mrb[0].mxu0
  %537 = vdwg.mxu0
  %vm538 = vcmp.ge.f32.partialorder %v341, 0.0
  %vm539 = vcmp.ge.f32.partialorder %v344, 0.0
  %vm540 = vcmp.ge.f32.partialorder %v349, 0.0
  %vm541 = vcmp.ge.f32.partialorder %v352, 0.0
  %vm542 = vcmp.ge.f32.partialorder %v357, 0.0
  %vm543 = vcmp.ge.f32.partialorder %v360, 0.0
  %vm544 = vcmp.ge.f32.partialorder %v365, 0.0
  %vm545 = vcmp.ge.f32.partialorder %v368, 0.0
  %vm546 = vcmp.ge.f32.partialorder %v373, 0.0
  %vm547 = vcmp.ge.f32.partialorder %v376, 0.0
  %vm548 = vcmp.ge.f32.partialorder %v381, 0.0
  %vm549 = vcmp.ge.f32.partialorder %v384, 0.0
  %vm550 = vcmp.ge.f32.partialorder %v389, 0.0
  %vm551 = vcmp.ge.f32.partialorder %v392, 0.0
  %vm552 = vcmp.ge.f32.partialorder %v397, 0.0
  %vm553 = vcmp.ge.f32.partialorder %v400, 0.0
  %vm554 = vcmp.ge.f32.partialorder %v405, 0.0
  %vm555 = vcmp.ge.f32.partialorder %v408, 0.0
  %vm556 = vcmp.ge.f32.partialorder %v413, 0.0
  %vm557 = vcmp.ge.f32.partialorder %v416, 0.0
  %vm558 = vcmp.ge.f32.partialorder %v421, 0.0
  %vm559 = vcmp.ge.f32.partialorder %v424, 0.0
  %vm560 = vcmp.ge.f32.partialorder %v429, 0.0
  %vm561 = vcmp.ge.f32.partialorder %v432, 0.0
  %vm562 = vcmp.ge.f32.partialorder %v437, 0.0
  %vm563 = vcmp.ge.f32.partialorder %v440, 0.0
  %vm564 = vcmp.ge.f32.partialorder %v445, 0.0
  %vm565 = vcmp.ge.f32.partialorder %v448, 0.0
  %vm566 = vcmp.ge.f32.partialorder %v453, 0.0
  %vm567 = vcmp.ge.f32.partialorder %v456, 0.0
  %vm568 = vcmp.ge.f32.partialorder %v461, 0.0
  %vm569 = vcmp.ge.f32.partialorder %v464, 0.0
  %vm570 = vcmp.ge.f32.partialorder %v469, 0.0
  %vm571 = vcmp.ge.f32.partialorder %v472, 0.0
  %vm572 = vcmp.ge.f32.partialorder %v477, 0.0
  %vm573 = vcmp.ge.f32.partialorder %v480, 0.0
  %vm574 = vcmp.ge.f32.partialorder %v485, 0.0
  %vm575 = vcmp.ge.f32.partialorder %v488, 0.0
  %vm576 = vcmp.ge.f32.partialorder %v493, 0.0
  %vm577 = vcmp.ge.f32.partialorder %v496, 0.0
  %vm578 = vcmp.ge.f32.partialorder %v501, 0.0
  %vm579 = vcmp.ge.f32.partialorder %v504, 0.0
  %vm580 = vcmp.ge.f32.partialorder %v509, 0.0
  %vm581 = vcmp.ge.f32.partialorder %v512, 0.0
  %vm582 = vcmp.ge.f32.partialorder %v517, 0.0
  %vm583 = vcmp.ge.f32.partialorder %v520, 0.0
  %vm584 = vcmp.ge.f32.partialorder %v525, 0.0
  %vm585 = vcmp.ge.f32.partialorder %v528, 0.0
  %vm586 = vcmp.ge.f32.partialorder %v533, 0.0
  %v587 = vmul.f32 %v341, 0.2
  %v588 = vmul.f32 %v344, 0.2
  %v589 = vmul.f32 %v349, 0.2
  %v590 = vmul.f32 %v352, 0.2
  %v591 = vmul.f32 %v357, 0.2
  %v592 = vmul.f32 %v360, 0.2
  %v593 = vmul.f32 %v365, 0.2
  %v594 = vmul.f32 %v368, 0.2
  %v595 = vmul.f32 %v373, 0.2
  %v596 = vmul.f32 %v376, 0.2
  %v597 = vmul.f32 %v381, 0.2
  %v598 = vmul.f32 %v384, 0.2
  %v599 = vmul.f32 %v389, 0.2
  %v600 = vmul.f32 %v392, 0.2
  %v601 = vmul.f32 %v397, 0.2
  %v602 = vmul.f32 %v400, 0.2
  %v603 = vmul.f32 %v405, 0.2
  %v604 = vmul.f32 %v408, 0.2
  %v605 = vmul.f32 %v413, 0.2
  %v606 = vmul.f32 %v416, 0.2
  %v607 = vmul.f32 %v421, 0.2
  %v608 = vmul.f32 %v424, 0.2
  %v609 = vmul.f32 %v429, 0.2
  %v610 = vmul.f32 %v432, 0.2
  %v611 = vmul.f32 %v437, 0.2
  %v612 = vmul.f32 %v440, 0.2
  %v613 = vmul.f32 %v445, 0.2
  %v614 = vmul.f32 %v448, 0.2
  %v615 = vmul.f32 %v453, 0.2
  %v616 = vmul.f32 %v456, 0.2
  %v617 = vmul.f32 %v461, 0.2
  %v618 = vmul.f32 %v464, 0.2
  %v619 = vmul.f32 %v469, 0.2
  %v620 = vmul.f32 %v472, 0.2
  %v621 = vmul.f32 %v477, 0.2
  %v622 = vmul.f32 %v480, 0.2
  %v623 = vmul.f32 %v485, 0.2
  %v624 = vmul.f32 %v488, 0.2
  %v625 = vmul.f32 %v493, 0.2
  %v626 = vmul.f32 %v496, 0.2
  %v627 = vmul.f32 %v501, 0.2
  %v628 = vmul.f32 %v504, 0.2
  %v629 = vmul.f32 %v509, 0.2
  %v630 = vmul.f32 %v512, 0.2
  %v631 = vmul.f32 %v517, 0.2
  %v632 = vmul.f32 %v520, 0.2
  %v633 = vmul.f32 %v525, 0.2
  %v634 = vmul.f32 %v528, 0.2
  %v635 = vmul.f32 %v533, 0.2
  %v636 = vsel %vm538, %v341, %v587
  %v637 = vsel %vm539, %v344, %v588
  %v638 = vsel %vm540, %v349, %v589
  %v639 = vsel %vm541, %v352, %v590
  %v640 = vsel %vm542, %v357, %v591
  %v641 = vsel %vm543, %v360, %v592
  %v642 = vsel %vm544, %v365, %v593
  %v643 = vsel %vm545, %v368, %v594
  %v644 = vsel %vm546, %v373, %v595
  %v645 = vsel %vm547, %v376, %v596
  %v646 = vsel %vm548, %v381, %v597
  %v647 = vsel %vm549, %v384, %v598
  %v648 = vsel %vm550, %v389, %v599
  %v649 = vsel %vm551, %v392, %v600
  %v650 = vsel %vm552, %v397, %v601
  %v651 = vsel %vm553, %v400, %v602
  %v652 = vsel %vm554, %v405, %v603
  %v653 = vsel %vm555, %v408, %v604
  %v654 = vsel %vm556, %v413, %v605
  %v655 = vsel %vm557, %v416, %v606
  %v656 = vsel %vm558, %v421, %v607
  %v657 = vsel %vm559, %v424, %v608
  %v658 = vsel %vm560, %v429, %v609
  %v659 = vsel %vm561, %v432, %v610
  %v660 = vsel %vm562, %v437, %v611
  %v661 = vsel %vm563, %v440, %v612
  %v662 = vsel %vm564, %v445, %v613
  %v663 = vsel %vm565, %v448, %v614
  %v664 = vsel %vm566, %v453, %v615
  %v665 = vsel %vm567, %v456, %v616
  %v666 = vsel %vm568, %v461, %v617
  %v667 = vsel %vm569, %v464, %v618
  %v668 = vsel %vm570, %v469, %v619
  %v669 = vsel %vm571, %v472, %v620
  %v670 = vsel %vm572, %v477, %v621
  %v671 = vsel %vm573, %v480, %v622
  %v672 = vsel %vm574, %v485, %v623
  %v673 = vsel %vm575, %v488, %v624
  %v674 = vsel %vm576, %v493, %v625
  %v675 = vsel %vm577, %v496, %v626
  %v676 = vsel %vm578, %v501, %v627
  %v677 = vsel %vm579, %v504, %v628
  %v678 = vsel %vm580, %v509, %v629
  %v679 = vsel %vm581, %v512, %v630
  %v680 = vsel %vm582, %v517, %v631
  %v681 = vsel %vm583, %v520, %v632
  %v682 = vsel %vm584, %v525, %v633
  %v683 = vsel %vm585, %v528, %v634
  %v684 = vsel %vm586, %v533, %v635
  %v685 = vpack.c.bf16 %v637, %v636
  %v686 = vpack.c.bf16 %v639, %v638
  %v687 = vpack.c.bf16 %v641, %v640
  %v688 = vpack.c.bf16 %v643, %v642
  %v689 = vpack.c.bf16 %v645, %v644
  %v690 = vpack.c.bf16 %v647, %v646
  %v691 = vpack.c.bf16 %v649, %v648
  %v692 = vpack.c.bf16 %v651, %v650
  %v693 = vpack.c.bf16 %v653, %v652
  %v694 = vpack.c.bf16 %v655, %v654
  %v695 = vpack.c.bf16 %v657, %v656
  %v696 = vpack.c.bf16 %v659, %v658
  %v697 = vpack.c.bf16 %v661, %v660
  %v698 = vpack.c.bf16 %v663, %v662
  %v699 = vpack.c.bf16 %v665, %v664
  %v700 = vpack.c.bf16 %v667, %v666
  %v701 = vpack.c.bf16 %v669, %v668
  %v702 = vpack.c.bf16 %v671, %v670
  %v703 = vpack.c.bf16 %v673, %v672
  %v704 = vpack.c.bf16 %v675, %v674
  %v705 = vpack.c.bf16 %v677, %v676
  %v706 = vpack.c.bf16 %v679, %v678
  %v707 = vpack.c.bf16 %v681, %v680
  %v708 = vpack.c.bf16 %v683, %v682
  %v709 = vpack.c.bf16 %v684, %v684
  %v735 = vunpack.c.l.b16 %v685
  %v736 = vunpack.c.h.b16 %v685
  %v737 = vunpack.c.l.b16 %v686
  %v738 = vunpack.c.h.b16 %v686
  %v739 = vunpack.c.l.b16 %v687
  %v740 = vunpack.c.h.b16 %v687
  %v741 = vunpack.c.l.b16 %v688
  %v742 = vunpack.c.h.b16 %v688
  %v743 = vunpack.c.l.b16 %v689
  %v744 = vunpack.c.h.b16 %v689
  %v745 = vunpack.c.l.b16 %v690
  %v746 = vunpack.c.h.b16 %v690
  %v747 = vunpack.c.l.b16 %v691
  %v748 = vunpack.c.h.b16 %v691
  %v749 = vunpack.c.l.b16 %v692
  %v750 = vunpack.c.h.b16 %v692
  %v751 = vunpack.c.l.b16 %v693
  %v752 = vunpack.c.h.b16 %v693
  %v753 = vunpack.c.l.b16 %v694
  %v754 = vunpack.c.h.b16 %v694
  %v755 = vunpack.c.l.b16 %v695
  %v756 = vunpack.c.h.b16 %v695
  %v757 = vunpack.c.l.b16 %v696
  %v758 = vunpack.c.h.b16 %v696
  %v759 = vunpack.c.l.b16 %v697
  %v760 = vunpack.c.h.b16 %v697
  %v761 = vunpack.c.l.b16 %v698
  %v762 = vunpack.c.h.b16 %v698
  %v763 = vunpack.c.l.b16 %v699
  %v764 = vunpack.c.h.b16 %v699
  %v765 = vunpack.c.l.b16 %v700
  %v766 = vunpack.c.h.b16 %v700
  %v767 = vunpack.c.l.b16 %v701
  %v768 = vunpack.c.h.b16 %v701
  %v769 = vunpack.c.l.b16 %v702
  %v770 = vunpack.c.h.b16 %v702
  %v771 = vunpack.c.l.b16 %v703
  %v772 = vunpack.c.h.b16 %v703
  %v773 = vunpack.c.l.b16 %v704
  %v774 = vunpack.c.h.b16 %v704
  %v775 = vunpack.c.l.b16 %v705
  %v776 = vunpack.c.h.b16 %v705
  %v777 = vunpack.c.l.b16 %v706
  %v778 = vunpack.c.h.b16 %v706
  %v779 = vunpack.c.l.b16 %v707
  %v780 = vunpack.c.h.b16 %v707
  %v781 = vunpack.c.l.b16 %v708
  %v782 = vunpack.c.h.b16 %v708
  %v783 = vunpack.c.l.b16 %v709
  %v784 = vpack.c.b16 %v735, %v735
  %v785 = vpack.c.b16 %v736, %v736
  %v786 = vpack.c.b16 %v737, %v737
  %v787 = vpack.c.b16 %v738, %v738
  %v788 = vpack.c.b16 %v739, %v739
  %v789 = vpack.c.b16 %v740, %v740
  %v790 = vpack.c.b16 %v741, %v741
  %v791 = vpack.c.b16 %v742, %v742
  %v792 = vpack.c.b16 %v743, %v743
  %v793 = vpack.c.b16 %v744, %v744
  %v794 = vpack.c.b16 %v745, %v745
  %v795 = vpack.c.b16 %v746, %v746
  %v796 = vpack.c.b16 %v747, %v747
  %v797 = vpack.c.b16 %v748, %v748
  %v798 = vpack.c.b16 %v749, %v749
  %v799 = vpack.c.b16 %v750, %v750
  %v800 = vpack.c.b16 %v751, %v751
  %v801 = vpack.c.b16 %v752, %v752
  %v802 = vpack.c.b16 %v753, %v753
  %v803 = vpack.c.b16 %v754, %v754
  %v804 = vpack.c.b16 %v755, %v755
  %v805 = vpack.c.b16 %v756, %v756
  %v806 = vpack.c.b16 %v757, %v757
  %v807 = vpack.c.b16 %v758, %v758
  %v808 = vpack.c.b16 %v759, %v759
  %v809 = vpack.c.b16 %v760, %v760
  %v810 = vpack.c.b16 %v761, %v761
  %v811 = vpack.c.b16 %v762, %v762
  %v812 = vpack.c.b16 %v763, %v763
  %v813 = vpack.c.b16 %v764, %v764
  %v814 = vpack.c.b16 %v765, %v765
  %v815 = vpack.c.b16 %v766, %v766
  %v816 = vpack.c.b16 %v767, %v767
  %v817 = vpack.c.b16 %v768, %v768
  %v818 = vpack.c.b16 %v769, %v769
  %v819 = vpack.c.b16 %v770, %v770
  %v820 = vpack.c.b16 %v771, %v771
  %v821 = vpack.c.b16 %v772, %v772
  %v822 = vpack.c.b16 %v773, %v773
  %v823 = vpack.c.b16 %v774, %v774
  %v824 = vpack.c.b16 %v775, %v775
  %v825 = vpack.c.b16 %v776, %v776
  %v826 = vpack.c.b16 %v777, %v777
  %v827 = vpack.c.b16 %v778, %v778
  %v828 = vpack.c.b16 %v779, %v779
  %v829 = vpack.c.b16 %v780, %v780
  %v830 = vpack.c.b16 %v781, %v781
  %v831 = vpack.c.b16 %v782, %v782
  %v832 = vpack.c.b16 %v783, %v783
  %vm882 = vcmask 257024
  %883 = vst.msk [vmem:[%s2] sm:$0xf] %vm882, %v784
  %884 = vst.msk [vmem:[%s2 + $0x4] sm:$0xf] %vm882, %v785
  %885 = vst.msk [vmem:[%s2 + $0x8] sm:$0xf] %vm882, %v786
  %886 = vst.msk [vmem:[%s2 + $0xc] sm:$0xf] %vm882, %v787
  %887 = vst.msk [vmem:[%s2 + $0x10] sm:$0xf] %vm882, %v788
  %888 = vst.msk [vmem:[%s2 + $0x14] sm:$0xf] %vm882, %v789
  %889 = vst.msk [vmem:[%s2 + $0x18] sm:$0xf] %vm882, %v790
  %890 = vst.msk [vmem:[%s2 + $0x1c] sm:$0xf] %vm882, %v791
  %891 = vst.msk [vmem:[%s2 + $0x20] sm:$0xf] %vm882, %v792
  %892 = vst.msk [vmem:[%s2 + $0x24] sm:$0xf] %vm882, %v793
  %893 = vst.msk [vmem:[%s2 + $0x28] sm:$0xf] %vm882, %v794
  %894 = vst.msk [vmem:[%s2 + $0x2c] sm:$0xf] %vm882, %v795
  %895 = vst.msk [vmem:[%s2 + $0x30] sm:$0xf] %vm882, %v796
  %896 = vst.msk [vmem:[%s2 + $0x34] sm:$0xf] %vm882, %v797
  %897 = vst.msk [vmem:[%s2 + $0x38] sm:$0xf] %vm882, %v798
  %898 = vst.msk [vmem:[%s2 + $0x3c] sm:$0xf] %vm882, %v799
  %899 = vst.msk [vmem:[%s2 + $0x40] sm:$0xf] %vm882, %v800
  %900 = vst.msk [vmem:[%s2 + $0x44] sm:$0xf] %vm882, %v801
  %901 = vst.msk [vmem:[%s2 + $0x48] sm:$0xf] %vm882, %v802
  %902 = vst.msk [vmem:[%s2 + $0x4c] sm:$0xf] %vm882, %v803
  %903 = vst.msk [vmem:[%s2 + $0x50] sm:$0xf] %vm882, %v804
  %904 = vst.msk [vmem:[%s2 + $0x54] sm:$0xf] %vm882, %v805
  %905 = vst.msk [vmem:[%s2 + $0x58] sm:$0xf] %vm882, %v806
  %906 = vst.msk [vmem:[%s2 + $0x5c] sm:$0xf] %vm882, %v807
  %907 = vst.msk [vmem:[%s2 + $0x60] sm:$0xf] %vm882, %v808
  %908 = vst.msk [vmem:[%s2 + $0x64] sm:$0xf] %vm882, %v809
  %909 = vst.msk [vmem:[%s2 + $0x68] sm:$0xf] %vm882, %v810
  %910 = vst.msk [vmem:[%s2 + $0x6c] sm:$0xf] %vm882, %v811
  %911 = vst.msk [vmem:[%s2 + $0x70] sm:$0xf] %vm882, %v812
  %912 = vst.msk [vmem:[%s2 + $0x74] sm:$0xf] %vm882, %v813
  %913 = vst.msk [vmem:[%s2 + $0x78] sm:$0xf] %vm882, %v814
  %914 = vst.msk [vmem:[%s2 + $0x7c] sm:$0xf] %vm882, %v815
  %915 = vst.msk [vmem:[%s2 + $0x80] sm:$0xf] %vm882, %v816
  %916 = vst.msk [vmem:[%s2 + $0x84] sm:$0xf] %vm882, %v817
  %917 = vst.msk [vmem:[%s2 + $0x88] sm:$0xf] %vm882, %v818
  %918 = vst.msk [vmem:[%s2 + $0x8c] sm:$0xf] %vm882, %v819
  %919 = vst.msk [vmem:[%s2 + $0x90] sm:$0xf] %vm882, %v820
  %920 = vst.msk [vmem:[%s2 + $0x94] sm:$0xf] %vm882, %v821
  %921 = vst.msk [vmem:[%s2 + $0x98] sm:$0xf] %vm882, %v822
  %922 = vst.msk [vmem:[%s2 + $0x9c] sm:$0xf] %vm882, %v823
  %923 = vst.msk [vmem:[%s2 + $0xa0] sm:$0xf] %vm882, %v824
  %924 = vst.msk [vmem:[%s2 + $0xa4] sm:$0xf] %vm882, %v825
  %925 = vst.msk [vmem:[%s2 + $0xa8] sm:$0xf] %vm882, %v826
  %926 = vst.msk [vmem:[%s2 + $0xac] sm:$0xf] %vm882, %v827
  %927 = vst.msk [vmem:[%s2 + $0xb0] sm:$0xf] %vm882, %v828
  %928 = vst.msk [vmem:[%s2 + $0xb4] sm:$0xf] %vm882, %v829
  %929 = vst.msk [vmem:[%s2 + $0xb8] sm:$0xf] %vm882, %v830
  %930 = vst.msk [vmem:[%s2 + $0xbc] sm:$0xf] %vm882, %v831
  %931 = vst.msk [vmem:[%s2 + $0xc0] sm:$0xf] %vm882, %v832
  // Predicated region
  $region10: #{discriminator_forward.3} parent=0 // pred_check
    _
  $region11: #{discriminator_forward.3} parent=0 // pred_check_branch
    %933 = sbr.rel (0) target = $region13
  $region12: #{discriminator_forward.3} parent=0 // pred_region
    _
  $region13: #{discriminator_forward.3} parent=0 // pred_fallthru
    _
  // Predicated region
  $region14: #{discriminator_forward.3} parent=0 // pred_check
    _
  $region15: #{discriminator_forward.3} parent=0 // pred_check_branch
    %935 = sbr.rel (0) target = $region17
  $region16: #{discriminator_forward.3} parent=0 // pred_region
    _
  $region17: #{discriminator_forward.3} parent=0 // pred_fallthru
    _

// kernel: discriminator_forward.4
$region0: #{discriminator_forward.4}
  #allocation0 [shape = 'u32[]', space=smem, size = 0x4, offset = 0x4, fixed_abs, tag = 'smem constant byte address 0x4 - core index']
  #allocation1 [shape = 'u32[144,128]{1,0:T(1,128)}', space=vmem, size = 0x12000, scoped, tag = 'internal scratch']
  %s0 = inlined_call_operand.vmem [shape: bf16[98,800], index: 0, kind: input, shape index: {}]
  %s1 = inlined_call_operand.vmem [shape: bf16[800,16], index: 1, kind: input, shape index: {}]
  %s2 = inlined_call_operand.vmem [shape: f32[98,16], index: 2, kind: output, shape index: {}]
  %s3 = sld [smem:[#allocation0]]
  $region18: #{discriminator_forward.4} parent=0
    _
  %s5 = ssub.s32 1, %s3
  %s6 = scalar_select 0, %s5, %s3
  // Predicated region
  $region2: #{discriminator_forward.4} parent=0 // pred_check
    _
  $region3: #{discriminator_forward.4} parent=0 // pred_check_branch
    %8 = sbr.rel (0) target = $region5
  $region4: #{discriminator_forward.4} parent=0 // pred_region
    _
  $region5: #{discriminator_forward.4} parent=0 // pred_fallthru
    _
  // Predicated region
  $region6: #{discriminator_forward.4} parent=0 // pred_check
    _
  $region7: #{discriminator_forward.4} parent=0 // pred_check_branch
    %10 = sbr.rel (0) target = $region9
  $region8: #{discriminator_forward.4} parent=0 // pred_region
    _
  $region9: #{discriminator_forward.4} parent=0 // pred_fallthru
    _
  %v12 = vld [vmem:[%s0] sm:$0xff]
  %v13 = vld [vmem:[%s0 + $0x8] sm:$0xff]
  %v14 = vld [vmem:[%s0 + $0x10] sm:$0xff]
  %v15 = vld [vmem:[%s0 + $0x18] sm:$0xf]
  %v16 = vld [vmem:[%s0 + $0x1c] sm:$0xff]
  %v17 = vld [vmem:[%s0 + $0x24] sm:$0xff]
  %v18 = vld [vmem:[%s0 + $0x2c] sm:$0xff]
  %v19 = vld [vmem:[%s0 + $0x34] sm:$0xf]
  %v20 = vld [vmem:[%s0 + $0x38] sm:$0xff]
  %v21 = vld [vmem:[%s0 + $0x40] sm:$0xff]
  %v22 = vld [vmem:[%s0 + $0x48] sm:$0xff]
  %v23 = vld [vmem:[%s0 + $0x50] sm:$0xf]
  %v24 = vld [vmem:[%s0 + $0x54] sm:$0xff]
  %v25 = vld [vmem:[%s0 + $0x5c] sm:$0xff]
  %v26 = vld [vmem:[%s0 + $0x64] sm:$0xff]
  %v27 = vld [vmem:[%s0 + $0x6c] sm:$0xf]
  %v28 = vld [vmem:[%s0 + $0x70] sm:$0xff]
  %v29 = vld [vmem:[%s0 + $0x78] sm:$0xff]
  %v30 = vld [vmem:[%s0 + $0x80] sm:$0xff]
  %v31 = vld [vmem:[%s0 + $0x88] sm:$0xf]
  %v32 = vld [vmem:[%s0 + $0x8c] sm:$0xff]
  %v33 = vld [vmem:[%s0 + $0x94] sm:$0xff]
  %v34 = vld [vmem:[%s0 + $0x9c] sm:$0xff]
  %v35 = vld [vmem:[%s0 + $0xa4] sm:$0xf]
  %v36 = vld [vmem:[%s0 + $0xa8] sm:$0xff]
  %v37 = vld [vmem:[%s0 + $0xb0] sm:$0xff]
  %v38 = vld [vmem:[%s0 + $0xb8] sm:$0xff]
  %v39 = vld [vmem:[%s0 + $0xc0] sm:$0xf]
  %v40 = vld [vmem:[%s0 + $0xc4] sm:$0xff]
  %v41 = vld [vmem:[%s0 + $0xcc] sm:$0xff]
  %v42 = vld [vmem:[%s0 + $0xd4] sm:$0xff]
  %v43 = vld [vmem:[%s0 + $0xdc] sm:$0xf]
  %v44 = vld [vmem:[%s0 + $0xe0] sm:$0xff]
  %v45 = vld [vmem:[%s0 + $0xe8] sm:$0xff]
  %v46 = vld [vmem:[%s0 + $0xf0] sm:$0xff]
  %v47 = vld [vmem:[%s0 + $0xf8] sm:$0xf]
  %v48 = vld [vmem:[%s0 + $0xfc] sm:$0xff]
  %v49 = vld [vmem:[%s0 + $0x104] sm:$0xff]
  %v50 = vld [vmem:[%s0 + $0x10c] sm:$0xff]
  %v51 = vld [vmem:[%s0 + $0x114] sm:$0xf]
  %v52 = vld [vmem:[%s0 + $0x118] sm:$0xff]
  %v53 = vld [vmem:[%s0 + $0x120] sm:$0xff]
  %v54 = vld [vmem:[%s0 + $0x128] sm:$0xff]
  %v55 = vld [vmem:[%s0 + $0x130] sm:$0xf]
  %v56 = vld [vmem:[%s0 + $0x134] sm:$0xff]
  %v57 = vld [vmem:[%s0 + $0x13c] sm:$0xff]
  %v58 = vld [vmem:[%s0 + $0x144] sm:$0xff]
  %v59 = vld [vmem:[%s0 + $0x14c] sm:$0xf]
  %v60 = vld [vmem:[%s0 + $0x150] sm:$0x11]
  %v61 = vld [vmem:[%s0 + $0x158] sm:$0x11]
  %v62 = vld [vmem:[%s0 + $0x160] sm:$0x11]
  %v63 = vld [vmem:[%s0 + $0x168] sm:$0x1]
  %v64 = vld [vmem:[%s1] sm:$0xf]
  %v65 = vld [vmem:[%s1 + $0x4] sm:$0xf]
  %v66 = vld [vmem:[%s1 + $0x8] sm:$0xf]
  %v67 = vld [vmem:[%s1 + $0xc] sm:$0xf]
  %v68 = vld [vmem:[%s1 + $0x10] sm:$0xf]
  %v69 = vld [vmem:[%s1 + $0x14] sm:$0xf]
  %v70 = vld [vmem:[%s1 + $0x18] sm:$0xf]
  %v71 = vld [vmem:[%s1 + $0x1c] sm:$0xf]
  %v72 = vld [vmem:[%s1 + $0x20] sm:$0xf]
  %v73 = vld [vmem:[%s1 + $0x24] sm:$0xf]
  %v74 = vld [vmem:[%s1 + $0x28] sm:$0xf]
  %v75 = vld [vmem:[%s1 + $0x2c] sm:$0xf]
  %v76 = vld [vmem:[%s1 + $0x30] sm:$0xf]
  %v77 = vld [vmem:[%s1 + $0x34] sm:$0xf]
  %v78 = vld [vmem:[%s1 + $0x38] sm:$0xf]
  %v79 = vld [vmem:[%s1 + $0x3c] sm:$0xf]
  %v80 = vld [vmem:[%s1 + $0x40] sm:$0xf]
  %v81 = vld [vmem:[%s1 + $0x44] sm:$0xf]
  %v82 = vld [vmem:[%s1 + $0x48] sm:$0xf]
  %v83 = vld [vmem:[%s1 + $0x4c] sm:$0xf]
  %v84 = vld [vmem:[%s1 + $0x50] sm:$0xf]
  %v85 = vld [vmem:[%s1 + $0x54] sm:$0xf]
  %v86 = vld [vmem:[%s1 + $0x58] sm:$0xf]
  %v87 = vld [vmem:[%s1 + $0x5c] sm:$0xf]
  %v88 = vld [vmem:[%s1 + $0x60] sm:$0xf]
  %v89 = vld [vmem:[%s1 + $0x64] sm:$0xf]
  %v90 = vld [vmem:[%s1 + $0x68] sm:$0xf]
  %v91 = vld [vmem:[%s1 + $0x6c] sm:$0xf]
  %v92 = vld [vmem:[%s1 + $0x70] sm:$0xf]
  %v93 = vld [vmem:[%s1 + $0x74] sm:$0xf]
  %v94 = vld [vmem:[%s1 + $0x78] sm:$0xf]
  %v95 = vld [vmem:[%s1 + $0x7c] sm:$0xf]
  %v96 = vld [vmem:[%s1 + $0x80] sm:$0xf]
  %v97 = vld [vmem:[%s1 + $0x84] sm:$0xf]
  %v98 = vld [vmem:[%s1 + $0x88] sm:$0xf]
  %v99 = vld [vmem:[%s1 + $0x8c] sm:$0xf]
  %v100 = vld [vmem:[%s1 + $0x90] sm:$0xf]
  %v101 = vld [vmem:[%s1 + $0x94] sm:$0xf]
  %v102 = vld [vmem:[%s1 + $0x98] sm:$0xf]
  %v103 = vld [vmem:[%s1 + $0x9c] sm:$0xf]
  %v104 = vld [vmem:[%s1 + $0xa0] sm:$0xf]
  %v105 = vld [vmem:[%s1 + $0xa4] sm:$0xf]
  %v106 = vld [vmem:[%s1 + $0xa8] sm:$0xf]
  %v107 = vld [vmem:[%s1 + $0xac] sm:$0xf]
  %v108 = vld [vmem:[%s1 + $0xb0] sm:$0xf]
  %v109 = vld [vmem:[%s1 + $0xb4] sm:$0xf]
  %v110 = vld [vmem:[%s1 + $0xb8] sm:$0xf]
  %v111 = vld [vmem:[%s1 + $0xbc] sm:$0xf]
  %v112 = vld [vmem:[%s1 + $0xc0] sm:$0xf]
  %v113 = vld [vmem:[%s1 + $0xc4] sm:$0xf]
  %v114 = vld [vmem:[%s1 + $0xc8] sm:$0xf]
  %v115 = vld [vmem:[%s1 + $0xcc] sm:$0xf]
  %v116 = vld [vmem:[%s1 + $0xd0] sm:$0xf]
  %v117 = vld [vmem:[%s1 + $0xd4] sm:$0xf]
  %v118 = vld [vmem:[%s1 + $0xd8] sm:$0xf]
  %v119 = vld [vmem:[%s1 + $0xdc] sm:$0xf]
  %v120 = vld [vmem:[%s1 + $0xe0] sm:$0xf]
  %v121 = vld [vmem:[%s1 + $0xe4] sm:$0xf]
  %v122 = vld [vmem:[%s1 + $0xe8] sm:$0xf]
  %v123 = vld [vmem:[%s1 + $0xec] sm:$0xf]
  %v124 = vld [vmem:[%s1 + $0xf0] sm:$0xf]
  %v125 = vld [vmem:[%s1 + $0xf4] sm:$0xf]
  %v126 = vld [vmem:[%s1 + $0xf8] sm:$0xf]
  %v127 = vld [vmem:[%s1 + $0xfc] sm:$0xf]
  %v128 = vld [vmem:[%s1 + $0x100] sm:$0xf]
  %v129 = vld [vmem:[%s1 + $0x104] sm:$0xf]
  %v130 = vld [vmem:[%s1 + $0x108] sm:$0xf]
  %v131 = vld [vmem:[%s1 + $0x10c] sm:$0xf]
  %v132 = vld [vmem:[%s1 + $0x110] sm:$0xf]
  %v133 = vld [vmem:[%s1 + $0x114] sm:$0xf]
  %v134 = vld [vmem:[%s1 + $0x118] sm:$0xf]
  %v135 = vld [vmem:[%s1 + $0x11c] sm:$0xf]
  %v136 = vld [vmem:[%s1 + $0x120] sm:$0xf]
  %v137 = vld [vmem:[%s1 + $0x124] sm:$0xf]
  %v138 = vld [vmem:[%s1 + $0x128] sm:$0xf]
  %v139 = vld [vmem:[%s1 + $0x12c] sm:$0xf]
  %v140 = vld [vmem:[%s1 + $0x130] sm:$0xf]
  %v141 = vld [vmem:[%s1 + $0x134] sm:$0xf]
  %v142 = vld [vmem:[%s1 + $0x138] sm:$0xf]
  %v143 = vld [vmem:[%s1 + $0x13c] sm:$0xf]
  %v144 = vld [vmem:[%s1 + $0x140] sm:$0xf]
  %v145 = vld [vmem:[%s1 + $0x144] sm:$0xf]
  %v146 = vld [vmem:[%s1 + $0x148] sm:$0xf]
  %v147 = vld [vmem:[%s1 + $0x14c] sm:$0xf]
  %v148 = vld [vmem:[%s1 + $0x150] sm:$0xf]
  %v149 = vld [vmem:[%s1 + $0x154] sm:$0xf]
  %v150 = vld [vmem:[%s1 + $0x158] sm:$0xf]
  %v151 = vld [vmem:[%s1 + $0x15c] sm:$0xf]
  %v152 = vld [vmem:[%s1 + $0x160] sm:$0xf]
  %v153 = vld [vmem:[%s1 + $0x164] sm:$0xf]
  %v154 = vld [vmem:[%s1 + $0x168] sm:$0xf]
  %v155 = vld [vmem:[%s1 + $0x16c] sm:$0xf]
  %v156 = vld [vmem:[%s1 + $0x170] sm:$0xf]
  %v157 = vld [vmem:[%s1 + $0x174] sm:$0xf]
  %v158 = vld [vmem:[%s1 + $0x178] sm:$0xf]
  %v159 = vld [vmem:[%s1 + $0x17c] sm:$0xf]
  %v160 = vld [vmem:[%s1 + $0x180] sm:$0xf]
  %v161 = vld [vmem:[%s1 + $0x184] sm:$0xf]
  %v162 = vld [vmem:[%s1 + $0x188] sm:$0xf]
  %v163 = vld [vmem:[%s1 + $0x18c] sm:$0xf]
  %v216 = vunpack.c.l.b16 %v12
  %v217 = vunpack.c.h.b16 %v12
  %v218 = vunpack.c.l.b16 %v13
  %v219 = vunpack.c.h.b16 %v13
  %v220 = vunpack.c.l.b16 %v14
  %v221 = vunpack.c.h.b16 %v14
  %v222 = vunpack.c.l.b16 %v15
  %v223 = vunpack.c.l.b16 %v16
  %v224 = vunpack.c.h.b16 %v16
  %v225 = vunpack.c.l.b16 %v17
  %v226 = vunpack.c.h.b16 %v17
  %v227 = vunpack.c.l.b16 %v18
  %v228 = vunpack.c.h.b16 %v18
  %v229 = vunpack.c.l.b16 %v19
  %v230 = vunpack.c.l.b16 %v20
  %v231 = vunpack.c.h.b16 %v20
  %v232 = vunpack.c.l.b16 %v21
  %v233 = vunpack.c.h.b16 %v21
  %v234 = vunpack.c.l.b16 %v22
  %v235 = vunpack.c.h.b16 %v22
  %v236 = vunpack.c.l.b16 %v23
  %v237 = vunpack.c.l.b16 %v24
  %v238 = vunpack.c.h.b16 %v24
  %v239 = vunpack.c.l.b16 %v25
  %v240 = vunpack.c.h.b16 %v25
  %v241 = vunpack.c.l.b16 %v26
  %v242 = vunpack.c.h.b16 %v26
  %v243 = vunpack.c.l.b16 %v27
  %v244 = vunpack.c.l.b16 %v28
  %v245 = vunpack.c.h.b16 %v28
  %v246 = vunpack.c.l.b16 %v29
  %v247 = vunpack.c.h.b16 %v29
  %v248 = vunpack.c.l.b16 %v30
  %v249 = vunpack.c.h.b16 %v30
  %v250 = vunpack.c.l.b16 %v31
  %v251 = vunpack.c.l.b16 %v32
  %v252 = vunpack.c.h.b16 %v32
  %v253 = vunpack.c.l.b16 %v33
  %v254 = vunpack.c.h.b16 %v33
  %v255 = vunpack.c.l.b16 %v34
  %v256 = vunpack.c.h.b16 %v34
  %v257 = vunpack.c.l.b16 %v35
  %v258 = vunpack.c.l.b16 %v36
  %v259 = vunpack.c.h.b16 %v36
  %v260 = vunpack.c.l.b16 %v37
  %v261 = vunpack.c.h.b16 %v37
  %v262 = vunpack.c.l.b16 %v38
  %v263 = vunpack.c.h.b16 %v38
  %v264 = vunpack.c.l.b16 %v39
  %v265 = vunpack.c.l.b16 %v40
  %v266 = vunpack.c.h.b16 %v40
  %v267 = vunpack.c.l.b16 %v41
  %v268 = vunpack.c.h.b16 %v41
  %v269 = vunpack.c.l.b16 %v42
  %v270 = vunpack.c.h.b16 %v42
  %v271 = vunpack.c.l.b16 %v43
  %v272 = vunpack.c.l.b16 %v44
  %v273 = vunpack.c.h.b16 %v44
  %v274 = vunpack.c.l.b16 %v45
  %v275 = vunpack.c.h.b16 %v45
  %v276 = vunpack.c.l.b16 %v46
  %v277 = vunpack.c.h.b16 %v46
  %v278 = vunpack.c.l.b16 %v47
  %v279 = vunpack.c.l.b16 %v48
  %v280 = vunpack.c.h.b16 %v48
  %v281 = vunpack.c.l.b16 %v49
  %v282 = vunpack.c.h.b16 %v49
  %v283 = vunpack.c.l.b16 %v50
  %v284 = vunpack.c.h.b16 %v50
  %v285 = vunpack.c.l.b16 %v51
  %v286 = vunpack.c.l.b16 %v52
  %v287 = vunpack.c.h.b16 %v52
  %v288 = vunpack.c.l.b16 %v53
  %v289 = vunpack.c.h.b16 %v53
  %v290 = vunpack.c.l.b16 %v54
  %v291 = vunpack.c.h.b16 %v54
  %v292 = vunpack.c.l.b16 %v55
  %v293 = vunpack.c.l.b16 %v56
  %v294 = vunpack.c.h.b16 %v56
  %v295 = vunpack.c.l.b16 %v57
  %v296 = vunpack.c.h.b16 %v57
  %v297 = vunpack.c.l.b16 %v58
  %v298 = vunpack.c.h.b16 %v58
  %v299 = vunpack.c.l.b16 %v59
  %v300 = vunpack.c.l.b16 %v60
  %v301 = vunpack.c.h.b16 %v60
  %v302 = vunpack.c.l.b16 %v61
  %v303 = vunpack.c.h.b16 %v61
  %v304 = vunpack.c.l.b16 %v62
  %v305 = vunpack.c.h.b16 %v62
  %v306 = vunpack.c.l.b16 %v63
  %v307 = vpack.c.b16 %v223, %v216
  %v308 = vpack.c.b16 %v224, %v217
  %v309 = vpack.c.b16 %v225, %v218
  %v310 = vpack.c.b16 %v226, %v219
  %v311 = vpack.c.b16 %v227, %v220
  %v312 = vpack.c.b16 %v228, %v221
  %v313 = vpack.c.b16 %v229, %v222
  %v314 = vpack.c.b16 %v237, %v230
  %v315 = vpack.c.b16 %v238, %v231
  %v316 = vpack.c.b16 %v239, %v232
  %v317 = vpack.c.b16 %v240, %v233
  %v318 = vpack.c.b16 %v241, %v234
  %v319 = vpack.c.b16 %v242, %v235
  %v320 = vpack.c.b16 %v243, %v236
  %v321 = vpack.c.b16 %v251, %v244
  %v322 = vpack.c.b16 %v252, %v245
  %v323 = vpack.c.b16 %v253, %v246
  %v324 = vpack.c.b16 %v254, %v247
  %v325 = vpack.c.b16 %v255, %v248
  %v326 = vpack.c.b16 %v256, %v249
  %v327 = vpack.c.b16 %v257, %v250
  %v328 = vpack.c.b16 %v265, %v258
  %v329 = vpack.c.b16 %v266, %v259
  %v330 = vpack.c.b16 %v267, %v260
  %v331 = vpack.c.b16 %v268, %v261
  %v332 = vpack.c.b16 %v269, %v262
  %v333 = vpack.c.b16 %v270, %v263
  %v334 = vpack.c.b16 %v271, %v264
  %v335 = vpack.c.b16 %v279, %v272
  %v336 = vpack.c.b16 %v280, %v273
  %v337 = vpack.c.b16 %v281, %v274
  %v338 = vpack.c.b16 %v282, %v275
  %v339 = vpack.c.b16 %v283, %v276
  %v340 = vpack.c.b16 %v284, %v277
  %v341 = vpack.c.b16 %v285, %v278
  %v342 = vpack.c.b16 %v293, %v286
  %v343 = vpack.c.b16 %v294, %v287
  %v344 = vpack.c.b16 %v295, %v288
  %v345 = vpack.c.b16 %v296, %v289
  %v346 = vpack.c.b16 %v297, %v290
  %v347 = vpack.c.b16 %v298, %v291
  %v348 = vpack.c.b16 %v299, %v292
  %v349 = vpack.c.b16 %v300, %v300
  %v350 = vpack.c.b16 %v301, %v301
  %v351 = vpack.c.b16 %v302, %v302
  %v352 = vpack.c.b16 %v303, %v303
  %v353 = vpack.c.b16 %v304, %v304
  %v354 = vpack.c.b16 %v305, %v305
  %v355 = vpack.c.b16 %v306, %v306
  %v498 = vunpack.c.l.b16 %v64
  %v499 = vunpack.c.l.b16 %v65
  %v500 = vunpack.c.l.b16 %v66
  %v501 = vunpack.c.l.b16 %v67
  %v502 = vunpack.c.l.b16 %v68
  %v503 = vunpack.c.l.b16 %v69
  %v504 = vunpack.c.l.b16 %v70
  %v505 = vunpack.c.l.b16 %v71
  %v506 = vunpack.c.l.b16 %v72
  %v507 = vunpack.c.l.b16 %v73
  %v508 = vunpack.c.l.b16 %v74
  %v509 = vunpack.c.l.b16 %v75
  %v510 = vunpack.c.l.b16 %v76
  %v511 = vunpack.c.l.b16 %v77
  %v512 = vunpack.c.l.b16 %v78
  %v513 = vunpack.c.l.b16 %v79
  %v514 = vunpack.c.l.b16 %v80
  %v515 = vunpack.c.l.b16 %v81
  %v516 = vunpack.c.l.b16 %v82
  %v517 = vunpack.c.l.b16 %v83
  %v518 = vunpack.c.l.b16 %v84
  %v519 = vunpack.c.l.b16 %v85
  %v520 = vunpack.c.l.b16 %v86
  %v521 = vunpack.c.l.b16 %v87
  %v522 = vunpack.c.l.b16 %v88
  %v523 = vunpack.c.l.b16 %v89
  %v524 = vunpack.c.l.b16 %v90
  %v525 = vunpack.c.l.b16 %v91
  %v526 = vunpack.c.l.b16 %v92
  %v527 = vunpack.c.l.b16 %v93
  %v528 = vunpack.c.l.b16 %v94
  %v529 = vunpack.c.l.b16 %v95
  %v530 = vunpack.c.l.b16 %v96
  %v531 = vunpack.c.l.b16 %v97
  %v532 = vunpack.c.l.b16 %v98
  %v533 = vunpack.c.l.b16 %v99
  %v534 = vunpack.c.l.b16 %v100
  %v535 = vunpack.c.l.b16 %v101
  %v536 = vunpack.c.l.b16 %v102
  %v537 = vunpack.c.l.b16 %v103
  %v538 = vunpack.c.l.b16 %v104
  %v539 = vunpack.c.l.b16 %v105
  %v540 = vunpack.c.l.b16 %v106
  %v541 = vunpack.c.l.b16 %v107
  %v542 = vunpack.c.l.b16 %v108
  %v543 = vunpack.c.l.b16 %v109
  %v544 = vunpack.c.l.b16 %v110
  %v545 = vunpack.c.l.b16 %v111
  %v546 = vunpack.c.l.b16 %v112
  %v547 = vunpack.c.l.b16 %v113
  %v548 = vunpack.c.l.b16 %v114
  %v549 = vunpack.c.l.b16 %v115
  %v550 = vunpack.c.l.b16 %v116
  %v551 = vunpack.c.l.b16 %v117
  %v552 = vunpack.c.l.b16 %v118
  %v553 = vunpack.c.l.b16 %v119
  %v554 = vunpack.c.l.b16 %v120
  %v555 = vunpack.c.l.b16 %v121
  %v556 = vunpack.c.l.b16 %v122
  %v557 = vunpack.c.l.b16 %v123
  %v558 = vunpack.c.l.b16 %v124
  %v559 = vunpack.c.l.b16 %v125
  %v560 = vunpack.c.l.b16 %v126
  %v561 = vunpack.c.l.b16 %v127
  %v562 = vunpack.c.l.b16 %v128
  %v563 = vunpack.c.l.b16 %v129
  %v564 = vunpack.c.l.b16 %v130
  %v565 = vunpack.c.l.b16 %v131
  %v566 = vunpack.c.l.b16 %v132
  %v567 = vunpack.c.l.b16 %v133
  %v568 = vunpack.c.l.b16 %v134
  %v569 = vunpack.c.l.b16 %v135
  %v570 = vunpack.c.l.b16 %v136
  %v571 = vunpack.c.l.b16 %v137
  %v572 = vunpack.c.l.b16 %v138
  %v573 = vunpack.c.l.b16 %v139
  %v574 = vunpack.c.l.b16 %v140
  %v575 = vunpack.c.l.b16 %v141
  %v576 = vunpack.c.l.b16 %v142
  %v577 = vunpack.c.l.b16 %v143
  %v578 = vunpack.c.l.b16 %v144
  %v579 = vunpack.c.l.b16 %v145
  %v580 = vunpack.c.l.b16 %v146
  %v581 = vunpack.c.l.b16 %v147
  %v582 = vunpack.c.l.b16 %v148
  %v583 = vunpack.c.l.b16 %v149
  %v584 = vunpack.c.l.b16 %v150
  %v585 = vunpack.c.l.b16 %v151
  %v586 = vunpack.c.l.b16 %v152
  %v587 = vunpack.c.l.b16 %v153
  %v588 = vunpack.c.l.b16 %v154
  %v589 = vunpack.c.l.b16 %v155
  %v590 = vunpack.c.l.b16 %v156
  %v591 = vunpack.c.l.b16 %v157
  %v592 = vunpack.c.l.b16 %v158
  %v593 = vunpack.c.l.b16 %v159
  %v594 = vunpack.c.l.b16 %v160
  %v595 = vunpack.c.l.b16 %v161
  %v596 = vunpack.c.l.b16 %v162
  %v597 = vunpack.c.l.b16 %v163
  %v598 = vpack.c.b16 %v499, %v498
  %v599 = vpack.c.b16 %v501, %v500
  %v600 = vpack.c.b16 %v503, %v502
  %v601 = vpack.c.b16 %v505, %v504
  %v602 = vpack.c.b16 %v507, %v506
  %v603 = vpack.c.b16 %v509, %v508
  %v604 = vpack.c.b16 %v511, %v510
  %v605 = vpack.c.b16 %v513, %v512
  %v606 = vpack.c.b16 %v515, %v514
  %v607 = vpack.c.b16 %v517, %v516
  %v608 = vpack.c.b16 %v519, %v518
  %v609 = vpack.c.b16 %v521, %v520
  %v610 = vpack.c.b16 %v523, %v522
  %v611 = vpack.c.b16 %v525, %v524
  %v612 = vpack.c.b16 %v527, %v526
  %v613 = vpack.c.b16 %v529, %v528
  %v614 = vpack.c.b16 %v531, %v530
  %v615 = vpack.c.b16 %v533, %v532
  %v616 = vpack.c.b16 %v535, %v534
  %v617 = vpack.c.b16 %v537, %v536
  %v618 = vpack.c.b16 %v539, %v538
  %v619 = vpack.c.b16 %v541, %v540
  %v620 = vpack.c.b16 %v543, %v542
  %v621 = vpack.c.b16 %v545, %v544
  %v622 = vpack.c.b16 %v547, %v546
  %v623 = vpack.c.b16 %v549, %v548
  %v624 = vpack.c.b16 %v551, %v550
  %v625 = vpack.c.b16 %v553, %v552
  %v626 = vpack.c.b16 %v555, %v554
  %v627 = vpack.c.b16 %v557, %v556
  %v628 = vpack.c.b16 %v559, %v558
  %v629 = vpack.c.b16 %v561, %v560
  %v630 = vpack.c.b16 %v563, %v562
  %v631 = vpack.c.b16 %v565, %v564
  %v632 = vpack.c.b16 %v567, %v566
  %v633 = vpack.c.b16 %v569, %v568
  %v634 = vpack.c.b16 %v571, %v570
  %v635 = vpack.c.b16 %v573, %v572
  %v636 = vpack.c.b16 %v575, %v574
  %v637 = vpack.c.b16 %v577, %v576
  %v638 = vpack.c.b16 %v579, %v578
  %v639 = vpack.c.b16 %v581, %v580
  %v640 = vpack.c.b16 %v583, %v582
  %v641 = vpack.c.b16 %v585, %v584
  %v642 = vpack.c.b16 %v587, %v586
  %v643 = vpack.c.b16 %v589, %v588
  %v644 = vpack.c.b16 %v591, %v590
  %v645 = vpack.c.b16 %v593, %v592
  %v646 = vpack.c.b16 %v595, %v594
  %v647 = vpack.c.b16 %v597, %v596
  %vm698 = vcmask 261120
  %v700 = vsel %vm698, %v313, 0
  %v703 = vsel %vm698, %v320, 0
  %v706 = vsel %vm698, %v327, 0
  %v709 = vsel %vm698, %v334, 0
  %v712 = vsel %vm698, %v341, 0
  %v715 = vsel %vm698, %v348, 0
  %v718 = vsel %vm698, %v355, 0
  %720 = vmatprep.subr.bf16.mxu0 0
  %721 = vmatpush1.bf16.msra.mxu0 %v598
  %722 = vmatprep.subr.bf16.mxu0 0
  %723 = vmatpush1.bf16.msra.mxu0 %v599
  %724 = vmatprep.subr.bf16.mxu0 0
  %725 = vmatpush1.bf16.msra.mxu0 %v600
  %726 = vmatprep.subr.bf16.mxu0 0
  %727 = vmatpush1.bf16.msra.mxu0 %v601
  %728 = vmatprep.subr.bf16.mxu0 0
  %729 = vmatpush1.bf16.msra.mxu0 %v602
  %730 = vmatprep.subr.bf16.mxu0 0
  %731 = vmatpush1.bf16.msra.mxu0 %v603
  %732 = vmatprep.subr.bf16.mxu0 0
  %733 = vmatpush1.bf16.msra.mxu0 %v604
  %734 = vmatprep.subr.bf16.mxu0 0
  %735 = vmatpush1.bf16.msra.mxu0 %v605
  %736 = vmatprep.subr.bf16.mxu0 0
  %737 = vmatpush1.bf16.msra.mxu0 %v606
  %738 = vmatprep.subr.bf16.mxu0 0
  %739 = vmatpush1.bf16.msra.mxu0 %v607
  %740 = vmatprep.subr.bf16.mxu0 0
  %741 = vmatpush1.bf16.msra.mxu0 %v608
  %742 = vmatprep.subr.bf16.mxu0 0
  %743 = vmatpush1.bf16.msra.mxu0 %v609
  %744 = vmatprep.subr.bf16.mxu0 0
  %745 = vmatpush1.bf16.msra.mxu0 %v610
  %746 = vmatprep.subr.bf16.mxu0 0
  %747 = vmatpush1.bf16.msra.mxu0 %v611
  %748 = vmatprep.subr.bf16.mxu0 0
  %749 = vmatpush1.bf16.msra.mxu0 %v612
  %750 = vmatprep.subr.bf16.mxu0 0
  %751 = vmatpush1.bf16.msra.mxu0 %v613
  %752 = vmatprep.mubr.bf16.mxu0 %v308
  %753 = vmatmul.mubr.bf16.gmra.mrb[0].mxu0 %v307
  %v754 = vpop.f32.mrb[0].mxu0
  %v755 = vadd.f32 0.0, %v754
  %v756 = vpop.f32.mrb[0].mxu0
  %v757 = vpop.f32.mrb[0].mxu0
  %v758 = vadd.f32 0.0, %v757
  %v759 = vpop.f32.mrb[0].mxu0
  %760 = vmatprep.mubr.bf16.mxu0 %v315
  %761 = vmatmul.mubr.bf16.gmra.mrb[0].mxu0 %v314
  %v762 = vpop.f32.mrb[0].mxu0
  %v763 = vadd.f32 0.0, %v762
  %v764 = vpop.f32.mrb[0].mxu0
  %v765 = vpop.f32.mrb[0].mxu0
  %v766 = vadd.f32 0.0, %v765
  %v767 = vpop.f32.mrb[0].mxu0
  %768 = vmatprep.mubr.bf16.mxu0 %v322
  %769 = vmatmul.mubr.bf16.gmra.mrb[0].mxu0 %v321
  %v770 = vpop.f32.mrb[0].mxu0
  %v771 = vadd.f32 0.0, %v770
  %v772 = vpop.f32.mrb[0].mxu0
  %v773 = vpop.f32.mrb[0].mxu0
  %v774 = vadd.f32 0.0, %v773
  %v775 = vpop.f32.mrb[0].mxu0
  %776 = vmatprep.mubr.bf16.mxu0 %v329
  %777 = vmatmul.mubr.bf16.gmra.mrb[0].mxu0 %v328
  %v778 = vpop.f32.mrb[0].mxu0
  %v779 = vadd.f32 0.0, %v778
  %v780 = vpop.f32.mrb[0].mxu0
  %v781 = vpop.f32.mrb[0].mxu0
  %v782 = vadd.f32 0.0, %v781
  %v783 = vpop.f32.mrb[0].mxu0
  %784 = vmatprep.mubr.bf16.mxu0 %v336
  %785 = vmatmul.mubr.bf16.gmra.mrb[0].mxu0 %v335
  %v786 = vpop.f32.mrb[0].mxu0
  %v787 = vadd.f32 0.0, %v786
  %v788 = vpop.f32.mrb[0].mxu0
  %v789 = vpop.f32.mrb[0].mxu0
  %v790 = vadd.f32 0.0, %v789
  %v791 = vpop.f32.mrb[0].mxu0
  %792 = vmatprep.mubr.bf16.mxu0 %v343
  %793 = vmatmul.mubr.bf16.gmra.mrb[0].mxu0 %v342
  %v794 = vpop.f32.mrb[0].mxu0
  %v795 = vadd.f32 0.0, %v794
  %v796 = vpop.f32.mrb[0].mxu0
  %v797 = vpop.f32.mrb[0].mxu0
  %v798 = vadd.f32 0.0, %v797
  %v799 = vpop.f32.mrb[0].mxu0
  %800 = vmatprep.mubr.bf16.mxu0 %v350
  %801 = vmatmul.mubr.bf16.gmra.mrb[0].mxu0 %v349
  %v802 = vpop.f32.mrb[0].mxu0
  %v803 = vadd.f32 0.0, %v802
  %v804 = vpop.f32.mrb[0].mxu0
  %v805 = vpop.f32.mrb[0].mxu0
  %v806 = vpop.f32.mrb[0].mxu0
  %807 = vdwg.mxu0
  %808 = vmatprep.subr.bf16.mxu0 0
  %809 = vmatpush1.bf16.msra.mxu0 %v614
  %810 = vmatprep.subr.bf16.mxu0 0
  %811 = vmatpush1.bf16.msra.mxu0 %v615
  %812 = vmatprep.subr.bf16.mxu0 0
  %813 = vmatpush1.bf16.msra.mxu0 %v616
  %814 = vmatprep.subr.bf16.mxu0 0
  %815 = vmatpush1.bf16.msra.mxu0 %v617
  %816 = vmatprep.subr.bf16.mxu0 0
  %817 = vmatpush1.bf16.msra.mxu0 %v618
  %818 = vmatprep.subr.bf16.mxu0 0
  %819 = vmatpush1.bf16.msra.mxu0 %v619
  %820 = vmatprep.subr.bf16.mxu0 0
  %821 = vmatpush1.bf16.msra.mxu0 %v620
  %822 = vmatprep.subr.bf16.mxu0 0
  %823 = vmatpush1.bf16.msra.mxu0 %v621
  %824 = vmatprep.subr.bf16.mxu0 0
  %825 = vmatpush1.bf16.msra.mxu0 %v622
  %826 = vmatprep.subr.bf16.mxu0 0
  %827 = vmatpush1.bf16.msra.mxu0 %v623
  %828 = vmatprep.subr.bf16.mxu0 0
  %829 = vmatpush1.bf16.msra.mxu0 %v624
  %830 = vmatprep.subr.bf16.mxu0 0
  %831 = vmatpush1.bf16.msra.mxu0 %v625
  %832 = vmatprep.subr.bf16.mxu0 0
  %833 = vmatpush1.bf16.msra.mxu0 %v626
  %834 = vmatprep.subr.bf16.mxu0 0
  %835 = vmatpush1.bf16.msra.mxu0 %v627
  %836 = vmatprep.subr.bf16.mxu0 0
  %837 = vmatpush1.bf16.msra.mxu0 %v628
  %838 = vmatprep.subr.bf16.mxu0 0
  %839 = vmatpush1.bf16.msra.mxu0 %v629
  %840 = vmatprep.mubr.bf16.mxu0 %v310
  %841 = vmatmul.mubr.bf16.gmra.mrb[0].mxu0 %v309
  %v842 = vpop.f32.mrb[0].mxu0
  %v843 = vadd.f32 %v755, %v842
  %v844 = vpop.f32.mrb[0].mxu0
  %v845 = vpop.f32.mrb[0].mxu0
  %v846 = vadd.f32 %v758, %v845
  %v847 = vpop.f32.mrb[0].mxu0
  %848 = vmatprep.mubr.bf16.mxu0 %v317
  %849 = vmatmul.mubr.bf16.gmra.mrb[0].mxu0 %v316
  %v850 = vpop.f32.mrb[0].mxu0
  %v851 = vadd.f32 %v763, %v850
  %v852 = vpop.f32.mrb[0].mxu0
  %v853 = vpop.f32.mrb[0].mxu0
  %v854 = vadd.f32 %v766, %v853
  %v855 = vpop.f32.mrb[0].mxu0
  %856 = vmatprep.mubr.bf16.mxu0 %v324
  %857 = vmatmul.mubr.bf16.gmra.mrb[0].mxu0 %v323
  %v858 = vpop.f32.mrb[0].mxu0
  %v859 = vadd.f32 %v771, %v858
  %v860 = vpop.f32.mrb[0].mxu0
  %v861 = vpop.f32.mrb[0].mxu0
  %v862 = vadd.f32 %v774, %v861
  %v863 = vpop.f32.mrb[0].mxu0
  %864 = vmatprep.mubr.bf16.mxu0 %v331
  %865 = vmatmul.mubr.bf16.gmra.mrb[0].mxu0 %v330
  %v866 = vpop.f32.mrb[0].mxu0
  %v867 = vadd.f32 %v779, %v866
  %v868 = vpop.f32.mrb[0].mxu0
  %v869 = vpop.f32.mrb[0].mxu0
  %v870 = vadd.f32 %v782, %v869
  %v871 = vpop.f32.mrb[0].mxu0
  %872 = vmatprep.mubr.bf16.mxu0 %v338
  %873 = vmatmul.mubr.bf16.gmra.mrb[0].mxu0 %v337
  %v874 = vpop.f32.mrb[0].mxu0
  %v875 = vadd.f32 %v787, %v874
  %v876 = vpop.f32.mrb[0].mxu0
  %v877 = vpop.f32.mrb[0].mxu0
  %v878 = vadd.f32 %v790, %v877
  %v879 = vpop.f32.mrb[0].mxu0
  %880 = vmatprep.mubr.bf16.mxu0 %v345
  %881 = vmatmul.mubr.bf16.gmra.mrb[0].mxu0 %v344
  %v882 = vpop.f32.mrb[0].mxu0
  %v883 = vadd.f32 %v795, %v882
  %v884 = vpop.f32.mrb[0].mxu0
  %v885 = vpop.f32.mrb[0].mxu0
  %v886 = vadd.f32 %v798, %v885
  %v887 = vpop.f32.mrb[0].mxu0
  %888 = vmatprep.mubr.bf16.mxu0 %v352
  %889 = vmatmul.mubr.bf16.gmra.mrb[0].mxu0 %v351
  %v890 = vpop.f32.mrb[0].mxu0
  %v891 = vadd.f32 %v803, %v890
  %v892 = vpop.f32.mrb[0].mxu0
  %v893 = vpop.f32.mrb[0].mxu0
  %v894 = vpop.f32.mrb[0].mxu0
  %895 = vdwg.mxu0
  %896 = vmatprep.subr.bf16.mxu0 0
  %897 = vmatpush1.bf16.msra.mxu0 %v630
  %898 = vmatprep.subr.bf16.mxu0 0
  %899 = vmatpush1.bf16.msra.mxu0 %v631
  %900 = vmatprep.subr.bf16.mxu0 0
  %901 = vmatpush1.bf16.msra.mxu0 %v632
  %902 = vmatprep.subr.bf16.mxu0 0
  %903 = vmatpush1.bf16.msra.mxu0 %v633
  %904 = vmatprep.subr.bf16.mxu0 0
  %905 = vmatpush1.bf16.msra.mxu0 %v634
  %906 = vmatprep.subr.bf16.mxu0 0
  %907 = vmatpush1.bf16.msra.mxu0 %v635
  %908 = vmatprep.subr.bf16.mxu0 0
  %909 = vmatpush1.bf16.msra.mxu0 %v636
  %910 = vmatprep.subr.bf16.mxu0 0
  %911 = vmatpush1.bf16.msra.mxu0 %v637
  %912 = vmatprep.subr.bf16.mxu0 0
  %913 = vmatpush1.bf16.msra.mxu0 %v638
  %914 = vmatprep.subr.bf16.mxu0 0
  %915 = vmatpush1.bf16.msra.mxu0 %v639
  %916 = vmatprep.subr.bf16.mxu0 0
  %917 = vmatpush1.bf16.msra.mxu0 %v640
  %918 = vmatprep.subr.bf16.mxu0 0
  %919 = vmatpush1.bf16.msra.mxu0 %v641
  %920 = vmatprep.subr.bf16.mxu0 0
  %921 = vmatpush1.bf16.msra.mxu0 %v642
  %922 = vmatprep.subr.bf16.mxu0 0
  %923 = vmatpush1.bf16.msra.mxu0 %v643
  %924 = vmatprep.subr.bf16.mxu0 0
  %925 = vmatpush1.bf16.msra.mxu0 %v644
  %926 = vmatprep.subr.bf16.mxu0 0
  %927 = vmatpush1.bf16.msra.mxu0 %v645
  %928 = vmatprep.mubr.bf16.mxu0 %v312
  %929 = vmatmul.mubr.bf16.gmra.mrb[0].mxu0 %v311
  %v930 = vpop.f32.mrb[0].mxu0
  %v931 = vadd.f32 %v843, %v930
  %v932 = vpop.f32.mrb[0].mxu0
  %v933 = vpop.f32.mrb[0].mxu0
  %v934 = vadd.f32 %v846, %v933
  %v935 = vpop.f32.mrb[0].mxu0
  %936 = vmatprep.mubr.bf16.mxu0 %v319
  %937 = vmatmul.mubr.bf16.gmra.mrb[0].mxu0 %v318
  %v938 = vpop.f32.mrb[0].mxu0
  %v939 = vadd.f32 %v851, %v938
  %v940 = vpop.f32.mrb[0].mxu0
  %v941 = vpop.f32.mrb[0].mxu0
  %v942 = vadd.f32 %v854, %v941
  %v943 = vpop.f32.mrb[0].mxu0
  %944 = vmatprep.mubr.bf16.mxu0 %v326
  %945 = vmatmul.mubr.bf16.gmra.mrb[0].mxu0 %v325
  %v946 = vpop.f32.mrb[0].mxu0
  %v947 = vadd.f32 %v859, %v946
  %v948 = vpop.f32.mrb[0].mxu0
  %v949 = vpop.f32.mrb[0].mxu0
  %v950 = vadd.f32 %v862, %v949
  %v951 = vpop.f32.mrb[0].mxu0
  %952 = vmatprep.mubr.bf16.mxu0 %v333
  %953 = vmatmul.mubr.bf16.gmra.mrb[0].mxu0 %v332
  %v954 = vpop.f32.mrb[0].mxu0
  %v955 = vadd.f32 %v867, %v954
  %v956 = vpop.f32.mrb[0].mxu0
  %v957 = vpop.f32.mrb[0].mxu0
  %v958 = vadd.f32 %v870, %v957
  %v959 = vpop.f32.mrb[0].mxu0
  %960 = vmatprep.mubr.bf16.mxu0 %v340
  %961 = vmatmul.mubr.bf16.gmra.mrb[0].mxu0 %v339
  %v962 = vpop.f32.mrb[0].mxu0
  %v963 = vadd.f32 %v875, %v962
  %v964 = vpop.f32.mrb[0].mxu0
  %v965 = vpop.f32.mrb[0].mxu0
  %v966 = vadd.f32 %v878, %v965
  %v967 = vpop.f32.mrb[0].mxu0
  %968 = vmatprep.mubr.bf16.mxu0 %v347
  %969 = vmatmul.mubr.bf16.gmra.mrb[0].mxu0 %v346
  %v970 = vpop.f32.mrb[0].mxu0
  %v971 = vadd.f32 %v883, %v970
  %v972 = vpop.f32.mrb[0].mxu0
  %v973 = vpop.f32.mrb[0].mxu0
  %v974 = vadd.f32 %v886, %v973
  %v975 = vpop.f32.mrb[0].mxu0
  %976 = vmatprep.mubr.bf16.mxu0 %v354
  %977 = vmatmul.mubr.bf16.gmra.mrb[0].mxu0 %v353
  %v978 = vpop.f32.mrb[0].mxu0
  %v979 = vadd.f32 %v891, %v978
  %v980 = vpop.f32.mrb[0].mxu0
  %v981 = vpop.f32.mrb[0].mxu0
  %v982 = vpop.f32.mrb[0].mxu0
  %983 = vdwg.mxu0
  %984 = vmatprep.subr.bf16.mxu0 0
  %985 = vmatpush1.bf16.msra.mxu0 %v646
  %986 = vmatprep.subr.bf16.mxu0 0
  %987 = vmatpush1.bf16.msra.mxu0 %v647
  %988 = vmatprep.subr.bf16.mxu0 0
  %989 = vmatpush1.bf16.msra.mxu0 0
  %990 = vmatprep.subr.bf16.mxu0 0
  %991 = vmatpush1.bf16.msra.mxu0 0
  %992 = vmatprep.subr.bf16.mxu0 0
  %993 = vmatpush1.bf16.msra.mxu0 0
  %994 = vmatprep.subr.bf16.mxu0 0
  %995 = vmatpush1.bf16.msra.mxu0 0
  %996 = vmatprep.subr.bf16.mxu0 0
  %997 = vmatpush1.bf16.msra.mxu0 0
  %998 = vmatprep.subr.bf16.mxu0 0
  %999 = vmatpush1.bf16.msra.mxu0 0
  %1000 = vmatprep.subr.bf16.mxu0 0
  %1001 = vmatpush1.bf16.msra.mxu0 0
  %1002 = vmatprep.subr.bf16.mxu0 0
  %1003 = vmatpush1.bf16.msra.mxu0 0
  %1004 = vmatprep.subr.bf16.mxu0 0
  %1005 = vmatpush1.bf16.msra.mxu0 0
  %1006 = vmatprep.subr.bf16.mxu0 0
  %1007 = vmatpush1.bf16.msra.mxu0 0
  %1008 = vmatprep.subr.bf16.mxu0 0
  %1009 = vmatpush1.bf16.msra.mxu0 0
  %1010 = vmatprep.subr.bf16.mxu0 0
  %1011 = vmatpush1.bf16.msra.mxu0 0
  %1012 = vmatprep.subr.bf16.mxu0 0
  %1013 = vmatpush1.bf16.msra.mxu0 0
  %1014 = vmatprep.subr.bf16.mxu0 0
  %1015 = vmatpush1.bf16.msra.mxu0 0
  %1016 = vmatprep.mubr.bf16.mxu0 0
  %1017 = vmatmul.mubr.bf16.gmra.mrb[0].mxu0 %v700
  %v1018 = vpop.f32.mrb[0].mxu0
  %v1019 = vadd.f32 %v931, %v1018
  %v1020 = vpop.f32.mrb[0].mxu0
  %v1021 = vpop.f32.mrb[0].mxu0
  %v1022 = vadd.f32 %v934, %v1021
  %v1023 = vpop.f32.mrb[0].mxu0
  %1024 = vmatprep.mubr.bf16.mxu0 0
  %1025 = vmatmul.mubr.bf16.gmra.mrb[0].mxu0 %v703
  %v1026 = vpop.f32.mrb[0].mxu0
  %v1027 = vadd.f32 %v939, %v1026
  %v1028 = vpop.f32.mrb[0].mxu0
  %v1029 = vpop.f32.mrb[0].mxu0
  %v1030 = vadd.f32 %v942, %v1029
  %v1031 = vpop.f32.mrb[0].mxu0
  %1032 = vmatprep.mubr.bf16.mxu0 0
  %1033 = vmatmul.mubr.bf16.gmra.mrb[0].mxu0 %v706
  %v1034 = vpop.f32.mrb[0].mxu0
  %v1035 = vadd.f32 %v947, %v1034
  %v1036 = vpop.f32.mrb[0].mxu0
  %v1037 = vpop.f32.mrb[0].mxu0
  %v1038 = vadd.f32 %v950, %v1037
  %v1039 = vpop.f32.mrb[0].mxu0
  %1040 = vmatprep.mubr.bf16.mxu0 0
  %1041 = vmatmul.mubr.bf16.gmra.mrb[0].mxu0 %v709
  %v1042 = vpop.f32.mrb[0].mxu0
  %v1043 = vadd.f32 %v955, %v1042
  %v1044 = vpop.f32.mrb[0].mxu0
  %v1045 = vpop.f32.mrb[0].mxu0
  %v1046 = vadd.f32 %v958, %v1045
  %v1047 = vpop.f32.mrb[0].mxu0
  %1048 = vmatprep.mubr.bf16.mxu0 0
  %1049 = vmatmul.mubr.bf16.gmra.mrb[0].mxu0 %v712
  %v1050 = vpop.f32.mrb[0].mxu0
  %v1051 = vadd.f32 %v963, %v1050
  %v1052 = vpop.f32.mrb[0].mxu0
  %v1053 = vpop.f32.mrb[0].mxu0
  %v1054 = vadd.f32 %v966, %v1053
  %v1055 = vpop.f32.mrb[0].mxu0
  %1056 = vmatprep.mubr.bf16.mxu0 0
  %1057 = vmatmul.mubr.bf16.gmra.mrb[0].mxu0 %v715
  %v1058 = vpop.f32.mrb[0].mxu0
  %v1059 = vadd.f32 %v971, %v1058
  %v1060 = vpop.f32.mrb[0].mxu0
  %v1061 = vpop.f32.mrb[0].mxu0
  %v1062 = vadd.f32 %v974, %v1061
  %v1063 = vpop.f32.mrb[0].mxu0
  %1064 = vmatprep.mubr.bf16.mxu0 0
  %1065 = vmatmul.mubr.bf16.gmra.mrb[0].mxu0 %v718
  %v1066 = vpop.f32.mrb[0].mxu0
  %v1067 = vadd.f32 %v979, %v1066
  %v1068 = vpop.f32.mrb[0].mxu0
  %v1069 = vpop.f32.mrb[0].mxu0
  %v1070 = vpop.f32.mrb[0].mxu0
  %1071 = vdwg.mxu0
  %vm1072 = vcmask 130048
  %1073 = vst.msk [vmem:[%s2] sm:$0xff] %vm1072, %v1019
  %1074 = vst.msk [vmem:[%s2 + $0x8] sm:$0xff] %vm1072, %v1022
  %1075 = vst.msk [vmem:[%s2 + $0x10] sm:$0xff] %vm1072, %v1027
  %1076 = vst.msk [vmem:[%s2 + $0x18] sm:$0xff] %vm1072, %v1030
  %1077 = vst.msk [vmem:[%s2 + $0x20] sm:$0xff] %vm1072, %v1035
  %1078 = vst.msk [vmem:[%s2 + $0x28] sm:$0xff] %vm1072, %v1038
  %1079 = vst.msk [vmem:[%s2 + $0x30] sm:$0xff] %vm1072, %v1043
  %1080 = vst.msk [vmem:[%s2 + $0x38] sm:$0xff] %vm1072, %v1046
  %1081 = vst.msk [vmem:[%s2 + $0x40] sm:$0xff] %vm1072, %v1051
  %1082 = vst.msk [vmem:[%s2 + $0x48] sm:$0xff] %vm1072, %v1054
  %1083 = vst.msk [vmem:[%s2 + $0x50] sm:$0xff] %vm1072, %v1059
  %1084 = vst.msk [vmem:[%s2 + $0x58] sm:$0xff] %vm1072, %v1062
  %vm1085 = vcmask 123904
  %1086 = vst.msk [vmem:[%s2 + $0x60] sm:$0x3] %vm1085, %v1067
  // Predicated region
  $region10: #{discriminator_forward.4} parent=0 // pred_check
    _
  $region11: #{discriminator_forward.4} parent=0 // pred_check_branch
    %1088 = sbr.rel (0) target = $region13
  $region12: #{discriminator_forward.4} parent=0 // pred_region
    _
  $region13: #{discriminator_forward.4} parent=0 // pred_fallthru
    _
  // Predicated region
  $region14: #{discriminator_forward.4} parent=0 // pred_check
    _
  $region15: #{discriminator_forward.4} parent=0 // pred_check_branch
    %1090 = sbr.rel (0) target = $region17
  $region16: #{discriminator_forward.4} parent=0 // pred_region
    _
  $region17: #{discriminator_forward.4} parent=0 // pred_fallthru
    _

// kernel: discriminator_forward.5
$region0: #{discriminator_forward.5}
  #allocation0 [shape = 'u32[]', space=smem, size = 0x4, offset = 0x4, fixed_abs, tag = 'smem constant byte address 0x4 - core index']
  #allocation1 [shape = 'u32[144,128]{1,0:T(1,128)}', space=vmem, size = 0x12000, scoped, tag = 'internal scratch']
  #allocation2 [shape = 'f32[1,1]{1,0:T(1,128)S(1)}', space=vmem, size = 0x200, scoped, tag = 'scoped memory for discriminator_forward.5']
  %s0 = inlined_call_operand.vmem [shape: f32[2,784], index: 0, kind: input, shape index: {}]
  %s1 = inlined_call_operand.vmem [shape: s32[2,1], index: 1, kind: input, shape index: {}]
  %s2 = inlined_call_operand.vmem [shape: f32[12,784], index: 2, kind: input, shape index: {}]
  %s3 = inlined_call_operand.vmem [shape: f32[1,784], index: 3, kind: input, shape index: {}]
  %s4 = inlined_call_operand.vmem [shape: f32[1,784], index: 4, kind: input, shape index: {}]
  %s5 = inlined_call_operand.vmem [shape: f32[1,784], index: 5, kind: input, shape index: {}]
  %s6 = inlined_call_operand.vmem [shape: f32[1,16], index: 6, kind: input, shape index: {}]
  %s7 = inlined_call_operand.vmem [shape: f32[1,16], index: 7, kind: input, shape index: {}]
  %s8 = inlined_call_operand.vmem [shape: f32[784,16], index: 8, kind: input, shape index: {}]
  %s9 = inlined_call_operand.vmem [shape: f32[16,784], index: 9, kind: input, shape index: {}]
  %s10 = inlined_call_operand.vmem [shape: bf16[784,784], index: 10, kind: input, shape index: {}]
  %s11 = inlined_call_operand.vmem [shape: f32[1,784], index: 11, kind: input, shape index: {}]
  %s12 = inlined_call_operand.vmem [shape: f32[1,784], index: 12, kind: input, shape index: {}]
  %s13 = inlined_call_operand.vmem [shape: f32[1,784], index: 13, kind: input, shape index: {}]
  %s14 = inlined_call_operand.vmem [shape: f32[1,784], index: 14, kind: input, shape index: {}]
  %s15 = inlined_call_operand.<no memory space> [shape: f32[1,1], index: 15, kind: input, shape index: {}]
  %s16 = inlined_call_operand.vmem [shape: f32[2,1], index: 16, kind: input, shape index: {}]
  %s17 = inlined_call_operand.hbm [shape: f32[1,1], index: 17, kind: output, shape index: {}]
  %s18 = sld [smem:[#allocation0]]
  $region78: #{discriminator_forward.5} parent=0
    _
  %s20 = ssub.s32 1, %s18
  %s21 = scalar_select 0, %s20, %s18
  %v22 = vstv %s15
  %23 = vst [vmem:[#allocation2] sm:$0x1] %v22
  $region1: #{discriminator_forward.5} parent=0
    #allocation3 [shape = 'u8[512]{0}', space=vmem, size = 0x400, scoped, tag = 'output window, operand 0, single buffered']
    #allocation4 [shape = 's32[1]{0}', space=sflag, size = 0x4, scoped, tag = 'scoped memory for discriminator_forward.5']
    %24 = vsyncpa [#allocation4], 0
    // Predicated region
    $region2: #{discriminator_forward.5} parent=1 // pred_check
      _
    $region3: #{discriminator_forward.5} parent=1 // pred_check_branch
      %26 = sbr.rel (0) target = $region5
    $region4: #{discriminator_forward.5} parent=1 // pred_region
      _
    $region5: #{discriminator_forward.5} parent=1 // pred_fallthru
      _
    // Predicated region
    $region6: #{discriminator_forward.5} parent=1 // pred_check
      _
    $region7: #{discriminator_forward.5} parent=1 // pred_check_branch
      %28 = sbr.rel (0) target = $region9
    $region8: #{discriminator_forward.5} parent=1 // pred_region
      _
    $region9: #{discriminator_forward.5} parent=1 // pred_fallthru
      _
    // Predicated region
    $region10: #{discriminator_forward.5} parent=1 // pred_check
      _
    $region11: #{discriminator_forward.5} parent=1 // pred_check_branch
      %30 = sbr.rel (0) target = $region13
    $region12: #{discriminator_forward.5} parent=1 // pred_region
      _
    $region13: #{discriminator_forward.5} parent=1 // pred_fallthru
      _
    // Predicated region
    $region14: #{discriminator_forward.5} parent=1 // pred_check
      _
    $region15: #{discriminator_forward.5} parent=1 // pred_check_branch
      %32 = sbr.rel (0) target = $region17
    $region16: #{discriminator_forward.5} parent=1 // pred_region
      _
    $region17: #{discriminator_forward.5} parent=1 // pred_fallthru
      _
    // Predicated region
    $region18: #{discriminator_forward.5} parent=1 // pred_check
      _
    $region19: #{discriminator_forward.5} parent=1 // pred_check_branch
      %34 = sbr.rel (0) target = $region21
    $region20: #{discriminator_forward.5} parent=1 // pred_region
      _
    $region21: #{discriminator_forward.5} parent=1 // pred_fallthru
      _
    // Predicated region
    $region22: #{discriminator_forward.5} parent=1 // pred_check
      _
    $region23: #{discriminator_forward.5} parent=1 // pred_check_branch
      %36 = sbr.rel (0) target = $region25
    $region24: #{discriminator_forward.5} parent=1 // pred_region
      _
    $region25: #{discriminator_forward.5} parent=1 // pred_fallthru
      _
    // Predicated region
    $region26: #{discriminator_forward.5} parent=1 // pred_check
      _
    $region27: #{discriminator_forward.5} parent=1 // pred_check_branch
      %38 = sbr.rel (0) target = $region29
    $region28: #{discriminator_forward.5} parent=1 // pred_region
      _
    $region29: #{discriminator_forward.5} parent=1 // pred_fallthru
      _
    // Predicated region
    $region30: #{discriminator_forward.5} parent=1 // pred_check
      _
    $region31: #{discriminator_forward.5} parent=1 // pred_check_branch
      %40 = sbr.rel (0) target = $region33
    $region32: #{discriminator_forward.5} parent=1 // pred_region
      _
    $region33: #{discriminator_forward.5} parent=1 // pred_fallthru
      _
    // Predicated region
    $region34: #{discriminator_forward.5} parent=1 // pred_check
      _
    $region35: #{discriminator_forward.5} parent=1 // pred_check_branch
      %42 = sbr.rel (0) target = $region37
    $region36: #{discriminator_forward.5} parent=1 // pred_region
      _
    $region37: #{discriminator_forward.5} parent=1 // pred_fallthru
      _
    // Predicated region
    $region38: #{discriminator_forward.5} parent=1 // pred_check
      _
    $region39: #{discriminator_forward.5} parent=1 // pred_check_branch
      %44 = sbr.rel (0) target = $region41
    $region40: #{discriminator_forward.5} parent=1 // pred_region
      _
    $region41: #{discriminator_forward.5} parent=1 // pred_fallthru
      _
    // Predicated region
    $region42: #{discriminator_forward.5} parent=1 // pred_check
      _
    $region43: #{discriminator_forward.5} parent=1 // pred_check_branch
      %46 = sbr.rel (0) target = $region45
    $region44: #{discriminator_forward.5} parent=1 // pred_region
      _
    $region45: #{discriminator_forward.5} parent=1 // pred_fallthru
      _
    // Predicated region
    $region46: #{discriminator_forward.5} parent=1 // pred_check
      _
    $region47: #{discriminator_forward.5} parent=1 // pred_check_branch
      %48 = sbr.rel (0) target = $region49
    $region48: #{discriminator_forward.5} parent=1 // pred_region
      _
    $region49: #{discriminator_forward.5} parent=1 // pred_fallthru
      _
    // Predicated region
    $region50: #{discriminator_forward.5} parent=1 // pred_check
      _
    $region51: #{discriminator_forward.5} parent=1 // pred_check_branch
      %50 = sbr.rel (0) target = $region53
    $region52: #{discriminator_forward.5} parent=1 // pred_region
      _
    $region53: #{discriminator_forward.5} parent=1 // pred_fallthru
      _
    // Predicated region
    $region54: #{discriminator_forward.5} parent=1 // pred_check
      _
    $region55: #{discriminator_forward.5} parent=1 // pred_check_branch
      %52 = sbr.rel (0) target = $region57
    $region56: #{discriminator_forward.5} parent=1 // pred_region
      _
    $region57: #{discriminator_forward.5} parent=1 // pred_fallthru
      _
    // Predicated region
    $region58: #{discriminator_forward.5} parent=1 // pred_check
      _
    $region59: #{discriminator_forward.5} parent=1 // pred_check_branch
      %54 = sbr.rel (0) target = $region61
    $region60: #{discriminator_forward.5} parent=1 // pred_region
      _
    $region61: #{discriminator_forward.5} parent=1 // pred_fallthru
      _
    // Predicated region
    $region62: #{discriminator_forward.5} parent=1 // pred_check
      _
    $region63: #{discriminator_forward.5} parent=1 // pred_check_branch
      %56 = sbr.rel (0) target = $region65
    $region64: #{discriminator_forward.5} parent=1 // pred_region
      _
    $region65: #{discriminator_forward.5} parent=1 // pred_fallthru
      _
    // Predicated region
    $region66: #{discriminator_forward.5} parent=1 // pred_check
      _
    $region67: #{discriminator_forward.5} parent=1 // pred_check_branch
      %58 = sbr.rel (0) target = $region69
    $region68: #{discriminator_forward.5} parent=1 // pred_region
      _
    $region69: #{discriminator_forward.5} parent=1 // pred_fallthru
      _
    %v60 = vld [vmem:[%s0] sm:$0xff]
    %v61 = vld [vmem:[%s0 + $0x8] sm:$0x3f]
    %v64 = vcombine.high %v60, %v60
    %v66 = vunpack.c.l.s4 1983009808
    %v67 = vunpack.c.0.s8 %v66
    %v68 = vlaneseq
    %v69 = vshrl.u32 %v68, 7
    %v70 = vsub.s32 %v67, %v69
    %v71 = vrot.slane %v60, %v70
    %v73 = vunpack.c.l.s4 1983009808
    %v74 = vunpack.c.0.s8 %v73
    %v75 = vlaneseq
    %v76 = vshrl.u32 %v75, 7
    %v77 = vsub.s32 %v74, %v76
    %v78 = vrot.slane %v64, %v77
    %v79 = vcombine.high %v71, %v71
    %v80 = vcombine.high %v78, %v78
    %v81 = vcombine.high %v61, %v61
    %v83 = vunpack.c.l.s4 1983009808
    %v84 = vunpack.c.0.s8 %v83
    %v85 = vlaneseq
    %v86 = vshrl.u32 %v85, 7
    %v87 = vsub.s32 %v84, %v86
    %v88 = vrot.slane %v61, %v87
    %v90 = vunpack.c.l.s4 1983009808
    %v91 = vunpack.c.0.s8 %v90
    %v92 = vlaneseq
    %v93 = vshrl.u32 %v92, 7
    %v94 = vsub.s32 %v91, %v93
    %v95 = vrot.slane %v81, %v94
    %v96 = vcombine.high %v88, %v88
    %vm104 = vcmask 1041408
    %v105 = vsel %vm104, %v71, 0.0
    %v106 = vrot.slane %v105, 4
    %v107 = vadd.f32 %v105, %v106
    %v108 = vrot.slane %v107, 2
    %v109 = vadd.f32 %v107, %v108
    %v110 = vrot.slane %v109, 1
    %v111 = vadd.f32 %v109, %v110
    %v112 = vsel %vm104, %v79, 0.0
    %v113 = vrot.slane %v112, 4
    %v114 = vadd.f32 %v112, %v113
    %v115 = vrot.slane %v114, 2
    %v116 = vadd.f32 %v114, %v115
    %v117 = vrot.slane %v116, 1
    %v118 = vadd.f32 %v116, %v117
    %v119 = vsel %vm104, %v78, 0.0
    %v120 = vrot.slane %v119, 4
    %v121 = vadd.f32 %v119, %v120
    %v122 = vrot.slane %v121, 2
    %v123 = vadd.f32 %v121, %v122
    %v124 = vrot.slane %v123, 1
    %v125 = vadd.f32 %v123, %v124
    %v126 = vsel %vm104, %v80, 0.0
    %v127 = vrot.slane %v126, 4
    %v128 = vadd.f32 %v126, %v127
    %v129 = vrot.slane %v128, 2
    %v130 = vadd.f32 %v128, %v129
    %v131 = vrot.slane %v130, 1
    %v132 = vadd.f32 %v130, %v131
    %v133 = vsel %vm104, %v88, 0.0
    %v134 = vrot.slane %v133, 4
    %v135 = vadd.f32 %v133, %v134
    %v136 = vrot.slane %v135, 2
    %v137 = vadd.f32 %v135, %v136
    %v138 = vrot.slane %v137, 1
    %v139 = vadd.f32 %v137, %v138
    %v140 = vsel %vm104, %v96, 0.0
    %v141 = vrot.slane %v140, 4
    %v142 = vadd.f32 %v140, %v141
    %v143 = vrot.slane %v142, 2
    %v144 = vadd.f32 %v142, %v143
    %v145 = vrot.slane %v144, 1
    %v146 = vadd.f32 %v144, %v145
    %vm147 = vcmask 123904
    %v148 = vsel %vm147, %v95, 0.0
    %v149 = vrot.slane %v148, 4
    %v150 = vadd.f32 %v148, %v149
    %v151 = vrot.slane %v150, 2
    %v152 = vadd.f32 %v150, %v151
    %v153 = vrot.slane %v152, 1
    %v154 = vadd.f32 %v152, %v153
    %v155 = vld [vmem:[%s8] sm:$0xff]
    %v156 = vld [vmem:[%s8 + $0x8] sm:$0xff]
    %v157 = vld [vmem:[%s8 + $0x10] sm:$0xff]
    %v158 = vld [vmem:[%s8 + $0x18] sm:$0xff]
    %v159 = vld [vmem:[%s8 + $0x20] sm:$0xff]
    %v160 = vld [vmem:[%s8 + $0x28] sm:$0xff]
    %v161 = vld [vmem:[%s8 + $0x30] sm:$0xff]
    %v162 = vld [vmem:[%s8 + $0x38] sm:$0xff]
    %v163 = vld [vmem:[%s8 + $0x40] sm:$0xff]
    %v164 = vld [vmem:[%s8 + $0x48] sm:$0xff]
    %v165 = vld [vmem:[%s8 + $0x50] sm:$0xff]
    %v166 = vld [vmem:[%s8 + $0x58] sm:$0xff]
    %v167 = vld [vmem:[%s8 + $0x60] sm:$0xff]
    %v168 = vld [vmem:[%s8 + $0x68] sm:$0xff]
    %v169 = vld [vmem:[%s8 + $0x70] sm:$0xff]
    %v170 = vld [vmem:[%s8 + $0x78] sm:$0xff]
    %v171 = vld [vmem:[%s8 + $0x80] sm:$0xff]
    %v172 = vld [vmem:[%s8 + $0x88] sm:$0xff]
    %v173 = vld [vmem:[%s8 + $0x90] sm:$0xff]
    %v174 = vld [vmem:[%s8 + $0x98] sm:$0xff]
    %v175 = vld [vmem:[%s8 + $0xa0] sm:$0xff]
    %v176 = vld [vmem:[%s8 + $0xa8] sm:$0xff]
    %v177 = vld [vmem:[%s8 + $0xb0] sm:$0xff]
    %v178 = vld [vmem:[%s8 + $0xb8] sm:$0xff]
    %v179 = vld [vmem:[%s8 + $0xc0] sm:$0xff]
    %v180 = vld [vmem:[%s8 + $0xc8] sm:$0xff]
    %v181 = vld [vmem:[%s8 + $0xd0] sm:$0xff]
    %v182 = vld [vmem:[%s8 + $0xd8] sm:$0xff]
    %v183 = vld [vmem:[%s8 + $0xe0] sm:$0xff]
    %v184 = vld [vmem:[%s8 + $0xe8] sm:$0xff]
    %v185 = vld [vmem:[%s8 + $0xf0] sm:$0xff]
    %v186 = vld [vmem:[%s8 + $0xf8] sm:$0xff]
    %v187 = vld [vmem:[%s8 + $0x100] sm:$0xff]
    %v188 = vld [vmem:[%s8 + $0x108] sm:$0xff]
    %v189 = vld [vmem:[%s8 + $0x110] sm:$0xff]
    %v190 = vld [vmem:[%s8 + $0x118] sm:$0xff]
    %v191 = vld [vmem:[%s8 + $0x120] sm:$0xff]
    %v192 = vld [vmem:[%s8 + $0x128] sm:$0xff]
    %v193 = vld [vmem:[%s8 + $0x130] sm:$0xff]
    %v194 = vld [vmem:[%s8 + $0x138] sm:$0xff]
    %v195 = vld [vmem:[%s8 + $0x140] sm:$0xff]
    %v196 = vld [vmem:[%s8 + $0x148] sm:$0xff]
    %v197 = vld [vmem:[%s8 + $0x150] sm:$0xff]
    %v198 = vld [vmem:[%s8 + $0x158] sm:$0xff]
    %v199 = vld [vmem:[%s8 + $0x160] sm:$0xff]
    %v200 = vld [vmem:[%s8 + $0x168] sm:$0xff]
    %v201 = vld [vmem:[%s8 + $0x170] sm:$0xff]
    %v202 = vld [vmem:[%s8 + $0x178] sm:$0xff]
    %v203 = vld [vmem:[%s8 + $0x180] sm:$0xff]
    %v204 = vld [vmem:[%s8 + $0x188] sm:$0xff]
    %v205 = vld [vmem:[%s8 + $0x190] sm:$0xff]
    %v206 = vld [vmem:[%s8 + $0x198] sm:$0xff]
    %v207 = vld [vmem:[%s8 + $0x1a0] sm:$0xff]
    %v208 = vld [vmem:[%s8 + $0x1a8] sm:$0xff]
    %v209 = vld [vmem:[%s8 + $0x1b0] sm:$0xff]
    %v210 = vld [vmem:[%s8 + $0x1b8] sm:$0xff]
    %v211 = vld [vmem:[%s8 + $0x1c0] sm:$0xff]
    %v212 = vld [vmem:[%s8 + $0x1c8] sm:$0xff]
    %v213 = vld [vmem:[%s8 + $0x1d0] sm:$0xff]
    %v214 = vld [vmem:[%s8 + $0x1d8] sm:$0xff]
    %v215 = vld [vmem:[%s8 + $0x1e0] sm:$0xff]
    %v216 = vld [vmem:[%s8 + $0x1e8] sm:$0xff]
    %v217 = vld [vmem:[%s8 + $0x1f0] sm:$0xff]
    %v218 = vld [vmem:[%s8 + $0x1f8] sm:$0xff]
    %v219 = vld [vmem:[%s8 + $0x200] sm:$0xff]
    %v220 = vld [vmem:[%s8 + $0x208] sm:$0xff]
    %v221 = vld [vmem:[%s8 + $0x210] sm:$0xff]
    %v222 = vld [vmem:[%s8 + $0x218] sm:$0xff]
    %v223 = vld [vmem:[%s8 + $0x220] sm:$0xff]
    %v224 = vld [vmem:[%s8 + $0x228] sm:$0xff]
    %v225 = vld [vmem:[%s8 + $0x230] sm:$0xff]
    %v226 = vld [vmem:[%s8 + $0x238] sm:$0xff]
    %v227 = vld [vmem:[%s8 + $0x240] sm:$0xff]
    %v228 = vld [vmem:[%s8 + $0x248] sm:$0xff]
    %v229 = vld [vmem:[%s8 + $0x250] sm:$0xff]
    %v230 = vld [vmem:[%s8 + $0x258] sm:$0xff]
    %v231 = vld [vmem:[%s8 + $0x260] sm:$0xff]
    %v232 = vld [vmem:[%s8 + $0x268] sm:$0xff]
    %v233 = vld [vmem:[%s8 + $0x270] sm:$0xff]
    %v234 = vld [vmem:[%s8 + $0x278] sm:$0xff]
    %v235 = vld [vmem:[%s8 + $0x280] sm:$0xff]
    %v236 = vld [vmem:[%s8 + $0x288] sm:$0xff]
    %v237 = vld [vmem:[%s8 + $0x290] sm:$0xff]
    %v238 = vld [vmem:[%s8 + $0x298] sm:$0xff]
    %v239 = vld [vmem:[%s8 + $0x2a0] sm:$0xff]
    %v240 = vld [vmem:[%s8 + $0x2a8] sm:$0xff]
    %v241 = vld [vmem:[%s8 + $0x2b0] sm:$0xff]
    %v242 = vld [vmem:[%s8 + $0x2b8] sm:$0xff]
    %v243 = vld [vmem:[%s8 + $0x2c0] sm:$0xff]
    %v244 = vld [vmem:[%s8 + $0x2c8] sm:$0xff]
    %v245 = vld [vmem:[%s8 + $0x2d0] sm:$0xff]
    %v246 = vld [vmem:[%s8 + $0x2d8] sm:$0xff]
    %v247 = vld [vmem:[%s8 + $0x2e0] sm:$0xff]
    %v248 = vld [vmem:[%s8 + $0x2e8] sm:$0xff]
    %v249 = vld [vmem:[%s8 + $0x2f0] sm:$0xff]
    %v250 = vld [vmem:[%s8 + $0x2f8] sm:$0xff]
    %v251 = vld [vmem:[%s8 + $0x300] sm:$0xff]
    %v252 = vld [vmem:[%s8 + $0x308] sm:$0xff]
    %vm253 = vcmask 130048
    %v255 = vsel %vm253, %v154, 0
    %257 = vmatprep.subr.mxu0 0.0
    %258 = vmatpush1.msra.mxu0 %v155
    %259 = vmatprep.subr.mxu0 0.0
    %260 = vmatpush1.msra.mxu0 %v156
    %261 = vmatprep.subr.mxu0 0.0
    %262 = vmatpush1.msra.mxu0 %v157
    %263 = vmatprep.subr.mxu0 0.0
    %264 = vmatpush1.msra.mxu0 %v158
    %265 = vmatprep.subr.mxu0 0.0
    %266 = vmatpush1.msra.mxu0 %v159
    %267 = vmatprep.subr.mxu0 0.0
    %268 = vmatpush1.msra.mxu0 %v160
    %269 = vmatprep.subr.mxu0 0.0
    %270 = vmatpush1.msra.mxu0 %v161
    %271 = vmatprep.subr.mxu0 0.0
    %272 = vmatpush1.msra.mxu0 %v162
    %273 = vmatprep.subr.mxu0 0.0
    %274 = vmatpush1.msra.mxu0 %v163
    %275 = vmatprep.subr.mxu0 0.0
    %276 = vmatpush1.msra.mxu0 %v164
    %277 = vmatprep.subr.mxu0 0.0
    %278 = vmatpush1.msra.mxu0 %v165
    %279 = vmatprep.subr.mxu0 0.0
    %280 = vmatpush1.msra.mxu0 %v166
    %281 = vmatprep.subr.mxu0 0.0
    %282 = vmatpush1.msra.mxu0 %v167
    %283 = vmatprep.subr.mxu0 0.0
    %284 = vmatpush1.msra.mxu0 %v168
    %285 = vmatprep.subr.mxu0 0.0
    %286 = vmatpush1.msra.mxu0 %v169
    %287 = vmatprep.subr.mxu0 0.0
    %288 = vmatpush1.msra.mxu0 %v170
    %289 = vmatprep.subr.mxu0 0.0
    %290 = vmatpush1.msra.mxu0 %v171
    %291 = vmatprep.subr.mxu0 0.0
    %292 = vmatpush1.msra.mxu0 %v172
    %293 = vmatprep.subr.mxu0 0.0
    %294 = vmatpush1.msra.mxu0 %v173
    %295 = vmatprep.subr.mxu0 0.0
    %296 = vmatpush1.msra.mxu0 %v174
    %297 = vmatprep.subr.mxu0 0.0
    %298 = vmatpush1.msra.mxu0 %v175
    %299 = vmatprep.subr.mxu0 0.0
    %300 = vmatpush1.msra.mxu0 %v176
    %301 = vmatprep.subr.mxu0 0.0
    %302 = vmatpush1.msra.mxu0 %v177
    %303 = vmatprep.subr.mxu0 0.0
    %304 = vmatpush1.msra.mxu0 %v178
    %305 = vmatprep.subr.mxu0 0.0
    %306 = vmatpush1.msra.mxu0 %v179
    %307 = vmatprep.subr.mxu0 0.0
    %308 = vmatpush1.msra.mxu0 %v180
    %309 = vmatprep.subr.mxu0 0.0
    %310 = vmatpush1.msra.mxu0 %v181
    %311 = vmatprep.subr.mxu0 0.0
    %312 = vmatpush1.msra.mxu0 %v182
    %313 = vmatprep.subr.mxu0 0.0
    %314 = vmatpush1.msra.mxu0 %v183
    %315 = vmatprep.subr.mxu0 0.0
    %316 = vmatpush1.msra.mxu0 %v184
    %317 = vmatprep.subr.mxu0 0.0
    %318 = vmatpush1.msra.mxu0 %v185
    %319 = vmatprep.subr.mxu0 0.0
    %320 = vmatpush1.msra.mxu0 %v186
    %321 = vmatprep.mubr.f32.mxu0 %v118
    %322 = vmatmul.mubr.f32.gmra.mrb[0].mxu0 %v111
    %v323 = vpop.f32.mrb[0].mxu0
    %v324 = vadd.f32 0.0, %v323
    %v325 = vpop.f32.mrb[0].mxu0
    %326 = vdwg.mxu0
    %327 = vmatprep.subr.mxu0 0.0
    %328 = vmatpush1.msra.mxu0 %v187
    %329 = vmatprep.subr.mxu0 0.0
    %330 = vmatpush1.msra.mxu0 %v188
    %331 = vmatprep.subr.mxu0 0.0
    %332 = vmatpush1.msra.mxu0 %v189
    %333 = vmatprep.subr.mxu0 0.0
    %334 = vmatpush1.msra.mxu0 %v190
    %335 = vmatprep.subr.mxu0 0.0
    %336 = vmatpush1.msra.mxu0 %v191
    %337 = vmatprep.subr.mxu0 0.0
    %338 = vmatpush1.msra.mxu0 %v192
    %339 = vmatprep.subr.mxu0 0.0
    %340 = vmatpush1.msra.mxu0 %v193
    %341 = vmatprep.subr.mxu0 0.0
    %342 = vmatpush1.msra.mxu0 %v194
    %343 = vmatprep.subr.mxu0 0.0
    %344 = vmatpush1.msra.mxu0 %v195
    %345 = vmatprep.subr.mxu0 0.0
    %346 = vmatpush1.msra.mxu0 %v196
    %347 = vmatprep.subr.mxu0 0.0
    %348 = vmatpush1.msra.mxu0 %v197
    %349 = vmatprep.subr.mxu0 0.0
    %350 = vmatpush1.msra.mxu0 %v198
    %351 = vmatprep.subr.mxu0 0.0
    %352 = vmatpush1.msra.mxu0 %v199
    %353 = vmatprep.subr.mxu0 0.0
    %354 = vmatpush1.msra.mxu0 %v200
    %355 = vmatprep.subr.mxu0 0.0
    %356 = vmatpush1.msra.mxu0 %v201
    %357 = vmatprep.subr.mxu0 0.0
    %358 = vmatpush1.msra.mxu0 %v202
    %359 = vmatprep.subr.mxu0 0.0
    %360 = vmatpush1.msra.mxu0 %v203
    %361 = vmatprep.subr.mxu0 0.0
    %362 = vmatpush1.msra.mxu0 %v204
    %363 = vmatprep.subr.mxu0 0.0
    %364 = vmatpush1.msra.mxu0 %v205
    %365 = vmatprep.subr.mxu0 0.0
    %366 = vmatpush1.msra.mxu0 %v206
    %367 = vmatprep.subr.mxu0 0.0
    %368 = vmatpush1.msra.mxu0 %v207
    %369 = vmatprep.subr.mxu0 0.0
    %370 = vmatpush1.msra.mxu0 %v208
    %371 = vmatprep.subr.mxu0 0.0
    %372 = vmatpush1.msra.mxu0 %v209
    %373 = vmatprep.subr.mxu0 0.0
    %374 = vmatpush1.msra.mxu0 %v210
    %375 = vmatprep.subr.mxu0 0.0
    %376 = vmatpush1.msra.mxu0 %v211
    %377 = vmatprep.subr.mxu0 0.0
    %378 = vmatpush1.msra.mxu0 %v212
    %379 = vmatprep.subr.mxu0 0.0
    %380 = vmatpush1.msra.mxu0 %v213
    %381 = vmatprep.subr.mxu0 0.0
    %382 = vmatpush1.msra.mxu0 %v214
    %383 = vmatprep.subr.mxu0 0.0
    %384 = vmatpush1.msra.mxu0 %v215
    %385 = vmatprep.subr.mxu0 0.0
    %386 = vmatpush1.msra.mxu0 %v216
    %387 = vmatprep.subr.mxu0 0.0
    %388 = vmatpush1.msra.mxu0 %v217
    %389 = vmatprep.subr.mxu0 0.0
    %390 = vmatpush1.msra.mxu0 %v218
    %391 = vmatprep.mubr.f32.mxu0 %v132
    %392 = vmatmul.mubr.f32.gmra.mrb[0].mxu0 %v125
    %v393 = vpop.f32.mrb[0].mxu0
    %v394 = vadd.f32 %v324, %v393
    %v395 = vpop.f32.mrb[0].mxu0
    %396 = vdwg.mxu0
    %397 = vmatprep.subr.mxu0 0.0
    %398 = vmatpush1.msra.mxu0 %v219
    %399 = vmatprep.subr.mxu0 0.0
    %400 = vmatpush1.msra.mxu0 %v220
    %401 = vmatprep.subr.mxu0 0.0
    %402 = vmatpush1.msra.mxu0 %v221
    %403 = vmatprep.subr.mxu0 0.0
    %404 = vmatpush1.msra.mxu0 %v222
    %405 = vmatprep.subr.mxu0 0.0
    %406 = vmatpush1.msra.mxu0 %v223
    %407 = vmatprep.subr.mxu0 0.0
    %408 = vmatpush1.msra.mxu0 %v224
    %409 = vmatprep.subr.mxu0 0.0
    %410 = vmatpush1.msra.mxu0 %v225
    %411 = vmatprep.subr.mxu0 0.0
    %412 = vmatpush1.msra.mxu0 %v226
    %413 = vmatprep.subr.mxu0 0.0
    %414 = vmatpush1.msra.mxu0 %v227
    %415 = vmatprep.subr.mxu0 0.0
    %416 = vmatpush1.msra.mxu0 %v228
    %417 = vmatprep.subr.mxu0 0.0
    %418 = vmatpush1.msra.mxu0 %v229
    %419 = vmatprep.subr.mxu0 0.0
    %420 = vmatpush1.msra.mxu0 %v230
    %421 = vmatprep.subr.mxu0 0.0
    %422 = vmatpush1.msra.mxu0 %v231
    %423 = vmatprep.subr.mxu0 0.0
    %424 = vmatpush1.msra.mxu0 %v232
    %425 = vmatprep.subr.mxu0 0.0
    %426 = vmatpush1.msra.mxu0 %v233
    %427 = vmatprep.subr.mxu0 0.0
    %428 = vmatpush1.msra.mxu0 %v234
    %429 = vmatprep.subr.mxu0 0.0
    %430 = vmatpush1.msra.mxu0 %v235
    %431 = vmatprep.subr.mxu0 0.0
    %432 = vmatpush1.msra.mxu0 %v236
    %433 = vmatprep.subr.mxu0 0.0
    %434 = vmatpush1.msra.mxu0 %v237
    %435 = vmatprep.subr.mxu0 0.0
    %436 = vmatpush1.msra.mxu0 %v238
    %437 = vmatprep.subr.mxu0 0.0
    %438 = vmatpush1.msra.mxu0 %v239
    %439 = vmatprep.subr.mxu0 0.0
    %440 = vmatpush1.msra.mxu0 %v240
    %441 = vmatprep.subr.mxu0 0.0
    %442 = vmatpush1.msra.mxu0 %v241
    %443 = vmatprep.subr.mxu0 0.0
    %444 = vmatpush1.msra.mxu0 %v242
    %445 = vmatprep.subr.mxu0 0.0
    %446 = vmatpush1.msra.mxu0 %v243
    %447 = vmatprep.subr.mxu0 0.0
    %448 = vmatpush1.msra.mxu0 %v244
    %449 = vmatprep.subr.mxu0 0.0
    %450 = vmatpush1.msra.mxu0 %v245
    %451 = vmatprep.subr.mxu0 0.0
    %452 = vmatpush1.msra.mxu0 %v246
    %453 = vmatprep.subr.mxu0 0.0
    %454 = vmatpush1.msra.mxu0 %v247
    %455 = vmatprep.subr.mxu0 0.0
    %456 = vmatpush1.msra.mxu0 %v248
    %457 = vmatprep.subr.mxu0 0.0
    %458 = vmatpush1.msra.mxu0 %v249
    %459 = vmatprep.subr.mxu0 0.0
    %460 = vmatpush1.msra.mxu0 %v250
    %461 = vmatprep.mubr.f32.mxu0 %v146
    %462 = vmatmul.mubr.f32.gmra.mrb[0].mxu0 %v139
    %v463 = vpop.f32.mrb[0].mxu0
    %v464 = vadd.f32 %v394, %v463
    %v465 = vpop.f32.mrb[0].mxu0
    %466 = vdwg.mxu0
    %467 = vmatprep.subr.mxu0 0.0
    %468 = vmatpush1.msra.mxu0 %v251
    %469 = vmatprep.subr.mxu0 0.0
    %470 = vmatpush1.msra.mxu0 %v252
    %471 = vmatprep.subr.mxu0 0.0
    %472 = vmatpush1.msra.mxu0 0.0
    %473 = vmatprep.subr.mxu0 0.0
    %474 = vmatpush1.msra.mxu0 0.0
    %475 = vmatprep.subr.mxu0 0.0
    %476 = vmatpush1.msra.mxu0 0.0
    %477 = vmatprep.subr.mxu0 0.0
    %478 = vmatpush1.msra.mxu0 0.0
    %479 = vmatprep.subr.mxu0 0.0
    %480 = vmatpush1.msra.mxu0 0.0
    %481 = vmatprep.subr.mxu0 0.0
    %482 = vmatpush1.msra.mxu0 0.0
    %483 = vmatprep.subr.mxu0 0.0
    %484 = vmatpush1.msra.mxu0 0.0
    %485 = vmatprep.subr.mxu0 0.0
    %486 = vmatpush1.msra.mxu0 0.0
    %487 = vmatprep.subr.mxu0 0.0
    %488 = vmatpush1.msra.mxu0 0.0
    %489 = vmatprep.subr.mxu0 0.0
    %490 = vmatpush1.msra.mxu0 0.0
    %491 = vmatprep.subr.mxu0 0.0
    %492 = vmatpush1.msra.mxu0 0.0
    %493 = vmatprep.subr.mxu0 0.0
    %494 = vmatpush1.msra.mxu0 0.0
    %495 = vmatprep.subr.mxu0 0.0
    %496 = vmatpush1.msra.mxu0 0.0
    %497 = vmatprep.subr.mxu0 0.0
    %498 = vmatpush1.msra.mxu0 0.0
    %499 = vmatprep.subr.mxu0 0.0
    %500 = vmatpush1.msra.mxu0 0.0
    %501 = vmatprep.subr.mxu0 0.0
    %502 = vmatpush1.msra.mxu0 0.0
    %503 = vmatprep.subr.mxu0 0.0
    %504 = vmatpush1.msra.mxu0 0.0
    %505 = vmatprep.subr.mxu0 0.0
    %506 = vmatpush1.msra.mxu0 0.0
    %507 = vmatprep.subr.mxu0 0.0
    %508 = vmatpush1.msra.mxu0 0.0
    %509 = vmatprep.subr.mxu0 0.0
    %510 = vmatpush1.msra.mxu0 0.0
    %511 = vmatprep.subr.mxu0 0.0
    %512 = vmatpush1.msra.mxu0 0.0
    %513 = vmatprep.subr.mxu0 0.0
    %514 = vmatpush1.msra.mxu0 0.0
    %515 = vmatprep.subr.mxu0 0.0
    %516 = vmatpush1.msra.mxu0 0.0
    %517 = vmatprep.subr.mxu0 0.0
    %518 = vmatpush1.msra.mxu0 0.0
    %519 = vmatprep.subr.mxu0 0.0
    %520 = vmatpush1.msra.mxu0 0.0
    %521 = vmatprep.subr.mxu0 0.0
    %522 = vmatpush1.msra.mxu0 0.0
    %523 = vmatprep.subr.mxu0 0.0
    %524 = vmatpush1.msra.mxu0 0.0
    %525 = vmatprep.subr.mxu0 0.0
    %526 = vmatpush1.msra.mxu0 0.0
    %527 = vmatprep.subr.mxu0 0.0
    %528 = vmatpush1.msra.mxu0 0.0
    %529 = vmatprep.subr.mxu0 0.0
    %530 = vmatpush1.msra.mxu0 0.0
    %531 = vmatprep.mubr.f32.mxu0 0.0
    %532 = vmatmul.mubr.f32.gmra.mrb[0].mxu0 %v255
    %v533 = vpop.f32.mrb[0].mxu0
    %v534 = vadd.f32 %v464, %v533
    %v535 = vpop.f32.mrb[0].mxu0
    %536 = vdwg.mxu0
    %v537 = vmul.f32 %v534, 0.010204081
    %v538 = vld [vmem:[%s9] sm:$0xff]
    %v539 = vld [vmem:[%s9 + $0x8] sm:$0xff]
    %v540 = vld [vmem:[%s9 + $0x10] sm:$0xff]
    %v541 = vld [vmem:[%s9 + $0x18] sm:$0xff]
    %v542 = vld [vmem:[%s9 + $0x20] sm:$0xff]
    %v543 = vld [vmem:[%s9 + $0x28] sm:$0xff]
    %v544 = vld [vmem:[%s9 + $0x30] sm:$0xff]
    %v545 = vld [vmem:[%s9 + $0x38] sm:$0xff]
    %v546 = vld [vmem:[%s9 + $0x40] sm:$0xff]
    %v547 = vld [vmem:[%s9 + $0x48] sm:$0xff]
    %v548 = vld [vmem:[%s9 + $0x50] sm:$0xff]
    %v549 = vld [vmem:[%s9 + $0x58] sm:$0xff]
    %v550 = vld [vmem:[%s9 + $0x60] sm:$0xff]
    %v551 = vld [vmem:[%s9 + $0x68] sm:$0xff]
    %v553 = vsel %vm253, %v537, 0
    %555 = vmatprep.subr.mxu0 %v539
    %556 = vmatpush1.msra.mxu0 %v538
    %557 = vmatprep.subr.mxu0 %v546
    %558 = vmatpush1.msra.mxu0 %v545
    %559 = vmatprep.subr.mxu0 0.0
    %560 = vmatpush1.msra.mxu0 0.0
    %561 = vmatprep.subr.mxu0 0.0
    %562 = vmatpush1.msra.mxu0 0.0
    %563 = vmatprep.subr.mxu0 0.0
    %564 = vmatpush1.msra.mxu0 0.0
    %565 = vmatprep.subr.mxu0 0.0
    %566 = vmatpush1.msra.mxu0 0.0
    %567 = vmatprep.subr.mxu0 0.0
    %568 = vmatpush1.msra.mxu0 0.0
    %569 = vmatprep.subr.mxu0 0.0
    %570 = vmatpush1.msra.mxu0 0.0
    %571 = vmatprep.subr.mxu0 0.0
    %572 = vmatpush1.msra.mxu0 0.0
    %573 = vmatprep.subr.mxu0 0.0
    %574 = vmatpush1.msra.mxu0 0.0
    %575 = vmatprep.subr.mxu0 0.0
    %576 = vmatpush1.msra.mxu0 0.0
    %577 = vmatprep.subr.mxu0 0.0
    %578 = vmatpush1.msra.mxu0 0.0
    %579 = vmatprep.subr.mxu0 0.0
    %580 = vmatpush1.msra.mxu0 0.0
    %581 = vmatprep.subr.mxu0 0.0
    %582 = vmatpush1.msra.mxu0 0.0
    %583 = vmatprep.subr.mxu0 0.0
    %584 = vmatpush1.msra.mxu0 0.0
    %585 = vmatprep.subr.mxu0 0.0
    %586 = vmatpush1.msra.mxu0 0.0
    %587 = vmatprep.subr.mxu0 0.0
    %588 = vmatpush1.msra.mxu0 0.0
    %589 = vmatprep.subr.mxu0 0.0
    %590 = vmatpush1.msra.mxu0 0.0
    %591 = vmatprep.subr.mxu0 0.0
    %592 = vmatpush1.msra.mxu0 0.0
    %593 = vmatprep.subr.mxu0 0.0
    %594 = vmatpush1.msra.mxu0 0.0
    %595 = vmatprep.subr.mxu0 0.0
    %596 = vmatpush1.msra.mxu0 0.0
    %597 = vmatprep.subr.mxu0 0.0
    %598 = vmatpush1.msra.mxu0 0.0
    %599 = vmatprep.subr.mxu0 0.0
    %600 = vmatpush1.msra.mxu0 0.0
    %601 = vmatprep.subr.mxu0 0.0
    %602 = vmatpush1.msra.mxu0 0.0
    %603 = vmatprep.subr.mxu0 0.0
    %604 = vmatpush1.msra.mxu0 0.0
    %605 = vmatprep.subr.mxu0 0.0
    %606 = vmatpush1.msra.mxu0 0.0
    %607 = vmatprep.subr.mxu0 0.0
    %608 = vmatpush1.msra.mxu0 0.0
    %609 = vmatprep.subr.mxu0 0.0
    %610 = vmatpush1.msra.mxu0 0.0
    %611 = vmatprep.subr.mxu0 0.0
    %612 = vmatpush1.msra.mxu0 0.0
    %613 = vmatprep.subr.mxu0 0.0
    %614 = vmatpush1.msra.mxu0 0.0
    %615 = vmatprep.subr.mxu0 0.0
    %616 = vmatpush1.msra.mxu0 0.0
    %617 = vmatprep.subr.mxu0 0.0
    %618 = vmatpush1.msra.mxu0 0.0
    %619 = vmatprep.mubr.f32.mxu0 0.0
    %620 = vmatmul.mubr.f32.gmra.mrb[0].mxu0 %v553
    %v621 = vpop.f32.mrb[0].mxu0
    %v622 = vadd.f32 0.0, %v621
    %v623 = vpop.f32.mrb[0].mxu0
    %v624 = vadd.f32 0.0, %v623
    %625 = vdwg.mxu0
    %626 = vmatprep.subr.mxu0 %v541
    %627 = vmatpush1.msra.mxu0 %v540
    %628 = vmatprep.subr.mxu0 %v548
    %629 = vmatpush1.msra.mxu0 %v547
    %630 = vmatprep.subr.mxu0 0.0
    %631 = vmatpush1.msra.mxu0 0.0
    %632 = vmatprep.subr.mxu0 0.0
    %633 = vmatpush1.msra.mxu0 0.0
    %634 = vmatprep.subr.mxu0 0.0
    %635 = vmatpush1.msra.mxu0 0.0
    %636 = vmatprep.subr.mxu0 0.0
    %637 = vmatpush1.msra.mxu0 0.0
    %638 = vmatprep.subr.mxu0 0.0
    %639 = vmatpush1.msra.mxu0 0.0
    %640 = vmatprep.subr.mxu0 0.0
    %641 = vmatpush1.msra.mxu0 0.0
    %642 = vmatprep.subr.mxu0 0.0
    %643 = vmatpush1.msra.mxu0 0.0
    %644 = vmatprep.subr.mxu0 0.0
    %645 = vmatpush1.msra.mxu0 0.0
    %646 = vmatprep.subr.mxu0 0.0
    %647 = vmatpush1.msra.mxu0 0.0
    %648 = vmatprep.subr.mxu0 0.0
    %649 = vmatpush1.msra.mxu0 0.0
    %650 = vmatprep.subr.mxu0 0.0
    %651 = vmatpush1.msra.mxu0 0.0
    %652 = vmatprep.subr.mxu0 0.0
    %653 = vmatpush1.msra.mxu0 0.0
    %654 = vmatprep.subr.mxu0 0.0
    %655 = vmatpush1.msra.mxu0 0.0
    %656 = vmatprep.subr.mxu0 0.0
    %657 = vmatpush1.msra.mxu0 0.0
    %658 = vmatprep.subr.mxu0 0.0
    %659 = vmatpush1.msra.mxu0 0.0
    %660 = vmatprep.subr.mxu0 0.0
    %661 = vmatpush1.msra.mxu0 0.0
    %662 = vmatprep.subr.mxu0 0.0
    %663 = vmatpush1.msra.mxu0 0.0
    %664 = vmatprep.subr.mxu0 0.0
    %665 = vmatpush1.msra.mxu0 0.0
    %666 = vmatprep.subr.mxu0 0.0
    %667 = vmatpush1.msra.mxu0 0.0
    %668 = vmatprep.subr.mxu0 0.0
    %669 = vmatpush1.msra.mxu0 0.0
    %670 = vmatprep.subr.mxu0 0.0
    %671 = vmatpush1.msra.mxu0 0.0
    %672 = vmatprep.subr.mxu0 0.0
    %673 = vmatpush1.msra.mxu0 0.0
    %674 = vmatprep.subr.mxu0 0.0
    %675 = vmatpush1.msra.mxu0 0.0
    %676 = vmatprep.subr.mxu0 0.0
    %677 = vmatpush1.msra.mxu0 0.0
    %678 = vmatprep.subr.mxu0 0.0
    %679 = vmatpush1.msra.mxu0 0.0
    %680 = vmatprep.subr.mxu0 0.0
    %681 = vmatpush1.msra.mxu0 0.0
    %682 = vmatprep.subr.mxu0 0.0
    %683 = vmatpush1.msra.mxu0 0.0
    %684 = vmatprep.subr.mxu0 0.0
    %685 = vmatpush1.msra.mxu0 0.0
    %686 = vmatprep.subr.mxu0 0.0
    %687 = vmatpush1.msra.mxu0 0.0
    %688 = vmatprep.subr.mxu0 0.0
    %689 = vmatpush1.msra.mxu0 0.0
    %690 = vmatprep.mubr.f32.mxu0 0.0
    %691 = vmatmul.mubr.f32.gmra.mrb[0].mxu0 %v553
    %v692 = vpop.f32.mrb[0].mxu0
    %v693 = vadd.f32 0.0, %v692
    %v694 = vpop.f32.mrb[0].mxu0
    %v695 = vadd.f32 0.0, %v694
    %696 = vdwg.mxu0
    %697 = vmatprep.subr.mxu0 %v543
    %698 = vmatpush1.msra.mxu0 %v542
    %699 = vmatprep.subr.mxu0 %v550
    %700 = vmatpush1.msra.mxu0 %v549
    %701 = vmatprep.subr.mxu0 0.0
    %702 = vmatpush1.msra.mxu0 0.0
    %703 = vmatprep.subr.mxu0 0.0
    %704 = vmatpush1.msra.mxu0 0.0
    %705 = vmatprep.subr.mxu0 0.0
    %706 = vmatpush1.msra.mxu0 0.0
    %707 = vmatprep.subr.mxu0 0.0
    %708 = vmatpush1.msra.mxu0 0.0
    %709 = vmatprep.subr.mxu0 0.0
    %710 = vmatpush1.msra.mxu0 0.0
    %711 = vmatprep.subr.mxu0 0.0
    %712 = vmatpush1.msra.mxu0 0.0
    %713 = vmatprep.subr.mxu0 0.0
    %714 = vmatpush1.msra.mxu0 0.0
    %715 = vmatprep.subr.mxu0 0.0
    %716 = vmatpush1.msra.mxu0 0.0
    %717 = vmatprep.subr.mxu0 0.0
    %718 = vmatpush1.msra.mxu0 0.0
    %719 = vmatprep.subr.mxu0 0.0
    %720 = vmatpush1.msra.mxu0 0.0
    %721 = vmatprep.subr.mxu0 0.0
    %722 = vmatpush1.msra.mxu0 0.0
    %723 = vmatprep.subr.mxu0 0.0
    %724 = vmatpush1.msra.mxu0 0.0
    %725 = vmatprep.subr.mxu0 0.0
    %726 = vmatpush1.msra.mxu0 0.0
    %727 = vmatprep.subr.mxu0 0.0
    %728 = vmatpush1.msra.mxu0 0.0
    %729 = vmatprep.subr.mxu0 0.0
    %730 = vmatpush1.msra.mxu0 0.0
    %731 = vmatprep.subr.mxu0 0.0
    %732 = vmatpush1.msra.mxu0 0.0
    %733 = vmatprep.subr.mxu0 0.0
    %734 = vmatpush1.msra.mxu0 0.0
    %735 = vmatprep.subr.mxu0 0.0
    %736 = vmatpush1.msra.mxu0 0.0
    %737 = vmatprep.subr.mxu0 0.0
    %738 = vmatpush1.msra.mxu0 0.0
    %739 = vmatprep.subr.mxu0 0.0
    %740 = vmatpush1.msra.mxu0 0.0
    %741 = vmatprep.subr.mxu0 0.0
    %742 = vmatpush1.msra.mxu0 0.0
    %743 = vmatprep.subr.mxu0 0.0
    %744 = vmatpush1.msra.mxu0 0.0
    %745 = vmatprep.subr.mxu0 0.0
    %746 = vmatpush1.msra.mxu0 0.0
    %747 = vmatprep.subr.mxu0 0.0
    %748 = vmatpush1.msra.mxu0 0.0
    %749 = vmatprep.subr.mxu0 0.0
    %750 = vmatpush1.msra.mxu0 0.0
    %751 = vmatprep.subr.mxu0 0.0
    %752 = vmatpush1.msra.mxu0 0.0
    %753 = vmatprep.subr.mxu0 0.0
    %754 = vmatpush1.msra.mxu0 0.0
    %755 = vmatprep.subr.mxu0 0.0
    %756 = vmatpush1.msra.mxu0 0.0
    %757 = vmatprep.subr.mxu0 0.0
    %758 = vmatpush1.msra.mxu0 0.0
    %759 = vmatprep.subr.mxu0 0.0
    %760 = vmatpush1.msra.mxu0 0.0
    %761 = vmatprep.mubr.f32.mxu0 0.0
    %762 = vmatmul.mubr.f32.gmra.mrb[0].mxu0 %v553
    %v763 = vpop.f32.mrb[0].mxu0
    %v764 = vadd.f32 0.0, %v763
    %v765 = vpop.f32.mrb[0].mxu0
    %v766 = vadd.f32 0.0, %v765
    %767 = vdwg.mxu0
    %768 = vmatprep.subr.mxu0 0.0
    %769 = vmatpush1.msra.mxu0 %v544
    %770 = vmatprep.subr.mxu0 0.0
    %771 = vmatpush1.msra.mxu0 %v551
    %772 = vmatprep.subr.mxu0 0.0
    %773 = vmatpush1.msra.mxu0 0.0
    %774 = vmatprep.subr.mxu0 0.0
    %775 = vmatpush1.msra.mxu0 0.0
    %776 = vmatprep.subr.mxu0 0.0
    %777 = vmatpush1.msra.mxu0 0.0
    %778 = vmatprep.subr.mxu0 0.0
    %779 = vmatpush1.msra.mxu0 0.0
    %780 = vmatprep.subr.mxu0 0.0
    %781 = vmatpush1.msra.mxu0 0.0
    %782 = vmatprep.subr.mxu0 0.0
    %783 = vmatpush1.msra.mxu0 0.0
    %784 = vmatprep.subr.mxu0 0.0
    %785 = vmatpush1.msra.mxu0 0.0
    %786 = vmatprep.subr.mxu0 0.0
    %787 = vmatpush1.msra.mxu0 0.0
    %788 = vmatprep.subr.mxu0 0.0
    %789 = vmatpush1.msra.mxu0 0.0
    %790 = vmatprep.subr.mxu0 0.0
    %791 = vmatpush1.msra.mxu0 0.0
    %792 = vmatprep.subr.mxu0 0.0
    %793 = vmatpush1.msra.mxu0 0.0
    %794 = vmatprep.subr.mxu0 0.0
    %795 = vmatpush1.msra.mxu0 0.0
    %796 = vmatprep.subr.mxu0 0.0
    %797 = vmatpush1.msra.mxu0 0.0
    %798 = vmatprep.subr.mxu0 0.0
    %799 = vmatpush1.msra.mxu0 0.0
    %800 = vmatprep.subr.mxu0 0.0
    %801 = vmatpush1.msra.mxu0 0.0
    %802 = vmatprep.subr.mxu0 0.0
    %803 = vmatpush1.msra.mxu0 0.0
    %804 = vmatprep.subr.mxu0 0.0
    %805 = vmatpush1.msra.mxu0 0.0
    %806 = vmatprep.subr.mxu0 0.0
    %807 = vmatpush1.msra.mxu0 0.0
    %808 = vmatprep.subr.mxu0 0.0
    %809 = vmatpush1.msra.mxu0 0.0
    %810 = vmatprep.subr.mxu0 0.0
    %811 = vmatpush1.msra.mxu0 0.0
    %812 = vmatprep.subr.mxu0 0.0
    %813 = vmatpush1.msra.mxu0 0.0
    %814 = vmatprep.subr.mxu0 0.0
    %815 = vmatpush1.msra.mxu0 0.0
    %816 = vmatprep.subr.mxu0 0.0
    %817 = vmatpush1.msra.mxu0 0.0
    %818 = vmatprep.subr.mxu0 0.0
    %819 = vmatpush1.msra.mxu0 0.0
    %820 = vmatprep.subr.mxu0 0.0
    %821 = vmatpush1.msra.mxu0 0.0
    %822 = vmatprep.subr.mxu0 0.0
    %823 = vmatpush1.msra.mxu0 0.0
    %824 = vmatprep.subr.mxu0 0.0
    %825 = vmatpush1.msra.mxu0 0.0
    %826 = vmatprep.subr.mxu0 0.0
    %827 = vmatpush1.msra.mxu0 0.0
    %828 = vmatprep.subr.mxu0 0.0
    %829 = vmatpush1.msra.mxu0 0.0
    %830 = vmatprep.subr.mxu0 0.0
    %831 = vmatpush1.msra.mxu0 0.0
    %832 = vmatprep.mubr.f32.mxu0 0.0
    %833 = vmatmul.mubr.f32.gmra.mrb[0].mxu0 %v553
    %v834 = vpop.f32.mrb[0].mxu0
    %v835 = vadd.f32 0.0, %v834
    %v836 = vpop.f32.mrb[0].mxu0
    %837 = vdwg.mxu0
    %v838 = vlaneseq
    %v839 = vshrl.u32 %v838, 7
    %v840 = vsub.s32 0, %v839
    %v841 = vrot.slane %v622, %v840
    %v842 = vlaneseq
    %v843 = vshrl.u32 %v842, 7
    %v844 = vsub.s32 0, %v843
    %v845 = vrot.slane %v624, %v844
    %v846 = vlaneseq
    %v847 = vshrl.u32 %v846, 7
    %v848 = vsub.s32 0, %v847
    %v849 = vrot.slane %v693, %v848
    %v850 = vlaneseq
    %v851 = vshrl.u32 %v850, 7
    %v852 = vsub.s32 0, %v851
    %v853 = vrot.slane %v695, %v852
    %v854 = vlaneseq
    %v855 = vshrl.u32 %v854, 7
    %v856 = vsub.s32 0, %v855
    %v857 = vrot.slane %v764, %v856
    %v858 = vlaneseq
    %v859 = vshrl.u32 %v858, 7
    %v860 = vsub.s32 0, %v859
    %v861 = vrot.slane %v766, %v860
    %v862 = vlaneseq
    %v863 = vshrl.u32 %v862, 7
    %v864 = vsub.s32 0, %v863
    %v865 = vrot.slane %v835, %v864
    %v873 = vcombine.low %v841, %v845
    %v874 = vcombine.low %v849, %v853
    %v876 = vunpack.c.l.s4 1983009808
    %v877 = vunpack.c.0.s8 %v876
    %v878 = vlaneseq
    %v879 = vshrl.u32 %v878, 7
    %v880 = vsub.s32 %v877, %v879
    %v881 = vrot.slane %v873, %v880
    %v883 = vunpack.c.l.s4 1983009808
    %v884 = vunpack.c.0.s8 %v883
    %v885 = vlaneseq
    %v886 = vshrl.u32 %v885, 7
    %v887 = vsub.s32 %v884, %v886
    %v888 = vrot.slane %v874, %v887
    %v889 = vcombine.low %v881, %v888
    %v890 = vcombine.low %v857, %v861
    %v892 = vunpack.c.l.s4 1983009808
    %v893 = vunpack.c.0.s8 %v892
    %v894 = vlaneseq
    %v895 = vshrl.u32 %v894, 7
    %v896 = vsub.s32 %v893, %v895
    %v897 = vrot.slane %v890, %v896
    %v899 = vunpack.c.l.s4 1983009808
    %v900 = vunpack.c.0.s8 %v899
    %v901 = vlaneseq
    %v902 = vshrl.u32 %v901, 7
    %v903 = vsub.s32 %v900, %v902
    %v904 = vrot.slane %v865, %v903
    %v905 = vcombine.low %v897, %v904
    %v908 = vsub.f32 %v60, %v889
    %v909 = vsub.f32 %v61, %v905
    %v910 = vmul.f32 %v908, %v908
    %v911 = vmul.f32 %v909, %v909
    %v914 = vcombine.high %v910, %v910
    %v916 = vunpack.c.l.s4 1983009808
    %v917 = vunpack.c.0.s8 %v916
    %v918 = vlaneseq
    %v919 = vshrl.u32 %v918, 7
    %v920 = vsub.s32 %v917, %v919
    %v921 = vrot.slane %v910, %v920
    %v923 = vunpack.c.l.s4 1983009808
    %v924 = vunpack.c.0.s8 %v923
    %v925 = vlaneseq
    %v926 = vshrl.u32 %v925, 7
    %v927 = vsub.s32 %v924, %v926
    %v928 = vrot.slane %v914, %v927
    %v929 = vcombine.high %v921, %v921
    %v930 = vcombine.high %v928, %v928
    %v931 = vcombine.high %v911, %v911
    %v933 = vunpack.c.l.s4 1983009808
    %v934 = vunpack.c.0.s8 %v933
    %v935 = vlaneseq
    %v936 = vshrl.u32 %v935, 7
    %v937 = vsub.s32 %v934, %v936
    %v938 = vrot.slane %v911, %v937
    %v940 = vunpack.c.l.s4 1983009808
    %v941 = vunpack.c.0.s8 %v940
    %v942 = vlaneseq
    %v943 = vshrl.u32 %v942, 7
    %v944 = vsub.s32 %v941, %v943
    %v945 = vrot.slane %v931, %v944
    %v946 = vcombine.high %v938, %v938
    %v954 = vsel %vm104, %v921, 0.0
    %v955 = vrot.slane %v954, 4
    %v956 = vadd.f32 %v954, %v955
    %v957 = vrot.slane %v956, 2
    %v958 = vadd.f32 %v956, %v957
    %v959 = vrot.slane %v958, 1
    %v960 = vadd.f32 %v958, %v959
    %v961 = vsel %vm104, %v929, 0.0
    %v962 = vrot.slane %v961, 4
    %v963 = vadd.f32 %v961, %v962
    %v964 = vrot.slane %v963, 2
    %v965 = vadd.f32 %v963, %v964
    %v966 = vrot.slane %v965, 1
    %v967 = vadd.f32 %v965, %v966
    %v968 = vsel %vm104, %v928, 0.0
    %v969 = vrot.slane %v968, 4
    %v970 = vadd.f32 %v968, %v969
    %v971 = vrot.slane %v970, 2
    %v972 = vadd.f32 %v970, %v971
    %v973 = vrot.slane %v972, 1
    %v974 = vadd.f32 %v972, %v973
    %v975 = vsel %vm104, %v930, 0.0
    %v976 = vrot.slane %v975, 4
    %v977 = vadd.f32 %v975, %v976
    %v978 = vrot.slane %v977, 2
    %v979 = vadd.f32 %v977, %v978
    %v980 = vrot.slane %v979, 1
    %v981 = vadd.f32 %v979, %v980
    %v982 = vsel %vm104, %v938, 0.0
    %v983 = vrot.slane %v982, 4
    %v984 = vadd.f32 %v982, %v983
    %v985 = vrot.slane %v984, 2
    %v986 = vadd.f32 %v984, %v985
    %v987 = vrot.slane %v986, 1
    %v988 = vadd.f32 %v986, %v987
    %v989 = vsel %vm104, %v946, 0.0
    %v990 = vrot.slane %v989, 4
    %v991 = vadd.f32 %v989, %v990
    %v992 = vrot.slane %v991, 2
    %v993 = vadd.f32 %v991, %v992
    %v994 = vrot.slane %v993, 1
    %v995 = vadd.f32 %v993, %v994
    %v996 = vsel %vm147, %v945, 0.0
    %v997 = vrot.slane %v996, 4
    %v998 = vadd.f32 %v996, %v997
    %v999 = vrot.slane %v998, 2
    %v1000 = vadd.f32 %v998, %v999
    %v1001 = vrot.slane %v1000, 1
    %v1002 = vadd.f32 %v1000, %v1001
    %v1004 = vsel %vm253, %v1002, 0
    %1006 = vmatprep.subr.mxu0 0.0
    %1007 = vmatpush1.msra.mxu0 %v155
    %1008 = vmatprep.subr.mxu0 0.0
    %1009 = vmatpush1.msra.mxu0 %v156
    %1010 = vmatprep.subr.mxu0 0.0
    %1011 = vmatpush1.msra.mxu0 %v157
    %1012 = vmatprep.subr.mxu0 0.0
    %1013 = vmatpush1.msra.mxu0 %v158
    %1014 = vmatprep.subr.mxu0 0.0
    %1015 = vmatpush1.msra.mxu0 %v159
    %1016 = vmatprep.subr.mxu0 0.0
    %1017 = vmatpush1.msra.mxu0 %v160
    %1018 = vmatprep.subr.mxu0 0.0
    %1019 = vmatpush1.msra.mxu0 %v161
    %1020 = vmatprep.subr.mxu0 0.0
    %1021 = vmatpush1.msra.mxu0 %v162
    %1022 = vmatprep.subr.mxu0 0.0
    %1023 = vmatpush1.msra.mxu0 %v163
    %1024 = vmatprep.subr.mxu0 0.0
    %1025 = vmatpush1.msra.mxu0 %v164
    %1026 = vmatprep.subr.mxu0 0.0
    %1027 = vmatpush1.msra.mxu0 %v165
    %1028 = vmatprep.subr.mxu0 0.0
    %1029 = vmatpush1.msra.mxu0 %v166
    %1030 = vmatprep.subr.mxu0 0.0
    %1031 = vmatpush1.msra.mxu0 %v167
    %1032 = vmatprep.subr.mxu0 0.0
    %1033 = vmatpush1.msra.mxu0 %v168
    %1034 = vmatprep.subr.mxu0 0.0
    %1035 = vmatpush1.msra.mxu0 %v169
    %1036 = vmatprep.subr.mxu0 0.0
    %1037 = vmatpush1.msra.mxu0 %v170
    %1038 = vmatprep.subr.mxu0 0.0
    %1039 = vmatpush1.msra.mxu0 %v171
    %1040 = vmatprep.subr.mxu0 0.0
    %1041 = vmatpush1.msra.mxu0 %v172
    %1042 = vmatprep.subr.mxu0 0.0
    %1043 = vmatpush1.msra.mxu0 %v173
    %1044 = vmatprep.subr.mxu0 0.0
    %1045 = vmatpush1.msra.mxu0 %v174
    %1046 = vmatprep.subr.mxu0 0.0
    %1047 = vmatpush1.msra.mxu0 %v175
    %1048 = vmatprep.subr.mxu0 0.0
    %1049 = vmatpush1.msra.mxu0 %v176
    %1050 = vmatprep.subr.mxu0 0.0
    %1051 = vmatpush1.msra.mxu0 %v177
    %1052 = vmatprep.subr.mxu0 0.0
    %1053 = vmatpush1.msra.mxu0 %v178
    %1054 = vmatprep.subr.mxu0 0.0
    %1055 = vmatpush1.msra.mxu0 %v179
    %1056 = vmatprep.subr.mxu0 0.0
    %1057 = vmatpush1.msra.mxu0 %v180
    %1058 = vmatprep.subr.mxu0 0.0
    %1059 = vmatpush1.msra.mxu0 %v181
    %1060 = vmatprep.subr.mxu0 0.0
    %1061 = vmatpush1.msra.mxu0 %v182
    %1062 = vmatprep.subr.mxu0 0.0
    %1063 = vmatpush1.msra.mxu0 %v183
    %1064 = vmatprep.subr.mxu0 0.0
    %1065 = vmatpush1.msra.mxu0 %v184
    %1066 = vmatprep.subr.mxu0 0.0
    %1067 = vmatpush1.msra.mxu0 %v185
    %1068 = vmatprep.subr.mxu0 0.0
    %1069 = vmatpush1.msra.mxu0 %v186
    %1070 = vmatprep.mubr.f32.mxu0 %v967
    %1071 = vmatmul.mubr.f32.gmra.mrb[0].mxu0 %v960
    %v1072 = vpop.f32.mrb[0].mxu0
    %v1073 = vadd.f32 0.0, %v1072
    %v1074 = vpop.f32.mrb[0].mxu0
    %1075 = vdwg.mxu0
    %1076 = vmatprep.subr.mxu0 0.0
    %1077 = vmatpush1.msra.mxu0 %v187
    %1078 = vmatprep.subr.mxu0 0.0
    %1079 = vmatpush1.msra.mxu0 %v188
    %1080 = vmatprep.subr.mxu0 0.0
    %1081 = vmatpush1.msra.mxu0 %v189
    %1082 = vmatprep.subr.mxu0 0.0
    %1083 = vmatpush1.msra.mxu0 %v190
    %1084 = vmatprep.subr.mxu0 0.0
    %1085 = vmatpush1.msra.mxu0 %v191
    %1086 = vmatprep.subr.mxu0 0.0
    %1087 = vmatpush1.msra.mxu0 %v192
    %1088 = vmatprep.subr.mxu0 0.0
    %1089 = vmatpush1.msra.mxu0 %v193
    %1090 = vmatprep.subr.mxu0 0.0
    %1091 = vmatpush1.msra.mxu0 %v194
    %1092 = vmatprep.subr.mxu0 0.0
    %1093 = vmatpush1.msra.mxu0 %v195
    %1094 = vmatprep.subr.mxu0 0.0
    %1095 = vmatpush1.msra.mxu0 %v196
    %1096 = vmatprep.subr.mxu0 0.0
    %1097 = vmatpush1.msra.mxu0 %v197
    %1098 = vmatprep.subr.mxu0 0.0
    %1099 = vmatpush1.msra.mxu0 %v198
    %1100 = vmatprep.subr.mxu0 0.0
    %1101 = vmatpush1.msra.mxu0 %v199
    %1102 = vmatprep.subr.mxu0 0.0
    %1103 = vmatpush1.msra.mxu0 %v200
    %1104 = vmatprep.subr.mxu0 0.0
    %1105 = vmatpush1.msra.mxu0 %v201
    %1106 = vmatprep.subr.mxu0 0.0
    %1107 = vmatpush1.msra.mxu0 %v202
    %1108 = vmatprep.subr.mxu0 0.0
    %1109 = vmatpush1.msra.mxu0 %v203
    %1110 = vmatprep.subr.mxu0 0.0
    %1111 = vmatpush1.msra.mxu0 %v204
    %1112 = vmatprep.subr.mxu0 0.0
    %1113 = vmatpush1.msra.mxu0 %v205
    %1114 = vmatprep.subr.mxu0 0.0
    %1115 = vmatpush1.msra.mxu0 %v206
    %1116 = vmatprep.subr.mxu0 0.0
    %1117 = vmatpush1.msra.mxu0 %v207
    %1118 = vmatprep.subr.mxu0 0.0
    %1119 = vmatpush1.msra.mxu0 %v208
    %1120 = vmatprep.subr.mxu0 0.0
    %1121 = vmatpush1.msra.mxu0 %v209
    %1122 = vmatprep.subr.mxu0 0.0
    %1123 = vmatpush1.msra.mxu0 %v210
    %1124 = vmatprep.subr.mxu0 0.0
    %1125 = vmatpush1.msra.mxu0 %v211
    %1126 = vmatprep.subr.mxu0 0.0
    %1127 = vmatpush1.msra.mxu0 %v212
    %1128 = vmatprep.subr.mxu0 0.0
    %1129 = vmatpush1.msra.mxu0 %v213
    %1130 = vmatprep.subr.mxu0 0.0
    %1131 = vmatpush1.msra.mxu0 %v214
    %1132 = vmatprep.subr.mxu0 0.0
    %1133 = vmatpush1.msra.mxu0 %v215
    %1134 = vmatprep.subr.mxu0 0.0
    %1135 = vmatpush1.msra.mxu0 %v216
    %1136 = vmatprep.subr.mxu0 0.0
    %1137 = vmatpush1.msra.mxu0 %v217
    %1138 = vmatprep.subr.mxu0 0.0
    %1139 = vmatpush1.msra.mxu0 %v218
    %1140 = vmatprep.mubr.f32.mxu0 %v981
    %1141 = vmatmul.mubr.f32.gmra.mrb[0].mxu0 %v974
    %v1142 = vpop.f32.mrb[0].mxu0
    %v1143 = vadd.f32 %v1073, %v1142
    %v1144 = vpop.f32.mrb[0].mxu0
    %1145 = vdwg.mxu0
    %1146 = vmatprep.subr.mxu0 0.0
    %1147 = vmatpush1.msra.mxu0 %v219
    %1148 = vmatprep.subr.mxu0 0.0
    %1149 = vmatpush1.msra.mxu0 %v220
    %1150 = vmatprep.subr.mxu0 0.0
    %1151 = vmatpush1.msra.mxu0 %v221
    %1152 = vmatprep.subr.mxu0 0.0
    %1153 = vmatpush1.msra.mxu0 %v222
    %1154 = vmatprep.subr.mxu0 0.0
    %1155 = vmatpush1.msra.mxu0 %v223
    %1156 = vmatprep.subr.mxu0 0.0
    %1157 = vmatpush1.msra.mxu0 %v224
    %1158 = vmatprep.subr.mxu0 0.0
    %1159 = vmatpush1.msra.mxu0 %v225
    %1160 = vmatprep.subr.mxu0 0.0
    %1161 = vmatpush1.msra.mxu0 %v226
    %1162 = vmatprep.subr.mxu0 0.0
    %1163 = vmatpush1.msra.mxu0 %v227
    %1164 = vmatprep.subr.mxu0 0.0
    %1165 = vmatpush1.msra.mxu0 %v228
    %1166 = vmatprep.subr.mxu0 0.0
    %1167 = vmatpush1.msra.mxu0 %v229
    %1168 = vmatprep.subr.mxu0 0.0
    %1169 = vmatpush1.msra.mxu0 %v230
    %1170 = vmatprep.subr.mxu0 0.0
    %1171 = vmatpush1.msra.mxu0 %v231
    %1172 = vmatprep.subr.mxu0 0.0
    %1173 = vmatpush1.msra.mxu0 %v232
    %1174 = vmatprep.subr.mxu0 0.0
    %1175 = vmatpush1.msra.mxu0 %v233
    %1176 = vmatprep.subr.mxu0 0.0
    %1177 = vmatpush1.msra.mxu0 %v234
    %1178 = vmatprep.subr.mxu0 0.0
    %1179 = vmatpush1.msra.mxu0 %v235
    %1180 = vmatprep.subr.mxu0 0.0
    %1181 = vmatpush1.msra.mxu0 %v236
    %1182 = vmatprep.subr.mxu0 0.0
    %1183 = vmatpush1.msra.mxu0 %v237
    %1184 = vmatprep.subr.mxu0 0.0
    %1185 = vmatpush1.msra.mxu0 %v238
    %1186 = vmatprep.subr.mxu0 0.0
    %1187 = vmatpush1.msra.mxu0 %v239
    %1188 = vmatprep.subr.mxu0 0.0
    %1189 = vmatpush1.msra.mxu0 %v240
    %1190 = vmatprep.subr.mxu0 0.0
    %1191 = vmatpush1.msra.mxu0 %v241
    %1192 = vmatprep.subr.mxu0 0.0
    %1193 = vmatpush1.msra.mxu0 %v242
    %1194 = vmatprep.subr.mxu0 0.0
    %1195 = vmatpush1.msra.mxu0 %v243
    %1196 = vmatprep.subr.mxu0 0.0
    %1197 = vmatpush1.msra.mxu0 %v244
    %1198 = vmatprep.subr.mxu0 0.0
    %1199 = vmatpush1.msra.mxu0 %v245
    %1200 = vmatprep.subr.mxu0 0.0
    %1201 = vmatpush1.msra.mxu0 %v246
    %1202 = vmatprep.subr.mxu0 0.0
    %1203 = vmatpush1.msra.mxu0 %v247
    %1204 = vmatprep.subr.mxu0 0.0
    %1205 = vmatpush1.msra.mxu0 %v248
    %1206 = vmatprep.subr.mxu0 0.0
    %1207 = vmatpush1.msra.mxu0 %v249
    %1208 = vmatprep.subr.mxu0 0.0
    %1209 = vmatpush1.msra.mxu0 %v250
    %1210 = vmatprep.mubr.f32.mxu0 %v995
    %1211 = vmatmul.mubr.f32.gmra.mrb[0].mxu0 %v988
    %v1212 = vpop.f32.mrb[0].mxu0
    %v1213 = vadd.f32 %v1143, %v1212
    %v1214 = vpop.f32.mrb[0].mxu0
    %1215 = vdwg.mxu0
    %1216 = vmatprep.subr.mxu0 0.0
    %1217 = vmatpush1.msra.mxu0 %v251
    %1218 = vmatprep.subr.mxu0 0.0
    %1219 = vmatpush1.msra.mxu0 %v252
    %1220 = vmatprep.subr.mxu0 0.0
    %1221 = vmatpush1.msra.mxu0 0.0
    %1222 = vmatprep.subr.mxu0 0.0
    %1223 = vmatpush1.msra.mxu0 0.0
    %1224 = vmatprep.subr.mxu0 0.0
    %1225 = vmatpush1.msra.mxu0 0.0
    %1226 = vmatprep.subr.mxu0 0.0
    %1227 = vmatpush1.msra.mxu0 0.0
    %1228 = vmatprep.subr.mxu0 0.0
    %1229 = vmatpush1.msra.mxu0 0.0
    %1230 = vmatprep.subr.mxu0 0.0
    %1231 = vmatpush1.msra.mxu0 0.0
    %1232 = vmatprep.subr.mxu0 0.0
    %1233 = vmatpush1.msra.mxu0 0.0
    %1234 = vmatprep.subr.mxu0 0.0
    %1235 = vmatpush1.msra.mxu0 0.0
    %1236 = vmatprep.subr.mxu0 0.0
    %1237 = vmatpush1.msra.mxu0 0.0
    %1238 = vmatprep.subr.mxu0 0.0
    %1239 = vmatpush1.msra.mxu0 0.0
    %1240 = vmatprep.subr.mxu0 0.0
    %1241 = vmatpush1.msra.mxu0 0.0
    %1242 = vmatprep.subr.mxu0 0.0
    %1243 = vmatpush1.msra.mxu0 0.0
    %1244 = vmatprep.subr.mxu0 0.0
    %1245 = vmatpush1.msra.mxu0 0.0
    %1246 = vmatprep.subr.mxu0 0.0
    %1247 = vmatpush1.msra.mxu0 0.0
    %1248 = vmatprep.subr.mxu0 0.0
    %1249 = vmatpush1.msra.mxu0 0.0
    %1250 = vmatprep.subr.mxu0 0.0
    %1251 = vmatpush1.msra.mxu0 0.0
    %1252 = vmatprep.subr.mxu0 0.0
    %1253 = vmatpush1.msra.mxu0 0.0
    %1254 = vmatprep.subr.mxu0 0.0
    %1255 = vmatpush1.msra.mxu0 0.0
    %1256 = vmatprep.subr.mxu0 0.0
    %1257 = vmatpush1.msra.mxu0 0.0
    %1258 = vmatprep.subr.mxu0 0.0
    %1259 = vmatpush1.msra.mxu0 0.0
    %1260 = vmatprep.subr.mxu0 0.0
    %1261 = vmatpush1.msra.mxu0 0.0
    %1262 = vmatprep.subr.mxu0 0.0
    %1263 = vmatpush1.msra.mxu0 0.0
    %1264 = vmatprep.subr.mxu0 0.0
    %1265 = vmatpush1.msra.mxu0 0.0
    %1266 = vmatprep.subr.mxu0 0.0
    %1267 = vmatpush1.msra.mxu0 0.0
    %1268 = vmatprep.subr.mxu0 0.0
    %1269 = vmatpush1.msra.mxu0 0.0
    %1270 = vmatprep.subr.mxu0 0.0
    %1271 = vmatpush1.msra.mxu0 0.0
    %1272 = vmatprep.subr.mxu0 0.0
    %1273 = vmatpush1.msra.mxu0 0.0
    %1274 = vmatprep.subr.mxu0 0.0
    %1275 = vmatpush1.msra.mxu0 0.0
    %1276 = vmatprep.subr.mxu0 0.0
    %1277 = vmatpush1.msra.mxu0 0.0
    %1278 = vmatprep.subr.mxu0 0.0
    %1279 = vmatpush1.msra.mxu0 0.0
    %1280 = vmatprep.mubr.f32.mxu0 0.0
    %1281 = vmatmul.mubr.f32.gmra.mrb[0].mxu0 %v1004
    %v1282 = vpop.f32.mrb[0].mxu0
    %v1283 = vadd.f32 %v1213, %v1282
    %v1284 = vpop.f32.mrb[0].mxu0
    %1285 = vdwg.mxu0
    %v1286 = vmul.f32 %v1283, 0.010204081
    %v1287 = vld [vmem:[%s6] sm:$0x1]
    %v1288 = vadd.f32 %v1286, 1e-05
    %v1289 = vrsqrt.pop %v1288
    %v1290 = vmul.f32 %v1287, %v1289
    %v1291 = vld [vmem:[%s7] sm:$0x1]
    %v1292 = vmul.f32 %v537, %v1290
    %v1293 = vsub.f32 %v1291, %v1292
    %v1295 = vsel %vm253, %v1290, 0
    %1297 = vmatprep.subr.mxu0 %v539
    %1298 = vmatpush1.msra.mxu0 %v538
    %1299 = vmatprep.subr.mxu0 %v546
    %1300 = vmatpush1.msra.mxu0 %v545
    %1301 = vmatprep.subr.mxu0 0.0
    %1302 = vmatpush1.msra.mxu0 0.0
    %1303 = vmatprep.subr.mxu0 0.0
    %1304 = vmatpush1.msra.mxu0 0.0
    %1305 = vmatprep.subr.mxu0 0.0
    %1306 = vmatpush1.msra.mxu0 0.0
    %1307 = vmatprep.subr.mxu0 0.0
    %1308 = vmatpush1.msra.mxu0 0.0
    %1309 = vmatprep.subr.mxu0 0.0
    %1310 = vmatpush1.msra.mxu0 0.0
    %1311 = vmatprep.subr.mxu0 0.0
    %1312 = vmatpush1.msra.mxu0 0.0
    %1313 = vmatprep.subr.mxu0 0.0
    %1314 = vmatpush1.msra.mxu0 0.0
    %1315 = vmatprep.subr.mxu0 0.0
    %1316 = vmatpush1.msra.mxu0 0.0
    %1317 = vmatprep.subr.mxu0 0.0
    %1318 = vmatpush1.msra.mxu0 0.0
    %1319 = vmatprep.subr.mxu0 0.0
    %1320 = vmatpush1.msra.mxu0 0.0
    %1321 = vmatprep.subr.mxu0 0.0
    %1322 = vmatpush1.msra.mxu0 0.0
    %1323 = vmatprep.subr.mxu0 0.0
    %1324 = vmatpush1.msra.mxu0 0.0
    %1325 = vmatprep.subr.mxu0 0.0
    %1326 = vmatpush1.msra.mxu0 0.0
    %1327 = vmatprep.subr.mxu0 0.0
    %1328 = vmatpush1.msra.mxu0 0.0
    %1329 = vmatprep.subr.mxu0 0.0
    %1330 = vmatpush1.msra.mxu0 0.0
    %1331 = vmatprep.subr.mxu0 0.0
    %1332 = vmatpush1.msra.mxu0 0.0
    %1333 = vmatprep.subr.mxu0 0.0
    %1334 = vmatpush1.msra.mxu0 0.0
    %1335 = vmatprep.subr.mxu0 0.0
    %1336 = vmatpush1.msra.mxu0 0.0
    %1337 = vmatprep.subr.mxu0 0.0
    %1338 = vmatpush1.msra.mxu0 0.0
    %1339 = vmatprep.subr.mxu0 0.0
    %1340 = vmatpush1.msra.mxu0 0.0
    %1341 = vmatprep.subr.mxu0 0.0
    %1342 = vmatpush1.msra.mxu0 0.0
    %1343 = vmatprep.subr.mxu0 0.0
    %1344 = vmatpush1.msra.mxu0 0.0
    %1345 = vmatprep.subr.mxu0 0.0
    %1346 = vmatpush1.msra.mxu0 0.0
    %1347 = vmatprep.subr.mxu0 0.0
    %1348 = vmatpush1.msra.mxu0 0.0
    %1349 = vmatprep.subr.mxu0 0.0
    %1350 = vmatpush1.msra.mxu0 0.0
    %1351 = vmatprep.subr.mxu0 0.0
    %1352 = vmatpush1.msra.mxu0 0.0
    %1353 = vmatprep.subr.mxu0 0.0
    %1354 = vmatpush1.msra.mxu0 0.0
    %1355 = vmatprep.subr.mxu0 0.0
    %1356 = vmatpush1.msra.mxu0 0.0
    %1357 = vmatprep.subr.mxu0 0.0
    %1358 = vmatpush1.msra.mxu0 0.0
    %1359 = vmatprep.subr.mxu0 0.0
    %1360 = vmatpush1.msra.mxu0 0.0
    %1361 = vmatprep.mubr.f32.mxu0 0.0
    %1362 = vmatmul.mubr.f32.gmra.mrb[0].mxu0 %v1295
    %v1363 = vpop.f32.mrb[0].mxu0
    %v1364 = vadd.f32 0.0, %v1363
    %v1365 = vpop.f32.mrb[0].mxu0
    %v1366 = vadd.f32 0.0, %v1365
    %1367 = vdwg.mxu0
    %1368 = vmatprep.subr.mxu0 %v541
    %1369 = vmatpush1.msra.mxu0 %v540
    %1370 = vmatprep.subr.mxu0 %v548
    %1371 = vmatpush1.msra.mxu0 %v547
    %1372 = vmatprep.subr.mxu0 0.0
    %1373 = vmatpush1.msra.mxu0 0.0
    %1374 = vmatprep.subr.mxu0 0.0
    %1375 = vmatpush1.msra.mxu0 0.0
    %1376 = vmatprep.subr.mxu0 0.0
    %1377 = vmatpush1.msra.mxu0 0.0
    %1378 = vmatprep.subr.mxu0 0.0
    %1379 = vmatpush1.msra.mxu0 0.0
    %1380 = vmatprep.subr.mxu0 0.0
    %1381 = vmatpush1.msra.mxu0 0.0
    %1382 = vmatprep.subr.mxu0 0.0
    %1383 = vmatpush1.msra.mxu0 0.0
    %1384 = vmatprep.subr.mxu0 0.0
    %1385 = vmatpush1.msra.mxu0 0.0
    %1386 = vmatprep.subr.mxu0 0.0
    %1387 = vmatpush1.msra.mxu0 0.0
    %1388 = vmatprep.subr.mxu0 0.0
    %1389 = vmatpush1.msra.mxu0 0.0
    %1390 = vmatprep.subr.mxu0 0.0
    %1391 = vmatpush1.msra.mxu0 0.0
    %1392 = vmatprep.subr.mxu0 0.0
    %1393 = vmatpush1.msra.mxu0 0.0
    %1394 = vmatprep.subr.mxu0 0.0
    %1395 = vmatpush1.msra.mxu0 0.0
    %1396 = vmatprep.subr.mxu0 0.0
    %1397 = vmatpush1.msra.mxu0 0.0
    %1398 = vmatprep.subr.mxu0 0.0
    %1399 = vmatpush1.msra.mxu0 0.0
    %1400 = vmatprep.subr.mxu0 0.0
    %1401 = vmatpush1.msra.mxu0 0.0
    %1402 = vmatprep.subr.mxu0 0.0
    %1403 = vmatpush1.msra.mxu0 0.0
    %1404 = vmatprep.subr.mxu0 0.0
    %1405 = vmatpush1.msra.mxu0 0.0
    %1406 = vmatprep.subr.mxu0 0.0
    %1407 = vmatpush1.msra.mxu0 0.0
    %1408 = vmatprep.subr.mxu0 0.0
    %1409 = vmatpush1.msra.mxu0 0.0
    %1410 = vmatprep.subr.mxu0 0.0
    %1411 = vmatpush1.msra.mxu0 0.0
    %1412 = vmatprep.subr.mxu0 0.0
    %1413 = vmatpush1.msra.mxu0 0.0
    %1414 = vmatprep.subr.mxu0 0.0
    %1415 = vmatpush1.msra.mxu0 0.0
    %1416 = vmatprep.subr.mxu0 0.0
    %1417 = vmatpush1.msra.mxu0 0.0
    %1418 = vmatprep.subr.mxu0 0.0
    %1419 = vmatpush1.msra.mxu0 0.0
    %1420 = vmatprep.subr.mxu0 0.0
    %1421 = vmatpush1.msra.mxu0 0.0
    %1422 = vmatprep.subr.mxu0 0.0
    %1423 = vmatpush1.msra.mxu0 0.0
    %1424 = vmatprep.subr.mxu0 0.0
    %1425 = vmatpush1.msra.mxu0 0.0
    %1426 = vmatprep.subr.mxu0 0.0
    %1427 = vmatpush1.msra.mxu0 0.0
    %1428 = vmatprep.subr.mxu0 0.0
    %1429 = vmatpush1.msra.mxu0 0.0
    %1430 = vmatprep.subr.mxu0 0.0
    %1431 = vmatpush1.msra.mxu0 0.0
    %1432 = vmatprep.mubr.f32.mxu0 0.0
    %1433 = vmatmul.mubr.f32.gmra.mrb[0].mxu0 %v1295
    %v1434 = vpop.f32.mrb[0].mxu0
    %v1435 = vadd.f32 0.0, %v1434
    %v1436 = vpop.f32.mrb[0].mxu0
    %v1437 = vadd.f32 0.0, %v1436
    %1438 = vdwg.mxu0
    %1439 = vmatprep.subr.mxu0 %v543
    %1440 = vmatpush1.msra.mxu0 %v542
    %1441 = vmatprep.subr.mxu0 %v550
    %1442 = vmatpush1.msra.mxu0 %v549
    %1443 = vmatprep.subr.mxu0 0.0
    %1444 = vmatpush1.msra.mxu0 0.0
    %1445 = vmatprep.subr.mxu0 0.0
    %1446 = vmatpush1.msra.mxu0 0.0
    %1447 = vmatprep.subr.mxu0 0.0
    %1448 = vmatpush1.msra.mxu0 0.0
    %1449 = vmatprep.subr.mxu0 0.0
    %1450 = vmatpush1.msra.mxu0 0.0
    %1451 = vmatprep.subr.mxu0 0.0
    %1452 = vmatpush1.msra.mxu0 0.0
    %1453 = vmatprep.subr.mxu0 0.0
    %1454 = vmatpush1.msra.mxu0 0.0
    %1455 = vmatprep.subr.mxu0 0.0
    %1456 = vmatpush1.msra.mxu0 0.0
    %1457 = vmatprep.subr.mxu0 0.0
    %1458 = vmatpush1.msra.mxu0 0.0
    %1459 = vmatprep.subr.mxu0 0.0
    %1460 = vmatpush1.msra.mxu0 0.0
    %1461 = vmatprep.subr.mxu0 0.0
    %1462 = vmatpush1.msra.mxu0 0.0
    %1463 = vmatprep.subr.mxu0 0.0
    %1464 = vmatpush1.msra.mxu0 0.0
    %1465 = vmatprep.subr.mxu0 0.0
    %1466 = vmatpush1.msra.mxu0 0.0
    %1467 = vmatprep.subr.mxu0 0.0
    %1468 = vmatpush1.msra.mxu0 0.0
    %1469 = vmatprep.subr.mxu0 0.0
    %1470 = vmatpush1.msra.mxu0 0.0
    %1471 = vmatprep.subr.mxu0 0.0
    %1472 = vmatpush1.msra.mxu0 0.0
    %1473 = vmatprep.subr.mxu0 0.0
    %1474 = vmatpush1.msra.mxu0 0.0
    %1475 = vmatprep.subr.mxu0 0.0
    %1476 = vmatpush1.msra.mxu0 0.0
    %1477 = vmatprep.subr.mxu0 0.0
    %1478 = vmatpush1.msra.mxu0 0.0
    %1479 = vmatprep.subr.mxu0 0.0
    %1480 = vmatpush1.msra.mxu0 0.0
    %1481 = vmatprep.subr.mxu0 0.0
    %1482 = vmatpush1.msra.mxu0 0.0
    %1483 = vmatprep.subr.mxu0 0.0
    %1484 = vmatpush1.msra.mxu0 0.0
    %1485 = vmatprep.subr.mxu0 0.0
    %1486 = vmatpush1.msra.mxu0 0.0
    %1487 = vmatprep.subr.mxu0 0.0
    %1488 = vmatpush1.msra.mxu0 0.0
    %1489 = vmatprep.subr.mxu0 0.0
    %1490 = vmatpush1.msra.mxu0 0.0
    %1491 = vmatprep.subr.mxu0 0.0
    %1492 = vmatpush1.msra.mxu0 0.0
    %1493 = vmatprep.subr.mxu0 0.0
    %1494 = vmatpush1.msra.mxu0 0.0
    %1495 = vmatprep.subr.mxu0 0.0
    %1496 = vmatpush1.msra.mxu0 0.0
    %1497 = vmatprep.subr.mxu0 0.0
    %1498 = vmatpush1.msra.mxu0 0.0
    %1499 = vmatprep.subr.mxu0 0.0
    %1500 = vmatpush1.msra.mxu0 0.0
    %1501 = vmatprep.subr.mxu0 0.0
    %1502 = vmatpush1.msra.mxu0 0.0
    %1503 = vmatprep.mubr.f32.mxu0 0.0
    %1504 = vmatmul.mubr.f32.gmra.mrb[0].mxu0 %v1295
    %v1505 = vpop.f32.mrb[0].mxu0
    %v1506 = vadd.f32 0.0, %v1505
    %v1507 = vpop.f32.mrb[0].mxu0
    %v1508 = vadd.f32 0.0, %v1507
    %1509 = vdwg.mxu0
    %1510 = vmatprep.subr.mxu0 0.0
    %1511 = vmatpush1.msra.mxu0 %v544
    %1512 = vmatprep.subr.mxu0 0.0
    %1513 = vmatpush1.msra.mxu0 %v551
    %1514 = vmatprep.subr.mxu0 0.0
    %1515 = vmatpush1.msra.mxu0 0.0
    %1516 = vmatprep.subr.mxu0 0.0
    %1517 = vmatpush1.msra.mxu0 0.0
    %1518 = vmatprep.subr.mxu0 0.0
    %1519 = vmatpush1.msra.mxu0 0.0
    %1520 = vmatprep.subr.mxu0 0.0
    %1521 = vmatpush1.msra.mxu0 0.0
    %1522 = vmatprep.subr.mxu0 0.0
    %1523 = vmatpush1.msra.mxu0 0.0
    %1524 = vmatprep.subr.mxu0 0.0
    %1525 = vmatpush1.msra.mxu0 0.0
    %1526 = vmatprep.subr.mxu0 0.0
    %1527 = vmatpush1.msra.mxu0 0.0
    %1528 = vmatprep.subr.mxu0 0.0
    %1529 = vmatpush1.msra.mxu0 0.0
    %1530 = vmatprep.subr.mxu0 0.0
    %1531 = vmatpush1.msra.mxu0 0.0
    %1532 = vmatprep.subr.mxu0 0.0
    %1533 = vmatpush1.msra.mxu0 0.0
    %1534 = vmatprep.subr.mxu0 0.0
    %1535 = vmatpush1.msra.mxu0 0.0
    %1536 = vmatprep.subr.mxu0 0.0
    %1537 = vmatpush1.msra.mxu0 0.0
    %1538 = vmatprep.subr.mxu0 0.0
    %1539 = vmatpush1.msra.mxu0 0.0
    %1540 = vmatprep.subr.mxu0 0.0
    %1541 = vmatpush1.msra.mxu0 0.0
    %1542 = vmatprep.subr.mxu0 0.0
    %1543 = vmatpush1.msra.mxu0 0.0
    %1544 = vmatprep.subr.mxu0 0.0
    %1545 = vmatpush1.msra.mxu0 0.0
    %1546 = vmatprep.subr.mxu0 0.0
    %1547 = vmatpush1.msra.mxu0 0.0
    %1548 = vmatprep.subr.mxu0 0.0
    %1549 = vmatpush1.msra.mxu0 0.0
    %1550 = vmatprep.subr.mxu0 0.0
    %1551 = vmatpush1.msra.mxu0 0.0
    %1552 = vmatprep.subr.mxu0 0.0
    %1553 = vmatpush1.msra.mxu0 0.0
    %1554 = vmatprep.subr.mxu0 0.0
    %1555 = vmatpush1.msra.mxu0 0.0
    %1556 = vmatprep.subr.mxu0 0.0
    %1557 = vmatpush1.msra.mxu0 0.0
    %1558 = vmatprep.subr.mxu0 0.0
    %1559 = vmatpush1.msra.mxu0 0.0
    %1560 = vmatprep.subr.mxu0 0.0
    %1561 = vmatpush1.msra.mxu0 0.0
    %1562 = vmatprep.subr.mxu0 0.0
    %1563 = vmatpush1.msra.mxu0 0.0
    %1564 = vmatprep.subr.mxu0 0.0
    %1565 = vmatpush1.msra.mxu0 0.0
    %1566 = vmatprep.subr.mxu0 0.0
    %1567 = vmatpush1.msra.mxu0 0.0
    %1568 = vmatprep.subr.mxu0 0.0
    %1569 = vmatpush1.msra.mxu0 0.0
    %1570 = vmatprep.subr.mxu0 0.0
    %1571 = vmatpush1.msra.mxu0 0.0
    %1572 = vmatprep.subr.mxu0 0.0
    %1573 = vmatpush1.msra.mxu0 0.0
    %1574 = vmatprep.mubr.f32.mxu0 0.0
    %1575 = vmatmul.mubr.f32.gmra.mrb[0].mxu0 %v1295
    %v1576 = vpop.f32.mrb[0].mxu0
    %v1577 = vadd.f32 0.0, %v1576
    %v1578 = vpop.f32.mrb[0].mxu0
    %1579 = vdwg.mxu0
    %v1581 = vsel %vm253, %v1293, 0
    %1583 = vmatprep.subr.mxu0 %v539
    %1584 = vmatpush1.msra.mxu0 %v538
    %1585 = vmatprep.subr.mxu0 %v546
    %1586 = vmatpush1.msra.mxu0 %v545
    %1587 = vmatprep.subr.mxu0 0.0
    %1588 = vmatpush1.msra.mxu0 0.0
    %1589 = vmatprep.subr.mxu0 0.0
    %1590 = vmatpush1.msra.mxu0 0.0
    %1591 = vmatprep.subr.mxu0 0.0
    %1592 = vmatpush1.msra.mxu0 0.0
    %1593 = vmatprep.subr.mxu0 0.0
    %1594 = vmatpush1.msra.mxu0 0.0
    %1595 = vmatprep.subr.mxu0 0.0
    %1596 = vmatpush1.msra.mxu0 0.0
    %1597 = vmatprep.subr.mxu0 0.0
    %1598 = vmatpush1.msra.mxu0 0.0
    %1599 = vmatprep.subr.mxu0 0.0
    %1600 = vmatpush1.msra.mxu0 0.0
    %1601 = vmatprep.subr.mxu0 0.0
    %1602 = vmatpush1.msra.mxu0 0.0
    %1603 = vmatprep.subr.mxu0 0.0
    %1604 = vmatpush1.msra.mxu0 0.0
    %1605 = vmatprep.subr.mxu0 0.0
    %1606 = vmatpush1.msra.mxu0 0.0
    %1607 = vmatprep.subr.mxu0 0.0
    %1608 = vmatpush1.msra.mxu0 0.0
    %1609 = vmatprep.subr.mxu0 0.0
    %1610 = vmatpush1.msra.mxu0 0.0
    %1611 = vmatprep.subr.mxu0 0.0
    %1612 = vmatpush1.msra.mxu0 0.0
    %1613 = vmatprep.subr.mxu0 0.0
    %1614 = vmatpush1.msra.mxu0 0.0
    %1615 = vmatprep.subr.mxu0 0.0
    %1616 = vmatpush1.msra.mxu0 0.0
    %1617 = vmatprep.subr.mxu0 0.0
    %1618 = vmatpush1.msra.mxu0 0.0
    %1619 = vmatprep.subr.mxu0 0.0
    %1620 = vmatpush1.msra.mxu0 0.0
    %1621 = vmatprep.subr.mxu0 0.0
    %1622 = vmatpush1.msra.mxu0 0.0
    %1623 = vmatprep.subr.mxu0 0.0
    %1624 = vmatpush1.msra.mxu0 0.0
    %1625 = vmatprep.subr.mxu0 0.0
    %1626 = vmatpush1.msra.mxu0 0.0
    %1627 = vmatprep.subr.mxu0 0.0
    %1628 = vmatpush1.msra.mxu0 0.0
    %1629 = vmatprep.subr.mxu0 0.0
    %1630 = vmatpush1.msra.mxu0 0.0
    %1631 = vmatprep.subr.mxu0 0.0
    %1632 = vmatpush1.msra.mxu0 0.0
    %1633 = vmatprep.subr.mxu0 0.0
    %1634 = vmatpush1.msra.mxu0 0.0
    %1635 = vmatprep.subr.mxu0 0.0
    %1636 = vmatpush1.msra.mxu0 0.0
    %1637 = vmatprep.subr.mxu0 0.0
    %1638 = vmatpush1.msra.mxu0 0.0
    %1639 = vmatprep.subr.mxu0 0.0
    %1640 = vmatpush1.msra.mxu0 0.0
    %1641 = vmatprep.subr.mxu0 0.0
    %1642 = vmatpush1.msra.mxu0 0.0
    %1643 = vmatprep.subr.mxu0 0.0
    %1644 = vmatpush1.msra.mxu0 0.0
    %1645 = vmatprep.subr.mxu0 0.0
    %1646 = vmatpush1.msra.mxu0 0.0
    %1647 = vmatprep.mubr.f32.mxu0 0.0
    %1648 = vmatmul.mubr.f32.gmra.mrb[0].mxu0 %v1581
    %v1649 = vpop.f32.mrb[0].mxu0
    %v1650 = vadd.f32 0.0, %v1649
    %v1651 = vpop.f32.mrb[0].mxu0
    %v1652 = vadd.f32 0.0, %v1651
    %1653 = vdwg.mxu0
    %1654 = vmatprep.subr.mxu0 %v541
    %1655 = vmatpush1.msra.mxu0 %v540
    %1656 = vmatprep.subr.mxu0 %v548
    %1657 = vmatpush1.msra.mxu0 %v547
    %1658 = vmatprep.subr.mxu0 0.0
    %1659 = vmatpush1.msra.mxu0 0.0
    %1660 = vmatprep.subr.mxu0 0.0
    %1661 = vmatpush1.msra.mxu0 0.0
    %1662 = vmatprep.subr.mxu0 0.0
    %1663 = vmatpush1.msra.mxu0 0.0
    %1664 = vmatprep.subr.mxu0 0.0
    %1665 = vmatpush1.msra.mxu0 0.0
    %1666 = vmatprep.subr.mxu0 0.0
    %1667 = vmatpush1.msra.mxu0 0.0
    %1668 = vmatprep.subr.mxu0 0.0
    %1669 = vmatpush1.msra.mxu0 0.0
    %1670 = vmatprep.subr.mxu0 0.0
    %1671 = vmatpush1.msra.mxu0 0.0
    %1672 = vmatprep.subr.mxu0 0.0
    %1673 = vmatpush1.msra.mxu0 0.0
    %1674 = vmatprep.subr.mxu0 0.0
    %1675 = vmatpush1.msra.mxu0 0.0
    %1676 = vmatprep.subr.mxu0 0.0
    %1677 = vmatpush1.msra.mxu0 0.0
    %1678 = vmatprep.subr.mxu0 0.0
    %1679 = vmatpush1.msra.mxu0 0.0
    %1680 = vmatprep.subr.mxu0 0.0
    %1681 = vmatpush1.msra.mxu0 0.0
    %1682 = vmatprep.subr.mxu0 0.0
    %1683 = vmatpush1.msra.mxu0 0.0
    %1684 = vmatprep.subr.mxu0 0.0
    %1685 = vmatpush1.msra.mxu0 0.0
    %1686 = vmatprep.subr.mxu0 0.0
    %1687 = vmatpush1.msra.mxu0 0.0
    %1688 = vmatprep.subr.mxu0 0.0
    %1689 = vmatpush1.msra.mxu0 0.0
    %1690 = vmatprep.subr.mxu0 0.0
    %1691 = vmatpush1.msra.mxu0 0.0
    %1692 = vmatprep.subr.mxu0 0.0
    %1693 = vmatpush1.msra.mxu0 0.0
    %1694 = vmatprep.subr.mxu0 0.0
    %1695 = vmatpush1.msra.mxu0 0.0
    %1696 = vmatprep.subr.mxu0 0.0
    %1697 = vmatpush1.msra.mxu0 0.0
    %1698 = vmatprep.subr.mxu0 0.0
    %1699 = vmatpush1.msra.mxu0 0.0
    %1700 = vmatprep.subr.mxu0 0.0
    %1701 = vmatpush1.msra.mxu0 0.0
    %1702 = vmatprep.subr.mxu0 0.0
    %1703 = vmatpush1.msra.mxu0 0.0
    %1704 = vmatprep.subr.mxu0 0.0
    %1705 = vmatpush1.msra.mxu0 0.0
    %1706 = vmatprep.subr.mxu0 0.0
    %1707 = vmatpush1.msra.mxu0 0.0
    %1708 = vmatprep.subr.mxu0 0.0
    %1709 = vmatpush1.msra.mxu0 0.0
    %1710 = vmatprep.subr.mxu0 0.0
    %1711 = vmatpush1.msra.mxu0 0.0
    %1712 = vmatprep.subr.mxu0 0.0
    %1713 = vmatpush1.msra.mxu0 0.0
    %1714 = vmatprep.subr.mxu0 0.0
    %1715 = vmatpush1.msra.mxu0 0.0
    %1716 = vmatprep.subr.mxu0 0.0
    %1717 = vmatpush1.msra.mxu0 0.0
    %1718 = vmatprep.mubr.f32.mxu0 0.0
    %1719 = vmatmul.mubr.f32.gmra.mrb[0].mxu0 %v1581
    %v1720 = vpop.f32.mrb[0].mxu0
    %v1721 = vadd.f32 0.0, %v1720
    %v1722 = vpop.f32.mrb[0].mxu0
    %v1723 = vadd.f32 0.0, %v1722
    %1724 = vdwg.mxu0
    %1725 = vmatprep.subr.mxu0 %v543
    %1726 = vmatpush1.msra.mxu0 %v542
    %1727 = vmatprep.subr.mxu0 %v550
    %1728 = vmatpush1.msra.mxu0 %v549
    %1729 = vmatprep.subr.mxu0 0.0
    %1730 = vmatpush1.msra.mxu0 0.0
    %1731 = vmatprep.subr.mxu0 0.0
    %1732 = vmatpush1.msra.mxu0 0.0
    %1733 = vmatprep.subr.mxu0 0.0
    %1734 = vmatpush1.msra.mxu0 0.0
    %1735 = vmatprep.subr.mxu0 0.0
    %1736 = vmatpush1.msra.mxu0 0.0
    %1737 = vmatprep.subr.mxu0 0.0
    %1738 = vmatpush1.msra.mxu0 0.0
    %1739 = vmatprep.subr.mxu0 0.0
    %1740 = vmatpush1.msra.mxu0 0.0
    %1741 = vmatprep.subr.mxu0 0.0
    %1742 = vmatpush1.msra.mxu0 0.0
    %1743 = vmatprep.subr.mxu0 0.0
    %1744 = vmatpush1.msra.mxu0 0.0
    %1745 = vmatprep.subr.mxu0 0.0
    %1746 = vmatpush1.msra.mxu0 0.0
    %1747 = vmatprep.subr.mxu0 0.0
    %1748 = vmatpush1.msra.mxu0 0.0
    %1749 = vmatprep.subr.mxu0 0.0
    %1750 = vmatpush1.msra.mxu0 0.0
    %1751 = vmatprep.subr.mxu0 0.0
    %1752 = vmatpush1.msra.mxu0 0.0
    %1753 = vmatprep.subr.mxu0 0.0
    %1754 = vmatpush1.msra.mxu0 0.0
    %1755 = vmatprep.subr.mxu0 0.0
    %1756 = vmatpush1.msra.mxu0 0.0
    %1757 = vmatprep.subr.mxu0 0.0
    %1758 = vmatpush1.msra.mxu0 0.0
    %1759 = vmatprep.subr.mxu0 0.0
    %1760 = vmatpush1.msra.mxu0 0.0
    %1761 = vmatprep.subr.mxu0 0.0
    %1762 = vmatpush1.msra.mxu0 0.0
    %1763 = vmatprep.subr.mxu0 0.0
    %1764 = vmatpush1.msra.mxu0 0.0
    %1765 = vmatprep.subr.mxu0 0.0
    %1766 = vmatpush1.msra.mxu0 0.0
    %1767 = vmatprep.subr.mxu0 0.0
    %1768 = vmatpush1.msra.mxu0 0.0
    %1769 = vmatprep.subr.mxu0 0.0
    %1770 = vmatpush1.msra.mxu0 0.0
    %1771 = vmatprep.subr.mxu0 0.0
    %1772 = vmatpush1.msra.mxu0 0.0
    %1773 = vmatprep.subr.mxu0 0.0
    %1774 = vmatpush1.msra.mxu0 0.0
    %1775 = vmatprep.subr.mxu0 0.0
    %1776 = vmatpush1.msra.mxu0 0.0
    %1777 = vmatprep.subr.mxu0 0.0
    %1778 = vmatpush1.msra.mxu0 0.0
    %1779 = vmatprep.subr.mxu0 0.0
    %1780 = vmatpush1.msra.mxu0 0.0
    %1781 = vmatprep.subr.mxu0 0.0
    %1782 = vmatpush1.msra.mxu0 0.0
    %1783 = vmatprep.subr.mxu0 0.0
    %1784 = vmatpush1.msra.mxu0 0.0
    %1785 = vmatprep.subr.mxu0 0.0
    %1786 = vmatpush1.msra.mxu0 0.0
    %1787 = vmatprep.subr.mxu0 0.0
    %1788 = vmatpush1.msra.mxu0 0.0
    %1789 = vmatprep.mubr.f32.mxu0 0.0
    %1790 = vmatmul.mubr.f32.gmra.mrb[0].mxu0 %v1581
    %v1791 = vpop.f32.mrb[0].mxu0
    %v1792 = vadd.f32 0.0, %v1791
    %v1793 = vpop.f32.mrb[0].mxu0
    %v1794 = vadd.f32 0.0, %v1793
    %1795 = vdwg.mxu0
    %1796 = vmatprep.subr.mxu0 0.0
    %1797 = vmatpush1.msra.mxu0 %v544
    %1798 = vmatprep.subr.mxu0 0.0
    %1799 = vmatpush1.msra.mxu0 %v551
    %1800 = vmatprep.subr.mxu0 0.0
    %1801 = vmatpush1.msra.mxu0 0.0
    %1802 = vmatprep.subr.mxu0 0.0
    %1803 = vmatpush1.msra.mxu0 0.0
    %1804 = vmatprep.subr.mxu0 0.0
    %1805 = vmatpush1.msra.mxu0 0.0
    %1806 = vmatprep.subr.mxu0 0.0
    %1807 = vmatpush1.msra.mxu0 0.0
    %1808 = vmatprep.subr.mxu0 0.0
    %1809 = vmatpush1.msra.mxu0 0.0
    %1810 = vmatprep.subr.mxu0 0.0
    %1811 = vmatpush1.msra.mxu0 0.0
    %1812 = vmatprep.subr.mxu0 0.0
    %1813 = vmatpush1.msra.mxu0 0.0
    %1814 = vmatprep.subr.mxu0 0.0
    %1815 = vmatpush1.msra.mxu0 0.0
    %1816 = vmatprep.subr.mxu0 0.0
    %1817 = vmatpush1.msra.mxu0 0.0
    %1818 = vmatprep.subr.mxu0 0.0
    %1819 = vmatpush1.msra.mxu0 0.0
    %1820 = vmatprep.subr.mxu0 0.0
    %1821 = vmatpush1.msra.mxu0 0.0
    %1822 = vmatprep.subr.mxu0 0.0
    %1823 = vmatpush1.msra.mxu0 0.0
    %1824 = vmatprep.subr.mxu0 0.0
    %1825 = vmatpush1.msra.mxu0 0.0
    %1826 = vmatprep.subr.mxu0 0.0
    %1827 = vmatpush1.msra.mxu0 0.0
    %1828 = vmatprep.subr.mxu0 0.0
    %1829 = vmatpush1.msra.mxu0 0.0
    %1830 = vmatprep.subr.mxu0 0.0
    %1831 = vmatpush1.msra.mxu0 0.0
    %1832 = vmatprep.subr.mxu0 0.0
    %1833 = vmatpush1.msra.mxu0 0.0
    %1834 = vmatprep.subr.mxu0 0.0
    %1835 = vmatpush1.msra.mxu0 0.0
    %1836 = vmatprep.subr.mxu0 0.0
    %1837 = vmatpush1.msra.mxu0 0.0
    %1838 = vmatprep.subr.mxu0 0.0
    %1839 = vmatpush1.msra.mxu0 0.0
    %1840 = vmatprep.subr.mxu0 0.0
    %1841 = vmatpush1.msra.mxu0 0.0
    %1842 = vmatprep.subr.mxu0 0.0
    %1843 = vmatpush1.msra.mxu0 0.0
    %1844 = vmatprep.subr.mxu0 0.0
    %1845 = vmatpush1.msra.mxu0 0.0
    %1846 = vmatprep.subr.mxu0 0.0
    %1847 = vmatpush1.msra.mxu0 0.0
    %1848 = vmatprep.subr.mxu0 0.0
    %1849 = vmatpush1.msra.mxu0 0.0
    %1850 = vmatprep.subr.mxu0 0.0
    %1851 = vmatpush1.msra.mxu0 0.0
    %1852 = vmatprep.subr.mxu0 0.0
    %1853 = vmatpush1.msra.mxu0 0.0
    %1854 = vmatprep.subr.mxu0 0.0
    %1855 = vmatpush1.msra.mxu0 0.0
    %1856 = vmatprep.subr.mxu0 0.0
    %1857 = vmatpush1.msra.mxu0 0.0
    %1858 = vmatprep.subr.mxu0 0.0
    %1859 = vmatpush1.msra.mxu0 0.0
    %1860 = vmatprep.mubr.f32.mxu0 0.0
    %1861 = vmatmul.mubr.f32.gmra.mrb[0].mxu0 %v1581
    %v1862 = vpop.f32.mrb[0].mxu0
    %v1863 = vadd.f32 0.0, %v1862
    %v1864 = vpop.f32.mrb[0].mxu0
    %1865 = vdwg.mxu0
    %v1866 = vlaneseq
    %v1867 = vshrl.u32 %v1866, 7
    %v1868 = vsub.s32 0, %v1867
    %v1869 = vrot.slane %v1364, %v1868
    %v1870 = vlaneseq
    %v1871 = vshrl.u32 %v1870, 7
    %v1872 = vsub.s32 0, %v1871
    %v1873 = vrot.slane %v1366, %v1872
    %v1874 = vlaneseq
    %v1875 = vshrl.u32 %v1874, 7
    %v1876 = vsub.s32 0, %v1875
    %v1877 = vrot.slane %v1435, %v1876
    %v1878 = vlaneseq
    %v1879 = vshrl.u32 %v1878, 7
    %v1880 = vsub.s32 0, %v1879
    %v1881 = vrot.slane %v1437, %v1880
    %v1882 = vlaneseq
    %v1883 = vshrl.u32 %v1882, 7
    %v1884 = vsub.s32 0, %v1883
    %v1885 = vrot.slane %v1506, %v1884
    %v1886 = vlaneseq
    %v1887 = vshrl.u32 %v1886, 7
    %v1888 = vsub.s32 0, %v1887
    %v1889 = vrot.slane %v1508, %v1888
    %v1890 = vlaneseq
    %v1891 = vshrl.u32 %v1890, 7
    %v1892 = vsub.s32 0, %v1891
    %v1893 = vrot.slane %v1577, %v1892
    %v1901 = vcombine.low %v1869, %v1873
    %v1902 = vcombine.low %v1877, %v1881
    %v1904 = vunpack.c.l.s4 1983009808
    %v1905 = vunpack.c.0.s8 %v1904
    %v1906 = vlaneseq
    %v1907 = vshrl.u32 %v1906, 7
    %v1908 = vsub.s32 %v1905, %v1907
    %v1909 = vrot.slane %v1901, %v1908
    %v1911 = vunpack.c.l.s4 1983009808
    %v1912 = vunpack.c.0.s8 %v1911
    %v1913 = vlaneseq
    %v1914 = vshrl.u32 %v1913, 7
    %v1915 = vsub.s32 %v1912, %v1914
    %v1916 = vrot.slane %v1902, %v1915
    %v1917 = vcombine.low %v1909, %v1916
    %v1918 = vcombine.low %v1885, %v1889
    %v1920 = vunpack.c.l.s4 1983009808
    %v1921 = vunpack.c.0.s8 %v1920
    %v1922 = vlaneseq
    %v1923 = vshrl.u32 %v1922, 7
    %v1924 = vsub.s32 %v1921, %v1923
    %v1925 = vrot.slane %v1918, %v1924
    %v1927 = vunpack.c.l.s4 1983009808
    %v1928 = vunpack.c.0.s8 %v1927
    %v1929 = vlaneseq
    %v1930 = vshrl.u32 %v1929, 7
    %v1931 = vsub.s32 %v1928, %v1930
    %v1932 = vrot.slane %v1893, %v1931
    %v1933 = vcombine.low %v1925, %v1932
    %v1936 = vmul.f32 %v60, %v1917
    %v1937 = vmul.f32 %v61, %v1933
    %v1938 = vlaneseq
    %v1939 = vshrl.u32 %v1938, 7
    %v1940 = vsub.s32 0, %v1939
    %v1941 = vrot.slane %v1650, %v1940
    %v1942 = vlaneseq
    %v1943 = vshrl.u32 %v1942, 7
    %v1944 = vsub.s32 0, %v1943
    %v1945 = vrot.slane %v1652, %v1944
    %v1946 = vlaneseq
    %v1947 = vshrl.u32 %v1946, 7
    %v1948 = vsub.s32 0, %v1947
    %v1949 = vrot.slane %v1721, %v1948
    %v1950 = vlaneseq
    %v1951 = vshrl.u32 %v1950, 7
    %v1952 = vsub.s32 0, %v1951
    %v1953 = vrot.slane %v1723, %v1952
    %v1954 = vlaneseq
    %v1955 = vshrl.u32 %v1954, 7
    %v1956 = vsub.s32 0, %v1955
    %v1957 = vrot.slane %v1792, %v1956
    %v1958 = vlaneseq
    %v1959 = vshrl.u32 %v1958, 7
    %v1960 = vsub.s32 0, %v1959
    %v1961 = vrot.slane %v1794, %v1960
    %v1962 = vlaneseq
    %v1963 = vshrl.u32 %v1962, 7
    %v1964 = vsub.s32 0, %v1963
    %v1965 = vrot.slane %v1863, %v1964
    %v1973 = vcombine.low %v1941, %v1945
    %v1974 = vcombine.low %v1949, %v1953
    %v1976 = vunpack.c.l.s4 1983009808
    %v1977 = vunpack.c.0.s8 %v1976
    %v1978 = vlaneseq
    %v1979 = vshrl.u32 %v1978, 7
    %v1980 = vsub.s32 %v1977, %v1979
    %v1981 = vrot.slane %v1973, %v1980
    %v1983 = vunpack.c.l.s4 1983009808
    %v1984 = vunpack.c.0.s8 %v1983
    %v1985 = vlaneseq
    %v1986 = vshrl.u32 %v1985, 7
    %v1987 = vsub.s32 %v1984, %v1986
    %v1988 = vrot.slane %v1974, %v1987
    %v1989 = vcombine.low %v1981, %v1988
    %v1990 = vcombine.low %v1957, %v1961
    %v1992 = vunpack.c.l.s4 1983009808
    %v1993 = vunpack.c.0.s8 %v1992
    %v1994 = vlaneseq
    %v1995 = vshrl.u32 %v1994, 7
    %v1996 = vsub.s32 %v1993, %v1995
    %v1997 = vrot.slane %v1990, %v1996
    %v1999 = vunpack.c.l.s4 1983009808
    %v2000 = vunpack.c.0.s8 %v1999
    %v2001 = vlaneseq
    %v2002 = vshrl.u32 %v2001, 7
    %v2003 = vsub.s32 %v2000, %v2002
    %v2004 = vrot.slane %v1965, %v2003
    %v2005 = vcombine.low %v1997, %v2004
    %v2008 = vadd.f32 %v1936, %v1989
    %v2009 = vadd.f32 %v1937, %v2005
    %vm2010 = vcmp.ge.f32.partialorder %v2008, 0.0
    %vm2011 = vcmp.ge.f32.partialorder %v2009, 0.0
    %v2012 = vmul.f32 %v2008, 0.2
    %v2013 = vmul.f32 %v2009, 0.2
    %v2014 = vsel %vm2010, %v2008, %v2012
    %v2015 = vsel %vm2011, %v2009, %v2013
    %v2016 = vld [vmem:[%s1] sm:$0x3]
    %v2017 = vlaneseq
    %v2018 = vand.u32 %v2017, 127
    %2019 = vset.pattern.permute.xlu0 0
    %2020 = vperm.xlu0 %2019, %v2016
    %v2021 = vpop.permute.xlu0 %2020
    %vm2022 = vcmp.eq.s32.totalorder %v2021, %v2018
    %v2023 = vsel %vm2022, 1, 0
    %v2024 = vcvt.s32.f32 %v2023
    %v2025 = vld [vmem:[%s2] sm:$0xff]
    %v2026 = vld [vmem:[%s2 + $0x8] sm:$0xff]
    %v2027 = vld [vmem:[%s2 + $0x10] sm:$0xff]
    %v2028 = vld [vmem:[%s2 + $0x18] sm:$0xff]
    %v2029 = vld [vmem:[%s2 + $0x20] sm:$0xff]
    %v2030 = vld [vmem:[%s2 + $0x28] sm:$0xff]
    %v2031 = vld [vmem:[%s2 + $0x30] sm:$0xff]
    %v2032 = vld [vmem:[%s2 + $0x38] sm:$0xf]
    %v2033 = vld [vmem:[%s2 + $0x40] sm:$0xf]
    %v2034 = vld [vmem:[%s2 + $0x48] sm:$0xf]
    %v2035 = vld [vmem:[%s2 + $0x50] sm:$0xf]
    %v2036 = vld [vmem:[%s2 + $0x58] sm:$0xf]
    %v2037 = vld [vmem:[%s2 + $0x60] sm:$0xf]
    %v2038 = vld [vmem:[%s2 + $0x68] sm:$0xf]
    %v2039 = vld [vmem:[%s3] sm:$0x7f]
    %v2041 = vlaneseq
    %v2042 = vshrl.u32 %v2041, 7
    %v2043 = vsub.s32 0, %v2042
    %v2044 = vrot.slane %v2039, %v2043
    %v2045 = vlaneseq
    %v2046 = vshrl.u32 %v2045, 7
    %v2047 = vsub.s32 1, %v2046
    %v2048 = vrot.slane %v2039, %v2047
    %v2049 = vlaneseq
    %v2050 = vshrl.u32 %v2049, 7
    %v2051 = vsub.s32 2, %v2050
    %v2052 = vrot.slane %v2039, %v2051
    %v2053 = vlaneseq
    %v2054 = vshrl.u32 %v2053, 7
    %v2055 = vsub.s32 3, %v2054
    %v2056 = vrot.slane %v2039, %v2055
    %v2057 = vlaneseq
    %v2058 = vshrl.u32 %v2057, 7
    %v2059 = vsub.s32 4, %v2058
    %v2060 = vrot.slane %v2039, %v2059
    %v2061 = vlaneseq
    %v2062 = vshrl.u32 %v2061, 7
    %v2063 = vsub.s32 5, %v2062
    %v2064 = vrot.slane %v2039, %v2063
    %v2065 = vlaneseq
    %v2066 = vshrl.u32 %v2065, 7
    %v2067 = vsub.s32 6, %v2066
    %v2068 = vrot.slane %v2039, %v2067
    %vm2076 = vcmask 97280
    %v2078 = vsel %vm2076, %v2024, 0
    %vm2080 = vcmask 1043456
    %v2082 = vsel %vm2080, %v2032, 0
    %v2085 = vsel %vm2080, %v2033, 0
    %v2088 = vsel %vm2080, %v2034, 0
    %v2091 = vsel %vm2080, %v2035, 0
    %v2094 = vsel %vm2080, %v2036, 0
    %v2097 = vsel %vm2080, %v2037, 0
    %v2100 = vsel %vm2080, %v2038, 0
    %2102 = vmatprep.subr.mxu0 %v2026
    %2103 = vmatpush1.msra.mxu0 %v2025
    %2104 = vmatprep.subr.mxu0 %v2085
    %2105 = vmatpush1.msra.mxu0 %v2082
    %2106 = vmatprep.subr.mxu0 0.0
    %2107 = vmatpush1.msra.mxu0 0.0
    %2108 = vmatprep.subr.mxu0 0.0
    %2109 = vmatpush1.msra.mxu0 0.0
    %2110 = vmatprep.subr.mxu0 0.0
    %2111 = vmatpush1.msra.mxu0 0.0
    %2112 = vmatprep.subr.mxu0 0.0
    %2113 = vmatpush1.msra.mxu0 0.0
    %2114 = vmatprep.subr.mxu0 0.0
    %2115 = vmatpush1.msra.mxu0 0.0
    %2116 = vmatprep.subr.mxu0 0.0
    %2117 = vmatpush1.msra.mxu0 0.0
    %2118 = vmatprep.subr.mxu0 0.0
    %2119 = vmatpush1.msra.mxu0 0.0
    %2120 = vmatprep.subr.mxu0 0.0
    %2121 = vmatpush1.msra.mxu0 0.0
    %2122 = vmatprep.subr.mxu0 0.0
    %2123 = vmatpush1.msra.mxu0 0.0
    %2124 = vmatprep.subr.mxu0 0.0
    %2125 = vmatpush1.msra.mxu0 0.0
    %2126 = vmatprep.subr.mxu0 0.0
    %2127 = vmatpush1.msra.mxu0 0.0
    %2128 = vmatprep.subr.mxu0 0.0
    %2129 = vmatpush1.msra.mxu0 0.0
    %2130 = vmatprep.subr.mxu0 0.0
    %2131 = vmatpush1.msra.mxu0 0.0
    %2132 = vmatprep.subr.mxu0 0.0
    %2133 = vmatpush1.msra.mxu0 0.0
    %2134 = vmatprep.subr.mxu0 0.0
    %2135 = vmatpush1.msra.mxu0 0.0
    %2136 = vmatprep.subr.mxu0 0.0
    %2137 = vmatpush1.msra.mxu0 0.0
    %2138 = vmatprep.subr.mxu0 0.0
    %2139 = vmatpush1.msra.mxu0 0.0
    %2140 = vmatprep.subr.mxu0 0.0
    %2141 = vmatpush1.msra.mxu0 0.0
    %2142 = vmatprep.subr.mxu0 0.0
    %2143 = vmatpush1.msra.mxu0 0.0
    %2144 = vmatprep.subr.mxu0 0.0
    %2145 = vmatpush1.msra.mxu0 0.0
    %2146 = vmatprep.subr.mxu0 0.0
    %2147 = vmatpush1.msra.mxu0 0.0
    %2148 = vmatprep.subr.mxu0 0.0
    %2149 = vmatpush1.msra.mxu0 0.0
    %2150 = vmatprep.subr.mxu0 0.0
    %2151 = vmatpush1.msra.mxu0 0.0
    %2152 = vmatprep.subr.mxu0 0.0
    %2153 = vmatpush1.msra.mxu0 0.0
    %2154 = vmatprep.subr.mxu0 0.0
    %2155 = vmatpush1.msra.mxu0 0.0
    %2156 = vmatprep.subr.mxu0 0.0
    %2157 = vmatpush1.msra.mxu0 0.0
    %2158 = vmatprep.subr.mxu0 0.0
    %2159 = vmatpush1.msra.mxu0 0.0
    %2160 = vmatprep.subr.mxu0 0.0
    %2161 = vmatpush1.msra.mxu0 0.0
    %2162 = vmatprep.subr.mxu0 0.0
    %2163 = vmatpush1.msra.mxu0 0.0
    %2164 = vmatprep.subr.mxu0 0.0
    %2165 = vmatpush1.msra.mxu0 0.0
    %2166 = vmatprep.mubr.f32.mxu0 0.0
    %2167 = vmatmul.mubr.f32.gmra.mrb[0].mxu0 %v2078
    %v2168 = vpop.f32.mrb[0].mxu0
    %v2169 = vadd.f32 %v2044, %v2168
    %v2170 = vpop.f32.mrb[0].mxu0
    %v2171 = vadd.f32 %v2048, %v2170
    %2172 = vdwg.mxu0
    %2173 = vmatprep.subr.mxu0 %v2028
    %2174 = vmatpush1.msra.mxu0 %v2027
    %2175 = vmatprep.subr.mxu0 %v2091
    %2176 = vmatpush1.msra.mxu0 %v2088
    %2177 = vmatprep.subr.mxu0 0.0
    %2178 = vmatpush1.msra.mxu0 0.0
    %2179 = vmatprep.subr.mxu0 0.0
    %2180 = vmatpush1.msra.mxu0 0.0
    %2181 = vmatprep.subr.mxu0 0.0
    %2182 = vmatpush1.msra.mxu0 0.0
    %2183 = vmatprep.subr.mxu0 0.0
    %2184 = vmatpush1.msra.mxu0 0.0
    %2185 = vmatprep.subr.mxu0 0.0
    %2186 = vmatpush1.msra.mxu0 0.0
    %2187 = vmatprep.subr.mxu0 0.0
    %2188 = vmatpush1.msra.mxu0 0.0
    %2189 = vmatprep.subr.mxu0 0.0
    %2190 = vmatpush1.msra.mxu0 0.0
    %2191 = vmatprep.subr.mxu0 0.0
    %2192 = vmatpush1.msra.mxu0 0.0
    %2193 = vmatprep.subr.mxu0 0.0
    %2194 = vmatpush1.msra.mxu0 0.0
    %2195 = vmatprep.subr.mxu0 0.0
    %2196 = vmatpush1.msra.mxu0 0.0
    %2197 = vmatprep.subr.mxu0 0.0
    %2198 = vmatpush1.msra.mxu0 0.0
    %2199 = vmatprep.subr.mxu0 0.0
    %2200 = vmatpush1.msra.mxu0 0.0
    %2201 = vmatprep.subr.mxu0 0.0
    %2202 = vmatpush1.msra.mxu0 0.0
    %2203 = vmatprep.subr.mxu0 0.0
    %2204 = vmatpush1.msra.mxu0 0.0
    %2205 = vmatprep.subr.mxu0 0.0
    %2206 = vmatpush1.msra.mxu0 0.0
    %2207 = vmatprep.subr.mxu0 0.0
    %2208 = vmatpush1.msra.mxu0 0.0
    %2209 = vmatprep.subr.mxu0 0.0
    %2210 = vmatpush1.msra.mxu0 0.0
    %2211 = vmatprep.subr.mxu0 0.0
    %2212 = vmatpush1.msra.mxu0 0.0
    %2213 = vmatprep.subr.mxu0 0.0
    %2214 = vmatpush1.msra.mxu0 0.0
    %2215 = vmatprep.subr.mxu0 0.0
    %2216 = vmatpush1.msra.mxu0 0.0
    %2217 = vmatprep.subr.mxu0 0.0
    %2218 = vmatpush1.msra.mxu0 0.0
    %2219 = vmatprep.subr.mxu0 0.0
    %2220 = vmatpush1.msra.mxu0 0.0
    %2221 = vmatprep.subr.mxu0 0.0
    %2222 = vmatpush1.msra.mxu0 0.0
    %2223 = vmatprep.subr.mxu0 0.0
    %2224 = vmatpush1.msra.mxu0 0.0
    %2225 = vmatprep.subr.mxu0 0.0
    %2226 = vmatpush1.msra.mxu0 0.0
    %2227 = vmatprep.subr.mxu0 0.0
    %2228 = vmatpush1.msra.mxu0 0.0
    %2229 = vmatprep.subr.mxu0 0.0
    %2230 = vmatpush1.msra.mxu0 0.0
    %2231 = vmatprep.subr.mxu0 0.0
    %2232 = vmatpush1.msra.mxu0 0.0
    %2233 = vmatprep.subr.mxu0 0.0
    %2234 = vmatpush1.msra.mxu0 0.0
    %2235 = vmatprep.subr.mxu0 0.0
    %2236 = vmatpush1.msra.mxu0 0.0
    %2237 = vmatprep.mubr.f32.mxu0 0.0
    %2238 = vmatmul.mubr.f32.gmra.mrb[0].mxu0 %v2078
    %v2239 = vpop.f32.mrb[0].mxu0
    %v2240 = vadd.f32 %v2052, %v2239
    %v2241 = vpop.f32.mrb[0].mxu0
    %v2242 = vadd.f32 %v2056, %v2241
    %2243 = vdwg.mxu0
    %2244 = vmatprep.subr.mxu0 %v2030
    %2245 = vmatpush1.msra.mxu0 %v2029
    %2246 = vmatprep.subr.mxu0 %v2097
    %2247 = vmatpush1.msra.mxu0 %v2094
    %2248 = vmatprep.subr.mxu0 0.0
    %2249 = vmatpush1.msra.mxu0 0.0
    %2250 = vmatprep.subr.mxu0 0.0
    %2251 = vmatpush1.msra.mxu0 0.0
    %2252 = vmatprep.subr.mxu0 0.0
    %2253 = vmatpush1.msra.mxu0 0.0
    %2254 = vmatprep.subr.mxu0 0.0
    %2255 = vmatpush1.msra.mxu0 0.0
    %2256 = vmatprep.subr.mxu0 0.0
    %2257 = vmatpush1.msra.mxu0 0.0
    %2258 = vmatprep.subr.mxu0 0.0
    %2259 = vmatpush1.msra.mxu0 0.0
    %2260 = vmatprep.subr.mxu0 0.0
    %2261 = vmatpush1.msra.mxu0 0.0
    %2262 = vmatprep.subr.mxu0 0.0
    %2263 = vmatpush1.msra.mxu0 0.0
    %2264 = vmatprep.subr.mxu0 0.0
    %2265 = vmatpush1.msra.mxu0 0.0
    %2266 = vmatprep.subr.mxu0 0.0
    %2267 = vmatpush1.msra.mxu0 0.0
    %2268 = vmatprep.subr.mxu0 0.0
    %2269 = vmatpush1.msra.mxu0 0.0
    %2270 = vmatprep.subr.mxu0 0.0
    %2271 = vmatpush1.msra.mxu0 0.0
    %2272 = vmatprep.subr.mxu0 0.0
    %2273 = vmatpush1.msra.mxu0 0.0
    %2274 = vmatprep.subr.mxu0 0.0
    %2275 = vmatpush1.msra.mxu0 0.0
    %2276 = vmatprep.subr.mxu0 0.0
    %2277 = vmatpush1.msra.mxu0 0.0
    %2278 = vmatprep.subr.mxu0 0.0
    %2279 = vmatpush1.msra.mxu0 0.0
    %2280 = vmatprep.subr.mxu0 0.0
    %2281 = vmatpush1.msra.mxu0 0.0
    %2282 = vmatprep.subr.mxu0 0.0
    %2283 = vmatpush1.msra.mxu0 0.0
    %2284 = vmatprep.subr.mxu0 0.0
    %2285 = vmatpush1.msra.mxu0 0.0
    %2286 = vmatprep.subr.mxu0 0.0
    %2287 = vmatpush1.msra.mxu0 0.0
    %2288 = vmatprep.subr.mxu0 0.0
    %2289 = vmatpush1.msra.mxu0 0.0
    %2290 = vmatprep.subr.mxu0 0.0
    %2291 = vmatpush1.msra.mxu0 0.0
    %2292 = vmatprep.subr.mxu0 0.0
    %2293 = vmatpush1.msra.mxu0 0.0
    %2294 = vmatprep.subr.mxu0 0.0
    %2295 = vmatpush1.msra.mxu0 0.0
    %2296 = vmatprep.subr.mxu0 0.0
    %2297 = vmatpush1.msra.mxu0 0.0
    %2298 = vmatprep.subr.mxu0 0.0
    %2299 = vmatpush1.msra.mxu0 0.0
    %2300 = vmatprep.subr.mxu0 0.0
    %2301 = vmatpush1.msra.mxu0 0.0
    %2302 = vmatprep.subr.mxu0 0.0
    %2303 = vmatpush1.msra.mxu0 0.0
    %2304 = vmatprep.subr.mxu0 0.0
    %2305 = vmatpush1.msra.mxu0 0.0
    %2306 = vmatprep.subr.mxu0 0.0
    %2307 = vmatpush1.msra.mxu0 0.0
    %2308 = vmatprep.mubr.f32.mxu0 0.0
    %2309 = vmatmul.mubr.f32.gmra.mrb[0].mxu0 %v2078
    %v2310 = vpop.f32.mrb[0].mxu0
    %v2311 = vadd.f32 %v2060, %v2310
    %v2312 = vpop.f32.mrb[0].mxu0
    %v2313 = vadd.f32 %v2064, %v2312
    %2314 = vdwg.mxu0
    %2315 = vmatprep.subr.mxu0 0.0
    %2316 = vmatpush1.msra.mxu0 %v2031
    %2317 = vmatprep.subr.mxu0 0.0
    %2318 = vmatpush1.msra.mxu0 %v2100
    %2319 = vmatprep.subr.mxu0 0.0
    %2320 = vmatpush1.msra.mxu0 0.0
    %2321 = vmatprep.subr.mxu0 0.0
    %2322 = vmatpush1.msra.mxu0 0.0
    %2323 = vmatprep.subr.mxu0 0.0
    %2324 = vmatpush1.msra.mxu0 0.0
    %2325 = vmatprep.subr.mxu0 0.0
    %2326 = vmatpush1.msra.mxu0 0.0
    %2327 = vmatprep.subr.mxu0 0.0
    %2328 = vmatpush1.msra.mxu0 0.0
    %2329 = vmatprep.subr.mxu0 0.0
    %2330 = vmatpush1.msra.mxu0 0.0
    %2331 = vmatprep.subr.mxu0 0.0
    %2332 = vmatpush1.msra.mxu0 0.0
    %2333 = vmatprep.subr.mxu0 0.0
    %2334 = vmatpush1.msra.mxu0 0.0
    %2335 = vmatprep.subr.mxu0 0.0
    %2336 = vmatpush1.msra.mxu0 0.0
    %2337 = vmatprep.subr.mxu0 0.0
    %2338 = vmatpush1.msra.mxu0 0.0
    %2339 = vmatprep.subr.mxu0 0.0
    %2340 = vmatpush1.msra.mxu0 0.0
    %2341 = vmatprep.subr.mxu0 0.0
    %2342 = vmatpush1.msra.mxu0 0.0
    %2343 = vmatprep.subr.mxu0 0.0
    %2344 = vmatpush1.msra.mxu0 0.0
    %2345 = vmatprep.subr.mxu0 0.0
    %2346 = vmatpush1.msra.mxu0 0.0
    %2347 = vmatprep.subr.mxu0 0.0
    %2348 = vmatpush1.msra.mxu0 0.0
    %2349 = vmatprep.subr.mxu0 0.0
    %2350 = vmatpush1.msra.mxu0 0.0
    %2351 = vmatprep.subr.mxu0 0.0
    %2352 = vmatpush1.msra.mxu0 0.0
    %2353 = vmatprep.subr.mxu0 0.0
    %2354 = vmatpush1.msra.mxu0 0.0
    %2355 = vmatprep.subr.mxu0 0.0
    %2356 = vmatpush1.msra.mxu0 0.0
    %2357 = vmatprep.subr.mxu0 0.0
    %2358 = vmatpush1.msra.mxu0 0.0
    %2359 = vmatprep.subr.mxu0 0.0
    %2360 = vmatpush1.msra.mxu0 0.0
    %2361 = vmatprep.subr.mxu0 0.0
    %2362 = vmatpush1.msra.mxu0 0.0
    %2363 = vmatprep.subr.mxu0 0.0
    %2364 = vmatpush1.msra.mxu0 0.0
    %2365 = vmatprep.subr.mxu0 0.0
    %2366 = vmatpush1.msra.mxu0 0.0
    %2367 = vmatprep.subr.mxu0 0.0
    %2368 = vmatpush1.msra.mxu0 0.0
    %2369 = vmatprep.subr.mxu0 0.0
    %2370 = vmatpush1.msra.mxu0 0.0
    %2371 = vmatprep.subr.mxu0 0.0
    %2372 = vmatpush1.msra.mxu0 0.0
    %2373 = vmatprep.subr.mxu0 0.0
    %2374 = vmatpush1.msra.mxu0 0.0
    %2375 = vmatprep.subr.mxu0 0.0
    %2376 = vmatpush1.msra.mxu0 0.0
    %2377 = vmatprep.subr.mxu0 0.0
    %2378 = vmatpush1.msra.mxu0 0.0
    %2379 = vmatprep.mubr.f32.mxu0 0.0
    %2380 = vmatmul.mubr.f32.gmra.mrb[0].mxu0 %v2078
    %v2381 = vpop.f32.mrb[0].mxu0
    %v2382 = vadd.f32 %v2068, %v2381
    %v2383 = vpop.f32.mrb[0].mxu0
    %2384 = vdwg.mxu0
    %v2385 = vsel %vm104, %v2169, 0.0
    %v2386 = vrot.slane %v2385, 4
    %v2387 = vadd.f32 %v2385, %v2386
    %v2388 = vrot.slane %v2387, 2
    %v2389 = vadd.f32 %v2387, %v2388
    %v2390 = vrot.slane %v2389, 1
    %v2391 = vadd.f32 %v2389, %v2390
    %v2392 = vsel %vm104, %v2171, 0.0
    %v2393 = vrot.slane %v2392, 4
    %v2394 = vadd.f32 %v2392, %v2393
    %v2395 = vrot.slane %v2394, 2
    %v2396 = vadd.f32 %v2394, %v2395
    %v2397 = vrot.slane %v2396, 1
    %v2398 = vadd.f32 %v2396, %v2397
    %v2399 = vsel %vm104, %v2240, 0.0
    %v2400 = vrot.slane %v2399, 4
    %v2401 = vadd.f32 %v2399, %v2400
    %v2402 = vrot.slane %v2401, 2
    %v2403 = vadd.f32 %v2401, %v2402
    %v2404 = vrot.slane %v2403, 1
    %v2405 = vadd.f32 %v2403, %v2404
    %v2406 = vsel %vm104, %v2242, 0.0
    %v2407 = vrot.slane %v2406, 4
    %v2408 = vadd.f32 %v2406, %v2407
    %v2409 = vrot.slane %v2408, 2
    %v2410 = vadd.f32 %v2408, %v2409
    %v2411 = vrot.slane %v2410, 1
    %v2412 = vadd.f32 %v2410, %v2411
    %v2413 = vsel %vm104, %v2311, 0.0
    %v2414 = vrot.slane %v2413, 4
    %v2415 = vadd.f32 %v2413, %v2414
    %v2416 = vrot.slane %v2415, 2
    %v2417 = vadd.f32 %v2415, %v2416
    %v2418 = vrot.slane %v2417, 1
    %v2419 = vadd.f32 %v2417, %v2418
    %v2420 = vsel %vm104, %v2313, 0.0
    %v2421 = vrot.slane %v2420, 4
    %v2422 = vadd.f32 %v2420, %v2421
    %v2423 = vrot.slane %v2422, 2
    %v2424 = vadd.f32 %v2422, %v2423
    %v2425 = vrot.slane %v2424, 1
    %v2426 = vadd.f32 %v2424, %v2425
    %v2427 = vsel %vm147, %v2382, 0.0
    %v2428 = vrot.slane %v2427, 4
    %v2429 = vadd.f32 %v2427, %v2428
    %v2430 = vrot.slane %v2429, 2
    %v2431 = vadd.f32 %v2429, %v2430
    %v2432 = vrot.slane %v2431, 1
    %v2433 = vadd.f32 %v2431, %v2432
    %v2434 = vmul.f32 %v2391, 0.5
    %v2435 = vmul.f32 %v2398, 0.5
    %v2436 = vmul.f32 %v2405, 0.5
    %v2437 = vmul.f32 %v2412, 0.5
    %v2438 = vmul.f32 %v2419, 0.5
    %v2439 = vmul.f32 %v2426, 0.5
    %v2440 = vmul.f32 %v2433, 0.5
    %v2441 = vsub.f32 %v2169, %v2434
    %v2442 = vsub.f32 %v2171, %v2435
    %v2443 = vsub.f32 %v2240, %v2436
    %v2444 = vsub.f32 %v2242, %v2437
    %v2445 = vsub.f32 %v2311, %v2438
    %v2446 = vsub.f32 %v2313, %v2439
    %v2447 = vsub.f32 %v2382, %v2440
    %v2448 = vmul.f32 %v2441, %v2441
    %v2449 = vmul.f32 %v2442, %v2442
    %v2450 = vmul.f32 %v2443, %v2443
    %v2451 = vmul.f32 %v2444, %v2444
    %v2452 = vmul.f32 %v2445, %v2445
    %v2453 = vmul.f32 %v2446, %v2446
    %v2454 = vmul.f32 %v2447, %v2447
    %v2455 = vsel %vm104, %v2448, 0.0
    %v2456 = vrot.slane %v2455, 4
    %v2457 = vadd.f32 %v2455, %v2456
    %v2458 = vrot.slane %v2457, 2
    %v2459 = vadd.f32 %v2457, %v2458
    %v2460 = vrot.slane %v2459, 1
    %v2461 = vadd.f32 %v2459, %v2460
    %v2462 = vsel %vm104, %v2449, 0.0
    %v2463 = vrot.slane %v2462, 4
    %v2464 = vadd.f32 %v2462, %v2463
    %v2465 = vrot.slane %v2464, 2
    %v2466 = vadd.f32 %v2464, %v2465
    %v2467 = vrot.slane %v2466, 1
    %v2468 = vadd.f32 %v2466, %v2467
    %v2469 = vsel %vm104, %v2450, 0.0
    %v2470 = vrot.slane %v2469, 4
    %v2471 = vadd.f32 %v2469, %v2470
    %v2472 = vrot.slane %v2471, 2
    %v2473 = vadd.f32 %v2471, %v2472
    %v2474 = vrot.slane %v2473, 1
    %v2475 = vadd.f32 %v2473, %v2474
    %v2476 = vsel %vm104, %v2451, 0.0
    %v2477 = vrot.slane %v2476, 4
    %v2478 = vadd.f32 %v2476, %v2477
    %v2479 = vrot.slane %v2478, 2
    %v2480 = vadd.f32 %v2478, %v2479
    %v2481 = vrot.slane %v2480, 1
    %v2482 = vadd.f32 %v2480, %v2481
    %v2483 = vsel %vm104, %v2452, 0.0
    %v2484 = vrot.slane %v2483, 4
    %v2485 = vadd.f32 %v2483, %v2484
    %v2486 = vrot.slane %v2485, 2
    %v2487 = vadd.f32 %v2485, %v2486
    %v2488 = vrot.slane %v2487, 1
    %v2489 = vadd.f32 %v2487, %v2488
    %v2490 = vsel %vm104, %v2453, 0.0
    %v2491 = vrot.slane %v2490, 4
    %v2492 = vadd.f32 %v2490, %v2491
    %v2493 = vrot.slane %v2492, 2
    %v2494 = vadd.f32 %v2492, %v2493
    %v2495 = vrot.slane %v2494, 1
    %v2496 = vadd.f32 %v2494, %v2495
    %v2497 = vsel %vm147, %v2454, 0.0
    %v2498 = vrot.slane %v2497, 4
    %v2499 = vadd.f32 %v2497, %v2498
    %v2500 = vrot.slane %v2499, 2
    %v2501 = vadd.f32 %v2499, %v2500
    %v2502 = vrot.slane %v2501, 1
    %v2503 = vadd.f32 %v2501, %v2502
    %v2504 = vmul.f32 %v2461, 0.5
    %v2505 = vmul.f32 %v2468, 0.5
    %v2506 = vmul.f32 %v2475, 0.5
    %v2507 = vmul.f32 %v2482, 0.5
    %v2508 = vmul.f32 %v2489, 0.5
    %v2509 = vmul.f32 %v2496, 0.5
    %v2510 = vmul.f32 %v2503, 0.5
    %v2511 = vadd.f32 %v2504, 1e-05
    %v2512 = vadd.f32 %v2505, 1e-05
    %v2513 = vadd.f32 %v2506, 1e-05
    %v2514 = vadd.f32 %v2507, 1e-05
    %v2515 = vadd.f32 %v2508, 1e-05
    %v2516 = vadd.f32 %v2509, 1e-05
    %v2517 = vadd.f32 %v2510, 1e-05
    %v2518 = vrsqrt.pop %v2511
    %v2519 = vrsqrt.pop %v2512
    %v2520 = vrsqrt.pop %v2513
    %v2521 = vrsqrt.pop %v2514
    %v2522 = vrsqrt.pop %v2515
    %v2523 = vrsqrt.pop %v2516
    %v2524 = vrsqrt.pop %v2517
    %v2525 = vmul.f32 %v2441, %v2518
    %v2526 = vmul.f32 %v2442, %v2519
    %v2527 = vmul.f32 %v2443, %v2520
    %v2528 = vmul.f32 %v2444, %v2521
    %v2529 = vmul.f32 %v2445, %v2522
    %v2530 = vmul.f32 %v2446, %v2523
    %v2531 = vmul.f32 %v2447, %v2524
    %v2532 = vld [vmem:[%s4] sm:$0x7f]
    %v2534 = vlaneseq
    %v2535 = vshrl.u32 %v2534, 7
    %v2536 = vsub.s32 0, %v2535
    %v2537 = vrot.slane %v2532, %v2536
    %v2538 = vlaneseq
    %v2539 = vshrl.u32 %v2538, 7
    %v2540 = vsub.s32 1, %v2539
    %v2541 = vrot.slane %v2532, %v2540
    %v2542 = vlaneseq
    %v2543 = vshrl.u32 %v2542, 7
    %v2544 = vsub.s32 2, %v2543
    %v2545 = vrot.slane %v2532, %v2544
    %v2546 = vlaneseq
    %v2547 = vshrl.u32 %v2546, 7
    %v2548 = vsub.s32 3, %v2547
    %v2549 = vrot.slane %v2532, %v2548
    %v2550 = vlaneseq
    %v2551 = vshrl.u32 %v2550, 7
    %v2552 = vsub.s32 4, %v2551
    %v2553 = vrot.slane %v2532, %v2552
    %v2554 = vlaneseq
    %v2555 = vshrl.u32 %v2554, 7
    %v2556 = vsub.s32 5, %v2555
    %v2557 = vrot.slane %v2532, %v2556
    %v2558 = vlaneseq
    %v2559 = vshrl.u32 %v2558, 7
    %v2560 = vsub.s32 6, %v2559
    %v2561 = vrot.slane %v2532, %v2560
    %v2569 = vmul.f32 %v2525, %v2537
    %v2570 = vmul.f32 %v2526, %v2541
    %v2571 = vmul.f32 %v2527, %v2545
    %v2572 = vmul.f32 %v2528, %v2549
    %v2573 = vmul.f32 %v2529, %v2553
    %v2574 = vmul.f32 %v2530, %v2557
    %v2575 = vmul.f32 %v2531, %v2561
    %v2576 = vld [vmem:[%s5] sm:$0x7f]
    %v2578 = vlaneseq
    %v2579 = vshrl.u32 %v2578, 7
    %v2580 = vsub.s32 0, %v2579
    %v2581 = vrot.slane %v2576, %v2580
    %v2582 = vlaneseq
    %v2583 = vshrl.u32 %v2582, 7
    %v2584 = vsub.s32 1, %v2583
    %v2585 = vrot.slane %v2576, %v2584
    %v2586 = vlaneseq
    %v2587 = vshrl.u32 %v2586, 7
    %v2588 = vsub.s32 2, %v2587
    %v2589 = vrot.slane %v2576, %v2588
    %v2590 = vlaneseq
    %v2591 = vshrl.u32 %v2590, 7
    %v2592 = vsub.s32 3, %v2591
    %v2593 = vrot.slane %v2576, %v2592
    %v2594 = vlaneseq
    %v2595 = vshrl.u32 %v2594, 7
    %v2596 = vsub.s32 4, %v2595
    %v2597 = vrot.slane %v2576, %v2596
    %v2598 = vlaneseq
    %v2599 = vshrl.u32 %v2598, 7
    %v2600 = vsub.s32 5, %v2599
    %v2601 = vrot.slane %v2576, %v2600
    %v2602 = vlaneseq
    %v2603 = vshrl.u32 %v2602, 7
    %v2604 = vsub.s32 6, %v2603
    %v2605 = vrot.slane %v2576, %v2604
    %v2613 = vadd.f32 %v2569, %v2581
    %v2614 = vadd.f32 %v2570, %v2585
    %v2615 = vadd.f32 %v2571, %v2589
    %v2616 = vadd.f32 %v2572, %v2593
    %v2617 = vadd.f32 %v2573, %v2597
    %v2618 = vadd.f32 %v2574, %v2601
    %v2619 = vadd.f32 %v2575, %v2605
    %vm2620 = vcmp.ge.f32.partialorder %v2613, 0.0
    %vm2621 = vcmp.ge.f32.partialorder %v2614, 0.0
    %vm2622 = vcmp.ge.f32.partialorder %v2615, 0.0
    %vm2623 = vcmp.ge.f32.partialorder %v2616, 0.0
    %vm2624 = vcmp.ge.f32.partialorder %v2617, 0.0
    %vm2625 = vcmp.ge.f32.partialorder %v2618, 0.0
    %vm2626 = vcmp.ge.f32.partialorder %v2619, 0.0
    %v2627 = vmul.f32 %v2613, 0.2
    %v2628 = vmul.f32 %v2614, 0.2
    %v2629 = vmul.f32 %v2615, 0.2
    %v2630 = vmul.f32 %v2616, 0.2
    %v2631 = vmul.f32 %v2617, 0.2
    %v2632 = vmul.f32 %v2618, 0.2
    %v2633 = vmul.f32 %v2619, 0.2
    %v2634 = vsel %vm2620, %v2613, %v2627
    %v2635 = vsel %vm2621, %v2614, %v2628
    %v2636 = vsel %vm2622, %v2615, %v2629
    %v2637 = vsel %vm2623, %v2616, %v2630
    %v2638 = vsel %vm2624, %v2617, %v2631
    %v2639 = vsel %vm2625, %v2618, %v2632
    %v2640 = vsel %vm2626, %v2619, %v2633
    %v2648 = vcombine.low %v2634, %v2635
    %v2649 = vcombine.low %v2636, %v2637
    %v2651 = vunpack.c.l.s4 1983009808
    %v2652 = vunpack.c.0.s8 %v2651
    %v2653 = vlaneseq
    %v2654 = vshrl.u32 %v2653, 7
    %v2655 = vsub.s32 %v2652, %v2654
    %v2656 = vrot.slane %v2648, %v2655
    %v2658 = vunpack.c.l.s4 1983009808
    %v2659 = vunpack.c.0.s8 %v2658
    %v2660 = vlaneseq
    %v2661 = vshrl.u32 %v2660, 7
    %v2662 = vsub.s32 %v2659, %v2661
    %v2663 = vrot.slane %v2649, %v2662
    %v2664 = vcombine.low %v2656, %v2663
    %v2665 = vcombine.low %v2638, %v2639
    %v2667 = vunpack.c.l.s4 1983009808
    %v2668 = vunpack.c.0.s8 %v2667
    %v2669 = vlaneseq
    %v2670 = vshrl.u32 %v2669, 7
    %v2671 = vsub.s32 %v2668, %v2670
    %v2672 = vrot.slane %v2665, %v2671
    %v2674 = vunpack.c.l.s4 1983009808
    %v2675 = vunpack.c.0.s8 %v2674
    %v2676 = vlaneseq
    %v2677 = vshrl.u32 %v2676, 7
    %v2678 = vsub.s32 %v2675, %v2677
    %v2679 = vrot.slane %v2640, %v2678
    %v2680 = vcombine.low %v2672, %v2679
    %v2683 = vadd.f32 %v2014, %v2664
    %v2684 = vadd.f32 %v2015, %v2680
    %v2687 = vcombine.high %v2683, %v2683
    %v2689 = vunpack.c.l.s4 1983009808
    %v2690 = vunpack.c.0.s8 %v2689
    %v2691 = vlaneseq
    %v2692 = vshrl.u32 %v2691, 7
    %v2693 = vsub.s32 %v2690, %v2692
    %v2694 = vrot.slane %v2683, %v2693
    %v2696 = vunpack.c.l.s4 1983009808
    %v2697 = vunpack.c.0.s8 %v2696
    %v2698 = vlaneseq
    %v2699 = vshrl.u32 %v2698, 7
    %v2700 = vsub.s32 %v2697, %v2699
    %v2701 = vrot.slane %v2687, %v2700
    %v2702 = vcombine.high %v2694, %v2694
    %v2703 = vcombine.high %v2701, %v2701
    %v2704 = vcombine.high %v2684, %v2684
    %v2706 = vunpack.c.l.s4 1983009808
    %v2707 = vunpack.c.0.s8 %v2706
    %v2708 = vlaneseq
    %v2709 = vshrl.u32 %v2708, 7
    %v2710 = vsub.s32 %v2707, %v2709
    %v2711 = vrot.slane %v2684, %v2710
    %v2713 = vunpack.c.l.s4 1983009808
    %v2714 = vunpack.c.0.s8 %v2713
    %v2715 = vlaneseq
    %v2716 = vshrl.u32 %v2715, 7
    %v2717 = vsub.s32 %v2714, %v2716
    %v2718 = vrot.slane %v2704, %v2717
    %v2719 = vcombine.high %v2711, %v2711
    %v2727 = vpack.c.bf16 %v2694, %v2694
    %v2728 = vpack.c.bf16 %v2702, %v2702
    %v2729 = vpack.c.bf16 %v2701, %v2701
    %v2730 = vpack.c.bf16 %v2703, %v2703
    %v2731 = vpack.c.bf16 %v2711, %v2711
    %v2732 = vpack.c.bf16 %v2719, %v2719
    %v2733 = vpack.c.bf16 %v2718, %v2718
    %v2734 = vld [vmem:[%s10] sm:$0xff]
    %v2735 = vld [vmem:[%s10 + $0x8] sm:$0xff]
    %v2736 = vld [vmem:[%s10 + $0x10] sm:$0xff]
    %v2737 = vld [vmem:[%s10 + $0x18] sm:$0xf]
    %v2738 = vld [vmem:[%s10 + $0x1c] sm:$0xff]
    %v2739 = vld [vmem:[%s10 + $0x24] sm:$0xff]
    %v2740 = vld [vmem:[%s10 + $0x2c] sm:$0xff]
    %v2741 = vld [vmem:[%s10 + $0x34] sm:$0xf]
    %v2742 = vld [vmem:[%s10 + $0x38] sm:$0xff]
    %v2743 = vld [vmem:[%s10 + $0x40] sm:$0xff]
    %v2744 = vld [vmem:[%s10 + $0x48] sm:$0xff]
    %v2745 = vld [vmem:[%s10 + $0x50] sm:$0xf]
    %v2746 = vld [vmem:[%s10 + $0x54] sm:$0xff]
    %v2747 = vld [vmem:[%s10 + $0x5c] sm:$0xff]
    %v2748 = vld [vmem:[%s10 + $0x64] sm:$0xff]
    %v2749 = vld [vmem:[%s10 + $0x6c] sm:$0xf]
    %v2750 = vld [vmem:[%s10 + $0x70] sm:$0xff]
    %v2751 = vld [vmem:[%s10 + $0x78] sm:$0xff]
    %v2752 = vld [vmem:[%s10 + $0x80] sm:$0xff]
    %v2753 = vld [vmem:[%s10 + $0x88] sm:$0xf]
    %v2754 = vld [vmem:[%s10 + $0x8c] sm:$0xff]
    %v2755 = vld [vmem:[%s10 + $0x94] sm:$0xff]
    %v2756 = vld [vmem:[%s10 + $0x9c] sm:$0xff]
    %v2757 = vld [vmem:[%s10 + $0xa4] sm:$0xf]
    %v2758 = vld [vmem:[%s10 + $0xa8] sm:$0xff]
    %v2759 = vld [vmem:[%s10 + $0xb0] sm:$0xff]
    %v2760 = vld [vmem:[%s10 + $0xb8] sm:$0xff]
    %v2761 = vld [vmem:[%s10 + $0xc0] sm:$0xf]
    %v2762 = vld [vmem:[%s10 + $0xc4] sm:$0xff]
    %v2763 = vld [vmem:[%s10 + $0xcc] sm:$0xff]
    %v2764 = vld [vmem:[%s10 + $0xd4] sm:$0xff]
    %v2765 = vld [vmem:[%s10 + $0xdc] sm:$0xf]
    %v2766 = vld [vmem:[%s10 + $0xe0] sm:$0xff]
    %v2767 = vld [vmem:[%s10 + $0xe8] sm:$0xff]
    %v2768 = vld [vmem:[%s10 + $0xf0] sm:$0xff]
    %v2769 = vld [vmem:[%s10 + $0xf8] sm:$0xf]
    %v2770 = vld [vmem:[%s10 + $0xfc] sm:$0xff]
    %v2771 = vld [vmem:[%s10 + $0x104] sm:$0xff]
    %v2772 = vld [vmem:[%s10 + $0x10c] sm:$0xff]
    %v2773 = vld [vmem:[%s10 + $0x114] sm:$0xf]
    %v2774 = vld [vmem:[%s10 + $0x118] sm:$0xff]
    %v2775 = vld [vmem:[%s10 + $0x120] sm:$0xff]
    %v2776 = vld [vmem:[%s10 + $0x128] sm:$0xff]
    %v2777 = vld [vmem:[%s10 + $0x130] sm:$0xf]
    %v2778 = vld [vmem:[%s10 + $0x134] sm:$0xff]
    %v2779 = vld [vmem:[%s10 + $0x13c] sm:$0xff]
    %v2780 = vld [vmem:[%s10 + $0x144] sm:$0xff]
    %v2781 = vld [vmem:[%s10 + $0x14c] sm:$0xf]
    %v2782 = vld [vmem:[%s10 + $0x150] sm:$0xff]
    %v2783 = vld [vmem:[%s10 + $0x158] sm:$0xff]
    %v2784 = vld [vmem:[%s10 + $0x160] sm:$0xff]
    %v2785 = vld [vmem:[%s10 + $0x168] sm:$0xf]
    %v2786 = vld [vmem:[%s10 + $0x16c] sm:$0xff]
    %v2787 = vld [vmem:[%s10 + $0x174] sm:$0xff]
    %v2788 = vld [vmem:[%s10 + $0x17c] sm:$0xff]
    %v2789 = vld [vmem:[%s10 + $0x184] sm:$0xf]
    %v2790 = vld [vmem:[%s10 + $0x188] sm:$0xff]
    %v2791 = vld [vmem:[%s10 + $0x190] sm:$0xff]
    %v2792 = vld [vmem:[%s10 + $0x198] sm:$0xff]
    %v2793 = vld [vmem:[%s10 + $0x1a0] sm:$0xf]
    %v2794 = vld [vmem:[%s10 + $0x1a4] sm:$0xff]
    %v2795 = vld [vmem:[%s10 + $0x1ac] sm:$0xff]
    %v2796 = vld [vmem:[%s10 + $0x1b4] sm:$0xff]
    %v2797 = vld [vmem:[%s10 + $0x1bc] sm:$0xf]
    %v2798 = vld [vmem:[%s10 + $0x1c0] sm:$0xff]
    %v2799 = vld [vmem:[%s10 + $0x1c8] sm:$0xff]
    %v2800 = vld [vmem:[%s10 + $0x1d0] sm:$0xff]
    %v2801 = vld [vmem:[%s10 + $0x1d8] sm:$0xf]
    %v2802 = vld [vmem:[%s10 + $0x1dc] sm:$0xff]
    %v2803 = vld [vmem:[%s10 + $0x1e4] sm:$0xff]
    %v2804 = vld [vmem:[%s10 + $0x1ec] sm:$0xff]
    %v2805 = vld [vmem:[%s10 + $0x1f4] sm:$0xf]
    %v2806 = vld [vmem:[%s10 + $0x1f8] sm:$0xff]
    %v2807 = vld [vmem:[%s10 + $0x200] sm:$0xff]
    %v2808 = vld [vmem:[%s10 + $0x208] sm:$0xff]
    %v2809 = vld [vmem:[%s10 + $0x210] sm:$0xf]
    %v2810 = vld [vmem:[%s10 + $0x214] sm:$0xff]
    %v2811 = vld [vmem:[%s10 + $0x21c] sm:$0xff]
    %v2812 = vld [vmem:[%s10 + $0x224] sm:$0xff]
    %v2813 = vld [vmem:[%s10 + $0x22c] sm:$0xf]
    %v2814 = vld [vmem:[%s10 + $0x230] sm:$0xff]
    %v2815 = vld [vmem:[%s10 + $0x238] sm:$0xff]
    %v2816 = vld [vmem:[%s10 + $0x240] sm:$0xff]
    %v2817 = vld [vmem:[%s10 + $0x248] sm:$0xf]
    %v2818 = vld [vmem:[%s10 + $0x24c] sm:$0xff]
    %v2819 = vld [vmem:[%s10 + $0x254] sm:$0xff]
    %v2820 = vld [vmem:[%s10 + $0x25c] sm:$0xff]
    %v2821 = vld [vmem:[%s10 + $0x264] sm:$0xf]
    %v2822 = vld [vmem:[%s10 + $0x268] sm:$0xff]
    %v2823 = vld [vmem:[%s10 + $0x270] sm:$0xff]
    %v2824 = vld [vmem:[%s10 + $0x278] sm:$0xff]
    %v2825 = vld [vmem:[%s10 + $0x280] sm:$0xf]
    %v2826 = vld [vmem:[%s10 + $0x284] sm:$0xff]
    %v2827 = vld [vmem:[%s10 + $0x28c] sm:$0xff]
    %v2828 = vld [vmem:[%s10 + $0x294] sm:$0xff]
    %v2829 = vld [vmem:[%s10 + $0x29c] sm:$0xf]
    %v2830 = vld [vmem:[%s10 + $0x2a0] sm:$0xff]
    %v2831 = vld [vmem:[%s10 + $0x2a8] sm:$0xff]
    %v2832 = vld [vmem:[%s10 + $0x2b0] sm:$0xff]
    %v2833 = vld [vmem:[%s10 + $0x2b8] sm:$0xf]
    %v2834 = vld [vmem:[%s10 + $0x2bc] sm:$0xff]
    %v2835 = vld [vmem:[%s10 + $0x2c4] sm:$0xff]
    %v2836 = vld [vmem:[%s10 + $0x2cc] sm:$0xff]
    %v2837 = vld [vmem:[%s10 + $0x2d4] sm:$0xf]
    %v2838 = vld [vmem:[%s10 + $0x2d8] sm:$0xff]
    %v2839 = vld [vmem:[%s10 + $0x2e0] sm:$0xff]
    %v2840 = vld [vmem:[%s10 + $0x2e8] sm:$0xff]
    %v2841 = vld [vmem:[%s10 + $0x2f0] sm:$0xf]
    %v2842 = vld [vmem:[%s10 + $0x2f4] sm:$0xff]
    %v2843 = vld [vmem:[%s10 + $0x2fc] sm:$0xff]
    %v2844 = vld [vmem:[%s10 + $0x304] sm:$0xff]
    %v2845 = vld [vmem:[%s10 + $0x30c] sm:$0xf]
    %v2846 = vld [vmem:[%s10 + $0x310] sm:$0xff]
    %v2847 = vld [vmem:[%s10 + $0x318] sm:$0xff]
    %v2848 = vld [vmem:[%s10 + $0x320] sm:$0xff]
    %v2849 = vld [vmem:[%s10 + $0x328] sm:$0xf]
    %v2850 = vld [vmem:[%s10 + $0x32c] sm:$0xff]
    %v2851 = vld [vmem:[%s10 + $0x334] sm:$0xff]
    %v2852 = vld [vmem:[%s10 + $0x33c] sm:$0xff]
    %v2853 = vld [vmem:[%s10 + $0x344] sm:$0xf]
    %v2854 = vld [vmem:[%s10 + $0x348] sm:$0xff]
    %v2855 = vld [vmem:[%s10 + $0x350] sm:$0xff]
    %v2856 = vld [vmem:[%s10 + $0x358] sm:$0xff]
    %v2857 = vld [vmem:[%s10 + $0x360] sm:$0xf]
    %v2858 = vld [vmem:[%s10 + $0x364] sm:$0xff]
    %v2859 = vld [vmem:[%s10 + $0x36c] sm:$0xff]
    %v2860 = vld [vmem:[%s10 + $0x374] sm:$0xff]
    %v2861 = vld [vmem:[%s10 + $0x37c] sm:$0xf]
    %v2862 = vld [vmem:[%s10 + $0x380] sm:$0xff]
    %v2863 = vld [vmem:[%s10 + $0x388] sm:$0xff]
    %v2864 = vld [vmem:[%s10 + $0x390] sm:$0xff]
    %v2865 = vld [vmem:[%s10 + $0x398] sm:$0xf]
    %v2866 = vld [vmem:[%s10 + $0x39c] sm:$0xff]
    %v2867 = vld [vmem:[%s10 + $0x3a4] sm:$0xff]
    %v2868 = vld [vmem:[%s10 + $0x3ac] sm:$0xff]
    %v2869 = vld [vmem:[%s10 + $0x3b4] sm:$0xf]
    %v2870 = vld [vmem:[%s10 + $0x3b8] sm:$0xff]
    %v2871 = vld [vmem:[%s10 + $0x3c0] sm:$0xff]
    %v2872 = vld [vmem:[%s10 + $0x3c8] sm:$0xff]
    %v2873 = vld [vmem:[%s10 + $0x3d0] sm:$0xf]
    %v2874 = vld [vmem:[%s10 + $0x3d4] sm:$0xff]
    %v2875 = vld [vmem:[%s10 + $0x3dc] sm:$0xff]
    %v2876 = vld [vmem:[%s10 + $0x3e4] sm:$0xff]
    %v2877 = vld [vmem:[%s10 + $0x3ec] sm:$0xf]
    %v2878 = vld [vmem:[%s10 + $0x3f0] sm:$0xff]
    %v2879 = vld [vmem:[%s10 + $0x3f8] sm:$0xff]
    %v2880 = vld [vmem:[%s10 + $0x400] sm:$0xff]
    %v2881 = vld [vmem:[%s10 + $0x408] sm:$0xf]
    %v2882 = vld [vmem:[%s10 + $0x40c] sm:$0xff]
    %v2883 = vld [vmem:[%s10 + $0x414] sm:$0xff]
    %v2884 = vld [vmem:[%s10 + $0x41c] sm:$0xff]
    %v2885 = vld [vmem:[%s10 + $0x424] sm:$0xf]
    %v2886 = vld [vmem:[%s10 + $0x428] sm:$0xff]
    %v2887 = vld [vmem:[%s10 + $0x430] sm:$0xff]
    %v2888 = vld [vmem:[%s10 + $0x438] sm:$0xff]
    %v2889 = vld [vmem:[%s10 + $0x440] sm:$0xf]
    %v2890 = vld [vmem:[%s10 + $0x444] sm:$0xff]
    %v2891 = vld [vmem:[%s10 + $0x44c] sm:$0xff]
    %v2892 = vld [vmem:[%s10 + $0x454] sm:$0xff]
    %v2893 = vld [vmem:[%s10 + $0x45c] sm:$0xf]
    %v2894 = vld [vmem:[%s10 + $0x460] sm:$0xff]
    %v2895 = vld [vmem:[%s10 + $0x468] sm:$0xff]
    %v2896 = vld [vmem:[%s10 + $0x470] sm:$0xff]
    %v2897 = vld [vmem:[%s10 + $0x478] sm:$0xf]
    %v2898 = vld [vmem:[%s10 + $0x47c] sm:$0xff]
    %v2899 = vld [vmem:[%s10 + $0x484] sm:$0xff]
    %v2900 = vld [vmem:[%s10 + $0x48c] sm:$0xff]
    %v2901 = vld [vmem:[%s10 + $0x494] sm:$0xf]
    %v2902 = vld [vmem:[%s10 + $0x498] sm:$0xff]
    %v2903 = vld [vmem:[%s10 + $0x4a0] sm:$0xff]
    %v2904 = vld [vmem:[%s10 + $0x4a8] sm:$0xff]
    %v2905 = vld [vmem:[%s10 + $0x4b0] sm:$0xf]
    %v2906 = vld [vmem:[%s10 + $0x4b4] sm:$0xff]
    %v2907 = vld [vmem:[%s10 + $0x4bc] sm:$0xff]
    %v2908 = vld [vmem:[%s10 + $0x4c4] sm:$0xff]
    %v2909 = vld [vmem:[%s10 + $0x4cc] sm:$0xf]
    %v2910 = vld [vmem:[%s10 + $0x4d0] sm:$0xff]
    %v2911 = vld [vmem:[%s10 + $0x4d8] sm:$0xff]
    %v2912 = vld [vmem:[%s10 + $0x4e0] sm:$0xff]
    %v2913 = vld [vmem:[%s10 + $0x4e8] sm:$0xf]
    %v2914 = vld [vmem:[%s10 + $0x4ec] sm:$0xff]
    %v2915 = vld [vmem:[%s10 + $0x4f4] sm:$0xff]
    %v2916 = vld [vmem:[%s10 + $0x4fc] sm:$0xff]
    %v2917 = vld [vmem:[%s10 + $0x504] sm:$0xf]
    %v2918 = vld [vmem:[%s10 + $0x508] sm:$0xff]
    %v2919 = vld [vmem:[%s10 + $0x510] sm:$0xff]
    %v2920 = vld [vmem:[%s10 + $0x518] sm:$0xff]
    %v2921 = vld [vmem:[%s10 + $0x520] sm:$0xf]
    %v2922 = vld [vmem:[%s10 + $0x524] sm:$0xff]
    %v2923 = vld [vmem:[%s10 + $0x52c] sm:$0xff]
    %v2924 = vld [vmem:[%s10 + $0x534] sm:$0xff]
    %v2925 = vld [vmem:[%s10 + $0x53c] sm:$0xf]
    %v2926 = vld [vmem:[%s10 + $0x540] sm:$0xff]
    %v2927 = vld [vmem:[%s10 + $0x548] sm:$0xff]
    %v2928 = vld [vmem:[%s10 + $0x550] sm:$0xff]
    %v2929 = vld [vmem:[%s10 + $0x558] sm:$0xf]
    %v2930 = vld [vmem:[%s10 + $0x55c] sm:$0xff]
    %v2931 = vld [vmem:[%s10 + $0x564] sm:$0xff]
    %v2932 = vld [vmem:[%s10 + $0x56c] sm:$0xff]
    %v2933 = vld [vmem:[%s10 + $0x574] sm:$0xf]
    %v2934 = vld [vmem:[%s10 + $0x578] sm:$0xff]
    %v2935 = vld [vmem:[%s10 + $0x580] sm:$0xff]
    %v2936 = vld [vmem:[%s10 + $0x588] sm:$0xff]
    %v2937 = vld [vmem:[%s10 + $0x590] sm:$0xf]
    %v2938 = vld [vmem:[%s10 + $0x594] sm:$0xff]
    %v2939 = vld [vmem:[%s10 + $0x59c] sm:$0xff]
    %v2940 = vld [vmem:[%s10 + $0x5a4] sm:$0xff]
    %v2941 = vld [vmem:[%s10 + $0x5ac] sm:$0xf]
    %v2942 = vld [vmem:[%s10 + $0x5b0] sm:$0xff]
    %v2943 = vld [vmem:[%s10 + $0x5b8] sm:$0xff]
    %v2944 = vld [vmem:[%s10 + $0x5c0] sm:$0xff]
    %v2945 = vld [vmem:[%s10 + $0x5c8] sm:$0xf]
    %v2946 = vld [vmem:[%s10 + $0x5cc] sm:$0xff]
    %v2947 = vld [vmem:[%s10 + $0x5d4] sm:$0xff]
    %v2948 = vld [vmem:[%s10 + $0x5dc] sm:$0xff]
    %v2949 = vld [vmem:[%s10 + $0x5e4] sm:$0xf]
    %v2950 = vld [vmem:[%s10 + $0x5e8] sm:$0xff]
    %v2951 = vld [vmem:[%s10 + $0x5f0] sm:$0xff]
    %v2952 = vld [vmem:[%s10 + $0x5f8] sm:$0xff]
    %v2953 = vld [vmem:[%s10 + $0x600] sm:$0xf]
    %v2954 = vld [vmem:[%s10 + $0x604] sm:$0xff]
    %v2955 = vld [vmem:[%s10 + $0x60c] sm:$0xff]
    %v2956 = vld [vmem:[%s10 + $0x614] sm:$0xff]
    %v2957 = vld [vmem:[%s10 + $0x61c] sm:$0xf]
    %v2958 = vld [vmem:[%s10 + $0x620] sm:$0xff]
    %v2959 = vld [vmem:[%s10 + $0x628] sm:$0xff]
    %v2960 = vld [vmem:[%s10 + $0x630] sm:$0xff]
    %v2961 = vld [vmem:[%s10 + $0x638] sm:$0xf]
    %v2962 = vld [vmem:[%s10 + $0x63c] sm:$0xff]
    %v2963 = vld [vmem:[%s10 + $0x644] sm:$0xff]
    %v2964 = vld [vmem:[%s10 + $0x64c] sm:$0xff]
    %v2965 = vld [vmem:[%s10 + $0x654] sm:$0xf]
    %v2966 = vld [vmem:[%s10 + $0x658] sm:$0xff]
    %v2967 = vld [vmem:[%s10 + $0x660] sm:$0xff]
    %v2968 = vld [vmem:[%s10 + $0x668] sm:$0xff]
    %v2969 = vld [vmem:[%s10 + $0x670] sm:$0xf]
    %v2970 = vld [vmem:[%s10 + $0x674] sm:$0xff]
    %v2971 = vld [vmem:[%s10 + $0x67c] sm:$0xff]
    %v2972 = vld [vmem:[%s10 + $0x684] sm:$0xff]
    %v2973 = vld [vmem:[%s10 + $0x68c] sm:$0xf]
    %v2974 = vld [vmem:[%s10 + $0x690] sm:$0xff]
    %v2975 = vld [vmem:[%s10 + $0x698] sm:$0xff]
    %v2976 = vld [vmem:[%s10 + $0x6a0] sm:$0xff]
    %v2977 = vld [vmem:[%s10 + $0x6a8] sm:$0xf]
    %v2978 = vld [vmem:[%s10 + $0x6ac] sm:$0xff]
    %v2979 = vld [vmem:[%s10 + $0x6b4] sm:$0xff]
    %v2980 = vld [vmem:[%s10 + $0x6bc] sm:$0xff]
    %v2981 = vld [vmem:[%s10 + $0x6c4] sm:$0xf]
    %v2982 = vld [vmem:[%s10 + $0x6c8] sm:$0xff]
    %v2983 = vld [vmem:[%s10 + $0x6d0] sm:$0xff]
    %v2984 = vld [vmem:[%s10 + $0x6d8] sm:$0xff]
    %v2985 = vld [vmem:[%s10 + $0x6e0] sm:$0xf]
    %v2986 = vld [vmem:[%s10 + $0x6e4] sm:$0xff]
    %v2987 = vld [vmem:[%s10 + $0x6ec] sm:$0xff]
    %v2988 = vld [vmem:[%s10 + $0x6f4] sm:$0xff]
    %v2989 = vld [vmem:[%s10 + $0x6fc] sm:$0xf]
    %v2990 = vld [vmem:[%s10 + $0x700] sm:$0xff]
    %v2991 = vld [vmem:[%s10 + $0x708] sm:$0xff]
    %v2992 = vld [vmem:[%s10 + $0x710] sm:$0xff]
    %v2993 = vld [vmem:[%s10 + $0x718] sm:$0xf]
    %v2994 = vld [vmem:[%s10 + $0x71c] sm:$0xff]
    %v2995 = vld [vmem:[%s10 + $0x724] sm:$0xff]
    %v2996 = vld [vmem:[%s10 + $0x72c] sm:$0xff]
    %v2997 = vld [vmem:[%s10 + $0x734] sm:$0xf]
    %v2998 = vld [vmem:[%s10 + $0x738] sm:$0xff]
    %v2999 = vld [vmem:[%s10 + $0x740] sm:$0xff]
    %v3000 = vld [vmem:[%s10 + $0x748] sm:$0xff]
    %v3001 = vld [vmem:[%s10 + $0x750] sm:$0xf]
    %v3002 = vld [vmem:[%s10 + $0x754] sm:$0xff]
    %v3003 = vld [vmem:[%s10 + $0x75c] sm:$0xff]
    %v3004 = vld [vmem:[%s10 + $0x764] sm:$0xff]
    %v3005 = vld [vmem:[%s10 + $0x76c] sm:$0xf]
    %v3006 = vld [vmem:[%s10 + $0x770] sm:$0xff]
    %v3007 = vld [vmem:[%s10 + $0x778] sm:$0xff]
    %v3008 = vld [vmem:[%s10 + $0x780] sm:$0xff]
    %v3009 = vld [vmem:[%s10 + $0x788] sm:$0xf]
    %v3010 = vld [vmem:[%s10 + $0x78c] sm:$0xff]
    %v3011 = vld [vmem:[%s10 + $0x794] sm:$0xff]
    %v3012 = vld [vmem:[%s10 + $0x79c] sm:$0xff]
    %v3013 = vld [vmem:[%s10 + $0x7a4] sm:$0xf]
    %v3014 = vld [vmem:[%s10 + $0x7a8] sm:$0xff]
    %v3015 = vld [vmem:[%s10 + $0x7b0] sm:$0xff]
    %v3016 = vld [vmem:[%s10 + $0x7b8] sm:$0xff]
    %v3017 = vld [vmem:[%s10 + $0x7c0] sm:$0xf]
    %v3018 = vld [vmem:[%s10 + $0x7c4] sm:$0xff]
    %v3019 = vld [vmem:[%s10 + $0x7cc] sm:$0xff]
    %v3020 = vld [vmem:[%s10 + $0x7d4] sm:$0xff]
    %v3021 = vld [vmem:[%s10 + $0x7dc] sm:$0xf]
    %v3022 = vld [vmem:[%s10 + $0x7e0] sm:$0xff]
    %v3023 = vld [vmem:[%s10 + $0x7e8] sm:$0xff]
    %v3024 = vld [vmem:[%s10 + $0x7f0] sm:$0xff]
    %v3025 = vld [vmem:[%s10 + $0x7f8] sm:$0xf]
    %v3026 = vld [vmem:[%s10 + $0x7fc] sm:$0xff]
    %v3027 = vld [vmem:[%s10 + $0x804] sm:$0xff]
    %v3028 = vld [vmem:[%s10 + $0x80c] sm:$0xff]
    %v3029 = vld [vmem:[%s10 + $0x814] sm:$0xf]
    %v3030 = vld [vmem:[%s10 + $0x818] sm:$0xff]
    %v3031 = vld [vmem:[%s10 + $0x820] sm:$0xff]
    %v3032 = vld [vmem:[%s10 + $0x828] sm:$0xff]
    %v3033 = vld [vmem:[%s10 + $0x830] sm:$0xf]
    %v3034 = vld [vmem:[%s10 + $0x834] sm:$0xff]
    %v3035 = vld [vmem:[%s10 + $0x83c] sm:$0xff]
    %v3036 = vld [vmem:[%s10 + $0x844] sm:$0xff]
    %v3037 = vld [vmem:[%s10 + $0x84c] sm:$0xf]
    %v3038 = vld [vmem:[%s10 + $0x850] sm:$0xff]
    %v3039 = vld [vmem:[%s10 + $0x858] sm:$0xff]
    %v3040 = vld [vmem:[%s10 + $0x860] sm:$0xff]
    %v3041 = vld [vmem:[%s10 + $0x868] sm:$0xf]
    %v3042 = vld [vmem:[%s10 + $0x86c] sm:$0xff]
    %v3043 = vld [vmem:[%s10 + $0x874] sm:$0xff]
    %v3044 = vld [vmem:[%s10 + $0x87c] sm:$0xff]
    %v3045 = vld [vmem:[%s10 + $0x884] sm:$0xf]
    %v3046 = vld [vmem:[%s10 + $0x888] sm:$0xff]
    %v3047 = vld [vmem:[%s10 + $0x890] sm:$0xff]
    %v3048 = vld [vmem:[%s10 + $0x898] sm:$0xff]
    %v3049 = vld [vmem:[%s10 + $0x8a0] sm:$0xf]
    %v3050 = vld [vmem:[%s10 + $0x8a4] sm:$0xff]
    %v3051 = vld [vmem:[%s10 + $0x8ac] sm:$0xff]
    %v3052 = vld [vmem:[%s10 + $0x8b4] sm:$0xff]
    %v3053 = vld [vmem:[%s10 + $0x8bc] sm:$0xf]
    %v3054 = vld [vmem:[%s10 + $0x8c0] sm:$0xff]
    %v3055 = vld [vmem:[%s10 + $0x8c8] sm:$0xff]
    %v3056 = vld [vmem:[%s10 + $0x8d0] sm:$0xff]
    %v3057 = vld [vmem:[%s10 + $0x8d8] sm:$0xf]
    %v3058 = vld [vmem:[%s10 + $0x8dc] sm:$0xff]
    %v3059 = vld [vmem:[%s10 + $0x8e4] sm:$0xff]
    %v3060 = vld [vmem:[%s10 + $0x8ec] sm:$0xff]
    %v3061 = vld [vmem:[%s10 + $0x8f4] sm:$0xf]
    %v3062 = vld [vmem:[%s10 + $0x8f8] sm:$0xff]
    %v3063 = vld [vmem:[%s10 + $0x900] sm:$0xff]
    %v3064 = vld [vmem:[%s10 + $0x908] sm:$0xff]
    %v3065 = vld [vmem:[%s10 + $0x910] sm:$0xf]
    %v3066 = vld [vmem:[%s10 + $0x914] sm:$0xff]
    %v3067 = vld [vmem:[%s10 + $0x91c] sm:$0xff]
    %v3068 = vld [vmem:[%s10 + $0x924] sm:$0xff]
    %v3069 = vld [vmem:[%s10 + $0x92c] sm:$0xf]
    %v3070 = vld [vmem:[%s10 + $0x930] sm:$0xff]
    %v3071 = vld [vmem:[%s10 + $0x938] sm:$0xff]
    %v3072 = vld [vmem:[%s10 + $0x940] sm:$0xff]
    %v3073 = vld [vmem:[%s10 + $0x948] sm:$0xf]
    %v3074 = vld [vmem:[%s10 + $0x94c] sm:$0xff]
    %v3075 = vld [vmem:[%s10 + $0x954] sm:$0xff]
    %v3076 = vld [vmem:[%s10 + $0x95c] sm:$0xff]
    %v3077 = vld [vmem:[%s10 + $0x964] sm:$0xf]
    %v3078 = vld [vmem:[%s10 + $0x968] sm:$0xff]
    %v3079 = vld [vmem:[%s10 + $0x970] sm:$0xff]
    %v3080 = vld [vmem:[%s10 + $0x978] sm:$0xff]
    %v3081 = vld [vmem:[%s10 + $0x980] sm:$0xf]
    %v3082 = vld [vmem:[%s10 + $0x984] sm:$0xff]
    %v3083 = vld [vmem:[%s10 + $0x98c] sm:$0xff]
    %v3084 = vld [vmem:[%s10 + $0x994] sm:$0xff]
    %v3085 = vld [vmem:[%s10 + $0x99c] sm:$0xf]
    %v3086 = vld [vmem:[%s10 + $0x9a0] sm:$0xff]
    %v3087 = vld [vmem:[%s10 + $0x9a8] sm:$0xff]
    %v3088 = vld [vmem:[%s10 + $0x9b0] sm:$0xff]
    %v3089 = vld [vmem:[%s10 + $0x9b8] sm:$0xf]
    %v3090 = vld [vmem:[%s10 + $0x9bc] sm:$0xff]
    %v3091 = vld [vmem:[%s10 + $0x9c4] sm:$0xff]
    %v3092 = vld [vmem:[%s10 + $0x9cc] sm:$0xff]
    %v3093 = vld [vmem:[%s10 + $0x9d4] sm:$0xf]
    %v3094 = vld [vmem:[%s10 + $0x9d8] sm:$0xff]
    %v3095 = vld [vmem:[%s10 + $0x9e0] sm:$0xff]
    %v3096 = vld [vmem:[%s10 + $0x9e8] sm:$0xff]
    %v3097 = vld [vmem:[%s10 + $0x9f0] sm:$0xf]
    %v3098 = vld [vmem:[%s10 + $0x9f4] sm:$0xff]
    %v3099 = vld [vmem:[%s10 + $0x9fc] sm:$0xff]
    %v3100 = vld [vmem:[%s10 + $0xa04] sm:$0xff]
    %v3101 = vld [vmem:[%s10 + $0xa0c] sm:$0xf]
    %v3102 = vld [vmem:[%s10 + $0xa10] sm:$0xff]
    %v3103 = vld [vmem:[%s10 + $0xa18] sm:$0xff]
    %v3104 = vld [vmem:[%s10 + $0xa20] sm:$0xff]
    %v3105 = vld [vmem:[%s10 + $0xa28] sm:$0xf]
    %v3106 = vld [vmem:[%s10 + $0xa2c] sm:$0xff]
    %v3107 = vld [vmem:[%s10 + $0xa34] sm:$0xff]
    %v3108 = vld [vmem:[%s10 + $0xa3c] sm:$0xff]
    %v3109 = vld [vmem:[%s10 + $0xa44] sm:$0xf]
    %v3110 = vld [vmem:[%s10 + $0xa48] sm:$0xff]
    %v3111 = vld [vmem:[%s10 + $0xa50] sm:$0xff]
    %v3112 = vld [vmem:[%s10 + $0xa58] sm:$0xff]
    %v3113 = vld [vmem:[%s10 + $0xa60] sm:$0xf]
    %v3114 = vld [vmem:[%s10 + $0xa64] sm:$0xff]
    %v3115 = vld [vmem:[%s10 + $0xa6c] sm:$0xff]
    %v3116 = vld [vmem:[%s10 + $0xa74] sm:$0xff]
    %v3117 = vld [vmem:[%s10 + $0xa7c] sm:$0xf]
    %v3118 = vld [vmem:[%s10 + $0xa80] sm:$0xff]
    %v3119 = vld [vmem:[%s10 + $0xa88] sm:$0xff]
    %v3120 = vld [vmem:[%s10 + $0xa90] sm:$0xff]
    %v3121 = vld [vmem:[%s10 + $0xa98] sm:$0xf]
    %v3122 = vld [vmem:[%s10 + $0xa9c] sm:$0xff]
    %v3123 = vld [vmem:[%s10 + $0xaa4] sm:$0xff]
    %v3124 = vld [vmem:[%s10 + $0xaac] sm:$0xff]
    %v3125 = vld [vmem:[%s10 + $0xab4] sm:$0xf]
    %v3126 = vld [vmem:[%s11] sm:$0x7f]
    %v3128 = vlaneseq
    %v3129 = vshrl.u32 %v3128, 7
    %v3130 = vsub.s32 0, %v3129
    %v3131 = vrot.slane %v3126, %v3130
    %v3132 = vlaneseq
    %v3133 = vshrl.u32 %v3132, 7
    %v3134 = vsub.s32 1, %v3133
    %v3135 = vrot.slane %v3126, %v3134
    %v3136 = vlaneseq
    %v3137 = vshrl.u32 %v3136, 7
    %v3138 = vsub.s32 2, %v3137
    %v3139 = vrot.slane %v3126, %v3138
    %v3140 = vlaneseq
    %v3141 = vshrl.u32 %v3140, 7
    %v3142 = vsub.s32 3, %v3141
    %v3143 = vrot.slane %v3126, %v3142
    %v3144 = vlaneseq
    %v3145 = vshrl.u32 %v3144, 7
    %v3146 = vsub.s32 4, %v3145
    %v3147 = vrot.slane %v3126, %v3146
    %v3148 = vlaneseq
    %v3149 = vshrl.u32 %v3148, 7
    %v3150 = vsub.s32 5, %v3149
    %v3151 = vrot.slane %v3126, %v3150
    %v3152 = vlaneseq
    %v3153 = vshrl.u32 %v3152, 7
    %v3154 = vsub.s32 6, %v3153
    %v3155 = vrot.slane %v3126, %v3154
    %v3555 = vunpack.c.l.b16 %v2734
    %v3556 = vunpack.c.h.b16 %v2734
    %v3557 = vunpack.c.l.b16 %v2735
    %v3558 = vunpack.c.h.b16 %v2735
    %v3559 = vunpack.c.l.b16 %v2736
    %v3560 = vunpack.c.h.b16 %v2736
    %v3561 = vunpack.c.l.b16 %v2737
    %v3562 = vunpack.c.l.b16 %v2738
    %v3563 = vunpack.c.h.b16 %v2738
    %v3564 = vunpack.c.l.b16 %v2739
    %v3565 = vunpack.c.h.b16 %v2739
    %v3566 = vunpack.c.l.b16 %v2740
    %v3567 = vunpack.c.h.b16 %v2740
    %v3568 = vunpack.c.l.b16 %v2741
    %v3569 = vunpack.c.l.b16 %v2742
    %v3570 = vunpack.c.h.b16 %v2742
    %v3571 = vunpack.c.l.b16 %v2743
    %v3572 = vunpack.c.h.b16 %v2743
    %v3573 = vunpack.c.l.b16 %v2744
    %v3574 = vunpack.c.h.b16 %v2744
    %v3575 = vunpack.c.l.b16 %v2745
    %v3576 = vunpack.c.l.b16 %v2746
    %v3577 = vunpack.c.h.b16 %v2746
    %v3578 = vunpack.c.l.b16 %v2747
    %v3579 = vunpack.c.h.b16 %v2747
    %v3580 = vunpack.c.l.b16 %v2748
    %v3581 = vunpack.c.h.b16 %v2748
    %v3582 = vunpack.c.l.b16 %v2749
    %v3583 = vunpack.c.l.b16 %v2750
    %v3584 = vunpack.c.h.b16 %v2750
    %v3585 = vunpack.c.l.b16 %v2751
    %v3586 = vunpack.c.h.b16 %v2751
    %v3587 = vunpack.c.l.b16 %v2752
    %v3588 = vunpack.c.h.b16 %v2752
    %v3589 = vunpack.c.l.b16 %v2753
    %v3590 = vunpack.c.l.b16 %v2754
    %v3591 = vunpack.c.h.b16 %v2754
    %v3592 = vunpack.c.l.b16 %v2755
    %v3593 = vunpack.c.h.b16 %v2755
    %v3594 = vunpack.c.l.b16 %v2756
    %v3595 = vunpack.c.h.b16 %v2756
    %v3596 = vunpack.c.l.b16 %v2757
    %v3597 = vunpack.c.l.b16 %v2758
    %v3598 = vunpack.c.h.b16 %v2758
    %v3599 = vunpack.c.l.b16 %v2759
    %v3600 = vunpack.c.h.b16 %v2759
    %v3601 = vunpack.c.l.b16 %v2760
    %v3602 = vunpack.c.h.b16 %v2760
    %v3603 = vunpack.c.l.b16 %v2761
    %v3604 = vunpack.c.l.b16 %v2762
    %v3605 = vunpack.c.h.b16 %v2762
    %v3606 = vunpack.c.l.b16 %v2763
    %v3607 = vunpack.c.h.b16 %v2763
    %v3608 = vunpack.c.l.b16 %v2764
    %v3609 = vunpack.c.h.b16 %v2764
    %v3610 = vunpack.c.l.b16 %v2765
    %v3611 = vunpack.c.l.b16 %v2766
    %v3612 = vunpack.c.h.b16 %v2766
    %v3613 = vunpack.c.l.b16 %v2767
    %v3614 = vunpack.c.h.b16 %v2767
    %v3615 = vunpack.c.l.b16 %v2768
    %v3616 = vunpack.c.h.b16 %v2768
    %v3617 = vunpack.c.l.b16 %v2769
    %v3618 = vunpack.c.l.b16 %v2770
    %v3619 = vunpack.c.h.b16 %v2770
    %v3620 = vunpack.c.l.b16 %v2771
    %v3621 = vunpack.c.h.b16 %v2771
    %v3622 = vunpack.c.l.b16 %v2772
    %v3623 = vunpack.c.h.b16 %v2772
    %v3624 = vunpack.c.l.b16 %v2773
    %v3625 = vunpack.c.l.b16 %v2774
    %v3626 = vunpack.c.h.b16 %v2774
    %v3627 = vunpack.c.l.b16 %v2775
    %v3628 = vunpack.c.h.b16 %v2775
    %v3629 = vunpack.c.l.b16 %v2776
    %v3630 = vunpack.c.h.b16 %v2776
    %v3631 = vunpack.c.l.b16 %v2777
    %v3632 = vunpack.c.l.b16 %v2778
    %v3633 = vunpack.c.h.b16 %v2778
    %v3634 = vunpack.c.l.b16 %v2779
    %v3635 = vunpack.c.h.b16 %v2779
    %v3636 = vunpack.c.l.b16 %v2780
    %v3637 = vunpack.c.h.b16 %v2780
    %v3638 = vunpack.c.l.b16 %v2781
    %v3639 = vunpack.c.l.b16 %v2782
    %v3640 = vunpack.c.h.b16 %v2782
    %v3641 = vunpack.c.l.b16 %v2783
    %v3642 = vunpack.c.h.b16 %v2783
    %v3643 = vunpack.c.l.b16 %v2784
    %v3644 = vunpack.c.h.b16 %v2784
    %v3645 = vunpack.c.l.b16 %v2785
    %v3646 = vunpack.c.l.b16 %v2786
    %v3647 = vunpack.c.h.b16 %v2786
    %v3648 = vunpack.c.l.b16 %v2787
    %v3649 = vunpack.c.h.b16 %v2787
    %v3650 = vunpack.c.l.b16 %v2788
    %v3651 = vunpack.c.h.b16 %v2788
    %v3652 = vunpack.c.l.b16 %v2789
    %v3653 = vunpack.c.l.b16 %v2790
    %v3654 = vunpack.c.h.b16 %v2790
    %v3655 = vunpack.c.l.b16 %v2791
    %v3656 = vunpack.c.h.b16 %v2791
    %v3657 = vunpack.c.l.b16 %v2792
    %v3658 = vunpack.c.h.b16 %v2792
    %v3659 = vunpack.c.l.b16 %v2793
    %v3660 = vunpack.c.l.b16 %v2794
    %v3661 = vunpack.c.h.b16 %v2794
    %v3662 = vunpack.c.l.b16 %v2795
    %v3663 = vunpack.c.h.b16 %v2795
    %v3664 = vunpack.c.l.b16 %v2796
    %v3665 = vunpack.c.h.b16 %v2796
    %v3666 = vunpack.c.l.b16 %v2797
    %v3667 = vunpack.c.l.b16 %v2798
    %v3668 = vunpack.c.h.b16 %v2798
    %v3669 = vunpack.c.l.b16 %v2799
    %v3670 = vunpack.c.h.b16 %v2799
    %v3671 = vunpack.c.l.b16 %v2800
    %v3672 = vunpack.c.h.b16 %v2800
    %v3673 = vunpack.c.l.b16 %v2801
    %v3674 = vunpack.c.l.b16 %v2802
    %v3675 = vunpack.c.h.b16 %v2802
    %v3676 = vunpack.c.l.b16 %v2803
    %v3677 = vunpack.c.h.b16 %v2803
    %v3678 = vunpack.c.l.b16 %v2804
    %v3679 = vunpack.c.h.b16 %v2804
    %v3680 = vunpack.c.l.b16 %v2805
    %v3681 = vunpack.c.l.b16 %v2806
    %v3682 = vunpack.c.h.b16 %v2806
    %v3683 = vunpack.c.l.b16 %v2807
    %v3684 = vunpack.c.h.b16 %v2807
    %v3685 = vunpack.c.l.b16 %v2808
    %v3686 = vunpack.c.h.b16 %v2808
    %v3687 = vunpack.c.l.b16 %v2809
    %v3688 = vunpack.c.l.b16 %v2810
    %v3689 = vunpack.c.h.b16 %v2810
    %v3690 = vunpack.c.l.b16 %v2811
    %v3691 = vunpack.c.h.b16 %v2811
    %v3692 = vunpack.c.l.b16 %v2812
    %v3693 = vunpack.c.h.b16 %v2812
    %v3694 = vunpack.c.l.b16 %v2813
    %v3695 = vunpack.c.l.b16 %v2814
    %v3696 = vunpack.c.h.b16 %v2814
    %v3697 = vunpack.c.l.b16 %v2815
    %v3698 = vunpack.c.h.b16 %v2815
    %v3699 = vunpack.c.l.b16 %v2816
    %v3700 = vunpack.c.h.b16 %v2816
    %v3701 = vunpack.c.l.b16 %v2817
    %v3702 = vunpack.c.l.b16 %v2818
    %v3703 = vunpack.c.h.b16 %v2818
    %v3704 = vunpack.c.l.b16 %v2819
    %v3705 = vunpack.c.h.b16 %v2819
    %v3706 = vunpack.c.l.b16 %v2820
    %v3707 = vunpack.c.h.b16 %v2820
    %v3708 = vunpack.c.l.b16 %v2821
    %v3709 = vunpack.c.l.b16 %v2822
    %v3710 = vunpack.c.h.b16 %v2822
    %v3711 = vunpack.c.l.b16 %v2823
    %v3712 = vunpack.c.h.b16 %v2823
    %v3713 = vunpack.c.l.b16 %v2824
    %v3714 = vunpack.c.h.b16 %v2824
    %v3715 = vunpack.c.l.b16 %v2825
    %v3716 = vunpack.c.l.b16 %v2826
    %v3717 = vunpack.c.h.b16 %v2826
    %v3718 = vunpack.c.l.b16 %v2827
    %v3719 = vunpack.c.h.b16 %v2827
    %v3720 = vunpack.c.l.b16 %v2828
    %v3721 = vunpack.c.h.b16 %v2828
    %v3722 = vunpack.c.l.b16 %v2829
    %v3723 = vunpack.c.l.b16 %v2830
    %v3724 = vunpack.c.h.b16 %v2830
    %v3725 = vunpack.c.l.b16 %v2831
    %v3726 = vunpack.c.h.b16 %v2831
    %v3727 = vunpack.c.l.b16 %v2832
    %v3728 = vunpack.c.h.b16 %v2832
    %v3729 = vunpack.c.l.b16 %v2833
    %v3730 = vunpack.c.l.b16 %v2834
    %v3731 = vunpack.c.h.b16 %v2834
    %v3732 = vunpack.c.l.b16 %v2835
    %v3733 = vunpack.c.h.b16 %v2835
    %v3734 = vunpack.c.l.b16 %v2836
    %v3735 = vunpack.c.h.b16 %v2836
    %v3736 = vunpack.c.l.b16 %v2837
    %v3737 = vunpack.c.l.b16 %v2838
    %v3738 = vunpack.c.h.b16 %v2838
    %v3739 = vunpack.c.l.b16 %v2839
    %v3740 = vunpack.c.h.b16 %v2839
    %v3741 = vunpack.c.l.b16 %v2840
    %v3742 = vunpack.c.h.b16 %v2840
    %v3743 = vunpack.c.l.b16 %v2841
    %v3744 = vunpack.c.l.b16 %v2842
    %v3745 = vunpack.c.h.b16 %v2842
    %v3746 = vunpack.c.l.b16 %v2843
    %v3747 = vunpack.c.h.b16 %v2843
    %v3748 = vunpack.c.l.b16 %v2844
    %v3749 = vunpack.c.h.b16 %v2844
    %v3750 = vunpack.c.l.b16 %v2845
    %v3751 = vunpack.c.l.b16 %v2846
    %v3752 = vunpack.c.h.b16 %v2846
    %v3753 = vunpack.c.l.b16 %v2847
    %v3754 = vunpack.c.h.b16 %v2847
    %v3755 = vunpack.c.l.b16 %v2848
    %v3756 = vunpack.c.h.b16 %v2848
    %v3757 = vunpack.c.l.b16 %v2849
    %v3758 = vunpack.c.l.b16 %v2850
    %v3759 = vunpack.c.h.b16 %v2850
    %v3760 = vunpack.c.l.b16 %v2851
    %v3761 = vunpack.c.h.b16 %v2851
    %v3762 = vunpack.c.l.b16 %v2852
    %v3763 = vunpack.c.h.b16 %v2852
    %v3764 = vunpack.c.l.b16 %v2853
    %v3765 = vunpack.c.l.b16 %v2854
    %v3766 = vunpack.c.h.b16 %v2854
    %v3767 = vunpack.c.l.b16 %v2855
    %v3768 = vunpack.c.h.b16 %v2855
    %v3769 = vunpack.c.l.b16 %v2856
    %v3770 = vunpack.c.h.b16 %v2856
    %v3771 = vunpack.c.l.b16 %v2857
    %v3772 = vunpack.c.l.b16 %v2858
    %v3773 = vunpack.c.h.b16 %v2858
    %v3774 = vunpack.c.l.b16 %v2859
    %v3775 = vunpack.c.h.b16 %v2859
    %v3776 = vunpack.c.l.b16 %v2860
    %v3777 = vunpack.c.h.b16 %v2860
    %v3778 = vunpack.c.l.b16 %v2861
    %v3779 = vunpack.c.l.b16 %v2862
    %v3780 = vunpack.c.h.b16 %v2862
    %v3781 = vunpack.c.l.b16 %v2863
    %v3782 = vunpack.c.h.b16 %v2863
    %v3783 = vunpack.c.l.b16 %v2864
    %v3784 = vunpack.c.h.b16 %v2864
    %v3785 = vunpack.c.l.b16 %v2865
    %v3786 = vunpack.c.l.b16 %v2866
    %v3787 = vunpack.c.h.b16 %v2866
    %v3788 = vunpack.c.l.b16 %v2867
    %v3789 = vunpack.c.h.b16 %v2867
    %v3790 = vunpack.c.l.b16 %v2868
    %v3791 = vunpack.c.h.b16 %v2868
    %v3792 = vunpack.c.l.b16 %v2869
    %v3793 = vunpack.c.l.b16 %v2870
    %v3794 = vunpack.c.h.b16 %v2870
    %v3795 = vunpack.c.l.b16 %v2871
    %v3796 = vunpack.c.h.b16 %v2871
    %v3797 = vunpack.c.l.b16 %v2872
    %v3798 = vunpack.c.h.b16 %v2872
    %v3799 = vunpack.c.l.b16 %v2873
    %v3800 = vunpack.c.l.b16 %v2874
    %v3801 = vunpack.c.h.b16 %v2874
    %v3802 = vunpack.c.l.b16 %v2875
    %v3803 = vunpack.c.h.b16 %v2875
    %v3804 = vunpack.c.l.b16 %v2876
    %v3805 = vunpack.c.h.b16 %v2876
    %v3806 = vunpack.c.l.b16 %v2877
    %v3807 = vunpack.c.l.b16 %v2878
    %v3808 = vunpack.c.h.b16 %v2878
    %v3809 = vunpack.c.l.b16 %v2879
    %v3810 = vunpack.c.h.b16 %v2879
    %v3811 = vunpack.c.l.b16 %v2880
    %v3812 = vunpack.c.h.b16 %v2880
    %v3813 = vunpack.c.l.b16 %v2881
    %v3814 = vunpack.c.l.b16 %v2882
    %v3815 = vunpack.c.h.b16 %v2882
    %v3816 = vunpack.c.l.b16 %v2883
    %v3817 = vunpack.c.h.b16 %v2883
    %v3818 = vunpack.c.l.b16 %v2884
    %v3819 = vunpack.c.h.b16 %v2884
    %v3820 = vunpack.c.l.b16 %v2885
    %v3821 = vunpack.c.l.b16 %v2886
    %v3822 = vunpack.c.h.b16 %v2886
    %v3823 = vunpack.c.l.b16 %v2887
    %v3824 = vunpack.c.h.b16 %v2887
    %v3825 = vunpack.c.l.b16 %v2888
    %v3826 = vunpack.c.h.b16 %v2888
    %v3827 = vunpack.c.l.b16 %v2889
    %v3828 = vunpack.c.l.b16 %v2890
    %v3829 = vunpack.c.h.b16 %v2890
    %v3830 = vunpack.c.l.b16 %v2891
    %v3831 = vunpack.c.h.b16 %v2891
    %v3832 = vunpack.c.l.b16 %v2892
    %v3833 = vunpack.c.h.b16 %v2892
    %v3834 = vunpack.c.l.b16 %v2893
    %v3835 = vunpack.c.l.b16 %v2894
    %v3836 = vunpack.c.h.b16 %v2894
    %v3837 = vunpack.c.l.b16 %v2895
    %v3838 = vunpack.c.h.b16 %v2895
    %v3839 = vunpack.c.l.b16 %v2896
    %v3840 = vunpack.c.h.b16 %v2896
    %v3841 = vunpack.c.l.b16 %v2897
    %v3842 = vunpack.c.l.b16 %v2898
    %v3843 = vunpack.c.h.b16 %v2898
    %v3844 = vunpack.c.l.b16 %v2899
    %v3845 = vunpack.c.h.b16 %v2899
    %v3846 = vunpack.c.l.b16 %v2900
    %v3847 = vunpack.c.h.b16 %v2900
    %v3848 = vunpack.c.l.b16 %v2901
    %v3849 = vunpack.c.l.b16 %v2902
    %v3850 = vunpack.c.h.b16 %v2902
    %v3851 = vunpack.c.l.b16 %v2903
    %v3852 = vunpack.c.h.b16 %v2903
    %v3853 = vunpack.c.l.b16 %v2904
    %v3854 = vunpack.c.h.b16 %v2904
    %v3855 = vunpack.c.l.b16 %v2905
    %v3856 = vunpack.c.l.b16 %v2906
    %v3857 = vunpack.c.h.b16 %v2906
    %v3858 = vunpack.c.l.b16 %v2907
    %v3859 = vunpack.c.h.b16 %v2907
    %v3860 = vunpack.c.l.b16 %v2908
    %v3861 = vunpack.c.h.b16 %v2908
    %v3862 = vunpack.c.l.b16 %v2909
    %v3863 = vunpack.c.l.b16 %v2910
    %v3864 = vunpack.c.h.b16 %v2910
    %v3865 = vunpack.c.l.b16 %v2911
    %v3866 = vunpack.c.h.b16 %v2911
    %v3867 = vunpack.c.l.b16 %v2912
    %v3868 = vunpack.c.h.b16 %v2912
    %v3869 = vunpack.c.l.b16 %v2913
    %v3870 = vunpack.c.l.b16 %v2914
    %v3871 = vunpack.c.h.b16 %v2914
    %v3872 = vunpack.c.l.b16 %v2915
    %v3873 = vunpack.c.h.b16 %v2915
    %v3874 = vunpack.c.l.b16 %v2916
    %v3875 = vunpack.c.h.b16 %v2916
    %v3876 = vunpack.c.l.b16 %v2917
    %v3877 = vunpack.c.l.b16 %v2918
    %v3878 = vunpack.c.h.b16 %v2918
    %v3879 = vunpack.c.l.b16 %v2919
    %v3880 = vunpack.c.h.b16 %v2919
    %v3881 = vunpack.c.l.b16 %v2920
    %v3882 = vunpack.c.h.b16 %v2920
    %v3883 = vunpack.c.l.b16 %v2921
    %v3884 = vunpack.c.l.b16 %v2922
    %v3885 = vunpack.c.h.b16 %v2922
    %v3886 = vunpack.c.l.b16 %v2923
    %v3887 = vunpack.c.h.b16 %v2923
    %v3888 = vunpack.c.l.b16 %v2924
    %v3889 = vunpack.c.h.b16 %v2924
    %v3890 = vunpack.c.l.b16 %v2925
    %v3891 = vunpack.c.l.b16 %v2926
    %v3892 = vunpack.c.h.b16 %v2926
    %v3893 = vunpack.c.l.b16 %v2927
    %v3894 = vunpack.c.h.b16 %v2927
    %v3895 = vunpack.c.l.b16 %v2928
    %v3896 = vunpack.c.h.b16 %v2928
    %v3897 = vunpack.c.l.b16 %v2929
    %v3898 = vunpack.c.l.b16 %v2930
    %v3899 = vunpack.c.h.b16 %v2930
    %v3900 = vunpack.c.l.b16 %v2931
    %v3901 = vunpack.c.h.b16 %v2931
    %v3902 = vunpack.c.l.b16 %v2932
    %v3903 = vunpack.c.h.b16 %v2932
    %v3904 = vunpack.c.l.b16 %v2933
    %v3905 = vunpack.c.l.b16 %v2934
    %v3906 = vunpack.c.h.b16 %v2934
    %v3907 = vunpack.c.l.b16 %v2935
    %v3908 = vunpack.c.h.b16 %v2935
    %v3909 = vunpack.c.l.b16 %v2936
    %v3910 = vunpack.c.h.b16 %v2936
    %v3911 = vunpack.c.l.b16 %v2937
    %v3912 = vunpack.c.l.b16 %v2938
    %v3913 = vunpack.c.h.b16 %v2938
    %v3914 = vunpack.c.l.b16 %v2939
    %v3915 = vunpack.c.h.b16 %v2939
    %v3916 = vunpack.c.l.b16 %v2940
    %v3917 = vunpack.c.h.b16 %v2940
    %v3918 = vunpack.c.l.b16 %v2941
    %v3919 = vunpack.c.l.b16 %v2942
    %v3920 = vunpack.c.h.b16 %v2942
    %v3921 = vunpack.c.l.b16 %v2943
    %v3922 = vunpack.c.h.b16 %v2943
    %v3923 = vunpack.c.l.b16 %v2944
    %v3924 = vunpack.c.h.b16 %v2944
    %v3925 = vunpack.c.l.b16 %v2945
    %v3926 = vunpack.c.l.b16 %v2946
    %v3927 = vunpack.c.h.b16 %v2946
    %v3928 = vunpack.c.l.b16 %v2947
    %v3929 = vunpack.c.h.b16 %v2947
    %v3930 = vunpack.c.l.b16 %v2948
    %v3931 = vunpack.c.h.b16 %v2948
    %v3932 = vunpack.c.l.b16 %v2949
    %v3933 = vunpack.c.l.b16 %v2950
    %v3934 = vunpack.c.h.b16 %v2950
    %v3935 = vunpack.c.l.b16 %v2951
    %v3936 = vunpack.c.h.b16 %v2951
    %v3937 = vunpack.c.l.b16 %v2952
    %v3938 = vunpack.c.h.b16 %v2952
    %v3939 = vunpack.c.l.b16 %v2953
    %v3940 = vunpack.c.l.b16 %v2954
    %v3941 = vunpack.c.h.b16 %v2954
    %v3942 = vunpack.c.l.b16 %v2955
    %v3943 = vunpack.c.h.b16 %v2955
    %v3944 = vunpack.c.l.b16 %v2956
    %v3945 = vunpack.c.h.b16 %v2956
    %v3946 = vunpack.c.l.b16 %v2957
    %v3947 = vunpack.c.l.b16 %v2958
    %v3948 = vunpack.c.h.b16 %v2958
    %v3949 = vunpack.c.l.b16 %v2959
    %v3950 = vunpack.c.h.b16 %v2959
    %v3951 = vunpack.c.l.b16 %v2960
    %v3952 = vunpack.c.h.b16 %v2960
    %v3953 = vunpack.c.l.b16 %v2961
    %v3954 = vunpack.c.l.b16 %v2962
    %v3955 = vunpack.c.h.b16 %v2962
    %v3956 = vunpack.c.l.b16 %v2963
    %v3957 = vunpack.c.h.b16 %v2963
    %v3958 = vunpack.c.l.b16 %v2964
    %v3959 = vunpack.c.h.b16 %v2964
    %v3960 = vunpack.c.l.b16 %v2965
    %v3961 = vunpack.c.l.b16 %v2966
    %v3962 = vunpack.c.h.b16 %v2966
    %v3963 = vunpack.c.l.b16 %v2967
    %v3964 = vunpack.c.h.b16 %v2967
    %v3965 = vunpack.c.l.b16 %v2968
    %v3966 = vunpack.c.h.b16 %v2968
    %v3967 = vunpack.c.l.b16 %v2969
    %v3968 = vunpack.c.l.b16 %v2970
    %v3969 = vunpack.c.h.b16 %v2970
    %v3970 = vunpack.c.l.b16 %v2971
    %v3971 = vunpack.c.h.b16 %v2971
    %v3972 = vunpack.c.l.b16 %v2972
    %v3973 = vunpack.c.h.b16 %v2972
    %v3974 = vunpack.c.l.b16 %v2973
    %v3975 = vunpack.c.l.b16 %v2974
    %v3976 = vunpack.c.h.b16 %v2974
    %v3977 = vunpack.c.l.b16 %v2975
    %v3978 = vunpack.c.h.b16 %v2975
    %v3979 = vunpack.c.l.b16 %v2976
    %v3980 = vunpack.c.h.b16 %v2976
    %v3981 = vunpack.c.l.b16 %v2977
    %v3982 = vunpack.c.l.b16 %v2978
    %v3983 = vunpack.c.h.b16 %v2978
    %v3984 = vunpack.c.l.b16 %v2979
    %v3985 = vunpack.c.h.b16 %v2979
    %v3986 = vunpack.c.l.b16 %v2980
    %v3987 = vunpack.c.h.b16 %v2980
    %v3988 = vunpack.c.l.b16 %v2981
    %v3989 = vunpack.c.l.b16 %v2982
    %v3990 = vunpack.c.h.b16 %v2982
    %v3991 = vunpack.c.l.b16 %v2983
    %v3992 = vunpack.c.h.b16 %v2983
    %v3993 = vunpack.c.l.b16 %v2984
    %v3994 = vunpack.c.h.b16 %v2984
    %v3995 = vunpack.c.l.b16 %v2985
    %v3996 = vunpack.c.l.b16 %v2986
    %v3997 = vunpack.c.h.b16 %v2986
    %v3998 = vunpack.c.l.b16 %v2987
    %v3999 = vunpack.c.h.b16 %v2987
    %v4000 = vunpack.c.l.b16 %v2988
    %v4001 = vunpack.c.h.b16 %v2988
    %v4002 = vunpack.c.l.b16 %v2989
    %v4003 = vunpack.c.l.b16 %v2990
    %v4004 = vunpack.c.h.b16 %v2990
    %v4005 = vunpack.c.l.b16 %v2991
    %v4006 = vunpack.c.h.b16 %v2991
    %v4007 = vunpack.c.l.b16 %v2992
    %v4008 = vunpack.c.h.b16 %v2992
    %v4009 = vunpack.c.l.b16 %v2993
    %v4010 = vunpack.c.l.b16 %v2994
    %v4011 = vunpack.c.h.b16 %v2994
    %v4012 = vunpack.c.l.b16 %v2995
    %v4013 = vunpack.c.h.b16 %v2995
    %v4014 = vunpack.c.l.b16 %v2996
    %v4015 = vunpack.c.h.b16 %v2996
    %v4016 = vunpack.c.l.b16 %v2997
    %v4017 = vunpack.c.l.b16 %v2998
    %v4018 = vunpack.c.h.b16 %v2998
    %v4019 = vunpack.c.l.b16 %v2999
    %v4020 = vunpack.c.h.b16 %v2999
    %v4021 = vunpack.c.l.b16 %v3000
    %v4022 = vunpack.c.h.b16 %v3000
    %v4023 = vunpack.c.l.b16 %v3001
    %v4024 = vunpack.c.l.b16 %v3002
    %v4025 = vunpack.c.h.b16 %v3002
    %v4026 = vunpack.c.l.b16 %v3003
    %v4027 = vunpack.c.h.b16 %v3003
    %v4028 = vunpack.c.l.b16 %v3004
    %v4029 = vunpack.c.h.b16 %v3004
    %v4030 = vunpack.c.l.b16 %v3005
    %v4031 = vunpack.c.l.b16 %v3006
    %v4032 = vunpack.c.h.b16 %v3006
    %v4033 = vunpack.c.l.b16 %v3007
    %v4034 = vunpack.c.h.b16 %v3007
    %v4035 = vunpack.c.l.b16 %v3008
    %v4036 = vunpack.c.h.b16 %v3008
    %v4037 = vunpack.c.l.b16 %v3009
    %v4038 = vunpack.c.l.b16 %v3010
    %v4039 = vunpack.c.h.b16 %v3010
    %v4040 = vunpack.c.l.b16 %v3011
    %v4041 = vunpack.c.h.b16 %v3011
    %v4042 = vunpack.c.l.b16 %v3012
    %v4043 = vunpack.c.h.b16 %v3012
    %v4044 = vunpack.c.l.b16 %v3013
    %v4045 = vunpack.c.l.b16 %v3014
    %v4046 = vunpack.c.h.b16 %v3014
    %v4047 = vunpack.c.l.b16 %v3015
    %v4048 = vunpack.c.h.b16 %v3015
    %v4049 = vunpack.c.l.b16 %v3016
    %v4050 = vunpack.c.h.b16 %v3016
    %v4051 = vunpack.c.l.b16 %v3017
    %v4052 = vunpack.c.l.b16 %v3018
    %v4053 = vunpack.c.h.b16 %v3018
    %v4054 = vunpack.c.l.b16 %v3019
    %v4055 = vunpack.c.h.b16 %v3019
    %v4056 = vunpack.c.l.b16 %v3020
    %v4057 = vunpack.c.h.b16 %v3020
    %v4058 = vunpack.c.l.b16 %v3021
    %v4059 = vunpack.c.l.b16 %v3022
    %v4060 = vunpack.c.h.b16 %v3022
    %v4061 = vunpack.c.l.b16 %v3023
    %v4062 = vunpack.c.h.b16 %v3023
    %v4063 = vunpack.c.l.b16 %v3024
    %v4064 = vunpack.c.h.b16 %v3024
    %v4065 = vunpack.c.l.b16 %v3025
    %v4066 = vunpack.c.l.b16 %v3026
    %v4067 = vunpack.c.h.b16 %v3026
    %v4068 = vunpack.c.l.b16 %v3027
    %v4069 = vunpack.c.h.b16 %v3027
    %v4070 = vunpack.c.l.b16 %v3028
    %v4071 = vunpack.c.h.b16 %v3028
    %v4072 = vunpack.c.l.b16 %v3029
    %v4073 = vunpack.c.l.b16 %v3030
    %v4074 = vunpack.c.h.b16 %v3030
    %v4075 = vunpack.c.l.b16 %v3031
    %v4076 = vunpack.c.h.b16 %v3031
    %v4077 = vunpack.c.l.b16 %v3032
    %v4078 = vunpack.c.h.b16 %v3032
    %v4079 = vunpack.c.l.b16 %v3033
    %v4080 = vunpack.c.l.b16 %v3034
    %v4081 = vunpack.c.h.b16 %v3034
    %v4082 = vunpack.c.l.b16 %v3035
    %v4083 = vunpack.c.h.b16 %v3035
    %v4084 = vunpack.c.l.b16 %v3036
    %v4085 = vunpack.c.h.b16 %v3036
    %v4086 = vunpack.c.l.b16 %v3037
    %v4087 = vunpack.c.l.b16 %v3038
    %v4088 = vunpack.c.h.b16 %v3038
    %v4089 = vunpack.c.l.b16 %v3039
    %v4090 = vunpack.c.h.b16 %v3039
    %v4091 = vunpack.c.l.b16 %v3040
    %v4092 = vunpack.c.h.b16 %v3040
    %v4093 = vunpack.c.l.b16 %v3041
    %v4094 = vunpack.c.l.b16 %v3042
    %v4095 = vunpack.c.h.b16 %v3042
    %v4096 = vunpack.c.l.b16 %v3043
    %v4097 = vunpack.c.h.b16 %v3043
    %v4098 = vunpack.c.l.b16 %v3044
    %v4099 = vunpack.c.h.b16 %v3044
    %v4100 = vunpack.c.l.b16 %v3045
    %v4101 = vunpack.c.l.b16 %v3046
    %v4102 = vunpack.c.h.b16 %v3046
    %v4103 = vunpack.c.l.b16 %v3047
    %v4104 = vunpack.c.h.b16 %v3047
    %v4105 = vunpack.c.l.b16 %v3048
    %v4106 = vunpack.c.h.b16 %v3048
    %v4107 = vunpack.c.l.b16 %v3049
    %v4108 = vunpack.c.l.b16 %v3050
    %v4109 = vunpack.c.h.b16 %v3050
    %v4110 = vunpack.c.l.b16 %v3051
    %v4111 = vunpack.c.h.b16 %v3051
    %v4112 = vunpack.c.l.b16 %v3052
    %v4113 = vunpack.c.h.b16 %v3052
    %v4114 = vunpack.c.l.b16 %v3053
    %v4115 = vunpack.c.l.b16 %v3054
    %v4116 = vunpack.c.h.b16 %v3054
    %v4117 = vunpack.c.l.b16 %v3055
    %v4118 = vunpack.c.h.b16 %v3055
    %v4119 = vunpack.c.l.b16 %v3056
    %v4120 = vunpack.c.h.b16 %v3056
    %v4121 = vunpack.c.l.b16 %v3057
    %v4122 = vunpack.c.l.b16 %v3058
    %v4123 = vunpack.c.h.b16 %v3058
    %v4124 = vunpack.c.l.b16 %v3059
    %v4125 = vunpack.c.h.b16 %v3059
    %v4126 = vunpack.c.l.b16 %v3060
    %v4127 = vunpack.c.h.b16 %v3060
    %v4128 = vunpack.c.l.b16 %v3061
    %v4129 = vunpack.c.l.b16 %v3062
    %v4130 = vunpack.c.h.b16 %v3062
    %v4131 = vunpack.c.l.b16 %v3063
    %v4132 = vunpack.c.h.b16 %v3063
    %v4133 = vunpack.c.l.b16 %v3064
    %v4134 = vunpack.c.h.b16 %v3064
    %v4135 = vunpack.c.l.b16 %v3065
    %v4136 = vunpack.c.l.b16 %v3066
    %v4137 = vunpack.c.h.b16 %v3066
    %v4138 = vunpack.c.l.b16 %v3067
    %v4139 = vunpack.c.h.b16 %v3067
    %v4140 = vunpack.c.l.b16 %v3068
    %v4141 = vunpack.c.h.b16 %v3068
    %v4142 = vunpack.c.l.b16 %v3069
    %v4143 = vunpack.c.l.b16 %v3070
    %v4144 = vunpack.c.h.b16 %v3070
    %v4145 = vunpack.c.l.b16 %v3071
    %v4146 = vunpack.c.h.b16 %v3071
    %v4147 = vunpack.c.l.b16 %v3072
    %v4148 = vunpack.c.h.b16 %v3072
    %v4149 = vunpack.c.l.b16 %v3073
    %v4150 = vunpack.c.l.b16 %v3074
    %v4151 = vunpack.c.h.b16 %v3074
    %v4152 = vunpack.c.l.b16 %v3075
    %v4153 = vunpack.c.h.b16 %v3075
    %v4154 = vunpack.c.l.b16 %v3076
    %v4155 = vunpack.c.h.b16 %v3076
    %v4156 = vunpack.c.l.b16 %v3077
    %v4157 = vunpack.c.l.b16 %v3078
    %v4158 = vunpack.c.h.b16 %v3078
    %v4159 = vunpack.c.l.b16 %v3079
    %v4160 = vunpack.c.h.b16 %v3079
    %v4161 = vunpack.c.l.b16 %v3080
    %v4162 = vunpack.c.h.b16 %v3080
    %v4163 = vunpack.c.l.b16 %v3081
    %v4164 = vunpack.c.l.b16 %v3082
    %v4165 = vunpack.c.h.b16 %v3082
    %v4166 = vunpack.c.l.b16 %v3083
    %v4167 = vunpack.c.h.b16 %v3083
    %v4168 = vunpack.c.l.b16 %v3084
    %v4169 = vunpack.c.h.b16 %v3084
    %v4170 = vunpack.c.l.b16 %v3085
    %v4171 = vunpack.c.l.b16 %v3086
    %v4172 = vunpack.c.h.b16 %v3086
    %v4173 = vunpack.c.l.b16 %v3087
    %v4174 = vunpack.c.h.b16 %v3087
    %v4175 = vunpack.c.l.b16 %v3088
    %v4176 = vunpack.c.h.b16 %v3088
    %v4177 = vunpack.c.l.b16 %v3089
    %v4178 = vunpack.c.l.b16 %v3090
    %v4179 = vunpack.c.h.b16 %v3090
    %v4180 = vunpack.c.l.b16 %v3091
    %v4181 = vunpack.c.h.b16 %v3091
    %v4182 = vunpack.c.l.b16 %v3092
    %v4183 = vunpack.c.h.b16 %v3092
    %v4184 = vunpack.c.l.b16 %v3093
    %v4185 = vunpack.c.l.b16 %v3094
    %v4186 = vunpack.c.h.b16 %v3094
    %v4187 = vunpack.c.l.b16 %v3095
    %v4188 = vunpack.c.h.b16 %v3095
    %v4189 = vunpack.c.l.b16 %v3096
    %v4190 = vunpack.c.h.b16 %v3096
    %v4191 = vunpack.c.l.b16 %v3097
    %v4192 = vunpack.c.l.b16 %v3098
    %v4193 = vunpack.c.h.b16 %v3098
    %v4194 = vunpack.c.l.b16 %v3099
    %v4195 = vunpack.c.h.b16 %v3099
    %v4196 = vunpack.c.l.b16 %v3100
    %v4197 = vunpack.c.h.b16 %v3100
    %v4198 = vunpack.c.l.b16 %v3101
    %v4199 = vunpack.c.l.b16 %v3102
    %v4200 = vunpack.c.h.b16 %v3102
    %v4201 = vunpack.c.l.b16 %v3103
    %v4202 = vunpack.c.h.b16 %v3103
    %v4203 = vunpack.c.l.b16 %v3104
    %v4204 = vunpack.c.h.b16 %v3104
    %v4205 = vunpack.c.l.b16 %v3105
    %v4206 = vunpack.c.l.b16 %v3106
    %v4207 = vunpack.c.h.b16 %v3106
    %v4208 = vunpack.c.l.b16 %v3107
    %v4209 = vunpack.c.h.b16 %v3107
    %v4210 = vunpack.c.l.b16 %v3108
    %v4211 = vunpack.c.h.b16 %v3108
    %v4212 = vunpack.c.l.b16 %v3109
    %v4213 = vunpack.c.l.b16 %v3110
    %v4214 = vunpack.c.h.b16 %v3110
    %v4215 = vunpack.c.l.b16 %v3111
    %v4216 = vunpack.c.h.b16 %v3111
    %v4217 = vunpack.c.l.b16 %v3112
    %v4218 = vunpack.c.h.b16 %v3112
    %v4219 = vunpack.c.l.b16 %v3113
    %v4220 = vunpack.c.l.b16 %v3114
    %v4221 = vunpack.c.h.b16 %v3114
    %v4222 = vunpack.c.l.b16 %v3115
    %v4223 = vunpack.c.h.b16 %v3115
    %v4224 = vunpack.c.l.b16 %v3116
    %v4225 = vunpack.c.h.b16 %v3116
    %v4226 = vunpack.c.l.b16 %v3117
    %v4227 = vunpack.c.l.b16 %v3118
    %v4228 = vunpack.c.h.b16 %v3118
    %v4229 = vunpack.c.l.b16 %v3119
    %v4230 = vunpack.c.h.b16 %v3119
    %v4231 = vunpack.c.l.b16 %v3120
    %v4232 = vunpack.c.h.b16 %v3120
    %v4233 = vunpack.c.l.b16 %v3121
    %v4234 = vunpack.c.l.b16 %v3122
    %v4235 = vunpack.c.h.b16 %v3122
    %v4236 = vunpack.c.l.b16 %v3123
    %v4237 = vunpack.c.h.b16 %v3123
    %v4238 = vunpack.c.l.b16 %v3124
    %v4239 = vunpack.c.h.b16 %v3124
    %v4240 = vunpack.c.l.b16 %v3125
    %v4241 = vpack.c.b16 %v3562, %v3555
    %v4242 = vpack.c.b16 %v3563, %v3556
    %v4243 = vpack.c.b16 %v3564, %v3557
    %v4244 = vpack.c.b16 %v3565, %v3558
    %v4245 = vpack.c.b16 %v3566, %v3559
    %v4246 = vpack.c.b16 %v3567, %v3560
    %v4247 = vpack.c.b16 %v3568, %v3561
    %v4248 = vpack.c.b16 %v3576, %v3569
    %v4249 = vpack.c.b16 %v3577, %v3570
    %v4250 = vpack.c.b16 %v3578, %v3571
    %v4251 = vpack.c.b16 %v3579, %v3572
    %v4252 = vpack.c.b16 %v3580, %v3573
    %v4253 = vpack.c.b16 %v3581, %v3574
    %v4254 = vpack.c.b16 %v3582, %v3575
    %v4255 = vpack.c.b16 %v3590, %v3583
    %v4256 = vpack.c.b16 %v3591, %v3584
    %v4257 = vpack.c.b16 %v3592, %v3585
    %v4258 = vpack.c.b16 %v3593, %v3586
    %v4259 = vpack.c.b16 %v3594, %v3587
    %v4260 = vpack.c.b16 %v3595, %v3588
    %v4261 = vpack.c.b16 %v3596, %v3589
    %v4262 = vpack.c.b16 %v3604, %v3597
    %v4263 = vpack.c.b16 %v3605, %v3598
    %v4264 = vpack.c.b16 %v3606, %v3599
    %v4265 = vpack.c.b16 %v3607, %v3600
    %v4266 = vpack.c.b16 %v3608, %v3601
    %v4267 = vpack.c.b16 %v3609, %v3602
    %v4268 = vpack.c.b16 %v3610, %v3603
    %v4269 = vpack.c.b16 %v3618, %v3611
    %v4270 = vpack.c.b16 %v3619, %v3612
    %v4271 = vpack.c.b16 %v3620, %v3613
    %v4272 = vpack.c.b16 %v3621, %v3614
    %v4273 = vpack.c.b16 %v3622, %v3615
    %v4274 = vpack.c.b16 %v3623, %v3616
    %v4275 = vpack.c.b16 %v3624, %v3617
    %v4276 = vpack.c.b16 %v3632, %v3625
    %v4277 = vpack.c.b16 %v3633, %v3626
    %v4278 = vpack.c.b16 %v3634, %v3627
    %v4279 = vpack.c.b16 %v3635, %v3628
    %v4280 = vpack.c.b16 %v3636, %v3629
    %v4281 = vpack.c.b16 %v3637, %v3630
    %v4282 = vpack.c.b16 %v3638, %v3631
    %v4283 = vpack.c.b16 %v3646, %v3639
    %v4284 = vpack.c.b16 %v3647, %v3640
    %v4285 = vpack.c.b16 %v3648, %v3641
    %v4286 = vpack.c.b16 %v3649, %v3642
    %v4287 = vpack.c.b16 %v3650, %v3643
    %v4288 = vpack.c.b16 %v3651, %v3644
    %v4289 = vpack.c.b16 %v3652, %v3645
    %v4290 = vpack.c.b16 %v3660, %v3653
    %v4291 = vpack.c.b16 %v3661, %v3654
    %v4292 = vpack.c.b16 %v3662, %v3655
    %v4293 = vpack.c.b16 %v3663, %v3656
    %v4294 = vpack.c.b16 %v3664, %v3657
    %v4295 = vpack.c.b16 %v3665, %v3658
    %v4296 = vpack.c.b16 %v3666, %v3659
    %v4297 = vpack.c.b16 %v3674, %v3667
    %v4298 = vpack.c.b16 %v3675, %v3668
    %v4299 = vpack.c.b16 %v3676, %v3669
    %v4300 = vpack.c.b16 %v3677, %v3670
    %v4301 = vpack.c.b16 %v3678, %v3671
    %v4302 = vpack.c.b16 %v3679, %v3672
    %v4303 = vpack.c.b16 %v3680, %v3673
    %v4304 = vpack.c.b16 %v3688, %v3681
    %v4305 = vpack.c.b16 %v3689, %v3682
    %v4306 = vpack.c.b16 %v3690, %v3683
    %v4307 = vpack.c.b16 %v3691, %v3684
    %v4308 = vpack.c.b16 %v3692, %v3685
    %v4309 = vpack.c.b16 %v3693, %v3686
    %v4310 = vpack.c.b16 %v3694, %v3687
    %v4311 = vpack.c.b16 %v3702, %v3695
    %v4312 = vpack.c.b16 %v3703, %v3696
    %v4313 = vpack.c.b16 %v3704, %v3697
    %v4314 = vpack.c.b16 %v3705, %v3698
    %v4315 = vpack.c.b16 %v3706, %v3699
    %v4316 = vpack.c.b16 %v3707, %v3700
    %v4317 = vpack.c.b16 %v3708, %v3701
    %v4318 = vpack.c.b16 %v3716, %v3709
    %v4319 = vpack.c.b16 %v3717, %v3710
    %v4320 = vpack.c.b16 %v3718, %v3711
    %v4321 = vpack.c.b16 %v3719, %v3712
    %v4322 = vpack.c.b16 %v3720, %v3713
    %v4323 = vpack.c.b16 %v3721, %v3714
    %v4324 = vpack.c.b16 %v3722, %v3715
    %v4325 = vpack.c.b16 %v3730, %v3723
    %v4326 = vpack.c.b16 %v3731, %v3724
    %v4327 = vpack.c.b16 %v3732, %v3725
    %v4328 = vpack.c.b16 %v3733, %v3726
    %v4329 = vpack.c.b16 %v3734, %v3727
    %v4330 = vpack.c.b16 %v3735, %v3728
    %v4331 = vpack.c.b16 %v3736, %v3729
    %v4332 = vpack.c.b16 %v3744, %v3737
    %v4333 = vpack.c.b16 %v3745, %v3738
    %v4334 = vpack.c.b16 %v3746, %v3739
    %v4335 = vpack.c.b16 %v3747, %v3740
    %v4336 = vpack.c.b16 %v3748, %v3741
    %v4337 = vpack.c.b16 %v3749, %v3742
    %v4338 = vpack.c.b16 %v3750, %v3743
    %v4339 = vpack.c.b16 %v3758, %v3751
    %v4340 = vpack.c.b16 %v3759, %v3752
    %v4341 = vpack.c.b16 %v3760, %v3753
    %v4342 = vpack.c.b16 %v3761, %v3754
    %v4343 = vpack.c.b16 %v3762, %v3755
    %v4344 = vpack.c.b16 %v3763, %v3756
    %v4345 = vpack.c.b16 %v3764, %v3757
    %v4346 = vpack.c.b16 %v3772, %v3765
    %v4347 = vpack.c.b16 %v3773, %v3766
    %v4348 = vpack.c.b16 %v3774, %v3767
    %v4349 = vpack.c.b16 %v3775, %v3768
    %v4350 = vpack.c.b16 %v3776, %v3769
    %v4351 = vpack.c.b16 %v3777, %v3770
    %v4352 = vpack.c.b16 %v3778, %v3771
    %v4353 = vpack.c.b16 %v3786, %v3779
    %v4354 = vpack.c.b16 %v3787, %v3780
    %v4355 = vpack.c.b16 %v3788, %v3781
    %v4356 = vpack.c.b16 %v3789, %v3782
    %v4357 = vpack.c.b16 %v3790, %v3783
    %v4358 = vpack.c.b16 %v3791, %v3784
    %v4359 = vpack.c.b16 %v3792, %v3785
    %v4360 = vpack.c.b16 %v3800, %v3793
    %v4361 = vpack.c.b16 %v3801, %v3794
    %v4362 = vpack.c.b16 %v3802, %v3795
    %v4363 = vpack.c.b16 %v3803, %v3796
    %v4364 = vpack.c.b16 %v3804, %v3797
    %v4365 = vpack.c.b16 %v3805, %v3798
    %v4366 = vpack.c.b16 %v3806, %v3799
    %v4367 = vpack.c.b16 %v3814, %v3807
    %v4368 = vpack.c.b16 %v3815, %v3808
    %v4369 = vpack.c.b16 %v3816, %v3809
    %v4370 = vpack.c.b16 %v3817, %v3810
    %v4371 = vpack.c.b16 %v3818, %v3811
    %v4372 = vpack.c.b16 %v3819, %v3812
    %v4373 = vpack.c.b16 %v3820, %v3813
    %v4374 = vpack.c.b16 %v3828, %v3821
    %v4375 = vpack.c.b16 %v3829, %v3822
    %v4376 = vpack.c.b16 %v3830, %v3823
    %v4377 = vpack.c.b16 %v3831, %v3824
    %v4378 = vpack.c.b16 %v3832, %v3825
    %v4379 = vpack.c.b16 %v3833, %v3826
    %v4380 = vpack.c.b16 %v3834, %v3827
    %v4381 = vpack.c.b16 %v3842, %v3835
    %v4382 = vpack.c.b16 %v3843, %v3836
    %v4383 = vpack.c.b16 %v3844, %v3837
    %v4384 = vpack.c.b16 %v3845, %v3838
    %v4385 = vpack.c.b16 %v3846, %v3839
    %v4386 = vpack.c.b16 %v3847, %v3840
    %v4387 = vpack.c.b16 %v3848, %v3841
    %v4388 = vpack.c.b16 %v3856, %v3849
    %v4389 = vpack.c.b16 %v3857, %v3850
    %v4390 = vpack.c.b16 %v3858, %v3851
    %v4391 = vpack.c.b16 %v3859, %v3852
    %v4392 = vpack.c.b16 %v3860, %v3853
    %v4393 = vpack.c.b16 %v3861, %v3854
    %v4394 = vpack.c.b16 %v3862, %v3855
    %v4395 = vpack.c.b16 %v3870, %v3863
    %v4396 = vpack.c.b16 %v3871, %v3864
    %v4397 = vpack.c.b16 %v3872, %v3865
    %v4398 = vpack.c.b16 %v3873, %v3866
    %v4399 = vpack.c.b16 %v3874, %v3867
    %v4400 = vpack.c.b16 %v3875, %v3868
    %v4401 = vpack.c.b16 %v3876, %v3869
    %v4402 = vpack.c.b16 %v3884, %v3877
    %v4403 = vpack.c.b16 %v3885, %v3878
    %v4404 = vpack.c.b16 %v3886, %v3879
    %v4405 = vpack.c.b16 %v3887, %v3880
    %v4406 = vpack.c.b16 %v3888, %v3881
    %v4407 = vpack.c.b16 %v3889, %v3882
    %v4408 = vpack.c.b16 %v3890, %v3883
    %v4409 = vpack.c.b16 %v3898, %v3891
    %v4410 = vpack.c.b16 %v3899, %v3892
    %v4411 = vpack.c.b16 %v3900, %v3893
    %v4412 = vpack.c.b16 %v3901, %v3894
    %v4413 = vpack.c.b16 %v3902, %v3895
    %v4414 = vpack.c.b16 %v3903, %v3896
    %v4415 = vpack.c.b16 %v3904, %v3897
    %v4416 = vpack.c.b16 %v3912, %v3905
    %v4417 = vpack.c.b16 %v3913, %v3906
    %v4418 = vpack.c.b16 %v3914, %v3907
    %v4419 = vpack.c.b16 %v3915, %v3908
    %v4420 = vpack.c.b16 %v3916, %v3909
    %v4421 = vpack.c.b16 %v3917, %v3910
    %v4422 = vpack.c.b16 %v3918, %v3911
    %v4423 = vpack.c.b16 %v3926, %v3919
    %v4424 = vpack.c.b16 %v3927, %v3920
    %v4425 = vpack.c.b16 %v3928, %v3921
    %v4426 = vpack.c.b16 %v3929, %v3922
    %v4427 = vpack.c.b16 %v3930, %v3923
    %v4428 = vpack.c.b16 %v3931, %v3924
    %v4429 = vpack.c.b16 %v3932, %v3925
    %v4430 = vpack.c.b16 %v3940, %v3933
    %v4431 = vpack.c.b16 %v3941, %v3934
    %v4432 = vpack.c.b16 %v3942, %v3935
    %v4433 = vpack.c.b16 %v3943, %v3936
    %v4434 = vpack.c.b16 %v3944, %v3937
    %v4435 = vpack.c.b16 %v3945, %v3938
    %v4436 = vpack.c.b16 %v3946, %v3939
    %v4437 = vpack.c.b16 %v3954, %v3947
    %v4438 = vpack.c.b16 %v3955, %v3948
    %v4439 = vpack.c.b16 %v3956, %v3949
    %v4440 = vpack.c.b16 %v3957, %v3950
    %v4441 = vpack.c.b16 %v3958, %v3951
    %v4442 = vpack.c.b16 %v3959, %v3952
    %v4443 = vpack.c.b16 %v3960, %v3953
    %v4444 = vpack.c.b16 %v3968, %v3961
    %v4445 = vpack.c.b16 %v3969, %v3962
    %v4446 = vpack.c.b16 %v3970, %v3963
    %v4447 = vpack.c.b16 %v3971, %v3964
    %v4448 = vpack.c.b16 %v3972, %v3965
    %v4449 = vpack.c.b16 %v3973, %v3966
    %v4450 = vpack.c.b16 %v3974, %v3967
    %v4451 = vpack.c.b16 %v3982, %v3975
    %v4452 = vpack.c.b16 %v3983, %v3976
    %v4453 = vpack.c.b16 %v3984, %v3977
    %v4454 = vpack.c.b16 %v3985, %v3978
    %v4455 = vpack.c.b16 %v3986, %v3979
    %v4456 = vpack.c.b16 %v3987, %v3980
    %v4457 = vpack.c.b16 %v3988, %v3981
    %v4458 = vpack.c.b16 %v3996, %v3989
    %v4459 = vpack.c.b16 %v3997, %v3990
    %v4460 = vpack.c.b16 %v3998, %v3991
    %v4461 = vpack.c.b16 %v3999, %v3992
    %v4462 = vpack.c.b16 %v4000, %v3993
    %v4463 = vpack.c.b16 %v4001, %v3994
    %v4464 = vpack.c.b16 %v4002, %v3995
    %v4465 = vpack.c.b16 %v4010, %v4003
    %v4466 = vpack.c.b16 %v4011, %v4004
    %v4467 = vpack.c.b16 %v4012, %v4005
    %v4468 = vpack.c.b16 %v4013, %v4006
    %v4469 = vpack.c.b16 %v4014, %v4007
    %v4470 = vpack.c.b16 %v4015, %v4008
    %v4471 = vpack.c.b16 %v4016, %v4009
    %v4472 = vpack.c.b16 %v4024, %v4017
    %v4473 = vpack.c.b16 %v4025, %v4018
    %v4474 = vpack.c.b16 %v4026, %v4019
    %v4475 = vpack.c.b16 %v4027, %v4020
    %v4476 = vpack.c.b16 %v4028, %v4021
    %v4477 = vpack.c.b16 %v4029, %v4022
    %v4478 = vpack.c.b16 %v4030, %v4023
    %v4479 = vpack.c.b16 %v4038, %v4031
    %v4480 = vpack.c.b16 %v4039, %v4032
    %v4481 = vpack.c.b16 %v4040, %v4033
    %v4482 = vpack.c.b16 %v4041, %v4034
    %v4483 = vpack.c.b16 %v4042, %v4035
    %v4484 = vpack.c.b16 %v4043, %v4036
    %v4485 = vpack.c.b16 %v4044, %v4037
    %v4486 = vpack.c.b16 %v4052, %v4045
    %v4487 = vpack.c.b16 %v4053, %v4046
    %v4488 = vpack.c.b16 %v4054, %v4047
    %v4489 = vpack.c.b16 %v4055, %v4048
    %v4490 = vpack.c.b16 %v4056, %v4049
    %v4491 = vpack.c.b16 %v4057, %v4050
    %v4492 = vpack.c.b16 %v4058, %v4051
    %v4493 = vpack.c.b16 %v4066, %v4059
    %v4494 = vpack.c.b16 %v4067, %v4060
    %v4495 = vpack.c.b16 %v4068, %v4061
    %v4496 = vpack.c.b16 %v4069, %v4062
    %v4497 = vpack.c.b16 %v4070, %v4063
    %v4498 = vpack.c.b16 %v4071, %v4064
    %v4499 = vpack.c.b16 %v4072, %v4065
    %v4500 = vpack.c.b16 %v4080, %v4073
    %v4501 = vpack.c.b16 %v4081, %v4074
    %v4502 = vpack.c.b16 %v4082, %v4075
    %v4503 = vpack.c.b16 %v4083, %v4076
    %v4504 = vpack.c.b16 %v4084, %v4077
    %v4505 = vpack.c.b16 %v4085, %v4078
    %v4506 = vpack.c.b16 %v4086, %v4079
    %v4507 = vpack.c.b16 %v4094, %v4087
    %v4508 = vpack.c.b16 %v4095, %v4088
    %v4509 = vpack.c.b16 %v4096, %v4089
    %v4510 = vpack.c.b16 %v4097, %v4090
    %v4511 = vpack.c.b16 %v4098, %v4091
    %v4512 = vpack.c.b16 %v4099, %v4092
    %v4513 = vpack.c.b16 %v4100, %v4093
    %v4514 = vpack.c.b16 %v4108, %v4101
    %v4515 = vpack.c.b16 %v4109, %v4102
    %v4516 = vpack.c.b16 %v4110, %v4103
    %v4517 = vpack.c.b16 %v4111, %v4104
    %v4518 = vpack.c.b16 %v4112, %v4105
    %v4519 = vpack.c.b16 %v4113, %v4106
    %v4520 = vpack.c.b16 %v4114, %v4107
    %v4521 = vpack.c.b16 %v4122, %v4115
    %v4522 = vpack.c.b16 %v4123, %v4116
    %v4523 = vpack.c.b16 %v4124, %v4117
    %v4524 = vpack.c.b16 %v4125, %v4118
    %v4525 = vpack.c.b16 %v4126, %v4119
    %v4526 = vpack.c.b16 %v4127, %v4120
    %v4527 = vpack.c.b16 %v4128, %v4121
    %v4528 = vpack.c.b16 %v4136, %v4129
    %v4529 = vpack.c.b16 %v4137, %v4130
    %v4530 = vpack.c.b16 %v4138, %v4131
    %v4531 = vpack.c.b16 %v4139, %v4132
    %v4532 = vpack.c.b16 %v4140, %v4133
    %v4533 = vpack.c.b16 %v4141, %v4134
    %v4534 = vpack.c.b16 %v4142, %v4135
    %v4535 = vpack.c.b16 %v4150, %v4143
    %v4536 = vpack.c.b16 %v4151, %v4144
    %v4537 = vpack.c.b16 %v4152, %v4145
    %v4538 = vpack.c.b16 %v4153, %v4146
    %v4539 = vpack.c.b16 %v4154, %v4147
    %v4540 = vpack.c.b16 %v4155, %v4148
    %v4541 = vpack.c.b16 %v4156, %v4149
    %v4542 = vpack.c.b16 %v4164, %v4157
    %v4543 = vpack.c.b16 %v4165, %v4158
    %v4544 = vpack.c.b16 %v4166, %v4159
    %v4545 = vpack.c.b16 %v4167, %v4160
    %v4546 = vpack.c.b16 %v4168, %v4161
    %v4547 = vpack.c.b16 %v4169, %v4162
    %v4548 = vpack.c.b16 %v4170, %v4163
    %v4549 = vpack.c.b16 %v4178, %v4171
    %v4550 = vpack.c.b16 %v4179, %v4172
    %v4551 = vpack.c.b16 %v4180, %v4173
    %v4552 = vpack.c.b16 %v4181, %v4174
    %v4553 = vpack.c.b16 %v4182, %v4175
    %v4554 = vpack.c.b16 %v4183, %v4176
    %v4555 = vpack.c.b16 %v4184, %v4177
    %v4556 = vpack.c.b16 %v4192, %v4185
    %v4557 = vpack.c.b16 %v4193, %v4186
    %v4558 = vpack.c.b16 %v4194, %v4187
    %v4559 = vpack.c.b16 %v4195, %v4188
    %v4560 = vpack.c.b16 %v4196, %v4189
    %v4561 = vpack.c.b16 %v4197, %v4190
    %v4562 = vpack.c.b16 %v4198, %v4191
    %v4563 = vpack.c.b16 %v4206, %v4199
    %v4564 = vpack.c.b16 %v4207, %v4200
    %v4565 = vpack.c.b16 %v4208, %v4201
    %v4566 = vpack.c.b16 %v4209, %v4202
    %v4567 = vpack.c.b16 %v4210, %v4203
    %v4568 = vpack.c.b16 %v4211, %v4204
    %v4569 = vpack.c.b16 %v4212, %v4205
    %v4570 = vpack.c.b16 %v4220, %v4213
    %v4571 = vpack.c.b16 %v4221, %v4214
    %v4572 = vpack.c.b16 %v4222, %v4215
    %v4573 = vpack.c.b16 %v4223, %v4216
    %v4574 = vpack.c.b16 %v4224, %v4217
    %v4575 = vpack.c.b16 %v4225, %v4218
    %v4576 = vpack.c.b16 %v4226, %v4219
    %v4577 = vpack.c.b16 %v4234, %v4227
    %v4578 = vpack.c.b16 %v4235, %v4228
    %v4579 = vpack.c.b16 %v4236, %v4229
    %v4580 = vpack.c.b16 %v4237, %v4230
    %v4581 = vpack.c.b16 %v4238, %v4231
    %v4582 = vpack.c.b16 %v4239, %v4232
    %v4583 = vpack.c.b16 %v4240, %v4233
    %v4928 = vsel %vm253, %v2733, 0
    %4930 = vmatprep.subr.bf16.mxu0 %v4242
    %4931 = vmatpush1.bf16.msra.mxu0 %v4241
    %4932 = vmatprep.subr.bf16.mxu0 %v4249
    %4933 = vmatpush1.bf16.msra.mxu0 %v4248
    %4934 = vmatprep.subr.bf16.mxu0 %v4256
    %4935 = vmatpush1.bf16.msra.mxu0 %v4255
    %4936 = vmatprep.subr.bf16.mxu0 %v4263
    %4937 = vmatpush1.bf16.msra.mxu0 %v4262
    %4938 = vmatprep.subr.bf16.mxu0 %v4270
    %4939 = vmatpush1.bf16.msra.mxu0 %v4269
    %4940 = vmatprep.subr.bf16.mxu0 %v4277
    %4941 = vmatpush1.bf16.msra.mxu0 %v4276
    %4942 = vmatprep.subr.bf16.mxu0 %v4284
    %4943 = vmatpush1.bf16.msra.mxu0 %v4283
    %4944 = vmatprep.subr.bf16.mxu0 %v4291
    %4945 = vmatpush1.bf16.msra.mxu0 %v4290
    %4946 = vmatprep.subr.bf16.mxu0 %v4298
    %4947 = vmatpush1.bf16.msra.mxu0 %v4297
    %4948 = vmatprep.subr.bf16.mxu0 %v4305
    %4949 = vmatpush1.bf16.msra.mxu0 %v4304
    %4950 = vmatprep.subr.bf16.mxu0 %v4312
    %4951 = vmatpush1.bf16.msra.mxu0 %v4311
    %4952 = vmatprep.subr.bf16.mxu0 %v4319
    %4953 = vmatpush1.bf16.msra.mxu0 %v4318
    %4954 = vmatprep.subr.bf16.mxu0 %v4326
    %4955 = vmatpush1.bf16.msra.mxu0 %v4325
    %4956 = vmatprep.subr.bf16.mxu0 %v4333
    %4957 = vmatpush1.bf16.msra.mxu0 %v4332
    %4958 = vmatprep.subr.bf16.mxu0 %v4340
    %4959 = vmatpush1.bf16.msra.mxu0 %v4339
    %4960 = vmatprep.subr.bf16.mxu0 %v4347
    %4961 = vmatpush1.bf16.msra.mxu0 %v4346
    %4962 = vmatprep.mubr.bf16.mxu0 %v2728
    %4963 = vmatmul.mubr.bf16.gmra.mrb[0].mxu0 %v2727
    %v4964 = vpop.f32.mrb[0].mxu0
    %v4965 = vadd.f32 %v3131, %v4964
    %v4966 = vpop.f32.mrb[0].mxu0
    %v4967 = vadd.f32 %v3135, %v4966
    %v4968 = vpop.f32.mrb[0].mxu0
    %v4969 = vpop.f32.mrb[0].mxu0
    %4970 = vdwg.mxu0
    %4971 = vmatprep.subr.bf16.mxu0 %v4354
    %4972 = vmatpush1.bf16.msra.mxu0 %v4353
    %4973 = vmatprep.subr.bf16.mxu0 %v4361
    %4974 = vmatpush1.bf16.msra.mxu0 %v4360
    %4975 = vmatprep.subr.bf16.mxu0 %v4368
    %4976 = vmatpush1.bf16.msra.mxu0 %v4367
    %4977 = vmatprep.subr.bf16.mxu0 %v4375
    %4978 = vmatpush1.bf16.msra.mxu0 %v4374
    %4979 = vmatprep.subr.bf16.mxu0 %v4382
    %4980 = vmatpush1.bf16.msra.mxu0 %v4381
    %4981 = vmatprep.subr.bf16.mxu0 %v4389
    %4982 = vmatpush1.bf16.msra.mxu0 %v4388
    %4983 = vmatprep.subr.bf16.mxu0 %v4396
    %4984 = vmatpush1.bf16.msra.mxu0 %v4395
    %4985 = vmatprep.subr.bf16.mxu0 %v4403
    %4986 = vmatpush1.bf16.msra.mxu0 %v4402
    %4987 = vmatprep.subr.bf16.mxu0 %v4410
    %4988 = vmatpush1.bf16.msra.mxu0 %v4409
    %4989 = vmatprep.subr.bf16.mxu0 %v4417
    %4990 = vmatpush1.bf16.msra.mxu0 %v4416
    %4991 = vmatprep.subr.bf16.mxu0 %v4424
    %4992 = vmatpush1.bf16.msra.mxu0 %v4423
    %4993 = vmatprep.subr.bf16.mxu0 %v4431
    %4994 = vmatpush1.bf16.msra.mxu0 %v4430
    %4995 = vmatprep.subr.bf16.mxu0 %v4438
    %4996 = vmatpush1.bf16.msra.mxu0 %v4437
    %4997 = vmatprep.subr.bf16.mxu0 %v4445
    %4998 = vmatpush1.bf16.msra.mxu0 %v4444
    %4999 = vmatprep.subr.bf16.mxu0 %v4452
    %5000 = vmatpush1.bf16.msra.mxu0 %v4451
    %5001 = vmatprep.subr.bf16.mxu0 %v4459
    %5002 = vmatpush1.bf16.msra.mxu0 %v4458
    %5003 = vmatprep.mubr.bf16.mxu0 %v2730
    %5004 = vmatmul.mubr.bf16.gmra.mrb[0].mxu0 %v2729
    %v5005 = vpop.f32.mrb[0].mxu0
    %v5006 = vadd.f32 %v4965, %v5005
    %v5007 = vpop.f32.mrb[0].mxu0
    %v5008 = vadd.f32 %v4967, %v5007
    %v5009 = vpop.f32.mrb[0].mxu0
    %v5010 = vpop.f32.mrb[0].mxu0
    %5011 = vdwg.mxu0
    %5012 = vmatprep.subr.bf16.mxu0 %v4466
    %5013 = vmatpush1.bf16.msra.mxu0 %v4465
    %5014 = vmatprep.subr.bf16.mxu0 %v4473
    %5015 = vmatpush1.bf16.msra.mxu0 %v4472
    %5016 = vmatprep.subr.bf16.mxu0 %v4480
    %5017 = vmatpush1.bf16.msra.mxu0 %v4479
    %5018 = vmatprep.subr.bf16.mxu0 %v4487
    %5019 = vmatpush1.bf16.msra.mxu0 %v4486
    %5020 = vmatprep.subr.bf16.mxu0 %v4494
    %5021 = vmatpush1.bf16.msra.mxu0 %v4493
    %5022 = vmatprep.subr.bf16.mxu0 %v4501
    %5023 = vmatpush1.bf16.msra.mxu0 %v4500
    %5024 = vmatprep.subr.bf16.mxu0 %v4508
    %5025 = vmatpush1.bf16.msra.mxu0 %v4507
    %5026 = vmatprep.subr.bf16.mxu0 %v4515
    %5027 = vmatpush1.bf16.msra.mxu0 %v4514
    %5028 = vmatprep.subr.bf16.mxu0 %v4522
    %5029 = vmatpush1.bf16.msra.mxu0 %v4521
    %5030 = vmatprep.subr.bf16.mxu0 %v4529
    %5031 = vmatpush1.bf16.msra.mxu0 %v4528
    %5032 = vmatprep.subr.bf16.mxu0 %v4536
    %5033 = vmatpush1.bf16.msra.mxu0 %v4535
    %5034 = vmatprep.subr.bf16.mxu0 %v4543
    %5035 = vmatpush1.bf16.msra.mxu0 %v4542
    %5036 = vmatprep.subr.bf16.mxu0 %v4550
    %5037 = vmatpush1.bf16.msra.mxu0 %v4549
    %5038 = vmatprep.subr.bf16.mxu0 %v4557
    %5039 = vmatpush1.bf16.msra.mxu0 %v4556
    %5040 = vmatprep.subr.bf16.mxu0 %v4564
    %5041 = vmatpush1.bf16.msra.mxu0 %v4563
    %5042 = vmatprep.subr.bf16.mxu0 %v4571
    %5043 = vmatpush1.bf16.msra.mxu0 %v4570
    %5044 = vmatprep.mubr.bf16.mxu0 %v2732
    %5045 = vmatmul.mubr.bf16.gmra.mrb[0].mxu0 %v2731
    %v5046 = vpop.f32.mrb[0].mxu0
    %v5047 = vadd.f32 %v5006, %v5046
    %v5048 = vpop.f32.mrb[0].mxu0
    %v5049 = vadd.f32 %v5008, %v5048
    %v5050 = vpop.f32.mrb[0].mxu0
    %v5051 = vpop.f32.mrb[0].mxu0
    %5052 = vdwg.mxu0
    %5053 = vmatprep.subr.bf16.mxu0 %v4578
    %5054 = vmatpush1.bf16.msra.mxu0 %v4577
    %5055 = vmatprep.subr.bf16.mxu0 0
    %5056 = vmatpush1.bf16.msra.mxu0 0
    %5057 = vmatprep.subr.bf16.mxu0 0
    %5058 = vmatpush1.bf16.msra.mxu0 0
    %5059 = vmatprep.subr.bf16.mxu0 0
    %5060 = vmatpush1.bf16.msra.mxu0 0
    %5061 = vmatprep.subr.bf16.mxu0 0
    %5062 = vmatpush1.bf16.msra.mxu0 0
    %5063 = vmatprep.subr.bf16.mxu0 0
    %5064 = vmatpush1.bf16.msra.mxu0 0
    %5065 = vmatprep.subr.bf16.mxu0 0
    %5066 = vmatpush1.bf16.msra.mxu0 0
    %5067 = vmatprep.subr.bf16.mxu0 0
    %5068 = vmatpush1.bf16.msra.mxu0 0
    %5069 = vmatprep.subr.bf16.mxu0 0
    %5070 = vmatpush1.bf16.msra.mxu0 0
    %5071 = vmatprep.subr.bf16.mxu0 0
    %5072 = vmatpush1.bf16.msra.mxu0 0
    %5073 = vmatprep.subr.bf16.mxu0 0
    %5074 = vmatpush1.bf16.msra.mxu0 0
    %5075 = vmatprep.subr.bf16.mxu0 0
    %5076 = vmatpush1.bf16.msra.mxu0 0
    %5077 = vmatprep.subr.bf16.mxu0 0
    %5078 = vmatpush1.bf16.msra.mxu0 0
    %5079 = vmatprep.subr.bf16.mxu0 0
    %5080 = vmatpush1.bf16.msra.mxu0 0
    %5081 = vmatprep.subr.bf16.mxu0 0
    %5082 = vmatpush1.bf16.msra.mxu0 0
    %5083 = vmatprep.subr.bf16.mxu0 0
    %5084 = vmatpush1.bf16.msra.mxu0 0
    %5085 = vmatprep.mubr.bf16.mxu0 0
    %5086 = vmatmul.mubr.bf16.gmra.mrb[0].mxu0 %v4928
    %v5087 = vpop.f32.mrb[0].mxu0
    %v5088 = vadd.f32 %v5047, %v5087
    %v5089 = vpop.f32.mrb[0].mxu0
    %v5090 = vadd.f32 %v5049, %v5089
    %v5091 = vpop.f32.mrb[0].mxu0
    %v5092 = vpop.f32.mrb[0].mxu0
    %5093 = vdwg.mxu0
    %5094 = vmatprep.subr.bf16.mxu0 %v4244
    %5095 = vmatpush1.bf16.msra.mxu0 %v4243
    %5096 = vmatprep.subr.bf16.mxu0 %v4251
    %5097 = vmatpush1.bf16.msra.mxu0 %v4250
    %5098 = vmatprep.subr.bf16.mxu0 %v4258
    %5099 = vmatpush1.bf16.msra.mxu0 %v4257
    %5100 = vmatprep.subr.bf16.mxu0 %v4265
    %5101 = vmatpush1.bf16.msra.mxu0 %v4264
    %5102 = vmatprep.subr.bf16.mxu0 %v4272
    %5103 = vmatpush1.bf16.msra.mxu0 %v4271
    %5104 = vmatprep.subr.bf16.mxu0 %v4279
    %5105 = vmatpush1.bf16.msra.mxu0 %v4278
    %5106 = vmatprep.subr.bf16.mxu0 %v4286
    %5107 = vmatpush1.bf16.msra.mxu0 %v4285
    %5108 = vmatprep.subr.bf16.mxu0 %v4293
    %5109 = vmatpush1.bf16.msra.mxu0 %v4292
    %5110 = vmatprep.subr.bf16.mxu0 %v4300
    %5111 = vmatpush1.bf16.msra.mxu0 %v4299
    %5112 = vmatprep.subr.bf16.mxu0 %v4307
    %5113 = vmatpush1.bf16.msra.mxu0 %v4306
    %5114 = vmatprep.subr.bf16.mxu0 %v4314
    %5115 = vmatpush1.bf16.msra.mxu0 %v4313
    %5116 = vmatprep.subr.bf16.mxu0 %v4321
    %5117 = vmatpush1.bf16.msra.mxu0 %v4320
    %5118 = vmatprep.subr.bf16.mxu0 %v4328
    %5119 = vmatpush1.bf16.msra.mxu0 %v4327
    %5120 = vmatprep.subr.bf16.mxu0 %v4335
    %5121 = vmatpush1.bf16.msra.mxu0 %v4334
    %5122 = vmatprep.subr.bf16.mxu0 %v4342
    %5123 = vmatpush1.bf16.msra.mxu0 %v4341
    %5124 = vmatprep.subr.bf16.mxu0 %v4349
    %5125 = vmatpush1.bf16.msra.mxu0 %v4348
    %5126 = vmatprep.mubr.bf16.mxu0 %v2728
    %5127 = vmatmul.mubr.bf16.gmra.mrb[0].mxu0 %v2727
    %v5128 = vpop.f32.mrb[0].mxu0
    %v5129 = vadd.f32 %v3139, %v5128
    %v5130 = vpop.f32.mrb[0].mxu0
    %v5131 = vadd.f32 %v3143, %v5130
    %v5132 = vpop.f32.mrb[0].mxu0
    %v5133 = vpop.f32.mrb[0].mxu0
    %5134 = vdwg.mxu0
    %5135 = vmatprep.subr.bf16.mxu0 %v4356
    %5136 = vmatpush1.bf16.msra.mxu0 %v4355
    %5137 = vmatprep.subr.bf16.mxu0 %v4363
    %5138 = vmatpush1.bf16.msra.mxu0 %v4362
    %5139 = vmatprep.subr.bf16.mxu0 %v4370
    %5140 = vmatpush1.bf16.msra.mxu0 %v4369
    %5141 = vmatprep.subr.bf16.mxu0 %v4377
    %5142 = vmatpush1.bf16.msra.mxu0 %v4376
    %5143 = vmatprep.subr.bf16.mxu0 %v4384
    %5144 = vmatpush1.bf16.msra.mxu0 %v4383
    %5145 = vmatprep.subr.bf16.mxu0 %v4391
    %5146 = vmatpush1.bf16.msra.mxu0 %v4390
    %5147 = vmatprep.subr.bf16.mxu0 %v4398
    %5148 = vmatpush1.bf16.msra.mxu0 %v4397
    %5149 = vmatprep.subr.bf16.mxu0 %v4405
    %5150 = vmatpush1.bf16.msra.mxu0 %v4404
    %5151 = vmatprep.subr.bf16.mxu0 %v4412
    %5152 = vmatpush1.bf16.msra.mxu0 %v4411
    %5153 = vmatprep.subr.bf16.mxu0 %v4419
    %5154 = vmatpush1.bf16.msra.mxu0 %v4418
    %5155 = vmatprep.subr.bf16.mxu0 %v4426
    %5156 = vmatpush1.bf16.msra.mxu0 %v4425
    %5157 = vmatprep.subr.bf16.mxu0 %v4433
    %5158 = vmatpush1.bf16.msra.mxu0 %v4432
    %5159 = vmatprep.subr.bf16.mxu0 %v4440
    %5160 = vmatpush1.bf16.msra.mxu0 %v4439
    %5161 = vmatprep.subr.bf16.mxu0 %v4447
    %5162 = vmatpush1.bf16.msra.mxu0 %v4446
    %5163 = vmatprep.subr.bf16.mxu0 %v4454
    %5164 = vmatpush1.bf16.msra.mxu0 %v4453
    %5165 = vmatprep.subr.bf16.mxu0 %v4461
    %5166 = vmatpush1.bf16.msra.mxu0 %v4460
    %5167 = vmatprep.mubr.bf16.mxu0 %v2730
    %5168 = vmatmul.mubr.bf16.gmra.mrb[0].mxu0 %v2729
    %v5169 = vpop.f32.mrb[0].mxu0
    %v5170 = vadd.f32 %v5129, %v5169
    %v5171 = vpop.f32.mrb[0].mxu0
    %v5172 = vadd.f32 %v5131, %v5171
    %v5173 = vpop.f32.mrb[0].mxu0
    %v5174 = vpop.f32.mrb[0].mxu0
    %5175 = vdwg.mxu0
    %5176 = vmatprep.subr.bf16.mxu0 %v4468
    %5177 = vmatpush1.bf16.msra.mxu0 %v4467
    %5178 = vmatprep.subr.bf16.mxu0 %v4475
    %5179 = vmatpush1.bf16.msra.mxu0 %v4474
    %5180 = vmatprep.subr.bf16.mxu0 %v4482
    %5181 = vmatpush1.bf16.msra.mxu0 %v4481
    %5182 = vmatprep.subr.bf16.mxu0 %v4489
    %5183 = vmatpush1.bf16.msra.mxu0 %v4488
    %5184 = vmatprep.subr.bf16.mxu0 %v4496
    %5185 = vmatpush1.bf16.msra.mxu0 %v4495
    %5186 = vmatprep.subr.bf16.mxu0 %v4503
    %5187 = vmatpush1.bf16.msra.mxu0 %v4502
    %5188 = vmatprep.subr.bf16.mxu0 %v4510
    %5189 = vmatpush1.bf16.msra.mxu0 %v4509
    %5190 = vmatprep.subr.bf16.mxu0 %v4517
    %5191 = vmatpush1.bf16.msra.mxu0 %v4516
    %5192 = vmatprep.subr.bf16.mxu0 %v4524
    %5193 = vmatpush1.bf16.msra.mxu0 %v4523
    %5194 = vmatprep.subr.bf16.mxu0 %v4531
    %5195 = vmatpush1.bf16.msra.mxu0 %v4530
    %5196 = vmatprep.subr.bf16.mxu0 %v4538
    %5197 = vmatpush1.bf16.msra.mxu0 %v4537
    %5198 = vmatprep.subr.bf16.mxu0 %v4545
    %5199 = vmatpush1.bf16.msra.mxu0 %v4544
    %5200 = vmatprep.subr.bf16.mxu0 %v4552
    %5201 = vmatpush1.bf16.msra.mxu0 %v4551
    %5202 = vmatprep.subr.bf16.mxu0 %v4559
    %5203 = vmatpush1.bf16.msra.mxu0 %v4558
    %5204 = vmatprep.subr.bf16.mxu0 %v4566
    %5205 = vmatpush1.bf16.msra.mxu0 %v4565
    %5206 = vmatprep.subr.bf16.mxu0 %v4573
    %5207 = vmatpush1.bf16.msra.mxu0 %v4572
    %5208 = vmatprep.mubr.bf16.mxu0 %v2732
    %5209 = vmatmul.mubr.bf16.gmra.mrb[0].mxu0 %v2731
    %v5210 = vpop.f32.mrb[0].mxu0
    %v5211 = vadd.f32 %v5170, %v5210
    %v5212 = vpop.f32.mrb[0].mxu0
    %v5213 = vadd.f32 %v5172, %v5212
    %v5214 = vpop.f32.mrb[0].mxu0
    %v5215 = vpop.f32.mrb[0].mxu0
    %5216 = vdwg.mxu0
    %5217 = vmatprep.subr.bf16.mxu0 %v4580
    %5218 = vmatpush1.bf16.msra.mxu0 %v4579
    %5219 = vmatprep.subr.bf16.mxu0 0
    %5220 = vmatpush1.bf16.msra.mxu0 0
    %5221 = vmatprep.subr.bf16.mxu0 0
    %5222 = vmatpush1.bf16.msra.mxu0 0
    %5223 = vmatprep.subr.bf16.mxu0 0
    %5224 = vmatpush1.bf16.msra.mxu0 0
    %5225 = vmatprep.subr.bf16.mxu0 0
    %5226 = vmatpush1.bf16.msra.mxu0 0
    %5227 = vmatprep.subr.bf16.mxu0 0
    %5228 = vmatpush1.bf16.msra.mxu0 0
    %5229 = vmatprep.subr.bf16.mxu0 0
    %5230 = vmatpush1.bf16.msra.mxu0 0
    %5231 = vmatprep.subr.bf16.mxu0 0
    %5232 = vmatpush1.bf16.msra.mxu0 0
    %5233 = vmatprep.subr.bf16.mxu0 0
    %5234 = vmatpush1.bf16.msra.mxu0 0
    %5235 = vmatprep.subr.bf16.mxu0 0
    %5236 = vmatpush1.bf16.msra.mxu0 0
    %5237 = vmatprep.subr.bf16.mxu0 0
    %5238 = vmatpush1.bf16.msra.mxu0 0
    %5239 = vmatprep.subr.bf16.mxu0 0
    %5240 = vmatpush1.bf16.msra.mxu0 0
    %5241 = vmatprep.subr.bf16.mxu0 0
    %5242 = vmatpush1.bf16.msra.mxu0 0
    %5243 = vmatprep.subr.bf16.mxu0 0
    %5244 = vmatpush1.bf16.msra.mxu0 0
    %5245 = vmatprep.subr.bf16.mxu0 0
    %5246 = vmatpush1.bf16.msra.mxu0 0
    %5247 = vmatprep.subr.bf16.mxu0 0
    %5248 = vmatpush1.bf16.msra.mxu0 0
    %5249 = vmatprep.mubr.bf16.mxu0 0
    %5250 = vmatmul.mubr.bf16.gmra.mrb[0].mxu0 %v4928
    %v5251 = vpop.f32.mrb[0].mxu0
    %v5252 = vadd.f32 %v5211, %v5251
    %v5253 = vpop.f32.mrb[0].mxu0
    %v5254 = vadd.f32 %v5213, %v5253
    %v5255 = vpop.f32.mrb[0].mxu0
    %v5256 = vpop.f32.mrb[0].mxu0
    %5257 = vdwg.mxu0
    %5258 = vmatprep.subr.bf16.mxu0 %v4246
    %5259 = vmatpush1.bf16.msra.mxu0 %v4245
    %5260 = vmatprep.subr.bf16.mxu0 %v4253
    %5261 = vmatpush1.bf16.msra.mxu0 %v4252
    %5262 = vmatprep.subr.bf16.mxu0 %v4260
    %5263 = vmatpush1.bf16.msra.mxu0 %v4259
    %5264 = vmatprep.subr.bf16.mxu0 %v4267
    %5265 = vmatpush1.bf16.msra.mxu0 %v4266
    %5266 = vmatprep.subr.bf16.mxu0 %v4274
    %5267 = vmatpush1.bf16.msra.mxu0 %v4273
    %5268 = vmatprep.subr.bf16.mxu0 %v4281
    %5269 = vmatpush1.bf16.msra.mxu0 %v4280
    %5270 = vmatprep.subr.bf16.mxu0 %v4288
    %5271 = vmatpush1.bf16.msra.mxu0 %v4287
    %5272 = vmatprep.subr.bf16.mxu0 %v4295
    %5273 = vmatpush1.bf16.msra.mxu0 %v4294
    %5274 = vmatprep.subr.bf16.mxu0 %v4302
    %5275 = vmatpush1.bf16.msra.mxu0 %v4301
    %5276 = vmatprep.subr.bf16.mxu0 %v4309
    %5277 = vmatpush1.bf16.msra.mxu0 %v4308
    %5278 = vmatprep.subr.bf16.mxu0 %v4316
    %5279 = vmatpush1.bf16.msra.mxu0 %v4315
    %5280 = vmatprep.subr.bf16.mxu0 %v4323
    %5281 = vmatpush1.bf16.msra.mxu0 %v4322
    %5282 = vmatprep.subr.bf16.mxu0 %v4330
    %5283 = vmatpush1.bf16.msra.mxu0 %v4329
    %5284 = vmatprep.subr.bf16.mxu0 %v4337
    %5285 = vmatpush1.bf16.msra.mxu0 %v4336
    %5286 = vmatprep.subr.bf16.mxu0 %v4344
    %5287 = vmatpush1.bf16.msra.mxu0 %v4343
    %5288 = vmatprep.subr.bf16.mxu0 %v4351
    %5289 = vmatpush1.bf16.msra.mxu0 %v4350
    %5290 = vmatprep.mubr.bf16.mxu0 %v2728
    %5291 = vmatmul.mubr.bf16.gmra.mrb[0].mxu0 %v2727
    %v5292 = vpop.f32.mrb[0].mxu0
    %v5293 = vadd.f32 %v3147, %v5292
    %v5294 = vpop.f32.mrb[0].mxu0
    %v5295 = vadd.f32 %v3151, %v5294
    %v5296 = vpop.f32.mrb[0].mxu0
    %v5297 = vpop.f32.mrb[0].mxu0
    %5298 = vdwg.mxu0
    %5299 = vmatprep.subr.bf16.mxu0 %v4358
    %5300 = vmatpush1.bf16.msra.mxu0 %v4357
    %5301 = vmatprep.subr.bf16.mxu0 %v4365
    %5302 = vmatpush1.bf16.msra.mxu0 %v4364
    %5303 = vmatprep.subr.bf16.mxu0 %v4372
    %5304 = vmatpush1.bf16.msra.mxu0 %v4371
    %5305 = vmatprep.subr.bf16.mxu0 %v4379
    %5306 = vmatpush1.bf16.msra.mxu0 %v4378
    %5307 = vmatprep.subr.bf16.mxu0 %v4386
    %5308 = vmatpush1.bf16.msra.mxu0 %v4385
    %5309 = vmatprep.subr.bf16.mxu0 %v4393
    %5310 = vmatpush1.bf16.msra.mxu0 %v4392
    %5311 = vmatprep.subr.bf16.mxu0 %v4400
    %5312 = vmatpush1.bf16.msra.mxu0 %v4399
    %5313 = vmatprep.subr.bf16.mxu0 %v4407
    %5314 = vmatpush1.bf16.msra.mxu0 %v4406
    %5315 = vmatprep.subr.bf16.mxu0 %v4414
    %5316 = vmatpush1.bf16.msra.mxu0 %v4413
    %5317 = vmatprep.subr.bf16.mxu0 %v4421
    %5318 = vmatpush1.bf16.msra.mxu0 %v4420
    %5319 = vmatprep.subr.bf16.mxu0 %v4428
    %5320 = vmatpush1.bf16.msra.mxu0 %v4427
    %5321 = vmatprep.subr.bf16.mxu0 %v4435
    %5322 = vmatpush1.bf16.msra.mxu0 %v4434
    %5323 = vmatprep.subr.bf16.mxu0 %v4442
    %5324 = vmatpush1.bf16.msra.mxu0 %v4441
    %5325 = vmatprep.subr.bf16.mxu0 %v4449
    %5326 = vmatpush1.bf16.msra.mxu0 %v4448
    %5327 = vmatprep.subr.bf16.mxu0 %v4456
    %5328 = vmatpush1.bf16.msra.mxu0 %v4455
    %5329 = vmatprep.subr.bf16.mxu0 %v4463
    %5330 = vmatpush1.bf16.msra.mxu0 %v4462
    %5331 = vmatprep.mubr.bf16.mxu0 %v2730
    %5332 = vmatmul.mubr.bf16.gmra.mrb[0].mxu0 %v2729
    %v5333 = vpop.f32.mrb[0].mxu0
    %v5334 = vadd.f32 %v5293, %v5333
    %v5335 = vpop.f32.mrb[0].mxu0
    %v5336 = vadd.f32 %v5295, %v5335
    %v5337 = vpop.f32.mrb[0].mxu0
    %v5338 = vpop.f32.mrb[0].mxu0
    %5339 = vdwg.mxu0
    %5340 = vmatprep.subr.bf16.mxu0 %v4470
    %5341 = vmatpush1.bf16.msra.mxu0 %v4469
    %5342 = vmatprep.subr.bf16.mxu0 %v4477
    %5343 = vmatpush1.bf16.msra.mxu0 %v4476
    %5344 = vmatprep.subr.bf16.mxu0 %v4484
    %5345 = vmatpush1.bf16.msra.mxu0 %v4483
    %5346 = vmatprep.subr.bf16.mxu0 %v4491
    %5347 = vmatpush1.bf16.msra.mxu0 %v4490
    %5348 = vmatprep.subr.bf16.mxu0 %v4498
    %5349 = vmatpush1.bf16.msra.mxu0 %v4497
    %5350 = vmatprep.subr.bf16.mxu0 %v4505
    %5351 = vmatpush1.bf16.msra.mxu0 %v4504
    %5352 = vmatprep.subr.bf16.mxu0 %v4512
    %5353 = vmatpush1.bf16.msra.mxu0 %v4511
    %5354 = vmatprep.subr.bf16.mxu0 %v4519
    %5355 = vmatpush1.bf16.msra.mxu0 %v4518
    %5356 = vmatprep.subr.bf16.mxu0 %v4526
    %5357 = vmatpush1.bf16.msra.mxu0 %v4525
    %5358 = vmatprep.subr.bf16.mxu0 %v4533
    %5359 = vmatpush1.bf16.msra.mxu0 %v4532
    %5360 = vmatprep.subr.bf16.mxu0 %v4540
    %5361 = vmatpush1.bf16.msra.mxu0 %v4539
    %5362 = vmatprep.subr.bf16.mxu0 %v4547
    %5363 = vmatpush1.bf16.msra.mxu0 %v4546
    %5364 = vmatprep.subr.bf16.mxu0 %v4554
    %5365 = vmatpush1.bf16.msra.mxu0 %v4553
    %5366 = vmatprep.subr.bf16.mxu0 %v4561
    %5367 = vmatpush1.bf16.msra.mxu0 %v4560
    %5368 = vmatprep.subr.bf16.mxu0 %v4568
    %5369 = vmatpush1.bf16.msra.mxu0 %v4567
    %5370 = vmatprep.subr.bf16.mxu0 %v4575
    %5371 = vmatpush1.bf16.msra.mxu0 %v4574
    %5372 = vmatprep.mubr.bf16.mxu0 %v2732
    %5373 = vmatmul.mubr.bf16.gmra.mrb[0].mxu0 %v2731
    %v5374 = vpop.f32.mrb[0].mxu0
    %v5375 = vadd.f32 %v5334, %v5374
    %v5376 = vpop.f32.mrb[0].mxu0
    %v5377 = vadd.f32 %v5336, %v5376
    %v5378 = vpop.f32.mrb[0].mxu0
    %v5379 = vpop.f32.mrb[0].mxu0
    %5380 = vdwg.mxu0
    %5381 = vmatprep.subr.bf16.mxu0 %v4582
    %5382 = vmatpush1.bf16.msra.mxu0 %v4581
    %5383 = vmatprep.subr.bf16.mxu0 0
    %5384 = vmatpush1.bf16.msra.mxu0 0
    %5385 = vmatprep.subr.bf16.mxu0 0
    %5386 = vmatpush1.bf16.msra.mxu0 0
    %5387 = vmatprep.subr.bf16.mxu0 0
    %5388 = vmatpush1.bf16.msra.mxu0 0
    %5389 = vmatprep.subr.bf16.mxu0 0
    %5390 = vmatpush1.bf16.msra.mxu0 0
    %5391 = vmatprep.subr.bf16.mxu0 0
    %5392 = vmatpush1.bf16.msra.mxu0 0
    %5393 = vmatprep.subr.bf16.mxu0 0
    %5394 = vmatpush1.bf16.msra.mxu0 0
    %5395 = vmatprep.subr.bf16.mxu0 0
    %5396 = vmatpush1.bf16.msra.mxu0 0
    %5397 = vmatprep.subr.bf16.mxu0 0
    %5398 = vmatpush1.bf16.msra.mxu0 0
    %5399 = vmatprep.subr.bf16.mxu0 0
    %5400 = vmatpush1.bf16.msra.mxu0 0
    %5401 = vmatprep.subr.bf16.mxu0 0
    %5402 = vmatpush1.bf16.msra.mxu0 0
    %5403 = vmatprep.subr.bf16.mxu0 0
    %5404 = vmatpush1.bf16.msra.mxu0 0
    %5405 = vmatprep.subr.bf16.mxu0 0
    %5406 = vmatpush1.bf16.msra.mxu0 0
    %5407 = vmatprep.subr.bf16.mxu0 0
    %5408 = vmatpush1.bf16.msra.mxu0 0
    %5409 = vmatprep.subr.bf16.mxu0 0
    %5410 = vmatpush1.bf16.msra.mxu0 0
    %5411 = vmatprep.subr.bf16.mxu0 0
    %5412 = vmatpush1.bf16.msra.mxu0 0
    %5413 = vmatprep.mubr.bf16.mxu0 0
    %5414 = vmatmul.mubr.bf16.gmra.mrb[0].mxu0 %v4928
    %v5415 = vpop.f32.mrb[0].mxu0
    %v5416 = vadd.f32 %v5375, %v5415
    %v5417 = vpop.f32.mrb[0].mxu0
    %v5418 = vadd.f32 %v5377, %v5417
    %v5419 = vpop.f32.mrb[0].mxu0
    %v5420 = vpop.f32.mrb[0].mxu0
    %5421 = vdwg.mxu0
    %5422 = vmatprep.subr.bf16.mxu0 0
    %5423 = vmatpush1.bf16.msra.mxu0 %v4247
    %5424 = vmatprep.subr.bf16.mxu0 0
    %5425 = vmatpush1.bf16.msra.mxu0 %v4254
    %5426 = vmatprep.subr.bf16.mxu0 0
    %5427 = vmatpush1.bf16.msra.mxu0 %v4261
    %5428 = vmatprep.subr.bf16.mxu0 0
    %5429 = vmatpush1.bf16.msra.mxu0 %v4268
    %5430 = vmatprep.subr.bf16.mxu0 0
    %5431 = vmatpush1.bf16.msra.mxu0 %v4275
    %5432 = vmatprep.subr.bf16.mxu0 0
    %5433 = vmatpush1.bf16.msra.mxu0 %v4282
    %5434 = vmatprep.subr.bf16.mxu0 0
    %5435 = vmatpush1.bf16.msra.mxu0 %v4289
    %5436 = vmatprep.subr.bf16.mxu0 0
    %5437 = vmatpush1.bf16.msra.mxu0 %v4296
    %5438 = vmatprep.subr.bf16.mxu0 0
    %5439 = vmatpush1.bf16.msra.mxu0 %v4303
    %5440 = vmatprep.subr.bf16.mxu0 0
    %5441 = vmatpush1.bf16.msra.mxu0 %v4310
    %5442 = vmatprep.subr.bf16.mxu0 0
    %5443 = vmatpush1.bf16.msra.mxu0 %v4317
    %5444 = vmatprep.subr.bf16.mxu0 0
    %5445 = vmatpush1.bf16.msra.mxu0 %v4324
    %5446 = vmatprep.subr.bf16.mxu0 0
    %5447 = vmatpush1.bf16.msra.mxu0 %v4331
    %5448 = vmatprep.subr.bf16.mxu0 0
    %5449 = vmatpush1.bf16.msra.mxu0 %v4338
    %5450 = vmatprep.subr.bf16.mxu0 0
    %5451 = vmatpush1.bf16.msra.mxu0 %v4345
    %5452 = vmatprep.subr.bf16.mxu0 0
    %5453 = vmatpush1.bf16.msra.mxu0 %v4352
    %5454 = vmatprep.mubr.bf16.mxu0 %v2728
    %5455 = vmatmul.mubr.bf16.gmra.mrb[0].mxu0 %v2727
    %v5456 = vpop.f32.mrb[0].mxu0
    %v5457 = vadd.f32 %v3155, %v5456
    %v5458 = vpop.f32.mrb[0].mxu0
    %v5459 = vpop.f32.mrb[0].mxu0
    %v5460 = vpop.f32.mrb[0].mxu0
    %5461 = vdwg.mxu0
    %5462 = vmatprep.subr.bf16.mxu0 0
    %5463 = vmatpush1.bf16.msra.mxu0 %v4359
    %5464 = vmatprep.subr.bf16.mxu0 0
    %5465 = vmatpush1.bf16.msra.mxu0 %v4366
    %5466 = vmatprep.subr.bf16.mxu0 0
    %5467 = vmatpush1.bf16.msra.mxu0 %v4373
    %5468 = vmatprep.subr.bf16.mxu0 0
    %5469 = vmatpush1.bf16.msra.mxu0 %v4380
    %5470 = vmatprep.subr.bf16.mxu0 0
    %5471 = vmatpush1.bf16.msra.mxu0 %v4387
    %5472 = vmatprep.subr.bf16.mxu0 0
    %5473 = vmatpush1.bf16.msra.mxu0 %v4394
    %5474 = vmatprep.subr.bf16.mxu0 0
    %5475 = vmatpush1.bf16.msra.mxu0 %v4401
    %5476 = vmatprep.subr.bf16.mxu0 0
    %5477 = vmatpush1.bf16.msra.mxu0 %v4408
    %5478 = vmatprep.subr.bf16.mxu0 0
    %5479 = vmatpush1.bf16.msra.mxu0 %v4415
    %5480 = vmatprep.subr.bf16.mxu0 0
    %5481 = vmatpush1.bf16.msra.mxu0 %v4422
    %5482 = vmatprep.subr.bf16.mxu0 0
    %5483 = vmatpush1.bf16.msra.mxu0 %v4429
    %5484 = vmatprep.subr.bf16.mxu0 0
    %5485 = vmatpush1.bf16.msra.mxu0 %v4436
    %5486 = vmatprep.subr.bf16.mxu0 0
    %5487 = vmatpush1.bf16.msra.mxu0 %v4443
    %5488 = vmatprep.subr.bf16.mxu0 0
    %5489 = vmatpush1.bf16.msra.mxu0 %v4450
    %5490 = vmatprep.subr.bf16.mxu0 0
    %5491 = vmatpush1.bf16.msra.mxu0 %v4457
    %5492 = vmatprep.subr.bf16.mxu0 0
    %5493 = vmatpush1.bf16.msra.mxu0 %v4464
    %5494 = vmatprep.mubr.bf16.mxu0 %v2730
    %5495 = vmatmul.mubr.bf16.gmra.mrb[0].mxu0 %v2729
    %v5496 = vpop.f32.mrb[0].mxu0
    %v5497 = vadd.f32 %v5457, %v5496
    %v5498 = vpop.f32.mrb[0].mxu0
    %v5499 = vpop.f32.mrb[0].mxu0
    %v5500 = vpop.f32.mrb[0].mxu0
    %5501 = vdwg.mxu0
    %5502 = vmatprep.subr.bf16.mxu0 0
    %5503 = vmatpush1.bf16.msra.mxu0 %v4471
    %5504 = vmatprep.subr.bf16.mxu0 0
    %5505 = vmatpush1.bf16.msra.mxu0 %v4478
    %5506 = vmatprep.subr.bf16.mxu0 0
    %5507 = vmatpush1.bf16.msra.mxu0 %v4485
    %5508 = vmatprep.subr.bf16.mxu0 0
    %5509 = vmatpush1.bf16.msra.mxu0 %v4492
    %5510 = vmatprep.subr.bf16.mxu0 0
    %5511 = vmatpush1.bf16.msra.mxu0 %v4499
    %5512 = vmatprep.subr.bf16.mxu0 0
    %5513 = vmatpush1.bf16.msra.mxu0 %v4506
    %5514 = vmatprep.subr.bf16.mxu0 0
    %5515 = vmatpush1.bf16.msra.mxu0 %v4513
    %5516 = vmatprep.subr.bf16.mxu0 0
    %5517 = vmatpush1.bf16.msra.mxu0 %v4520
    %5518 = vmatprep.subr.bf16.mxu0 0
    %5519 = vmatpush1.bf16.msra.mxu0 %v4527
    %5520 = vmatprep.subr.bf16.mxu0 0
    %5521 = vmatpush1.bf16.msra.mxu0 %v4534
    %5522 = vmatprep.subr.bf16.mxu0 0
    %5523 = vmatpush1.bf16.msra.mxu0 %v4541
    %5524 = vmatprep.subr.bf16.mxu0 0
    %5525 = vmatpush1.bf16.msra.mxu0 %v4548
    %5526 = vmatprep.subr.bf16.mxu0 0
    %5527 = vmatpush1.bf16.msra.mxu0 %v4555
    %5528 = vmatprep.subr.bf16.mxu0 0
    %5529 = vmatpush1.bf16.msra.mxu0 %v4562
    %5530 = vmatprep.subr.bf16.mxu0 0
    %5531 = vmatpush1.bf16.msra.mxu0 %v4569
    %5532 = vmatprep.subr.bf16.mxu0 0
    %5533 = vmatpush1.bf16.msra.mxu0 %v4576
    %5534 = vmatprep.mubr.bf16.mxu0 %v2732
    %5535 = vmatmul.mubr.bf16.gmra.mrb[0].mxu0 %v2731
    %v5536 = vpop.f32.mrb[0].mxu0
    %v5537 = vadd.f32 %v5497, %v5536
    %v5538 = vpop.f32.mrb[0].mxu0
    %v5539 = vpop.f32.mrb[0].mxu0
    %v5540 = vpop.f32.mrb[0].mxu0
    %5541 = vdwg.mxu0
    %5542 = vmatprep.subr.bf16.mxu0 0
    %5543 = vmatpush1.bf16.msra.mxu0 %v4583
    %5544 = vmatprep.subr.bf16.mxu0 0
    %5545 = vmatpush1.bf16.msra.mxu0 0
    %5546 = vmatprep.subr.bf16.mxu0 0
    %5547 = vmatpush1.bf16.msra.mxu0 0
    %5548 = vmatprep.subr.bf16.mxu0 0
    %5549 = vmatpush1.bf16.msra.mxu0 0
    %5550 = vmatprep.subr.bf16.mxu0 0
    %5551 = vmatpush1.bf16.msra.mxu0 0
    %5552 = vmatprep.subr.bf16.mxu0 0
    %5553 = vmatpush1.bf16.msra.mxu0 0
    %5554 = vmatprep.subr.bf16.mxu0 0
    %5555 = vmatpush1.bf16.msra.mxu0 0
    %5556 = vmatprep.subr.bf16.mxu0 0
    %5557 = vmatpush1.bf16.msra.mxu0 0
    %5558 = vmatprep.subr.bf16.mxu0 0
    %5559 = vmatpush1.bf16.msra.mxu0 0
    %5560 = vmatprep.subr.bf16.mxu0 0
    %5561 = vmatpush1.bf16.msra.mxu0 0
    %5562 = vmatprep.subr.bf16.mxu0 0
    %5563 = vmatpush1.bf16.msra.mxu0 0
    %5564 = vmatprep.subr.bf16.mxu0 0
    %5565 = vmatpush1.bf16.msra.mxu0 0
    %5566 = vmatprep.subr.bf16.mxu0 0
    %5567 = vmatpush1.bf16.msra.mxu0 0
    %5568 = vmatprep.subr.bf16.mxu0 0
    %5569 = vmatpush1.bf16.msra.mxu0 0
    %5570 = vmatprep.subr.bf16.mxu0 0
    %5571 = vmatpush1.bf16.msra.mxu0 0
    %5572 = vmatprep.subr.bf16.mxu0 0
    %5573 = vmatpush1.bf16.msra.mxu0 0
    %5574 = vmatprep.mubr.bf16.mxu0 0
    %5575 = vmatmul.mubr.bf16.gmra.mrb[0].mxu0 %v4928
    %v5576 = vpop.f32.mrb[0].mxu0
    %v5577 = vadd.f32 %v5537, %v5576
    %v5578 = vpop.f32.mrb[0].mxu0
    %v5579 = vpop.f32.mrb[0].mxu0
    %v5580 = vpop.f32.mrb[0].mxu0
    %5581 = vdwg.mxu0
    %v5582 = vsel %vm104, %v5088, 0.0
    %v5583 = vrot.slane %v5582, 4
    %v5584 = vadd.f32 %v5582, %v5583
    %v5585 = vrot.slane %v5584, 2
    %v5586 = vadd.f32 %v5584, %v5585
    %v5587 = vrot.slane %v5586, 1
    %v5588 = vadd.f32 %v5586, %v5587
    %v5589 = vsel %vm104, %v5090, 0.0
    %v5590 = vrot.slane %v5589, 4
    %v5591 = vadd.f32 %v5589, %v5590
    %v5592 = vrot.slane %v5591, 2
    %v5593 = vadd.f32 %v5591, %v5592
    %v5594 = vrot.slane %v5593, 1
    %v5595 = vadd.f32 %v5593, %v5594
    %v5596 = vsel %vm104, %v5252, 0.0
    %v5597 = vrot.slane %v5596, 4
    %v5598 = vadd.f32 %v5596, %v5597
    %v5599 = vrot.slane %v5598, 2
    %v5600 = vadd.f32 %v5598, %v5599
    %v5601 = vrot.slane %v5600, 1
    %v5602 = vadd.f32 %v5600, %v5601
    %v5603 = vsel %vm104, %v5254, 0.0
    %v5604 = vrot.slane %v5603, 4
    %v5605 = vadd.f32 %v5603, %v5604
    %v5606 = vrot.slane %v5605, 2
    %v5607 = vadd.f32 %v5605, %v5606
    %v5608 = vrot.slane %v5607, 1
    %v5609 = vadd.f32 %v5607, %v5608
    %v5610 = vsel %vm104, %v5416, 0.0
    %v5611 = vrot.slane %v5610, 4
    %v5612 = vadd.f32 %v5610, %v5611
    %v5613 = vrot.slane %v5612, 2
    %v5614 = vadd.f32 %v5612, %v5613
    %v5615 = vrot.slane %v5614, 1
    %v5616 = vadd.f32 %v5614, %v5615
    %v5617 = vsel %vm104, %v5418, 0.0
    %v5618 = vrot.slane %v5617, 4
    %v5619 = vadd.f32 %v5617, %v5618
    %v5620 = vrot.slane %v5619, 2
    %v5621 = vadd.f32 %v5619, %v5620
    %v5622 = vrot.slane %v5621, 1
    %v5623 = vadd.f32 %v5621, %v5622
    %v5624 = vsel %vm147, %v5577, 0.0
    %v5625 = vrot.slane %v5624, 4
    %v5626 = vadd.f32 %v5624, %v5625
    %v5627 = vrot.slane %v5626, 2
    %v5628 = vadd.f32 %v5626, %v5627
    %v5629 = vrot.slane %v5628, 1
    %v5630 = vadd.f32 %v5628, %v5629
    %v5631 = vmul.f32 %v5588, 0.5
    %v5632 = vmul.f32 %v5595, 0.5
    %v5633 = vmul.f32 %v5602, 0.5
    %v5634 = vmul.f32 %v5609, 0.5
    %v5635 = vmul.f32 %v5616, 0.5
    %v5636 = vmul.f32 %v5623, 0.5
    %v5637 = vmul.f32 %v5630, 0.5
    %v5638 = vsub.f32 %v5088, %v5631
    %v5639 = vsub.f32 %v5090, %v5632
    %v5640 = vsub.f32 %v5252, %v5633
    %v5641 = vsub.f32 %v5254, %v5634
    %v5642 = vsub.f32 %v5416, %v5635
    %v5643 = vsub.f32 %v5418, %v5636
    %v5644 = vsub.f32 %v5577, %v5637
    %v5645 = vmul.f32 %v5638, %v5638
    %v5646 = vmul.f32 %v5639, %v5639
    %v5647 = vmul.f32 %v5640, %v5640
    %v5648 = vmul.f32 %v5641, %v5641
    %v5649 = vmul.f32 %v5642, %v5642
    %v5650 = vmul.f32 %v5643, %v5643
    %v5651 = vmul.f32 %v5644, %v5644
    %v5652 = vsel %vm104, %v5645, 0.0
    %v5653 = vrot.slane %v5652, 4
    %v5654 = vadd.f32 %v5652, %v5653
    %v5655 = vrot.slane %v5654, 2
    %v5656 = vadd.f32 %v5654, %v5655
    %v5657 = vrot.slane %v5656, 1
    %v5658 = vadd.f32 %v5656, %v5657
    %v5659 = vsel %vm104, %v5646, 0.0
    %v5660 = vrot.slane %v5659, 4
    %v5661 = vadd.f32 %v5659, %v5660
    %v5662 = vrot.slane %v5661, 2
    %v5663 = vadd.f32 %v5661, %v5662
    %v5664 = vrot.slane %v5663, 1
    %v5665 = vadd.f32 %v5663, %v5664
    %v5666 = vsel %vm104, %v5647, 0.0
    %v5667 = vrot.slane %v5666, 4
    %v5668 = vadd.f32 %v5666, %v5667
    %v5669 = vrot.slane %v5668, 2
    %v5670 = vadd.f32 %v5668, %v5669
    %v5671 = vrot.slane %v5670, 1
    %v5672 = vadd.f32 %v5670, %v5671
    %v5673 = vsel %vm104, %v5648, 0.0
    %v5674 = vrot.slane %v5673, 4
    %v5675 = vadd.f32 %v5673, %v5674
    %v5676 = vrot.slane %v5675, 2
    %v5677 = vadd.f32 %v5675, %v5676
    %v5678 = vrot.slane %v5677, 1
    %v5679 = vadd.f32 %v5677, %v5678
    %v5680 = vsel %vm104, %v5649, 0.0
    %v5681 = vrot.slane %v5680, 4
    %v5682 = vadd.f32 %v5680, %v5681
    %v5683 = vrot.slane %v5682, 2
    %v5684 = vadd.f32 %v5682, %v5683
    %v5685 = vrot.slane %v5684, 1
    %v5686 = vadd.f32 %v5684, %v5685
    %v5687 = vsel %vm104, %v5650, 0.0
    %v5688 = vrot.slane %v5687, 4
    %v5689 = vadd.f32 %v5687, %v5688
    %v5690 = vrot.slane %v5689, 2
    %v5691 = vadd.f32 %v5689, %v5690
    %v5692 = vrot.slane %v5691, 1
    %v5693 = vadd.f32 %v5691, %v5692
    %v5694 = vsel %vm147, %v5651, 0.0
    %v5695 = vrot.slane %v5694, 4
    %v5696 = vadd.f32 %v5694, %v5695
    %v5697 = vrot.slane %v5696, 2
    %v5698 = vadd.f32 %v5696, %v5697
    %v5699 = vrot.slane %v5698, 1
    %v5700 = vadd.f32 %v5698, %v5699
    %v5701 = vmul.f32 %v5658, 0.5
    %v5702 = vmul.f32 %v5665, 0.5
    %v5703 = vmul.f32 %v5672, 0.5
    %v5704 = vmul.f32 %v5679, 0.5
    %v5705 = vmul.f32 %v5686, 0.5
    %v5706 = vmul.f32 %v5693, 0.5
    %v5707 = vmul.f32 %v5700, 0.5
    %v5708 = vadd.f32 %v5701, 1e-05
    %v5709 = vadd.f32 %v5702, 1e-05
    %v5710 = vadd.f32 %v5703, 1e-05
    %v5711 = vadd.f32 %v5704, 1e-05
    %v5712 = vadd.f32 %v5705, 1e-05
    %v5713 = vadd.f32 %v5706, 1e-05
    %v5714 = vadd.f32 %v5707, 1e-05
    %v5715 = vrsqrt.pop %v5708
    %v5716 = vrsqrt.pop %v5709
    %v5717 = vrsqrt.pop %v5710
    %v5718 = vrsqrt.pop %v5711
    %v5719 = vrsqrt.pop %v5712
    %v5720 = vrsqrt.pop %v5713
    %v5721 = vrsqrt.pop %v5714
    %v5722 = vmul.f32 %v5638, %v5715
    %v5723 = vmul.f32 %v5639, %v5716
    %v5724 = vmul.f32 %v5640, %v5717
    %v5725 = vmul.f32 %v5641, %v5718
    %v5726 = vmul.f32 %v5642, %v5719
    %v5727 = vmul.f32 %v5643, %v5720
    %v5728 = vmul.f32 %v5644, %v5721
    %v5729 = vld [vmem:[%s12] sm:$0x7f]
    %v5731 = vlaneseq
    %v5732 = vshrl.u32 %v5731, 7
    %v5733 = vsub.s32 0, %v5732
    %v5734 = vrot.slane %v5729, %v5733
    %v5735 = vlaneseq
    %v5736 = vshrl.u32 %v5735, 7
    %v5737 = vsub.s32 1, %v5736
    %v5738 = vrot.slane %v5729, %v5737
    %v5739 = vlaneseq
    %v5740 = vshrl.u32 %v5739, 7
    %v5741 = vsub.s32 2, %v5740
    %v5742 = vrot.slane %v5729, %v5741
    %v5743 = vlaneseq
    %v5744 = vshrl.u32 %v5743, 7
    %v5745 = vsub.s32 3, %v5744
    %v5746 = vrot.slane %v5729, %v5745
    %v5747 = vlaneseq
    %v5748 = vshrl.u32 %v5747, 7
    %v5749 = vsub.s32 4, %v5748
    %v5750 = vrot.slane %v5729, %v5749
    %v5751 = vlaneseq
    %v5752 = vshrl.u32 %v5751, 7
    %v5753 = vsub.s32 5, %v5752
    %v5754 = vrot.slane %v5729, %v5753
    %v5755 = vlaneseq
    %v5756 = vshrl.u32 %v5755, 7
    %v5757 = vsub.s32 6, %v5756
    %v5758 = vrot.slane %v5729, %v5757
    %v5766 = vmul.f32 %v5722, %v5734
    %v5767 = vmul.f32 %v5723, %v5738
    %v5768 = vmul.f32 %v5724, %v5742
    %v5769 = vmul.f32 %v5725, %v5746
    %v5770 = vmul.f32 %v5726, %v5750
    %v5771 = vmul.f32 %v5727, %v5754
    %v5772 = vmul.f32 %v5728, %v5758
    %v5773 = vld [vmem:[%s13] sm:$0x7f]
    %v5775 = vlaneseq
    %v5776 = vshrl.u32 %v5775, 7
    %v5777 = vsub.s32 0, %v5776
    %v5778 = vrot.slane %v5773, %v5777
    %v5779 = vlaneseq
    %v5780 = vshrl.u32 %v5779, 7
    %v5781 = vsub.s32 1, %v5780
    %v5782 = vrot.slane %v5773, %v5781
    %v5783 = vlaneseq
    %v5784 = vshrl.u32 %v5783, 7
    %v5785 = vsub.s32 2, %v5784
    %v5786 = vrot.slane %v5773, %v5785
    %v5787 = vlaneseq
    %v5788 = vshrl.u32 %v5787, 7
    %v5789 = vsub.s32 3, %v5788
    %v5790 = vrot.slane %v5773, %v5789
    %v5791 = vlaneseq
    %v5792 = vshrl.u32 %v5791, 7
    %v5793 = vsub.s32 4, %v5792
    %v5794 = vrot.slane %v5773, %v5793
    %v5795 = vlaneseq
    %v5796 = vshrl.u32 %v5795, 7
    %v5797 = vsub.s32 5, %v5796
    %v5798 = vrot.slane %v5773, %v5797
    %v5799 = vlaneseq
    %v5800 = vshrl.u32 %v5799, 7
    %v5801 = vsub.s32 6, %v5800
    %v5802 = vrot.slane %v5773, %v5801
    %v5810 = vadd.f32 %v5766, %v5778
    %v5811 = vadd.f32 %v5767, %v5782
    %v5812 = vadd.f32 %v5768, %v5786
    %v5813 = vadd.f32 %v5769, %v5790
    %v5814 = vadd.f32 %v5770, %v5794
    %v5815 = vadd.f32 %v5771, %v5798
    %v5816 = vadd.f32 %v5772, %v5802
    %vm5817 = vcmp.ge.f32.partialorder %v5810, 0.0
    %vm5818 = vcmp.ge.f32.partialorder %v5811, 0.0
    %vm5819 = vcmp.ge.f32.partialorder %v5812, 0.0
    %vm5820 = vcmp.ge.f32.partialorder %v5813, 0.0
    %vm5821 = vcmp.ge.f32.partialorder %v5814, 0.0
    %vm5822 = vcmp.ge.f32.partialorder %v5815, 0.0
    %vm5823 = vcmp.ge.f32.partialorder %v5816, 0.0
    %v5824 = vmul.f32 %v5810, 0.2
    %v5825 = vmul.f32 %v5811, 0.2
    %v5826 = vmul.f32 %v5812, 0.2
    %v5827 = vmul.f32 %v5813, 0.2
    %v5828 = vmul.f32 %v5814, 0.2
    %v5829 = vmul.f32 %v5815, 0.2
    %v5830 = vmul.f32 %v5816, 0.2
    %v5831 = vsel %vm5817, %v5810, %v5824
    %v5832 = vsel %vm5818, %v5811, %v5825
    %v5833 = vsel %vm5819, %v5812, %v5826
    %v5834 = vsel %vm5820, %v5813, %v5827
    %v5835 = vsel %vm5821, %v5814, %v5828
    %v5836 = vsel %vm5822, %v5815, %v5829
    %v5837 = vsel %vm5823, %v5816, %v5830
    %v5838 = vld [vmem:[%s14] sm:$0x7f]
    %v5840 = vlaneseq
    %v5841 = vshrl.u32 %v5840, 7
    %v5842 = vsub.s32 0, %v5841
    %v5843 = vrot.slane %v5838, %v5842
    %v5844 = vlaneseq
    %v5845 = vshrl.u32 %v5844, 7
    %v5846 = vsub.s32 1, %v5845
    %v5847 = vrot.slane %v5838, %v5846
    %v5848 = vlaneseq
    %v5849 = vshrl.u32 %v5848, 7
    %v5850 = vsub.s32 2, %v5849
    %v5851 = vrot.slane %v5838, %v5850
    %v5852 = vlaneseq
    %v5853 = vshrl.u32 %v5852, 7
    %v5854 = vsub.s32 3, %v5853
    %v5855 = vrot.slane %v5838, %v5854
    %v5856 = vlaneseq
    %v5857 = vshrl.u32 %v5856, 7
    %v5858 = vsub.s32 4, %v5857
    %v5859 = vrot.slane %v5838, %v5858
    %v5860 = vlaneseq
    %v5861 = vshrl.u32 %v5860, 7
    %v5862 = vsub.s32 5, %v5861
    %v5863 = vrot.slane %v5838, %v5862
    %v5864 = vlaneseq
    %v5865 = vshrl.u32 %v5864, 7
    %v5866 = vsub.s32 6, %v5865
    %v5867 = vrot.slane %v5838, %v5866
    %v5875 = vmul.f32 %v5831, %v5843
    %v5876 = vmul.f32 %v5832, %v5847
    %v5877 = vmul.f32 %v5833, %v5851
    %v5878 = vmul.f32 %v5834, %v5855
    %v5879 = vmul.f32 %v5835, %v5859
    %v5880 = vmul.f32 %v5836, %v5863
    %v5881 = vmul.f32 %v5837, %v5867
    %v5882 = vsel %vm104, %v5875, 0.0
    %v5883 = vsel %vm104, %v5876, 0.0
    %v5884 = vadd.f32 %v5882, %v5883
    %v5885 = vsel %vm104, %v5877, 0.0
    %v5886 = vadd.f32 %v5884, %v5885
    %v5887 = vsel %vm104, %v5878, 0.0
    %v5888 = vadd.f32 %v5886, %v5887
    %v5889 = vsel %vm104, %v5879, 0.0
    %v5890 = vadd.f32 %v5888, %v5889
    %v5891 = vsel %vm104, %v5880, 0.0
    %v5892 = vadd.f32 %v5890, %v5891
    %v5893 = vsel %vm147, %v5881, 0.0
    %v5894 = vadd.f32 %v5892, %v5893
    %5895 = vadd.xlane.f32.xlu0 %v5894
    %v5896 = vpop.xlane.xlu0 %5895
    %v5897 = vld [vmem:[#allocation2] sm:$0x1]
    %v5899 = vlaneseq
    %v5900 = vshrl.u32 %v5899, 7
    %v5901 = vsub.s32 0, %v5900
    %v5902 = vrot.slane %v5897, %v5901
    %v5904 = vadd.f32 %v5896, %v5902
    %v5905 = vld [vmem:[%s16] sm:$0x3]
    %v5906 = vmax.f32 %v5904, 0.0
    %v5907 = vmul.f32 %v5904, %v5905
    %v5908 = vsub.f32 %v5906, %v5907
    %v5909 = vand.u32 2147483647, %v5904
    %v5910 = vsub.f32 0.0, %v5909
    %v5911 = vmul.f32 %v5910, 1.442695
    %v5912 = vpow.pop %v5911
    %v5913 = vadd.f32 %v5912, 1.0
    %v5914 = vlog2.pop %v5913
    %v5915 = vmul.f32 %v5914, 0.6931472
    %v5916 = vmul.f32 -0.5, %v5912
    %v5917 = vadd.f32 %v5916, 1.0
    %v5918 = vmul.f32 %v5917, %v5912
    %v5919 = vand.u32 2147483647, %v5912
    %vm5920 = vcmp.lt.f32.partialorder %v5919, 0.0004427343
    %v5921 = vsel %vm5920, %v5918, %v5915
    %v5922 = vadd.f32 %v5908, %v5921
    %vm5923 = vcmask 1024
    %v5924 = vsel %vm5923, %v5922, 0.0
    %v5925 = vrot.slane %v5924, 4
    %v5926 = vadd.f32 %v5924, %v5925
    %v5927 = vrot.slane %v5926, 2
    %v5928 = vadd.f32 %v5926, %v5927
    %v5929 = vrot.slane %v5928, 1
    %v5930 = vadd.f32 %v5928, %v5929
    %v5931 = vmul.f32 %v5930, 0.5
    %vm5932 = vcmask 0
    %5933 = vst.msk [vmem:[#allocation3] sm:$0x1] %vm5932, %v5931
    // Predicated region
    $region70: #{discriminator_forward.5} parent=1 // pred_check
      _
    $region71: #{discriminator_forward.5} parent=1 // pred_check_branch
      %5935 = sbr.rel (0) target = $region73
    $region72: #{discriminator_forward.5} parent=1 // pred_region
      %s5937 = ssub.s32 16, 16
      %5938 = vsyncadd [#allocation4], %s5937
      %s5940 = sshll.u32 [#allocation3], 4
      %s5941 = int_to_ptr.vmem [resolvable:$true] %s5940
      %5943 = dma.vmem_to_hbm [thread:$0]  %s5941, 16, %s17, [#allocation4]
    $region73: #{discriminator_forward.5} parent=1 // pred_fallthru
      _
    // Predicated region
    $region74: #{discriminator_forward.5} parent=1 // pred_check
      _
    $region75: #{discriminator_forward.5} parent=1 // pred_check_branch
      %5945 = sbr.rel (0) target = $region77
    $region76: #{discriminator_forward.5} parent=1 // pred_region
      %5946 = dma.done [#allocation4], 16
    $region77: #{discriminator_forward.5} parent=1 // pred_fallthru
      _
    %5947 = vsyncpa [#allocation4], 1

</llo_original>
